<compile_context>
chip_gen: v7x
topology: tpu7x:2x2x1
jax: 0.10.0
libtpu: 0.0.40
codegen_flags: <defaults>
</compile_context>

<pallas_src>
import math
from functools import partial

import numpy as np
import jax
import jax.numpy as jnp
from jax.experimental import pallas as pl
from jax.experimental.pallas import tpu as pltpu


def _interp_operator(shape, out_axis, n_in, inv_scale):
    """1-D linear-interp operator (PyTorch align_corners=False), built in-kernel.

    Returns a float32 array of `shape`; `out_axis` indexes output positions, the
    other axis indexes input positions. Each entry is the weight of that input
    sample for that output sample (at most two non-zeros per output row).
    """
    o = jax.lax.broadcasted_iota(jnp.int32, shape, out_axis).astype(jnp.float32)
    i = jax.lax.broadcasted_iota(jnp.int32, shape, 1 - out_axis).astype(jnp.float32)
    src = jnp.maximum((o + 0.5) * inv_scale - 0.5, 0.0)   # half-pixel centers, clamp < 0
    i0 = jnp.floor(src)
    lam = src - i0
    i1 = jnp.minimum(i0 + 1.0, float(n_in - 1))           # edge clamp
    # when i0 == i1 (clamped edge) the two terms sum to 1.0, matching PyTorch
    return (jnp.where(i == i0, 1.0 - lam, 0.0) +
            jnp.where(i == i1, lam, 0.0))


def _upsample_kernel(x_ref, o_ref, *, h_in, w_in, h_out, w_out, inv_h, inv_w):
    tbc = x_ref.shape[0]
    x = x_ref[...].astype(jnp.float32)                       # (tbc, H, W)

    # Tiny interpolation operators, rebuilt on the VPU (no constant-input DMA).
    a_h = _interp_operator((h_out, h_in), 0, h_in, inv_h)    # (H_out, H)
    a_wT = _interp_operator((w_in, w_out), 1, w_in, inv_w)   # (W,  W_out)

    # W-axis interpolation: batched MXU matmul.
    a_wT_b = jnp.broadcast_to(a_wT[None], (tbc, w_in, w_out))
    y = jnp.einsum('bhw,bwv->bhv', x, a_wT_b,
                   preferred_element_type=jnp.float32,
                   precision=jax.lax.Precision.HIGHEST)      # (tbc, H, W_out)

    # H-axis interpolation: batched MXU matmul.
    a_h_b = jnp.broadcast_to(a_h[None], (tbc, h_out, h_in))
    out = jnp.einsum('boh,bhv->bov', a_h_b, y,
                     preferred_element_type=jnp.float32,
                     precision=jax.lax.Precision.HIGHEST)    # (tbc, H_out, W_out)

    o_ref[...] = out.astype(o_ref.dtype)                     # single contiguous store


def upsample_bilinear(x, factor=2, *, out_tile_bytes=512 * 1024):
    """Pallas TPU equivalent of Upsample(dim=2, factor=factor, mode='linear')."""
    assert x.ndim == 4, "expected NCHW input"
    assert factor > 0
    B, C, H, W = x.shape
    h_out = int(math.floor(H * factor))
    w_out = int(math.floor(W * factor))
    inv = 1.0 / float(factor)

    BC = B * C
    x3 = x.reshape(BC, H, W)

    # Channel tile: largest divisor of B*C whose output block stays around
    # `out_tile_bytes` (keeps double-buffered tiles far below the 16/32 MiB
    # scoped-VMEM defaults while amortizing per-grid-step overhead).
    itemsize = jnp.dtype(x.dtype).itemsize
    cap = max(1, out_tile_bytes // max(1, h_out * w_out * itemsize))
    tbc = min(BC, cap)
    while BC % tbc:
        tbc -= 1

    kernel = partial(_upsample_kernel, h_in=H, w_in=W, h_out=h_out, w_out=w_out,
                     inv_h=inv, inv_w=inv)

    out = pl.pallas_call(
        kernel,
        out_shape=jax.ShapeDtypeStruct((BC, h_out, w_out), x.dtype),
        grid=(BC // tbc,),
        in_specs=[pl.BlockSpec((tbc, H, W), lambda i: (i, 0, 0))],
        out_specs=pl.BlockSpec((tbc, h_out, w_out), lambda i: (i, 0, 0)),
        compiler_params=pltpu.CompilerParams(dimension_semantics=("parallel",)),
    )(x3)
    return out.reshape(B, C, h_out, w_out)


def _reference_upsample_bilinear(x, factor=2):
    """Pure-jnp reference: PyTorch bilinear, align_corners=False."""
    B, C, H, W = x.shape
    h_out = int(math.floor(H * factor))
    w_out = int(math.floor(W * factor))
    inv = 1.0 / float(factor)

    def axis(n_in, n_out):
        o = np.arange(n_out, dtype=np.float64)
        src = np.maximum((o + 0.5) * inv - 0.5, 0.0)
        i0 = np.floor(src).astype(np.int32)
        lam = (src - i0).astype(np.float32)
        i1 = np.minimum(i0 + 1, n_in - 1).astype(np.int32)
        return i0, i1, lam

    h0, h1, lh = axis(H, h_out)
    w0, w1, lw = axis(W, w_out)
    xh = (x[:, :, h0, :] * (1.0 - lh)[None, None, :, None]
          + x[:, :, h1, :] * lh[None, None, :, None])
    out = xh[:, :, :, w0] * (1.0 - lw) + xh[:, :, :, w1] * lw
    return out


if __name__ == "__main__":
    key = jax.random.PRNGKey(0)
    B, C, H, W = 2, 4, 16, 16
    x = jax.random.normal(key, (B, C, H, W), dtype=jnp.float32)

    out = upsample_bilinear(x, factor=2)
    out = jax.block_until_ready(out)

    ref = _reference_upsample_bilinear(x, factor=2)
    assert out.shape == (B, C, 2 * H, 2 * W)
    err = float(jnp.max(jnp.abs(out - ref)))
    assert jnp.allclose(out, ref, atol=1e-4, rtol=1e-4), f"max abs err {err}"

    print("KERNEL_OK")
</pallas_src>

<mosaic_0001>
module attributes {stable_mosaic.version = 11 : i64} {
  func.func @_upsample_kernel(%arg0: i32, %arg1: memref<8x16x16xf32, #tpu.memory_space<vmem>>, %arg2: memref<8x32x32xf32, #tpu.memory_space<vmem>>) attributes {dimension_semantics = [#tpu.dimension_semantics<parallel>], iteration_bounds = array<i64: 1>, scalar_prefetch = 0 : i64, scratch_operands = 0 : i64, tpu.core_type = #tpu.core_type<tc>, window_params = [{transform_indices = @transform_0, window_bounds = array<i64: 8, 16, 16>}, {transform_indices = @transform_1, window_bounds = array<i64: 8, 32, 32>}]} {
    %c0 = arith.constant 0 : index
    %c0_0 = arith.constant 0 : index
    %c0_1 = arith.constant 0 : index
    %0 = vector.load %arg1[%c0, %c0_0, %c0_1] : memref<8x16x16xf32, #tpu.memory_space<vmem>>, vector<8x16x16xf32>
    %1 = tpu.iota {dimensions = array<i32: 0>} : vector<32x16xi32>
    %2 = arith.sitofp %1 : vector<32x16xi32> to vector<32x16xf32>
    %3 = tpu.iota {dimensions = array<i32: 1>} : vector<32x16xi32>
    %4 = arith.sitofp %3 : vector<32x16xi32> to vector<32x16xf32>
    %cst = arith.constant 5.000000e-01 : f32
    %5 = vector.broadcast %cst : f32 to vector<32x16xf32>
    %6 = arith.addf %2, %5 : vector<32x16xf32>
    %cst_2 = arith.constant 5.000000e-01 : f32
    %7 = vector.broadcast %cst_2 : f32 to vector<32x16xf32>
    %8 = arith.mulf %6, %7 : vector<32x16xf32>
    %cst_3 = arith.constant 5.000000e-01 : f32
    %9 = vector.broadcast %cst_3 : f32 to vector<32x16xf32>
    %10 = arith.subf %8, %9 : vector<32x16xf32>
    %cst_4 = arith.constant 0.000000e+00 : f32
    %11 = vector.broadcast %cst_4 : f32 to vector<32x16xf32>
    %12 = arith.maximumf %10, %11 : vector<32x16xf32>
    %13 = math.floor %12 : vector<32x16xf32>
    %14 = arith.subf %12, %13 : vector<32x16xf32>
    %cst_5 = arith.constant 1.000000e+00 : f32
    %15 = vector.broadcast %cst_5 : f32 to vector<32x16xf32>
    %16 = arith.addf %13, %15 : vector<32x16xf32>
    %cst_6 = arith.constant 1.500000e+01 : f32
    %17 = vector.broadcast %cst_6 : f32 to vector<32x16xf32>
    %18 = arith.minimumf %16, %17 : vector<32x16xf32>
    %19 = arith.cmpf oeq, %4, %13 : vector<32x16xf32>
    %cst_7 = arith.constant 1.000000e+00 : f32
    %20 = vector.broadcast %cst_7 : f32 to vector<32x16xf32>
    %21 = arith.subf %20, %14 : vector<32x16xf32>
    %cst_8 = arith.constant 0.000000e+00 : f32
    %22 = vector.broadcast %cst_8 : f32 to vector<32x16xf32>
    %23 = arith.select %19, %21, %22 : vector<32x16xi1>, vector<32x16xf32>
    %24 = arith.cmpf oeq, %4, %18 : vector<32x16xf32>
    %cst_9 = arith.constant 0.000000e+00 : f32
    %25 = vector.broadcast %cst_9 : f32 to vector<32x16xf32>
    %26 = arith.select %24, %14, %25 : vector<32x16xi1>, vector<32x16xf32>
    %27 = arith.addf %23, %26 : vector<32x16xf32>
    %28 = tpu.iota {dimensions = array<i32: 1>} : vector<16x32xi32>
    %29 = arith.sitofp %28 : vector<16x32xi32> to vector<16x32xf32>
    %30 = tpu.iota {dimensions = array<i32: 0>} : vector<16x32xi32>
    %31 = arith.sitofp %30 : vector<16x32xi32> to vector<16x32xf32>
    %cst_10 = arith.constant 5.000000e-01 : f32
    %32 = vector.broadcast %cst_10 : f32 to vector<16x32xf32>
    %33 = arith.addf %29, %32 : vector<16x32xf32>
    %cst_11 = arith.constant 5.000000e-01 : f32
    %34 = vector.broadcast %cst_11 : f32 to vector<16x32xf32>
    %35 = arith.mulf %33, %34 : vector<16x32xf32>
    %cst_12 = arith.constant 5.000000e-01 : f32
    %36 = vector.broadcast %cst_12 : f32 to vector<16x32xf32>
    %37 = arith.subf %35, %36 : vector<16x32xf32>
    %cst_13 = arith.constant 0.000000e+00 : f32
    %38 = vector.broadcast %cst_13 : f32 to vector<16x32xf32>
    %39 = arith.maximumf %37, %38 : vector<16x32xf32>
    %40 = math.floor %39 : vector<16x32xf32>
    %41 = arith.subf %39, %40 : vector<16x32xf32>
    %cst_14 = arith.constant 1.000000e+00 : f32
    %42 = vector.broadcast %cst_14 : f32 to vector<16x32xf32>
    %43 = arith.addf %40, %42 : vector<16x32xf32>
    %cst_15 = arith.constant 1.500000e+01 : f32
    %44 = vector.broadcast %cst_15 : f32 to vector<16x32xf32>
    %45 = arith.minimumf %43, %44 : vector<16x32xf32>
    %46 = arith.cmpf oeq, %31, %40 : vector<16x32xf32>
    %cst_16 = arith.constant 1.000000e+00 : f32
    %47 = vector.broadcast %cst_16 : f32 to vector<16x32xf32>
    %48 = arith.subf %47, %41 : vector<16x32xf32>
    %cst_17 = arith.constant 0.000000e+00 : f32
    %49 = vector.broadcast %cst_17 : f32 to vector<16x32xf32>
    %50 = arith.select %46, %48, %49 : vector<16x32xi1>, vector<16x32xf32>
    %51 = arith.cmpf oeq, %31, %45 : vector<16x32xf32>
    %cst_18 = arith.constant 0.000000e+00 : f32
    %52 = vector.broadcast %cst_18 : f32 to vector<16x32xf32>
    %53 = arith.select %51, %41, %52 : vector<16x32xi1>, vector<16x32xf32>
    %54 = arith.addf %50, %53 : vector<16x32xf32>
    %55 = vector.shape_cast %54 : vector<16x32xf32> to vector<1x16x32xf32>
    %56 = vector.shape_cast %55 : vector<1x16x32xf32> to vector<1x16x32xf32>
    %57 = vector.broadcast %56 : vector<1x16x32xf32> to vector<8x16x32xf32>
    "tpu.trace_start"() <{level = 10 : i32, message = "bhw,bwv->bhv"}> : () -> ()
    %cst_19 = arith.constant dense<0.000000e+00> : vector<8x16x32xf32>
    %58 = tpu.matmul %0, %57, %cst_19 {dimension_numbers = #tpu.dot_dimension_numbers<[2], [1], [1], [2], [0, 0, 0, 1, 1, 2], [0], [0]>, precision = #tpu.contract_precision<fp32>} : vector<8x16x16xf32>, vector<8x16x32xf32>, vector<8x16x32xf32> -> vector<8x16x32xf32>
    "tpu.trace_stop"() : () -> ()
    %59 = vector.shape_cast %27 : vector<32x16xf32> to vector<1x32x16xf32>
    %60 = vector.shape_cast %59 : vector<1x32x16xf32> to vector<1x32x16xf32>
    %61 = vector.broadcast %60 : vector<1x32x16xf32> to vector<8x32x16xf32>
    "tpu.trace_start"() <{level = 10 : i32, message = "boh,bhv->bov"}> : () -> ()
    %cst_20 = arith.constant dense<0.000000e+00> : vector<8x32x32xf32>
    %62 = tpu.matmul %61, %58, %cst_20 {dimension_numbers = #tpu.dot_dimension_numbers<[2], [1], [1], [2], [0, 0, 0, 1, 1, 2], [0], [0]>, precision = #tpu.contract_precision<fp32>} : vector<8x32x16xf32>, vector<8x16x32xf32>, vector<8x32x32xf32> -> vector<8x32x32xf32>
    "tpu.trace_stop"() : () -> ()
    %c0_21 = arith.constant 0 : index
    %c0_22 = arith.constant 0 : index
    %c0_23 = arith.constant 0 : index
    %63 = vector.load %arg2[%c0_21, %c0_22, %c0_23] : memref<8x32x32xf32, #tpu.memory_space<vmem>>, vector<8x32x32xf32>
    tpu.vector_store %arg2[%c0_21, %c0_22, %c0_23], %62 {strides = array<i32>} : memref<8x32x32xf32, #tpu.memory_space<vmem>>, vector<8x32x32xf32>,
    return
  }
  func.func @transform_0(%arg0: i32) -> (i32, i32, i32) {
    %c0_i32 = arith.constant 0 : i32
    %c0_i32_0 = arith.constant 0 : i32
    %c0_i32_1 = arith.constant 0 : i32
    return %arg0, %c0_i32, %c0_i32_0 : i32, i32, i32
  }
  func.func @transform_1(%arg0: i32) -> (i32, i32, i32) {
    %c0_i32 = arith.constant 0 : i32
    %c0_i32_0 = arith.constant 0 : i32
    %c0_i32_1 = arith.constant 0 : i32
    return %arg0, %c0_i32, %c0_i32_0 : i32, i32, i32
  }
}

</mosaic_0001>

<llo_original>
// kernel: tpu_custom_call.1
$region0: #{tpu_custom_call.1}
  #allocation0 [shape = 'u32[]', space=smem, size = 0x4, offset = 0x4, fixed_abs, tag = 'smem constant byte address 0x4 - core index']
  #allocation1 [shape = 'u32[144,128]{1,0:T(1,128)}', space=vmem, size = 0x12000, scoped, tag = 'internal scratch']
  %s0 = inlined_call_operand.hbm [shape: f32[8,16,16], index: 0, kind: input, shape index: {}]
  %s1 = inlined_call_operand.hbm [shape: f32[8,32,32], index: 1, kind: output, shape index: {}]
  %s2 = sld [smem:[#allocation0]]
  $region18: #{tpu_custom_call.1} parent=0
    _
  %s4 = ssub.s32 1, %s2
  %s5 = scalar_select 0, %s4, %s2
  $region1: #{tpu_custom_call.1} parent=0
    #allocation2 [shape = 'u8[65536]{0}', space=vmem, size = 0x10000, scoped, tag = 'input window, operand 0, single buffered']
    #allocation3 [shape = 's32[1]{0}', space=sflag, size = 0x4, scoped, tag = 'scoped memory for tpu_custom_call.1']
    #allocation4 [shape = 's32[1]{0}', space=sflag, size = 0x4, scoped, tag = 'scoped memory for tpu_custom_call.1']
    #allocation5 [shape = 'u8[131072]{0}', space=vmem, size = 0x20000, scoped, tag = 'output window, operand 0, single buffered']
    %6 = vsyncpa [#allocation3], 0
    %7 = vsyncpa [#allocation4], 0
    // Predicated region
    $region2: #{tpu_custom_call.1} parent=1 // pred_check
      _
    $region3: #{tpu_custom_call.1} parent=1 // pred_check_branch
      %9 = sbr.rel (0) target = $region5
    $region4: #{tpu_custom_call.1} parent=1 // pred_region
      %s11 = ssub.s32 2048, 2048
      %12 = vsyncadd [#allocation3], %s11
      %s13 = sshll.u32 [#allocation2], 4
      %s14 = int_to_ptr.vmem [resolvable:$true] %s13
      %19 = dma.hbm_to_vmem [thread:$0]  %s0, 2048, %s14, [#allocation3], 128, 128, 8
    $region5: #{tpu_custom_call.1} parent=1 // pred_fallthru
      _
    // Predicated region
    $region6: #{tpu_custom_call.1} parent=1 // pred_check
      _
    $region7: #{tpu_custom_call.1} parent=1 // pred_check_branch
      %21 = sbr.rel (0) target = $region9
    $region8: #{tpu_custom_call.1} parent=1 // pred_region
      %22 = dma.done [#allocation3], 2048
    $region9: #{tpu_custom_call.1} parent=1 // pred_fallthru
      _
    %v23 = vld [vmem:[#allocation2] sm:$0xff]
    %v24 = vld [vmem:[#allocation2 + $0x8] sm:$0xff]
    %v25 = vld [vmem:[#allocation2 + $0x10] sm:$0xff]
    %v26 = vld [vmem:[#allocation2 + $0x18] sm:$0xff]
    %v27 = vld [vmem:[#allocation2 + $0x20] sm:$0xff]
    %v28 = vld [vmem:[#allocation2 + $0x28] sm:$0xff]
    %v29 = vld [vmem:[#allocation2 + $0x30] sm:$0xff]
    %v30 = vld [vmem:[#allocation2 + $0x38] sm:$0xff]
    %v31 = vld [vmem:[#allocation2 + $0x40] sm:$0xff]
    %v32 = vld [vmem:[#allocation2 + $0x48] sm:$0xff]
    %v33 = vld [vmem:[#allocation2 + $0x50] sm:$0xff]
    %v34 = vld [vmem:[#allocation2 + $0x58] sm:$0xff]
    %v35 = vld [vmem:[#allocation2 + $0x60] sm:$0xff]
    %v36 = vld [vmem:[#allocation2 + $0x68] sm:$0xff]
    %v37 = vld [vmem:[#allocation2 + $0x70] sm:$0xff]
    %v38 = vld [vmem:[#allocation2 + $0x78] sm:$0xff]
    %v39 = vlaneseq
    %v40 = vshrl.u32 %v39, 7
    %v41 = vadd.s32 %v40, 8
    %v42 = vadd.s32 %v40, 16
    %v43 = vadd.s32 %v40, 24
    %v44 = vcvt.s32.f32 %v40
    %v45 = vcvt.s32.f32 %v41
    %v46 = vcvt.s32.f32 %v42
    %v47 = vcvt.s32.f32 %v43
    %v48 = vlaneseq
    %v49 = vand.u32 %v48, 127
    %v50 = vcvt.s32.f32 %v49
    %v51 = vadd.f32 %v44, 0.5
    %v52 = vadd.f32 %v45, 0.5
    %v53 = vadd.f32 %v46, 0.5
    %v54 = vadd.f32 %v47, 0.5
    %v55 = vmul.f32 %v51, 0.5
    %v56 = vmul.f32 %v52, 0.5
    %v57 = vmul.f32 %v53, 0.5
    %v58 = vmul.f32 %v54, 0.5
    %v59 = vsub.f32 %v55, 0.5
    %v60 = vsub.f32 %v56, 0.5
    %v61 = vsub.f32 %v57, 0.5
    %v62 = vsub.f32 %v58, 0.5
    %v63 = vmax.f32 %v59, 0.0
    %v64 = vmax.f32 %v60, 0.0
    %v65 = vmax.f32 %v61, 0.0
    %v66 = vmax.f32 %v62, 0.0
    %v67 = vfloor.f32 %v63
    %v68 = vfloor.f32 %v64
    %v69 = vfloor.f32 %v65
    %v70 = vfloor.f32 %v66
    %v71 = vsub.f32 %v63, %v67
    %v72 = vsub.f32 %v64, %v68
    %v73 = vsub.f32 %v65, %v69
    %v74 = vsub.f32 %v66, %v70
    %v75 = vadd.f32 %v67, 1.0
    %v76 = vadd.f32 %v68, 1.0
    %v77 = vadd.f32 %v69, 1.0
    %v78 = vadd.f32 %v70, 1.0
    %v79 = vmin.f32 %v75, 15.0
    %v80 = vmin.f32 %v76, 15.0
    %v81 = vmin.f32 %v77, 15.0
    %v82 = vmin.f32 %v78, 15.0
    %vm83 = vcmp.eq.f32.partialorder %v50, %v67
    %vm84 = vcmp.eq.f32.partialorder %v50, %v68
    %vm85 = vcmp.eq.f32.partialorder %v50, %v69
    %vm86 = vcmp.eq.f32.partialorder %v50, %v70
    %v87 = vsub.f32 1.0, %v71
    %v88 = vsub.f32 1.0, %v72
    %v89 = vsub.f32 1.0, %v73
    %v90 = vsub.f32 1.0, %v74
    %v91 = vsel %vm83, %v87, 0.0
    %v92 = vsel %vm84, %v88, 0.0
    %v93 = vsel %vm85, %v89, 0.0
    %v94 = vsel %vm86, %v90, 0.0
    %vm95 = vcmp.eq.f32.partialorder %v50, %v79
    %vm96 = vcmp.eq.f32.partialorder %v50, %v80
    %vm97 = vcmp.eq.f32.partialorder %v50, %v81
    %vm98 = vcmp.eq.f32.partialorder %v50, %v82
    %v99 = vsel %vm95, %v71, 0.0
    %v100 = vsel %vm96, %v72, 0.0
    %v101 = vsel %vm97, %v73, 0.0
    %v102 = vsel %vm98, %v74, 0.0
    %v103 = vadd.f32 %v91, %v99
    %v104 = vadd.f32 %v92, %v100
    %v105 = vadd.f32 %v93, %v101
    %v106 = vadd.f32 %v94, %v102
    %v107 = vadd.f32 %v50, 0.5
    %v108 = vmul.f32 %v107, 0.5
    %v109 = vsub.f32 %v108, 0.5
    %v110 = vmax.f32 %v109, 0.0
    %v111 = vfloor.f32 %v110
    %v112 = vsub.f32 %v110, %v111
    %v113 = vadd.f32 %v111, 1.0
    %v114 = vmin.f32 %v113, 15.0
    %vm115 = vcmp.eq.f32.partialorder %v44, %v111
    %vm116 = vcmp.eq.f32.partialorder %v45, %v111
    %v117 = vsub.f32 1.0, %v112
    %v118 = vsel %vm115, %v117, 0.0
    %v119 = vsel %vm116, %v117, 0.0
    %vm120 = vcmp.eq.f32.partialorder %v44, %v114
    %vm121 = vcmp.eq.f32.partialorder %v45, %v114
    %v122 = vsel %vm120, %v112, 0.0
    %v123 = vsel %vm121, %v112, 0.0
    %v124 = vadd.f32 %v118, %v122
    %v125 = vadd.f32 %v119, %v123
    %vm126 = vcmask 130048
    %v128 = vsel %vm126, %v23, 0
    %v131 = vsel %vm126, %v24, 0
    %133 = vmatprep.subr.mxu0 0.0
    %v134 = vand.u32 %v124, 4294901760
    %135 = vmatpush1.msra.mxu0 %v134
    %136 = vmatprep.subr.mxu0 0.0
    %v137 = vand.u32 %v125, 4294901760
    %138 = vmatpush1.msra.mxu0 %v137
    %139 = vmatprep.subr.mxu0 0.0
    %140 = vmatpush1.msra.mxu0 0.0
    %141 = vmatprep.subr.mxu0 0.0
    %142 = vmatpush1.msra.mxu0 0.0
    %143 = vmatprep.subr.mxu0 0.0
    %144 = vmatpush1.msra.mxu0 0.0
    %145 = vmatprep.subr.mxu0 0.0
    %146 = vmatpush1.msra.mxu0 0.0
    %147 = vmatprep.subr.mxu0 0.0
    %148 = vmatpush1.msra.mxu0 0.0
    %149 = vmatprep.subr.mxu0 0.0
    %150 = vmatpush1.msra.mxu0 0.0
    %151 = vmatprep.subr.mxu0 0.0
    %152 = vmatpush1.msra.mxu0 0.0
    %153 = vmatprep.subr.mxu0 0.0
    %154 = vmatpush1.msra.mxu0 0.0
    %155 = vmatprep.subr.mxu0 0.0
    %156 = vmatpush1.msra.mxu0 0.0
    %157 = vmatprep.subr.mxu0 0.0
    %158 = vmatpush1.msra.mxu0 0.0
    %159 = vmatprep.subr.mxu0 0.0
    %160 = vmatpush1.msra.mxu0 0.0
    %161 = vmatprep.subr.mxu0 0.0
    %162 = vmatpush1.msra.mxu0 0.0
    %163 = vmatprep.subr.mxu0 0.0
    %164 = vmatpush1.msra.mxu0 0.0
    %165 = vmatprep.subr.mxu0 0.0
    %166 = vmatpush1.msra.mxu0 0.0
    %167 = vmatprep.subr.mxu0 0.0
    %168 = vmatpush1.msra.mxu0 0.0
    %169 = vmatprep.subr.mxu0 0.0
    %170 = vmatpush1.msra.mxu0 0.0
    %171 = vmatprep.subr.mxu0 0.0
    %172 = vmatpush1.msra.mxu0 0.0
    %173 = vmatprep.subr.mxu0 0.0
    %174 = vmatpush1.msra.mxu0 0.0
    %175 = vmatprep.subr.mxu0 0.0
    %176 = vmatpush1.msra.mxu0 0.0
    %177 = vmatprep.subr.mxu0 0.0
    %178 = vmatpush1.msra.mxu0 0.0
    %179 = vmatprep.subr.mxu0 0.0
    %180 = vmatpush1.msra.mxu0 0.0
    %181 = vmatprep.subr.mxu0 0.0
    %182 = vmatpush1.msra.mxu0 0.0
    %183 = vmatprep.subr.mxu0 0.0
    %184 = vmatpush1.msra.mxu0 0.0
    %185 = vmatprep.subr.mxu0 0.0
    %186 = vmatpush1.msra.mxu0 0.0
    %187 = vmatprep.subr.mxu0 0.0
    %188 = vmatpush1.msra.mxu0 0.0
    %189 = vmatprep.subr.mxu0 0.0
    %190 = vmatpush1.msra.mxu0 0.0
    %191 = vmatprep.subr.mxu0 0.0
    %192 = vmatpush1.msra.mxu0 0.0
    %193 = vmatprep.subr.mxu0 0.0
    %194 = vmatpush1.msra.mxu0 0.0
    %195 = vmatprep.subr.mxu0 0.0
    %196 = vmatpush1.msra.mxu0 0.0
    %197 = vmatprep.subr.mxu0 0.0
    %198 = vmatpush1.msra.mxu0 0.0
    %199 = vmatprep.mubr.f32.mxu0 0.0
    %v200 = vand.u32 %v128, 4294901760
    %v201 = vsub.f32 %v128, %v200
    %v202 = vand.u32 %v201, 4294901760
    %v203 = vsub.f32 %v201, %v202
    %v204 = vand.u32 %v203, 4294901760
    %205 = vmatmul.mubr.f32.gmra.mrb[0].mxu0 %v204
    %v206 = vpop.f32.mrb[0].mxu0
    %v207 = vadd.f32 0.0, %v206
    %v208 = vpop.f32.mrb[0].mxu0
    %209 = vmatprep.mubr.f32.mxu0 0.0
    %v210 = vand.u32 %v131, 4294901760
    %v211 = vsub.f32 %v131, %v210
    %v212 = vand.u32 %v211, 4294901760
    %v213 = vsub.f32 %v211, %v212
    %v214 = vand.u32 %v213, 4294901760
    %215 = vmatmul.mubr.f32.gmra.mrb[0].mxu0 %v214
    %v216 = vpop.f32.mrb[0].mxu0
    %v217 = vadd.f32 0.0, %v216
    %v218 = vpop.f32.mrb[0].mxu0
    %219 = vdwg.mxu0
    %220 = vmatprep.subr.mxu0 0.0
    %v221 = vand.u32 %v124, 4294901760
    %v222 = vsub.f32 %v124, %v221
    %v223 = vand.u32 %v222, 4294901760
    %v224 = vsub.f32 %v222, %v223
    %v225 = vand.u32 %v224, 4294901760
    %226 = vmatpush1.msra.mxu0 %v225
    %227 = vmatprep.subr.mxu0 0.0
    %v228 = vand.u32 %v125, 4294901760
    %v229 = vsub.f32 %v125, %v228
    %v230 = vand.u32 %v229, 4294901760
    %v231 = vsub.f32 %v229, %v230
    %v232 = vand.u32 %v231, 4294901760
    %233 = vmatpush1.msra.mxu0 %v232
    %234 = vmatprep.subr.mxu0 0.0
    %235 = vmatpush1.msra.mxu0 0.0
    %236 = vmatprep.subr.mxu0 0.0
    %237 = vmatpush1.msra.mxu0 0.0
    %238 = vmatprep.subr.mxu0 0.0
    %239 = vmatpush1.msra.mxu0 0.0
    %240 = vmatprep.subr.mxu0 0.0
    %241 = vmatpush1.msra.mxu0 0.0
    %242 = vmatprep.subr.mxu0 0.0
    %243 = vmatpush1.msra.mxu0 0.0
    %244 = vmatprep.subr.mxu0 0.0
    %245 = vmatpush1.msra.mxu0 0.0
    %246 = vmatprep.subr.mxu0 0.0
    %247 = vmatpush1.msra.mxu0 0.0
    %248 = vmatprep.subr.mxu0 0.0
    %249 = vmatpush1.msra.mxu0 0.0
    %250 = vmatprep.subr.mxu0 0.0
    %251 = vmatpush1.msra.mxu0 0.0
    %252 = vmatprep.subr.mxu0 0.0
    %253 = vmatpush1.msra.mxu0 0.0
    %254 = vmatprep.subr.mxu0 0.0
    %255 = vmatpush1.msra.mxu0 0.0
    %256 = vmatprep.subr.mxu0 0.0
    %257 = vmatpush1.msra.mxu0 0.0
    %258 = vmatprep.subr.mxu0 0.0
    %259 = vmatpush1.msra.mxu0 0.0
    %260 = vmatprep.subr.mxu0 0.0
    %261 = vmatpush1.msra.mxu0 0.0
    %262 = vmatprep.subr.mxu0 0.0
    %263 = vmatpush1.msra.mxu0 0.0
    %264 = vmatprep.subr.mxu0 0.0
    %265 = vmatpush1.msra.mxu0 0.0
    %266 = vmatprep.subr.mxu0 0.0
    %267 = vmatpush1.msra.mxu0 0.0
    %268 = vmatprep.subr.mxu0 0.0
    %269 = vmatpush1.msra.mxu0 0.0
    %270 = vmatprep.subr.mxu0 0.0
    %271 = vmatpush1.msra.mxu0 0.0
    %272 = vmatprep.subr.mxu0 0.0
    %273 = vmatpush1.msra.mxu0 0.0
    %274 = vmatprep.subr.mxu0 0.0
    %275 = vmatpush1.msra.mxu0 0.0
    %276 = vmatprep.subr.mxu0 0.0
    %277 = vmatpush1.msra.mxu0 0.0
    %278 = vmatprep.subr.mxu0 0.0
    %279 = vmatpush1.msra.mxu0 0.0
    %280 = vmatprep.subr.mxu0 0.0
    %281 = vmatpush1.msra.mxu0 0.0
    %282 = vmatprep.subr.mxu0 0.0
    %283 = vmatpush1.msra.mxu0 0.0
    %284 = vmatprep.subr.mxu0 0.0
    %285 = vmatpush1.msra.mxu0 0.0
    %286 = vmatprep.subr.mxu0 0.0
    %287 = vmatpush1.msra.mxu0 0.0
    %288 = vmatprep.subr.mxu0 0.0
    %289 = vmatpush1.msra.mxu0 0.0
    %290 = vmatprep.subr.mxu0 0.0
    %291 = vmatpush1.msra.mxu0 0.0
    %292 = vmatprep.subr.mxu0 0.0
    %293 = vmatpush1.msra.mxu0 0.0
    %294 = vmatprep.mubr.f32.mxu0 0.0
    %v295 = vand.u32 %v128, 4294901760
    %296 = vmatmul.mubr.f32.gmra.mrb[0].mxu0 %v295
    %v297 = vpop.f32.mrb[0].mxu0
    %v298 = vadd.f32 %v207, %v297
    %v299 = vpop.f32.mrb[0].mxu0
    %300 = vmatprep.mubr.f32.mxu0 0.0
    %v301 = vand.u32 %v131, 4294901760
    %302 = vmatmul.mubr.f32.gmra.mrb[0].mxu0 %v301
    %v303 = vpop.f32.mrb[0].mxu0
    %v304 = vadd.f32 %v217, %v303
    %v305 = vpop.f32.mrb[0].mxu0
    %306 = vdwg.mxu0
    %307 = vmatprep.subr.mxu0 0.0
    %v308 = vand.u32 %v124, 4294901760
    %v309 = vsub.f32 %v124, %v308
    %310 = vmatpush1.msra.mxu0 %v309
    %311 = vmatprep.subr.mxu0 0.0
    %v312 = vand.u32 %v125, 4294901760
    %v313 = vsub.f32 %v125, %v312
    %314 = vmatpush1.msra.mxu0 %v313
    %315 = vmatprep.subr.mxu0 0.0
    %316 = vmatpush1.msra.mxu0 0.0
    %317 = vmatprep.subr.mxu0 0.0
    %318 = vmatpush1.msra.mxu0 0.0
    %319 = vmatprep.subr.mxu0 0.0
    %320 = vmatpush1.msra.mxu0 0.0
    %321 = vmatprep.subr.mxu0 0.0
    %322 = vmatpush1.msra.mxu0 0.0
    %323 = vmatprep.subr.mxu0 0.0
    %324 = vmatpush1.msra.mxu0 0.0
    %325 = vmatprep.subr.mxu0 0.0
    %326 = vmatpush1.msra.mxu0 0.0
    %327 = vmatprep.subr.mxu0 0.0
    %328 = vmatpush1.msra.mxu0 0.0
    %329 = vmatprep.subr.mxu0 0.0
    %330 = vmatpush1.msra.mxu0 0.0
    %331 = vmatprep.subr.mxu0 0.0
    %332 = vmatpush1.msra.mxu0 0.0
    %333 = vmatprep.subr.mxu0 0.0
    %334 = vmatpush1.msra.mxu0 0.0
    %335 = vmatprep.subr.mxu0 0.0
    %336 = vmatpush1.msra.mxu0 0.0
    %337 = vmatprep.subr.mxu0 0.0
    %338 = vmatpush1.msra.mxu0 0.0
    %339 = vmatprep.subr.mxu0 0.0
    %340 = vmatpush1.msra.mxu0 0.0
    %341 = vmatprep.subr.mxu0 0.0
    %342 = vmatpush1.msra.mxu0 0.0
    %343 = vmatprep.subr.mxu0 0.0
    %344 = vmatpush1.msra.mxu0 0.0
    %345 = vmatprep.subr.mxu0 0.0
    %346 = vmatpush1.msra.mxu0 0.0
    %347 = vmatprep.subr.mxu0 0.0
    %348 = vmatpush1.msra.mxu0 0.0
    %349 = vmatprep.subr.mxu0 0.0
    %350 = vmatpush1.msra.mxu0 0.0
    %351 = vmatprep.subr.mxu0 0.0
    %352 = vmatpush1.msra.mxu0 0.0
    %353 = vmatprep.subr.mxu0 0.0
    %354 = vmatpush1.msra.mxu0 0.0
    %355 = vmatprep.subr.mxu0 0.0
    %356 = vmatpush1.msra.mxu0 0.0
    %357 = vmatprep.subr.mxu0 0.0
    %358 = vmatpush1.msra.mxu0 0.0
    %359 = vmatprep.subr.mxu0 0.0
    %360 = vmatpush1.msra.mxu0 0.0
    %361 = vmatprep.subr.mxu0 0.0
    %362 = vmatpush1.msra.mxu0 0.0
    %363 = vmatprep.subr.mxu0 0.0
    %364 = vmatpush1.msra.mxu0 0.0
    %365 = vmatprep.subr.mxu0 0.0
    %366 = vmatpush1.msra.mxu0 0.0
    %367 = vmatprep.subr.mxu0 0.0
    %368 = vmatpush1.msra.mxu0 0.0
    %369 = vmatprep.subr.mxu0 0.0
    %370 = vmatpush1.msra.mxu0 0.0
    %371 = vmatprep.subr.mxu0 0.0
    %372 = vmatpush1.msra.mxu0 0.0
    %373 = vmatprep.subr.mxu0 0.0
    %374 = vmatpush1.msra.mxu0 0.0
    %375 = vmatprep.mubr.f32.mxu0 0.0
    %v376 = vand.u32 %v128, 4294901760
    %v377 = vsub.f32 %v128, %v376
    %378 = vmatmul.mubr.f32.gmra.mrb[0].mxu0 %v377
    %v379 = vpop.f32.mrb[0].mxu0
    %v380 = vadd.f32 %v298, %v379
    %v381 = vpop.f32.mrb[0].mxu0
    %382 = vmatprep.mubr.f32.mxu0 0.0
    %v383 = vand.u32 %v131, 4294901760
    %v384 = vsub.f32 %v131, %v383
    %385 = vmatmul.mubr.f32.gmra.mrb[0].mxu0 %v384
    %v386 = vpop.f32.mrb[0].mxu0
    %v387 = vadd.f32 %v304, %v386
    %v388 = vpop.f32.mrb[0].mxu0
    %389 = vdwg.mxu0
    %390 = vmatprep.subr.mxu0 0.0
    %v391 = vand.u32 %v124, 4294901760
    %392 = vmatpush1.msra.mxu0 %v391
    %393 = vmatprep.subr.mxu0 0.0
    %v394 = vand.u32 %v125, 4294901760
    %395 = vmatpush1.msra.mxu0 %v394
    %396 = vmatprep.subr.mxu0 0.0
    %397 = vmatpush1.msra.mxu0 0.0
    %398 = vmatprep.subr.mxu0 0.0
    %399 = vmatpush1.msra.mxu0 0.0
    %400 = vmatprep.subr.mxu0 0.0
    %401 = vmatpush1.msra.mxu0 0.0
    %402 = vmatprep.subr.mxu0 0.0
    %403 = vmatpush1.msra.mxu0 0.0
    %404 = vmatprep.subr.mxu0 0.0
    %405 = vmatpush1.msra.mxu0 0.0
    %406 = vmatprep.subr.mxu0 0.0
    %407 = vmatpush1.msra.mxu0 0.0
    %408 = vmatprep.subr.mxu0 0.0
    %409 = vmatpush1.msra.mxu0 0.0
    %410 = vmatprep.subr.mxu0 0.0
    %411 = vmatpush1.msra.mxu0 0.0
    %412 = vmatprep.subr.mxu0 0.0
    %413 = vmatpush1.msra.mxu0 0.0
    %414 = vmatprep.subr.mxu0 0.0
    %415 = vmatpush1.msra.mxu0 0.0
    %416 = vmatprep.subr.mxu0 0.0
    %417 = vmatpush1.msra.mxu0 0.0
    %418 = vmatprep.subr.mxu0 0.0
    %419 = vmatpush1.msra.mxu0 0.0
    %420 = vmatprep.subr.mxu0 0.0
    %421 = vmatpush1.msra.mxu0 0.0
    %422 = vmatprep.subr.mxu0 0.0
    %423 = vmatpush1.msra.mxu0 0.0
    %424 = vmatprep.subr.mxu0 0.0
    %425 = vmatpush1.msra.mxu0 0.0
    %426 = vmatprep.subr.mxu0 0.0
    %427 = vmatpush1.msra.mxu0 0.0
    %428 = vmatprep.subr.mxu0 0.0
    %429 = vmatpush1.msra.mxu0 0.0
    %430 = vmatprep.subr.mxu0 0.0
    %431 = vmatpush1.msra.mxu0 0.0
    %432 = vmatprep.subr.mxu0 0.0
    %433 = vmatpush1.msra.mxu0 0.0
    %434 = vmatprep.subr.mxu0 0.0
    %435 = vmatpush1.msra.mxu0 0.0
    %436 = vmatprep.subr.mxu0 0.0
    %437 = vmatpush1.msra.mxu0 0.0
    %438 = vmatprep.subr.mxu0 0.0
    %439 = vmatpush1.msra.mxu0 0.0
    %440 = vmatprep.subr.mxu0 0.0
    %441 = vmatpush1.msra.mxu0 0.0
    %442 = vmatprep.subr.mxu0 0.0
    %443 = vmatpush1.msra.mxu0 0.0
    %444 = vmatprep.subr.mxu0 0.0
    %445 = vmatpush1.msra.mxu0 0.0
    %446 = vmatprep.subr.mxu0 0.0
    %447 = vmatpush1.msra.mxu0 0.0
    %448 = vmatprep.subr.mxu0 0.0
    %449 = vmatpush1.msra.mxu0 0.0
    %450 = vmatprep.subr.mxu0 0.0
    %451 = vmatpush1.msra.mxu0 0.0
    %452 = vmatprep.subr.mxu0 0.0
    %453 = vmatpush1.msra.mxu0 0.0
    %454 = vmatprep.subr.mxu0 0.0
    %455 = vmatpush1.msra.mxu0 0.0
    %456 = vmatprep.mubr.f32.mxu0 0.0
    %v457 = vand.u32 %v128, 4294901760
    %v458 = vsub.f32 %v128, %v457
    %v459 = vand.u32 %v458, 4294901760
    %460 = vmatmul.mubr.f32.gmra.mrb[0].mxu0 %v459
    %v461 = vpop.f32.mrb[0].mxu0
    %v462 = vadd.f32 %v380, %v461
    %v463 = vpop.f32.mrb[0].mxu0
    %464 = vmatprep.mubr.f32.mxu0 0.0
    %v465 = vand.u32 %v131, 4294901760
    %v466 = vsub.f32 %v131, %v465
    %v467 = vand.u32 %v466, 4294901760
    %468 = vmatmul.mubr.f32.gmra.mrb[0].mxu0 %v467
    %v469 = vpop.f32.mrb[0].mxu0
    %v470 = vadd.f32 %v387, %v469
    %v471 = vpop.f32.mrb[0].mxu0
    %472 = vdwg.mxu0
    %473 = vmatprep.subr.mxu0 0.0
    %v474 = vand.u32 %v124, 4294901760
    %v475 = vsub.f32 %v124, %v474
    %v476 = vand.u32 %v475, 4294901760
    %477 = vmatpush1.msra.mxu0 %v476
    %478 = vmatprep.subr.mxu0 0.0
    %v479 = vand.u32 %v125, 4294901760
    %v480 = vsub.f32 %v125, %v479
    %v481 = vand.u32 %v480, 4294901760
    %482 = vmatpush1.msra.mxu0 %v481
    %483 = vmatprep.subr.mxu0 0.0
    %484 = vmatpush1.msra.mxu0 0.0
    %485 = vmatprep.subr.mxu0 0.0
    %486 = vmatpush1.msra.mxu0 0.0
    %487 = vmatprep.subr.mxu0 0.0
    %488 = vmatpush1.msra.mxu0 0.0
    %489 = vmatprep.subr.mxu0 0.0
    %490 = vmatpush1.msra.mxu0 0.0
    %491 = vmatprep.subr.mxu0 0.0
    %492 = vmatpush1.msra.mxu0 0.0
    %493 = vmatprep.subr.mxu0 0.0
    %494 = vmatpush1.msra.mxu0 0.0
    %495 = vmatprep.subr.mxu0 0.0
    %496 = vmatpush1.msra.mxu0 0.0
    %497 = vmatprep.subr.mxu0 0.0
    %498 = vmatpush1.msra.mxu0 0.0
    %499 = vmatprep.subr.mxu0 0.0
    %500 = vmatpush1.msra.mxu0 0.0
    %501 = vmatprep.subr.mxu0 0.0
    %502 = vmatpush1.msra.mxu0 0.0
    %503 = vmatprep.subr.mxu0 0.0
    %504 = vmatpush1.msra.mxu0 0.0
    %505 = vmatprep.subr.mxu0 0.0
    %506 = vmatpush1.msra.mxu0 0.0
    %507 = vmatprep.subr.mxu0 0.0
    %508 = vmatpush1.msra.mxu0 0.0
    %509 = vmatprep.subr.mxu0 0.0
    %510 = vmatpush1.msra.mxu0 0.0
    %511 = vmatprep.subr.mxu0 0.0
    %512 = vmatpush1.msra.mxu0 0.0
    %513 = vmatprep.subr.mxu0 0.0
    %514 = vmatpush1.msra.mxu0 0.0
    %515 = vmatprep.subr.mxu0 0.0
    %516 = vmatpush1.msra.mxu0 0.0
    %517 = vmatprep.subr.mxu0 0.0
    %518 = vmatpush1.msra.mxu0 0.0
    %519 = vmatprep.subr.mxu0 0.0
    %520 = vmatpush1.msra.mxu0 0.0
    %521 = vmatprep.subr.mxu0 0.0
    %522 = vmatpush1.msra.mxu0 0.0
    %523 = vmatprep.subr.mxu0 0.0
    %524 = vmatpush1.msra.mxu0 0.0
    %525 = vmatprep.subr.mxu0 0.0
    %526 = vmatpush1.msra.mxu0 0.0
    %527 = vmatprep.subr.mxu0 0.0
    %528 = vmatpush1.msra.mxu0 0.0
    %529 = vmatprep.subr.mxu0 0.0
    %530 = vmatpush1.msra.mxu0 0.0
    %531 = vmatprep.subr.mxu0 0.0
    %532 = vmatpush1.msra.mxu0 0.0
    %533 = vmatprep.subr.mxu0 0.0
    %534 = vmatpush1.msra.mxu0 0.0
    %535 = vmatprep.subr.mxu0 0.0
    %536 = vmatpush1.msra.mxu0 0.0
    %537 = vmatprep.subr.mxu0 0.0
    %538 = vmatpush1.msra.mxu0 0.0
    %539 = vmatprep.subr.mxu0 0.0
    %540 = vmatpush1.msra.mxu0 0.0
    %541 = vmatprep.subr.mxu0 0.0
    %542 = vmatpush1.msra.mxu0 0.0
    %543 = vmatprep.mubr.f32.mxu0 0.0
    %v544 = vand.u32 %v128, 4294901760
    %545 = vmatmul.mubr.f32.gmra.mrb[0].mxu0 %v544
    %v546 = vpop.f32.mrb[0].mxu0
    %v547 = vadd.f32 %v462, %v546
    %v548 = vpop.f32.mrb[0].mxu0
    %549 = vmatprep.mubr.f32.mxu0 0.0
    %v550 = vand.u32 %v131, 4294901760
    %551 = vmatmul.mubr.f32.gmra.mrb[0].mxu0 %v550
    %v552 = vpop.f32.mrb[0].mxu0
    %v553 = vadd.f32 %v470, %v552
    %v554 = vpop.f32.mrb[0].mxu0
    %555 = vdwg.mxu0
    %556 = vmatprep.subr.mxu0 0.0
    %v557 = vand.u32 %v124, 4294901760
    %558 = vmatpush1.msra.mxu0 %v557
    %559 = vmatprep.subr.mxu0 0.0
    %v560 = vand.u32 %v125, 4294901760
    %561 = vmatpush1.msra.mxu0 %v560
    %562 = vmatprep.subr.mxu0 0.0
    %563 = vmatpush1.msra.mxu0 0.0
    %564 = vmatprep.subr.mxu0 0.0
    %565 = vmatpush1.msra.mxu0 0.0
    %566 = vmatprep.subr.mxu0 0.0
    %567 = vmatpush1.msra.mxu0 0.0
    %568 = vmatprep.subr.mxu0 0.0
    %569 = vmatpush1.msra.mxu0 0.0
    %570 = vmatprep.subr.mxu0 0.0
    %571 = vmatpush1.msra.mxu0 0.0
    %572 = vmatprep.subr.mxu0 0.0
    %573 = vmatpush1.msra.mxu0 0.0
    %574 = vmatprep.subr.mxu0 0.0
    %575 = vmatpush1.msra.mxu0 0.0
    %576 = vmatprep.subr.mxu0 0.0
    %577 = vmatpush1.msra.mxu0 0.0
    %578 = vmatprep.subr.mxu0 0.0
    %579 = vmatpush1.msra.mxu0 0.0
    %580 = vmatprep.subr.mxu0 0.0
    %581 = vmatpush1.msra.mxu0 0.0
    %582 = vmatprep.subr.mxu0 0.0
    %583 = vmatpush1.msra.mxu0 0.0
    %584 = vmatprep.subr.mxu0 0.0
    %585 = vmatpush1.msra.mxu0 0.0
    %586 = vmatprep.subr.mxu0 0.0
    %587 = vmatpush1.msra.mxu0 0.0
    %588 = vmatprep.subr.mxu0 0.0
    %589 = vmatpush1.msra.mxu0 0.0
    %590 = vmatprep.subr.mxu0 0.0
    %591 = vmatpush1.msra.mxu0 0.0
    %592 = vmatprep.subr.mxu0 0.0
    %593 = vmatpush1.msra.mxu0 0.0
    %594 = vmatprep.subr.mxu0 0.0
    %595 = vmatpush1.msra.mxu0 0.0
    %596 = vmatprep.subr.mxu0 0.0
    %597 = vmatpush1.msra.mxu0 0.0
    %598 = vmatprep.subr.mxu0 0.0
    %599 = vmatpush1.msra.mxu0 0.0
    %600 = vmatprep.subr.mxu0 0.0
    %601 = vmatpush1.msra.mxu0 0.0
    %602 = vmatprep.subr.mxu0 0.0
    %603 = vmatpush1.msra.mxu0 0.0
    %604 = vmatprep.subr.mxu0 0.0
    %605 = vmatpush1.msra.mxu0 0.0
    %606 = vmatprep.subr.mxu0 0.0
    %607 = vmatpush1.msra.mxu0 0.0
    %608 = vmatprep.subr.mxu0 0.0
    %609 = vmatpush1.msra.mxu0 0.0
    %610 = vmatprep.subr.mxu0 0.0
    %611 = vmatpush1.msra.mxu0 0.0
    %612 = vmatprep.subr.mxu0 0.0
    %613 = vmatpush1.msra.mxu0 0.0
    %614 = vmatprep.subr.mxu0 0.0
    %615 = vmatpush1.msra.mxu0 0.0
    %616 = vmatprep.subr.mxu0 0.0
    %617 = vmatpush1.msra.mxu0 0.0
    %618 = vmatprep.subr.mxu0 0.0
    %619 = vmatpush1.msra.mxu0 0.0
    %620 = vmatprep.subr.mxu0 0.0
    %621 = vmatpush1.msra.mxu0 0.0
    %622 = vmatprep.mubr.f32.mxu0 0.0
    %v623 = vand.u32 %v128, 4294901760
    %624 = vmatmul.mubr.f32.gmra.mrb[0].mxu0 %v623
    %v625 = vpop.f32.mrb[0].mxu0
    %v626 = vadd.f32 %v547, %v625
    %v627 = vpop.f32.mrb[0].mxu0
    %628 = vmatprep.mubr.f32.mxu0 0.0
    %v629 = vand.u32 %v131, 4294901760
    %630 = vmatmul.mubr.f32.gmra.mrb[0].mxu0 %v629
    %v631 = vpop.f32.mrb[0].mxu0
    %v632 = vadd.f32 %v553, %v631
    %v633 = vpop.f32.mrb[0].mxu0
    %634 = vdwg.mxu0
    %v636 = vsel %vm126, %v25, 0
    %v639 = vsel %vm126, %v26, 0
    %641 = vmatprep.subr.mxu0 0.0
    %v642 = vand.u32 %v124, 4294901760
    %643 = vmatpush1.msra.mxu0 %v642
    %644 = vmatprep.subr.mxu0 0.0
    %v645 = vand.u32 %v125, 4294901760
    %646 = vmatpush1.msra.mxu0 %v645
    %647 = vmatprep.subr.mxu0 0.0
    %648 = vmatpush1.msra.mxu0 0.0
    %649 = vmatprep.subr.mxu0 0.0
    %650 = vmatpush1.msra.mxu0 0.0
    %651 = vmatprep.subr.mxu0 0.0
    %652 = vmatpush1.msra.mxu0 0.0
    %653 = vmatprep.subr.mxu0 0.0
    %654 = vmatpush1.msra.mxu0 0.0
    %655 = vmatprep.subr.mxu0 0.0
    %656 = vmatpush1.msra.mxu0 0.0
    %657 = vmatprep.subr.mxu0 0.0
    %658 = vmatpush1.msra.mxu0 0.0
    %659 = vmatprep.subr.mxu0 0.0
    %660 = vmatpush1.msra.mxu0 0.0
    %661 = vmatprep.subr.mxu0 0.0
    %662 = vmatpush1.msra.mxu0 0.0
    %663 = vmatprep.subr.mxu0 0.0
    %664 = vmatpush1.msra.mxu0 0.0
    %665 = vmatprep.subr.mxu0 0.0
    %666 = vmatpush1.msra.mxu0 0.0
    %667 = vmatprep.subr.mxu0 0.0
    %668 = vmatpush1.msra.mxu0 0.0
    %669 = vmatprep.subr.mxu0 0.0
    %670 = vmatpush1.msra.mxu0 0.0
    %671 = vmatprep.subr.mxu0 0.0
    %672 = vmatpush1.msra.mxu0 0.0
    %673 = vmatprep.subr.mxu0 0.0
    %674 = vmatpush1.msra.mxu0 0.0
    %675 = vmatprep.subr.mxu0 0.0
    %676 = vmatpush1.msra.mxu0 0.0
    %677 = vmatprep.subr.mxu0 0.0
    %678 = vmatpush1.msra.mxu0 0.0
    %679 = vmatprep.subr.mxu0 0.0
    %680 = vmatpush1.msra.mxu0 0.0
    %681 = vmatprep.subr.mxu0 0.0
    %682 = vmatpush1.msra.mxu0 0.0
    %683 = vmatprep.subr.mxu0 0.0
    %684 = vmatpush1.msra.mxu0 0.0
    %685 = vmatprep.subr.mxu0 0.0
    %686 = vmatpush1.msra.mxu0 0.0
    %687 = vmatprep.subr.mxu0 0.0
    %688 = vmatpush1.msra.mxu0 0.0
    %689 = vmatprep.subr.mxu0 0.0
    %690 = vmatpush1.msra.mxu0 0.0
    %691 = vmatprep.subr.mxu0 0.0
    %692 = vmatpush1.msra.mxu0 0.0
    %693 = vmatprep.subr.mxu0 0.0
    %694 = vmatpush1.msra.mxu0 0.0
    %695 = vmatprep.subr.mxu0 0.0
    %696 = vmatpush1.msra.mxu0 0.0
    %697 = vmatprep.subr.mxu0 0.0
    %698 = vmatpush1.msra.mxu0 0.0
    %699 = vmatprep.subr.mxu0 0.0
    %700 = vmatpush1.msra.mxu0 0.0
    %701 = vmatprep.subr.mxu0 0.0
    %702 = vmatpush1.msra.mxu0 0.0
    %703 = vmatprep.subr.mxu0 0.0
    %704 = vmatpush1.msra.mxu0 0.0
    %705 = vmatprep.subr.mxu0 0.0
    %706 = vmatpush1.msra.mxu0 0.0
    %707 = vmatprep.mubr.f32.mxu0 0.0
    %v708 = vand.u32 %v636, 4294901760
    %v709 = vsub.f32 %v636, %v708
    %v710 = vand.u32 %v709, 4294901760
    %v711 = vsub.f32 %v709, %v710
    %v712 = vand.u32 %v711, 4294901760
    %713 = vmatmul.mubr.f32.gmra.mrb[0].mxu0 %v712
    %v714 = vpop.f32.mrb[0].mxu0
    %v715 = vadd.f32 0.0, %v714
    %v716 = vpop.f32.mrb[0].mxu0
    %717 = vmatprep.mubr.f32.mxu0 0.0
    %v718 = vand.u32 %v639, 4294901760
    %v719 = vsub.f32 %v639, %v718
    %v720 = vand.u32 %v719, 4294901760
    %v721 = vsub.f32 %v719, %v720
    %v722 = vand.u32 %v721, 4294901760
    %723 = vmatmul.mubr.f32.gmra.mrb[0].mxu0 %v722
    %v724 = vpop.f32.mrb[0].mxu0
    %v725 = vadd.f32 0.0, %v724
    %v726 = vpop.f32.mrb[0].mxu0
    %727 = vdwg.mxu0
    %728 = vmatprep.subr.mxu0 0.0
    %v729 = vand.u32 %v124, 4294901760
    %v730 = vsub.f32 %v124, %v729
    %v731 = vand.u32 %v730, 4294901760
    %v732 = vsub.f32 %v730, %v731
    %v733 = vand.u32 %v732, 4294901760
    %734 = vmatpush1.msra.mxu0 %v733
    %735 = vmatprep.subr.mxu0 0.0
    %v736 = vand.u32 %v125, 4294901760
    %v737 = vsub.f32 %v125, %v736
    %v738 = vand.u32 %v737, 4294901760
    %v739 = vsub.f32 %v737, %v738
    %v740 = vand.u32 %v739, 4294901760
    %741 = vmatpush1.msra.mxu0 %v740
    %742 = vmatprep.subr.mxu0 0.0
    %743 = vmatpush1.msra.mxu0 0.0
    %744 = vmatprep.subr.mxu0 0.0
    %745 = vmatpush1.msra.mxu0 0.0
    %746 = vmatprep.subr.mxu0 0.0
    %747 = vmatpush1.msra.mxu0 0.0
    %748 = vmatprep.subr.mxu0 0.0
    %749 = vmatpush1.msra.mxu0 0.0
    %750 = vmatprep.subr.mxu0 0.0
    %751 = vmatpush1.msra.mxu0 0.0
    %752 = vmatprep.subr.mxu0 0.0
    %753 = vmatpush1.msra.mxu0 0.0
    %754 = vmatprep.subr.mxu0 0.0
    %755 = vmatpush1.msra.mxu0 0.0
    %756 = vmatprep.subr.mxu0 0.0
    %757 = vmatpush1.msra.mxu0 0.0
    %758 = vmatprep.subr.mxu0 0.0
    %759 = vmatpush1.msra.mxu0 0.0
    %760 = vmatprep.subr.mxu0 0.0
    %761 = vmatpush1.msra.mxu0 0.0
    %762 = vmatprep.subr.mxu0 0.0
    %763 = vmatpush1.msra.mxu0 0.0
    %764 = vmatprep.subr.mxu0 0.0
    %765 = vmatpush1.msra.mxu0 0.0
    %766 = vmatprep.subr.mxu0 0.0
    %767 = vmatpush1.msra.mxu0 0.0
    %768 = vmatprep.subr.mxu0 0.0
    %769 = vmatpush1.msra.mxu0 0.0
    %770 = vmatprep.subr.mxu0 0.0
    %771 = vmatpush1.msra.mxu0 0.0
    %772 = vmatprep.subr.mxu0 0.0
    %773 = vmatpush1.msra.mxu0 0.0
    %774 = vmatprep.subr.mxu0 0.0
    %775 = vmatpush1.msra.mxu0 0.0
    %776 = vmatprep.subr.mxu0 0.0
    %777 = vmatpush1.msra.mxu0 0.0
    %778 = vmatprep.subr.mxu0 0.0
    %779 = vmatpush1.msra.mxu0 0.0
    %780 = vmatprep.subr.mxu0 0.0
    %781 = vmatpush1.msra.mxu0 0.0
    %782 = vmatprep.subr.mxu0 0.0
    %783 = vmatpush1.msra.mxu0 0.0
    %784 = vmatprep.subr.mxu0 0.0
    %785 = vmatpush1.msra.mxu0 0.0
    %786 = vmatprep.subr.mxu0 0.0
    %787 = vmatpush1.msra.mxu0 0.0
    %788 = vmatprep.subr.mxu0 0.0
    %789 = vmatpush1.msra.mxu0 0.0
    %790 = vmatprep.subr.mxu0 0.0
    %791 = vmatpush1.msra.mxu0 0.0
    %792 = vmatprep.subr.mxu0 0.0
    %793 = vmatpush1.msra.mxu0 0.0
    %794 = vmatprep.subr.mxu0 0.0
    %795 = vmatpush1.msra.mxu0 0.0
    %796 = vmatprep.subr.mxu0 0.0
    %797 = vmatpush1.msra.mxu0 0.0
    %798 = vmatprep.subr.mxu0 0.0
    %799 = vmatpush1.msra.mxu0 0.0
    %800 = vmatprep.subr.mxu0 0.0
    %801 = vmatpush1.msra.mxu0 0.0
    %802 = vmatprep.mubr.f32.mxu0 0.0
    %v803 = vand.u32 %v636, 4294901760
    %804 = vmatmul.mubr.f32.gmra.mrb[0].mxu0 %v803
    %v805 = vpop.f32.mrb[0].mxu0
    %v806 = vadd.f32 %v715, %v805
    %v807 = vpop.f32.mrb[0].mxu0
    %808 = vmatprep.mubr.f32.mxu0 0.0
    %v809 = vand.u32 %v639, 4294901760
    %810 = vmatmul.mubr.f32.gmra.mrb[0].mxu0 %v809
    %v811 = vpop.f32.mrb[0].mxu0
    %v812 = vadd.f32 %v725, %v811
    %v813 = vpop.f32.mrb[0].mxu0
    %814 = vdwg.mxu0
    %815 = vmatprep.subr.mxu0 0.0
    %v816 = vand.u32 %v124, 4294901760
    %v817 = vsub.f32 %v124, %v816
    %818 = vmatpush1.msra.mxu0 %v817
    %819 = vmatprep.subr.mxu0 0.0
    %v820 = vand.u32 %v125, 4294901760
    %v821 = vsub.f32 %v125, %v820
    %822 = vmatpush1.msra.mxu0 %v821
    %823 = vmatprep.subr.mxu0 0.0
    %824 = vmatpush1.msra.mxu0 0.0
    %825 = vmatprep.subr.mxu0 0.0
    %826 = vmatpush1.msra.mxu0 0.0
    %827 = vmatprep.subr.mxu0 0.0
    %828 = vmatpush1.msra.mxu0 0.0
    %829 = vmatprep.subr.mxu0 0.0
    %830 = vmatpush1.msra.mxu0 0.0
    %831 = vmatprep.subr.mxu0 0.0
    %832 = vmatpush1.msra.mxu0 0.0
    %833 = vmatprep.subr.mxu0 0.0
    %834 = vmatpush1.msra.mxu0 0.0
    %835 = vmatprep.subr.mxu0 0.0
    %836 = vmatpush1.msra.mxu0 0.0
    %837 = vmatprep.subr.mxu0 0.0
    %838 = vmatpush1.msra.mxu0 0.0
    %839 = vmatprep.subr.mxu0 0.0
    %840 = vmatpush1.msra.mxu0 0.0
    %841 = vmatprep.subr.mxu0 0.0
    %842 = vmatpush1.msra.mxu0 0.0
    %843 = vmatprep.subr.mxu0 0.0
    %844 = vmatpush1.msra.mxu0 0.0
    %845 = vmatprep.subr.mxu0 0.0
    %846 = vmatpush1.msra.mxu0 0.0
    %847 = vmatprep.subr.mxu0 0.0
    %848 = vmatpush1.msra.mxu0 0.0
    %849 = vmatprep.subr.mxu0 0.0
    %850 = vmatpush1.msra.mxu0 0.0
    %851 = vmatprep.subr.mxu0 0.0
    %852 = vmatpush1.msra.mxu0 0.0
    %853 = vmatprep.subr.mxu0 0.0
    %854 = vmatpush1.msra.mxu0 0.0
    %855 = vmatprep.subr.mxu0 0.0
    %856 = vmatpush1.msra.mxu0 0.0
    %857 = vmatprep.subr.mxu0 0.0
    %858 = vmatpush1.msra.mxu0 0.0
    %859 = vmatprep.subr.mxu0 0.0
    %860 = vmatpush1.msra.mxu0 0.0
    %861 = vmatprep.subr.mxu0 0.0
    %862 = vmatpush1.msra.mxu0 0.0
    %863 = vmatprep.subr.mxu0 0.0
    %864 = vmatpush1.msra.mxu0 0.0
    %865 = vmatprep.subr.mxu0 0.0
    %866 = vmatpush1.msra.mxu0 0.0
    %867 = vmatprep.subr.mxu0 0.0
    %868 = vmatpush1.msra.mxu0 0.0
    %869 = vmatprep.subr.mxu0 0.0
    %870 = vmatpush1.msra.mxu0 0.0
    %871 = vmatprep.subr.mxu0 0.0
    %872 = vmatpush1.msra.mxu0 0.0
    %873 = vmatprep.subr.mxu0 0.0
    %874 = vmatpush1.msra.mxu0 0.0
    %875 = vmatprep.subr.mxu0 0.0
    %876 = vmatpush1.msra.mxu0 0.0
    %877 = vmatprep.subr.mxu0 0.0
    %878 = vmatpush1.msra.mxu0 0.0
    %879 = vmatprep.subr.mxu0 0.0
    %880 = vmatpush1.msra.mxu0 0.0
    %881 = vmatprep.subr.mxu0 0.0
    %882 = vmatpush1.msra.mxu0 0.0
    %883 = vmatprep.mubr.f32.mxu0 0.0
    %v884 = vand.u32 %v636, 4294901760
    %v885 = vsub.f32 %v636, %v884
    %886 = vmatmul.mubr.f32.gmra.mrb[0].mxu0 %v885
    %v887 = vpop.f32.mrb[0].mxu0
    %v888 = vadd.f32 %v806, %v887
    %v889 = vpop.f32.mrb[0].mxu0
    %890 = vmatprep.mubr.f32.mxu0 0.0
    %v891 = vand.u32 %v639, 4294901760
    %v892 = vsub.f32 %v639, %v891
    %893 = vmatmul.mubr.f32.gmra.mrb[0].mxu0 %v892
    %v894 = vpop.f32.mrb[0].mxu0
    %v895 = vadd.f32 %v812, %v894
    %v896 = vpop.f32.mrb[0].mxu0
    %897 = vdwg.mxu0
    %898 = vmatprep.subr.mxu0 0.0
    %v899 = vand.u32 %v124, 4294901760
    %900 = vmatpush1.msra.mxu0 %v899
    %901 = vmatprep.subr.mxu0 0.0
    %v902 = vand.u32 %v125, 4294901760
    %903 = vmatpush1.msra.mxu0 %v902
    %904 = vmatprep.subr.mxu0 0.0
    %905 = vmatpush1.msra.mxu0 0.0
    %906 = vmatprep.subr.mxu0 0.0
    %907 = vmatpush1.msra.mxu0 0.0
    %908 = vmatprep.subr.mxu0 0.0
    %909 = vmatpush1.msra.mxu0 0.0
    %910 = vmatprep.subr.mxu0 0.0
    %911 = vmatpush1.msra.mxu0 0.0
    %912 = vmatprep.subr.mxu0 0.0
    %913 = vmatpush1.msra.mxu0 0.0
    %914 = vmatprep.subr.mxu0 0.0
    %915 = vmatpush1.msra.mxu0 0.0
    %916 = vmatprep.subr.mxu0 0.0
    %917 = vmatpush1.msra.mxu0 0.0
    %918 = vmatprep.subr.mxu0 0.0
    %919 = vmatpush1.msra.mxu0 0.0
    %920 = vmatprep.subr.mxu0 0.0
    %921 = vmatpush1.msra.mxu0 0.0
    %922 = vmatprep.subr.mxu0 0.0
    %923 = vmatpush1.msra.mxu0 0.0
    %924 = vmatprep.subr.mxu0 0.0
    %925 = vmatpush1.msra.mxu0 0.0
    %926 = vmatprep.subr.mxu0 0.0
    %927 = vmatpush1.msra.mxu0 0.0
    %928 = vmatprep.subr.mxu0 0.0
    %929 = vmatpush1.msra.mxu0 0.0
    %930 = vmatprep.subr.mxu0 0.0
    %931 = vmatpush1.msra.mxu0 0.0
    %932 = vmatprep.subr.mxu0 0.0
    %933 = vmatpush1.msra.mxu0 0.0
    %934 = vmatprep.subr.mxu0 0.0
    %935 = vmatpush1.msra.mxu0 0.0
    %936 = vmatprep.subr.mxu0 0.0
    %937 = vmatpush1.msra.mxu0 0.0
    %938 = vmatprep.subr.mxu0 0.0
    %939 = vmatpush1.msra.mxu0 0.0
    %940 = vmatprep.subr.mxu0 0.0
    %941 = vmatpush1.msra.mxu0 0.0
    %942 = vmatprep.subr.mxu0 0.0
    %943 = vmatpush1.msra.mxu0 0.0
    %944 = vmatprep.subr.mxu0 0.0
    %945 = vmatpush1.msra.mxu0 0.0
    %946 = vmatprep.subr.mxu0 0.0
    %947 = vmatpush1.msra.mxu0 0.0
    %948 = vmatprep.subr.mxu0 0.0
    %949 = vmatpush1.msra.mxu0 0.0
    %950 = vmatprep.subr.mxu0 0.0
    %951 = vmatpush1.msra.mxu0 0.0
    %952 = vmatprep.subr.mxu0 0.0
    %953 = vmatpush1.msra.mxu0 0.0
    %954 = vmatprep.subr.mxu0 0.0
    %955 = vmatpush1.msra.mxu0 0.0
    %956 = vmatprep.subr.mxu0 0.0
    %957 = vmatpush1.msra.mxu0 0.0
    %958 = vmatprep.subr.mxu0 0.0
    %959 = vmatpush1.msra.mxu0 0.0
    %960 = vmatprep.subr.mxu0 0.0
    %961 = vmatpush1.msra.mxu0 0.0
    %962 = vmatprep.subr.mxu0 0.0
    %963 = vmatpush1.msra.mxu0 0.0
    %964 = vmatprep.mubr.f32.mxu0 0.0
    %v965 = vand.u32 %v636, 4294901760
    %v966 = vsub.f32 %v636, %v965
    %v967 = vand.u32 %v966, 4294901760
    %968 = vmatmul.mubr.f32.gmra.mrb[0].mxu0 %v967
    %v969 = vpop.f32.mrb[0].mxu0
    %v970 = vadd.f32 %v888, %v969
    %v971 = vpop.f32.mrb[0].mxu0
    %972 = vmatprep.mubr.f32.mxu0 0.0
    %v973 = vand.u32 %v639, 4294901760
    %v974 = vsub.f32 %v639, %v973
    %v975 = vand.u32 %v974, 4294901760
    %976 = vmatmul.mubr.f32.gmra.mrb[0].mxu0 %v975
    %v977 = vpop.f32.mrb[0].mxu0
    %v978 = vadd.f32 %v895, %v977
    %v979 = vpop.f32.mrb[0].mxu0
    %980 = vdwg.mxu0
    %981 = vmatprep.subr.mxu0 0.0
    %v982 = vand.u32 %v124, 4294901760
    %v983 = vsub.f32 %v124, %v982
    %v984 = vand.u32 %v983, 4294901760
    %985 = vmatpush1.msra.mxu0 %v984
    %986 = vmatprep.subr.mxu0 0.0
    %v987 = vand.u32 %v125, 4294901760
    %v988 = vsub.f32 %v125, %v987
    %v989 = vand.u32 %v988, 4294901760
    %990 = vmatpush1.msra.mxu0 %v989
    %991 = vmatprep.subr.mxu0 0.0
    %992 = vmatpush1.msra.mxu0 0.0
    %993 = vmatprep.subr.mxu0 0.0
    %994 = vmatpush1.msra.mxu0 0.0
    %995 = vmatprep.subr.mxu0 0.0
    %996 = vmatpush1.msra.mxu0 0.0
    %997 = vmatprep.subr.mxu0 0.0
    %998 = vmatpush1.msra.mxu0 0.0
    %999 = vmatprep.subr.mxu0 0.0
    %1000 = vmatpush1.msra.mxu0 0.0
    %1001 = vmatprep.subr.mxu0 0.0
    %1002 = vmatpush1.msra.mxu0 0.0
    %1003 = vmatprep.subr.mxu0 0.0
    %1004 = vmatpush1.msra.mxu0 0.0
    %1005 = vmatprep.subr.mxu0 0.0
    %1006 = vmatpush1.msra.mxu0 0.0
    %1007 = vmatprep.subr.mxu0 0.0
    %1008 = vmatpush1.msra.mxu0 0.0
    %1009 = vmatprep.subr.mxu0 0.0
    %1010 = vmatpush1.msra.mxu0 0.0
    %1011 = vmatprep.subr.mxu0 0.0
    %1012 = vmatpush1.msra.mxu0 0.0
    %1013 = vmatprep.subr.mxu0 0.0
    %1014 = vmatpush1.msra.mxu0 0.0
    %1015 = vmatprep.subr.mxu0 0.0
    %1016 = vmatpush1.msra.mxu0 0.0
    %1017 = vmatprep.subr.mxu0 0.0
    %1018 = vmatpush1.msra.mxu0 0.0
    %1019 = vmatprep.subr.mxu0 0.0
    %1020 = vmatpush1.msra.mxu0 0.0
    %1021 = vmatprep.subr.mxu0 0.0
    %1022 = vmatpush1.msra.mxu0 0.0
    %1023 = vmatprep.subr.mxu0 0.0
    %1024 = vmatpush1.msra.mxu0 0.0
    %1025 = vmatprep.subr.mxu0 0.0
    %1026 = vmatpush1.msra.mxu0 0.0
    %1027 = vmatprep.subr.mxu0 0.0
    %1028 = vmatpush1.msra.mxu0 0.0
    %1029 = vmatprep.subr.mxu0 0.0
    %1030 = vmatpush1.msra.mxu0 0.0
    %1031 = vmatprep.subr.mxu0 0.0
    %1032 = vmatpush1.msra.mxu0 0.0
    %1033 = vmatprep.subr.mxu0 0.0
    %1034 = vmatpush1.msra.mxu0 0.0
    %1035 = vmatprep.subr.mxu0 0.0
    %1036 = vmatpush1.msra.mxu0 0.0
    %1037 = vmatprep.subr.mxu0 0.0
    %1038 = vmatpush1.msra.mxu0 0.0
    %1039 = vmatprep.subr.mxu0 0.0
    %1040 = vmatpush1.msra.mxu0 0.0
    %1041 = vmatprep.subr.mxu0 0.0
    %1042 = vmatpush1.msra.mxu0 0.0
    %1043 = vmatprep.subr.mxu0 0.0
    %1044 = vmatpush1.msra.mxu0 0.0
    %1045 = vmatprep.subr.mxu0 0.0
    %1046 = vmatpush1.msra.mxu0 0.0
    %1047 = vmatprep.subr.mxu0 0.0
    %1048 = vmatpush1.msra.mxu0 0.0
    %1049 = vmatprep.subr.mxu0 0.0
    %1050 = vmatpush1.msra.mxu0 0.0
    %1051 = vmatprep.mubr.f32.mxu0 0.0
    %v1052 = vand.u32 %v636, 4294901760
    %1053 = vmatmul.mubr.f32.gmra.mrb[0].mxu0 %v1052
    %v1054 = vpop.f32.mrb[0].mxu0
    %v1055 = vadd.f32 %v970, %v1054
    %v1056 = vpop.f32.mrb[0].mxu0
    %1057 = vmatprep.mubr.f32.mxu0 0.0
    %v1058 = vand.u32 %v639, 4294901760
    %1059 = vmatmul.mubr.f32.gmra.mrb[0].mxu0 %v1058
    %v1060 = vpop.f32.mrb[0].mxu0
    %v1061 = vadd.f32 %v978, %v1060
    %v1062 = vpop.f32.mrb[0].mxu0
    %1063 = vdwg.mxu0
    %1064 = vmatprep.subr.mxu0 0.0
    %v1065 = vand.u32 %v124, 4294901760
    %1066 = vmatpush1.msra.mxu0 %v1065
    %1067 = vmatprep.subr.mxu0 0.0
    %v1068 = vand.u32 %v125, 4294901760
    %1069 = vmatpush1.msra.mxu0 %v1068
    %1070 = vmatprep.subr.mxu0 0.0
    %1071 = vmatpush1.msra.mxu0 0.0
    %1072 = vmatprep.subr.mxu0 0.0
    %1073 = vmatpush1.msra.mxu0 0.0
    %1074 = vmatprep.subr.mxu0 0.0
    %1075 = vmatpush1.msra.mxu0 0.0
    %1076 = vmatprep.subr.mxu0 0.0
    %1077 = vmatpush1.msra.mxu0 0.0
    %1078 = vmatprep.subr.mxu0 0.0
    %1079 = vmatpush1.msra.mxu0 0.0
    %1080 = vmatprep.subr.mxu0 0.0
    %1081 = vmatpush1.msra.mxu0 0.0
    %1082 = vmatprep.subr.mxu0 0.0
    %1083 = vmatpush1.msra.mxu0 0.0
    %1084 = vmatprep.subr.mxu0 0.0
    %1085 = vmatpush1.msra.mxu0 0.0
    %1086 = vmatprep.subr.mxu0 0.0
    %1087 = vmatpush1.msra.mxu0 0.0
    %1088 = vmatprep.subr.mxu0 0.0
    %1089 = vmatpush1.msra.mxu0 0.0
    %1090 = vmatprep.subr.mxu0 0.0
    %1091 = vmatpush1.msra.mxu0 0.0
    %1092 = vmatprep.subr.mxu0 0.0
    %1093 = vmatpush1.msra.mxu0 0.0
    %1094 = vmatprep.subr.mxu0 0.0
    %1095 = vmatpush1.msra.mxu0 0.0
    %1096 = vmatprep.subr.mxu0 0.0
    %1097 = vmatpush1.msra.mxu0 0.0
    %1098 = vmatprep.subr.mxu0 0.0
    %1099 = vmatpush1.msra.mxu0 0.0
    %1100 = vmatprep.subr.mxu0 0.0
    %1101 = vmatpush1.msra.mxu0 0.0
    %1102 = vmatprep.subr.mxu0 0.0
    %1103 = vmatpush1.msra.mxu0 0.0
    %1104 = vmatprep.subr.mxu0 0.0
    %1105 = vmatpush1.msra.mxu0 0.0
    %1106 = vmatprep.subr.mxu0 0.0
    %1107 = vmatpush1.msra.mxu0 0.0
    %1108 = vmatprep.subr.mxu0 0.0
    %1109 = vmatpush1.msra.mxu0 0.0
    %1110 = vmatprep.subr.mxu0 0.0
    %1111 = vmatpush1.msra.mxu0 0.0
    %1112 = vmatprep.subr.mxu0 0.0
    %1113 = vmatpush1.msra.mxu0 0.0
    %1114 = vmatprep.subr.mxu0 0.0
    %1115 = vmatpush1.msra.mxu0 0.0
    %1116 = vmatprep.subr.mxu0 0.0
    %1117 = vmatpush1.msra.mxu0 0.0
    %1118 = vmatprep.subr.mxu0 0.0
    %1119 = vmatpush1.msra.mxu0 0.0
    %1120 = vmatprep.subr.mxu0 0.0
    %1121 = vmatpush1.msra.mxu0 0.0
    %1122 = vmatprep.subr.mxu0 0.0
    %1123 = vmatpush1.msra.mxu0 0.0
    %1124 = vmatprep.subr.mxu0 0.0
    %1125 = vmatpush1.msra.mxu0 0.0
    %1126 = vmatprep.subr.mxu0 0.0
    %1127 = vmatpush1.msra.mxu0 0.0
    %1128 = vmatprep.subr.mxu0 0.0
    %1129 = vmatpush1.msra.mxu0 0.0
    %1130 = vmatprep.mubr.f32.mxu0 0.0
    %v1131 = vand.u32 %v636, 4294901760
    %1132 = vmatmul.mubr.f32.gmra.mrb[0].mxu0 %v1131
    %v1133 = vpop.f32.mrb[0].mxu0
    %v1134 = vadd.f32 %v1055, %v1133
    %v1135 = vpop.f32.mrb[0].mxu0
    %1136 = vmatprep.mubr.f32.mxu0 0.0
    %v1137 = vand.u32 %v639, 4294901760
    %1138 = vmatmul.mubr.f32.gmra.mrb[0].mxu0 %v1137
    %v1139 = vpop.f32.mrb[0].mxu0
    %v1140 = vadd.f32 %v1061, %v1139
    %v1141 = vpop.f32.mrb[0].mxu0
    %1142 = vdwg.mxu0
    %v1144 = vsel %vm126, %v27, 0
    %v1147 = vsel %vm126, %v28, 0
    %1149 = vmatprep.subr.mxu0 0.0
    %v1150 = vand.u32 %v124, 4294901760
    %1151 = vmatpush1.msra.mxu0 %v1150
    %1152 = vmatprep.subr.mxu0 0.0
    %v1153 = vand.u32 %v125, 4294901760
    %1154 = vmatpush1.msra.mxu0 %v1153
    %1155 = vmatprep.subr.mxu0 0.0
    %1156 = vmatpush1.msra.mxu0 0.0
    %1157 = vmatprep.subr.mxu0 0.0
    %1158 = vmatpush1.msra.mxu0 0.0
    %1159 = vmatprep.subr.mxu0 0.0
    %1160 = vmatpush1.msra.mxu0 0.0
    %1161 = vmatprep.subr.mxu0 0.0
    %1162 = vmatpush1.msra.mxu0 0.0
    %1163 = vmatprep.subr.mxu0 0.0
    %1164 = vmatpush1.msra.mxu0 0.0
    %1165 = vmatprep.subr.mxu0 0.0
    %1166 = vmatpush1.msra.mxu0 0.0
    %1167 = vmatprep.subr.mxu0 0.0
    %1168 = vmatpush1.msra.mxu0 0.0
    %1169 = vmatprep.subr.mxu0 0.0
    %1170 = vmatpush1.msra.mxu0 0.0
    %1171 = vmatprep.subr.mxu0 0.0
    %1172 = vmatpush1.msra.mxu0 0.0
    %1173 = vmatprep.subr.mxu0 0.0
    %1174 = vmatpush1.msra.mxu0 0.0
    %1175 = vmatprep.subr.mxu0 0.0
    %1176 = vmatpush1.msra.mxu0 0.0
    %1177 = vmatprep.subr.mxu0 0.0
    %1178 = vmatpush1.msra.mxu0 0.0
    %1179 = vmatprep.subr.mxu0 0.0
    %1180 = vmatpush1.msra.mxu0 0.0
    %1181 = vmatprep.subr.mxu0 0.0
    %1182 = vmatpush1.msra.mxu0 0.0
    %1183 = vmatprep.subr.mxu0 0.0
    %1184 = vmatpush1.msra.mxu0 0.0
    %1185 = vmatprep.subr.mxu0 0.0
    %1186 = vmatpush1.msra.mxu0 0.0
    %1187 = vmatprep.subr.mxu0 0.0
    %1188 = vmatpush1.msra.mxu0 0.0
    %1189 = vmatprep.subr.mxu0 0.0
    %1190 = vmatpush1.msra.mxu0 0.0
    %1191 = vmatprep.subr.mxu0 0.0
    %1192 = vmatpush1.msra.mxu0 0.0
    %1193 = vmatprep.subr.mxu0 0.0
    %1194 = vmatpush1.msra.mxu0 0.0
    %1195 = vmatprep.subr.mxu0 0.0
    %1196 = vmatpush1.msra.mxu0 0.0
    %1197 = vmatprep.subr.mxu0 0.0
    %1198 = vmatpush1.msra.mxu0 0.0
    %1199 = vmatprep.subr.mxu0 0.0
    %1200 = vmatpush1.msra.mxu0 0.0
    %1201 = vmatprep.subr.mxu0 0.0
    %1202 = vmatpush1.msra.mxu0 0.0
    %1203 = vmatprep.subr.mxu0 0.0
    %1204 = vmatpush1.msra.mxu0 0.0
    %1205 = vmatprep.subr.mxu0 0.0
    %1206 = vmatpush1.msra.mxu0 0.0
    %1207 = vmatprep.subr.mxu0 0.0
    %1208 = vmatpush1.msra.mxu0 0.0
    %1209 = vmatprep.subr.mxu0 0.0
    %1210 = vmatpush1.msra.mxu0 0.0
    %1211 = vmatprep.subr.mxu0 0.0
    %1212 = vmatpush1.msra.mxu0 0.0
    %1213 = vmatprep.subr.mxu0 0.0
    %1214 = vmatpush1.msra.mxu0 0.0
    %1215 = vmatprep.mubr.f32.mxu0 0.0
    %v1216 = vand.u32 %v1144, 4294901760
    %v1217 = vsub.f32 %v1144, %v1216
    %v1218 = vand.u32 %v1217, 4294901760
    %v1219 = vsub.f32 %v1217, %v1218
    %v1220 = vand.u32 %v1219, 4294901760
    %1221 = vmatmul.mubr.f32.gmra.mrb[0].mxu0 %v1220
    %v1222 = vpop.f32.mrb[0].mxu0
    %v1223 = vadd.f32 0.0, %v1222
    %v1224 = vpop.f32.mrb[0].mxu0
    %1225 = vmatprep.mubr.f32.mxu0 0.0
    %v1226 = vand.u32 %v1147, 4294901760
    %v1227 = vsub.f32 %v1147, %v1226
    %v1228 = vand.u32 %v1227, 4294901760
    %v1229 = vsub.f32 %v1227, %v1228
    %v1230 = vand.u32 %v1229, 4294901760
    %1231 = vmatmul.mubr.f32.gmra.mrb[0].mxu0 %v1230
    %v1232 = vpop.f32.mrb[0].mxu0
    %v1233 = vadd.f32 0.0, %v1232
    %v1234 = vpop.f32.mrb[0].mxu0
    %1235 = vdwg.mxu0
    %1236 = vmatprep.subr.mxu0 0.0
    %v1237 = vand.u32 %v124, 4294901760
    %v1238 = vsub.f32 %v124, %v1237
    %v1239 = vand.u32 %v1238, 4294901760
    %v1240 = vsub.f32 %v1238, %v1239
    %v1241 = vand.u32 %v1240, 4294901760
    %1242 = vmatpush1.msra.mxu0 %v1241
    %1243 = vmatprep.subr.mxu0 0.0
    %v1244 = vand.u32 %v125, 4294901760
    %v1245 = vsub.f32 %v125, %v1244
    %v1246 = vand.u32 %v1245, 4294901760
    %v1247 = vsub.f32 %v1245, %v1246
    %v1248 = vand.u32 %v1247, 4294901760
    %1249 = vmatpush1.msra.mxu0 %v1248
    %1250 = vmatprep.subr.mxu0 0.0
    %1251 = vmatpush1.msra.mxu0 0.0
    %1252 = vmatprep.subr.mxu0 0.0
    %1253 = vmatpush1.msra.mxu0 0.0
    %1254 = vmatprep.subr.mxu0 0.0
    %1255 = vmatpush1.msra.mxu0 0.0
    %1256 = vmatprep.subr.mxu0 0.0
    %1257 = vmatpush1.msra.mxu0 0.0
    %1258 = vmatprep.subr.mxu0 0.0
    %1259 = vmatpush1.msra.mxu0 0.0
    %1260 = vmatprep.subr.mxu0 0.0
    %1261 = vmatpush1.msra.mxu0 0.0
    %1262 = vmatprep.subr.mxu0 0.0
    %1263 = vmatpush1.msra.mxu0 0.0
    %1264 = vmatprep.subr.mxu0 0.0
    %1265 = vmatpush1.msra.mxu0 0.0
    %1266 = vmatprep.subr.mxu0 0.0
    %1267 = vmatpush1.msra.mxu0 0.0
    %1268 = vmatprep.subr.mxu0 0.0
    %1269 = vmatpush1.msra.mxu0 0.0
    %1270 = vmatprep.subr.mxu0 0.0
    %1271 = vmatpush1.msra.mxu0 0.0
    %1272 = vmatprep.subr.mxu0 0.0
    %1273 = vmatpush1.msra.mxu0 0.0
    %1274 = vmatprep.subr.mxu0 0.0
    %1275 = vmatpush1.msra.mxu0 0.0
    %1276 = vmatprep.subr.mxu0 0.0
    %1277 = vmatpush1.msra.mxu0 0.0
    %1278 = vmatprep.subr.mxu0 0.0
    %1279 = vmatpush1.msra.mxu0 0.0
    %1280 = vmatprep.subr.mxu0 0.0
    %1281 = vmatpush1.msra.mxu0 0.0
    %1282 = vmatprep.subr.mxu0 0.0
    %1283 = vmatpush1.msra.mxu0 0.0
    %1284 = vmatprep.subr.mxu0 0.0
    %1285 = vmatpush1.msra.mxu0 0.0
    %1286 = vmatprep.subr.mxu0 0.0
    %1287 = vmatpush1.msra.mxu0 0.0
    %1288 = vmatprep.subr.mxu0 0.0
    %1289 = vmatpush1.msra.mxu0 0.0
    %1290 = vmatprep.subr.mxu0 0.0
    %1291 = vmatpush1.msra.mxu0 0.0
    %1292 = vmatprep.subr.mxu0 0.0
    %1293 = vmatpush1.msra.mxu0 0.0
    %1294 = vmatprep.subr.mxu0 0.0
    %1295 = vmatpush1.msra.mxu0 0.0
    %1296 = vmatprep.subr.mxu0 0.0
    %1297 = vmatpush1.msra.mxu0 0.0
    %1298 = vmatprep.subr.mxu0 0.0
    %1299 = vmatpush1.msra.mxu0 0.0
    %1300 = vmatprep.subr.mxu0 0.0
    %1301 = vmatpush1.msra.mxu0 0.0
    %1302 = vmatprep.subr.mxu0 0.0
    %1303 = vmatpush1.msra.mxu0 0.0
    %1304 = vmatprep.subr.mxu0 0.0
    %1305 = vmatpush1.msra.mxu0 0.0
    %1306 = vmatprep.subr.mxu0 0.0
    %1307 = vmatpush1.msra.mxu0 0.0
    %1308 = vmatprep.subr.mxu0 0.0
    %1309 = vmatpush1.msra.mxu0 0.0
    %1310 = vmatprep.mubr.f32.mxu0 0.0
    %v1311 = vand.u32 %v1144, 4294901760
    %1312 = vmatmul.mubr.f32.gmra.mrb[0].mxu0 %v1311
    %v1313 = vpop.f32.mrb[0].mxu0
    %v1314 = vadd.f32 %v1223, %v1313
    %v1315 = vpop.f32.mrb[0].mxu0
    %1316 = vmatprep.mubr.f32.mxu0 0.0
    %v1317 = vand.u32 %v1147, 4294901760
    %1318 = vmatmul.mubr.f32.gmra.mrb[0].mxu0 %v1317
    %v1319 = vpop.f32.mrb[0].mxu0
    %v1320 = vadd.f32 %v1233, %v1319
    %v1321 = vpop.f32.mrb[0].mxu0
    %1322 = vdwg.mxu0
    %1323 = vmatprep.subr.mxu0 0.0
    %v1324 = vand.u32 %v124, 4294901760
    %v1325 = vsub.f32 %v124, %v1324
    %1326 = vmatpush1.msra.mxu0 %v1325
    %1327 = vmatprep.subr.mxu0 0.0
    %v1328 = vand.u32 %v125, 4294901760
    %v1329 = vsub.f32 %v125, %v1328
    %1330 = vmatpush1.msra.mxu0 %v1329
    %1331 = vmatprep.subr.mxu0 0.0
    %1332 = vmatpush1.msra.mxu0 0.0
    %1333 = vmatprep.subr.mxu0 0.0
    %1334 = vmatpush1.msra.mxu0 0.0
    %1335 = vmatprep.subr.mxu0 0.0
    %1336 = vmatpush1.msra.mxu0 0.0
    %1337 = vmatprep.subr.mxu0 0.0
    %1338 = vmatpush1.msra.mxu0 0.0
    %1339 = vmatprep.subr.mxu0 0.0
    %1340 = vmatpush1.msra.mxu0 0.0
    %1341 = vmatprep.subr.mxu0 0.0
    %1342 = vmatpush1.msra.mxu0 0.0
    %1343 = vmatprep.subr.mxu0 0.0
    %1344 = vmatpush1.msra.mxu0 0.0
    %1345 = vmatprep.subr.mxu0 0.0
    %1346 = vmatpush1.msra.mxu0 0.0
    %1347 = vmatprep.subr.mxu0 0.0
    %1348 = vmatpush1.msra.mxu0 0.0
    %1349 = vmatprep.subr.mxu0 0.0
    %1350 = vmatpush1.msra.mxu0 0.0
    %1351 = vmatprep.subr.mxu0 0.0
    %1352 = vmatpush1.msra.mxu0 0.0
    %1353 = vmatprep.subr.mxu0 0.0
    %1354 = vmatpush1.msra.mxu0 0.0
    %1355 = vmatprep.subr.mxu0 0.0
    %1356 = vmatpush1.msra.mxu0 0.0
    %1357 = vmatprep.subr.mxu0 0.0
    %1358 = vmatpush1.msra.mxu0 0.0
    %1359 = vmatprep.subr.mxu0 0.0
    %1360 = vmatpush1.msra.mxu0 0.0
    %1361 = vmatprep.subr.mxu0 0.0
    %1362 = vmatpush1.msra.mxu0 0.0
    %1363 = vmatprep.subr.mxu0 0.0
    %1364 = vmatpush1.msra.mxu0 0.0
    %1365 = vmatprep.subr.mxu0 0.0
    %1366 = vmatpush1.msra.mxu0 0.0
    %1367 = vmatprep.subr.mxu0 0.0
    %1368 = vmatpush1.msra.mxu0 0.0
    %1369 = vmatprep.subr.mxu0 0.0
    %1370 = vmatpush1.msra.mxu0 0.0
    %1371 = vmatprep.subr.mxu0 0.0
    %1372 = vmatpush1.msra.mxu0 0.0
    %1373 = vmatprep.subr.mxu0 0.0
    %1374 = vmatpush1.msra.mxu0 0.0
    %1375 = vmatprep.subr.mxu0 0.0
    %1376 = vmatpush1.msra.mxu0 0.0
    %1377 = vmatprep.subr.mxu0 0.0
    %1378 = vmatpush1.msra.mxu0 0.0
    %1379 = vmatprep.subr.mxu0 0.0
    %1380 = vmatpush1.msra.mxu0 0.0
    %1381 = vmatprep.subr.mxu0 0.0
    %1382 = vmatpush1.msra.mxu0 0.0
    %1383 = vmatprep.subr.mxu0 0.0
    %1384 = vmatpush1.msra.mxu0 0.0
    %1385 = vmatprep.subr.mxu0 0.0
    %1386 = vmatpush1.msra.mxu0 0.0
    %1387 = vmatprep.subr.mxu0 0.0
    %1388 = vmatpush1.msra.mxu0 0.0
    %1389 = vmatprep.subr.mxu0 0.0
    %1390 = vmatpush1.msra.mxu0 0.0
    %1391 = vmatprep.mubr.f32.mxu0 0.0
    %v1392 = vand.u32 %v1144, 4294901760
    %v1393 = vsub.f32 %v1144, %v1392
    %1394 = vmatmul.mubr.f32.gmra.mrb[0].mxu0 %v1393
    %v1395 = vpop.f32.mrb[0].mxu0
    %v1396 = vadd.f32 %v1314, %v1395
    %v1397 = vpop.f32.mrb[0].mxu0
    %1398 = vmatprep.mubr.f32.mxu0 0.0
    %v1399 = vand.u32 %v1147, 4294901760
    %v1400 = vsub.f32 %v1147, %v1399
    %1401 = vmatmul.mubr.f32.gmra.mrb[0].mxu0 %v1400
    %v1402 = vpop.f32.mrb[0].mxu0
    %v1403 = vadd.f32 %v1320, %v1402
    %v1404 = vpop.f32.mrb[0].mxu0
    %1405 = vdwg.mxu0
    %1406 = vmatprep.subr.mxu0 0.0
    %v1407 = vand.u32 %v124, 4294901760
    %1408 = vmatpush1.msra.mxu0 %v1407
    %1409 = vmatprep.subr.mxu0 0.0
    %v1410 = vand.u32 %v125, 4294901760
    %1411 = vmatpush1.msra.mxu0 %v1410
    %1412 = vmatprep.subr.mxu0 0.0
    %1413 = vmatpush1.msra.mxu0 0.0
    %1414 = vmatprep.subr.mxu0 0.0
    %1415 = vmatpush1.msra.mxu0 0.0
    %1416 = vmatprep.subr.mxu0 0.0
    %1417 = vmatpush1.msra.mxu0 0.0
    %1418 = vmatprep.subr.mxu0 0.0
    %1419 = vmatpush1.msra.mxu0 0.0
    %1420 = vmatprep.subr.mxu0 0.0
    %1421 = vmatpush1.msra.mxu0 0.0
    %1422 = vmatprep.subr.mxu0 0.0
    %1423 = vmatpush1.msra.mxu0 0.0
    %1424 = vmatprep.subr.mxu0 0.0
    %1425 = vmatpush1.msra.mxu0 0.0
    %1426 = vmatprep.subr.mxu0 0.0
    %1427 = vmatpush1.msra.mxu0 0.0
    %1428 = vmatprep.subr.mxu0 0.0
    %1429 = vmatpush1.msra.mxu0 0.0
    %1430 = vmatprep.subr.mxu0 0.0
    %1431 = vmatpush1.msra.mxu0 0.0
    %1432 = vmatprep.subr.mxu0 0.0
    %1433 = vmatpush1.msra.mxu0 0.0
    %1434 = vmatprep.subr.mxu0 0.0
    %1435 = vmatpush1.msra.mxu0 0.0
    %1436 = vmatprep.subr.mxu0 0.0
    %1437 = vmatpush1.msra.mxu0 0.0
    %1438 = vmatprep.subr.mxu0 0.0
    %1439 = vmatpush1.msra.mxu0 0.0
    %1440 = vmatprep.subr.mxu0 0.0
    %1441 = vmatpush1.msra.mxu0 0.0
    %1442 = vmatprep.subr.mxu0 0.0
    %1443 = vmatpush1.msra.mxu0 0.0
    %1444 = vmatprep.subr.mxu0 0.0
    %1445 = vmatpush1.msra.mxu0 0.0
    %1446 = vmatprep.subr.mxu0 0.0
    %1447 = vmatpush1.msra.mxu0 0.0
    %1448 = vmatprep.subr.mxu0 0.0
    %1449 = vmatpush1.msra.mxu0 0.0
    %1450 = vmatprep.subr.mxu0 0.0
    %1451 = vmatpush1.msra.mxu0 0.0
    %1452 = vmatprep.subr.mxu0 0.0
    %1453 = vmatpush1.msra.mxu0 0.0
    %1454 = vmatprep.subr.mxu0 0.0
    %1455 = vmatpush1.msra.mxu0 0.0
    %1456 = vmatprep.subr.mxu0 0.0
    %1457 = vmatpush1.msra.mxu0 0.0
    %1458 = vmatprep.subr.mxu0 0.0
    %1459 = vmatpush1.msra.mxu0 0.0
    %1460 = vmatprep.subr.mxu0 0.0
    %1461 = vmatpush1.msra.mxu0 0.0
    %1462 = vmatprep.subr.mxu0 0.0
    %1463 = vmatpush1.msra.mxu0 0.0
    %1464 = vmatprep.subr.mxu0 0.0
    %1465 = vmatpush1.msra.mxu0 0.0
    %1466 = vmatprep.subr.mxu0 0.0
    %1467 = vmatpush1.msra.mxu0 0.0
    %1468 = vmatprep.subr.mxu0 0.0
    %1469 = vmatpush1.msra.mxu0 0.0
    %1470 = vmatprep.subr.mxu0 0.0
    %1471 = vmatpush1.msra.mxu0 0.0
    %1472 = vmatprep.mubr.f32.mxu0 0.0
    %v1473 = vand.u32 %v1144, 4294901760
    %v1474 = vsub.f32 %v1144, %v1473
    %v1475 = vand.u32 %v1474, 4294901760
    %1476 = vmatmul.mubr.f32.gmra.mrb[0].mxu0 %v1475
    %v1477 = vpop.f32.mrb[0].mxu0
    %v1478 = vadd.f32 %v1396, %v1477
    %v1479 = vpop.f32.mrb[0].mxu0
    %1480 = vmatprep.mubr.f32.mxu0 0.0
    %v1481 = vand.u32 %v1147, 4294901760
    %v1482 = vsub.f32 %v1147, %v1481
    %v1483 = vand.u32 %v1482, 4294901760
    %1484 = vmatmul.mubr.f32.gmra.mrb[0].mxu0 %v1483
    %v1485 = vpop.f32.mrb[0].mxu0
    %v1486 = vadd.f32 %v1403, %v1485
    %v1487 = vpop.f32.mrb[0].mxu0
    %1488 = vdwg.mxu0
    %1489 = vmatprep.subr.mxu0 0.0
    %v1490 = vand.u32 %v124, 4294901760
    %v1491 = vsub.f32 %v124, %v1490
    %v1492 = vand.u32 %v1491, 4294901760
    %1493 = vmatpush1.msra.mxu0 %v1492
    %1494 = vmatprep.subr.mxu0 0.0
    %v1495 = vand.u32 %v125, 4294901760
    %v1496 = vsub.f32 %v125, %v1495
    %v1497 = vand.u32 %v1496, 4294901760
    %1498 = vmatpush1.msra.mxu0 %v1497
    %1499 = vmatprep.subr.mxu0 0.0
    %1500 = vmatpush1.msra.mxu0 0.0
    %1501 = vmatprep.subr.mxu0 0.0
    %1502 = vmatpush1.msra.mxu0 0.0
    %1503 = vmatprep.subr.mxu0 0.0
    %1504 = vmatpush1.msra.mxu0 0.0
    %1505 = vmatprep.subr.mxu0 0.0
    %1506 = vmatpush1.msra.mxu0 0.0
    %1507 = vmatprep.subr.mxu0 0.0
    %1508 = vmatpush1.msra.mxu0 0.0
    %1509 = vmatprep.subr.mxu0 0.0
    %1510 = vmatpush1.msra.mxu0 0.0
    %1511 = vmatprep.subr.mxu0 0.0
    %1512 = vmatpush1.msra.mxu0 0.0
    %1513 = vmatprep.subr.mxu0 0.0
    %1514 = vmatpush1.msra.mxu0 0.0
    %1515 = vmatprep.subr.mxu0 0.0
    %1516 = vmatpush1.msra.mxu0 0.0
    %1517 = vmatprep.subr.mxu0 0.0
    %1518 = vmatpush1.msra.mxu0 0.0
    %1519 = vmatprep.subr.mxu0 0.0
    %1520 = vmatpush1.msra.mxu0 0.0
    %1521 = vmatprep.subr.mxu0 0.0
    %1522 = vmatpush1.msra.mxu0 0.0
    %1523 = vmatprep.subr.mxu0 0.0
    %1524 = vmatpush1.msra.mxu0 0.0
    %1525 = vmatprep.subr.mxu0 0.0
    %1526 = vmatpush1.msra.mxu0 0.0
    %1527 = vmatprep.subr.mxu0 0.0
    %1528 = vmatpush1.msra.mxu0 0.0
    %1529 = vmatprep.subr.mxu0 0.0
    %1530 = vmatpush1.msra.mxu0 0.0
    %1531 = vmatprep.subr.mxu0 0.0
    %1532 = vmatpush1.msra.mxu0 0.0
    %1533 = vmatprep.subr.mxu0 0.0
    %1534 = vmatpush1.msra.mxu0 0.0
    %1535 = vmatprep.subr.mxu0 0.0
    %1536 = vmatpush1.msra.mxu0 0.0
    %1537 = vmatprep.subr.mxu0 0.0
    %1538 = vmatpush1.msra.mxu0 0.0
    %1539 = vmatprep.subr.mxu0 0.0
    %1540 = vmatpush1.msra.mxu0 0.0
    %1541 = vmatprep.subr.mxu0 0.0
    %1542 = vmatpush1.msra.mxu0 0.0
    %1543 = vmatprep.subr.mxu0 0.0
    %1544 = vmatpush1.msra.mxu0 0.0
    %1545 = vmatprep.subr.mxu0 0.0
    %1546 = vmatpush1.msra.mxu0 0.0
    %1547 = vmatprep.subr.mxu0 0.0
    %1548 = vmatpush1.msra.mxu0 0.0
    %1549 = vmatprep.subr.mxu0 0.0
    %1550 = vmatpush1.msra.mxu0 0.0
    %1551 = vmatprep.subr.mxu0 0.0
    %1552 = vmatpush1.msra.mxu0 0.0
    %1553 = vmatprep.subr.mxu0 0.0
    %1554 = vmatpush1.msra.mxu0 0.0
    %1555 = vmatprep.subr.mxu0 0.0
    %1556 = vmatpush1.msra.mxu0 0.0
    %1557 = vmatprep.subr.mxu0 0.0
    %1558 = vmatpush1.msra.mxu0 0.0
    %1559 = vmatprep.mubr.f32.mxu0 0.0
    %v1560 = vand.u32 %v1144, 4294901760
    %1561 = vmatmul.mubr.f32.gmra.mrb[0].mxu0 %v1560
    %v1562 = vpop.f32.mrb[0].mxu0
    %v1563 = vadd.f32 %v1478, %v1562
    %v1564 = vpop.f32.mrb[0].mxu0
    %1565 = vmatprep.mubr.f32.mxu0 0.0
    %v1566 = vand.u32 %v1147, 4294901760
    %1567 = vmatmul.mubr.f32.gmra.mrb[0].mxu0 %v1566
    %v1568 = vpop.f32.mrb[0].mxu0
    %v1569 = vadd.f32 %v1486, %v1568
    %v1570 = vpop.f32.mrb[0].mxu0
    %1571 = vdwg.mxu0
    %1572 = vmatprep.subr.mxu0 0.0
    %v1573 = vand.u32 %v124, 4294901760
    %1574 = vmatpush1.msra.mxu0 %v1573
    %1575 = vmatprep.subr.mxu0 0.0
    %v1576 = vand.u32 %v125, 4294901760
    %1577 = vmatpush1.msra.mxu0 %v1576
    %1578 = vmatprep.subr.mxu0 0.0
    %1579 = vmatpush1.msra.mxu0 0.0
    %1580 = vmatprep.subr.mxu0 0.0
    %1581 = vmatpush1.msra.mxu0 0.0
    %1582 = vmatprep.subr.mxu0 0.0
    %1583 = vmatpush1.msra.mxu0 0.0
    %1584 = vmatprep.subr.mxu0 0.0
    %1585 = vmatpush1.msra.mxu0 0.0
    %1586 = vmatprep.subr.mxu0 0.0
    %1587 = vmatpush1.msra.mxu0 0.0
    %1588 = vmatprep.subr.mxu0 0.0
    %1589 = vmatpush1.msra.mxu0 0.0
    %1590 = vmatprep.subr.mxu0 0.0
    %1591 = vmatpush1.msra.mxu0 0.0
    %1592 = vmatprep.subr.mxu0 0.0
    %1593 = vmatpush1.msra.mxu0 0.0
    %1594 = vmatprep.subr.mxu0 0.0
    %1595 = vmatpush1.msra.mxu0 0.0
    %1596 = vmatprep.subr.mxu0 0.0
    %1597 = vmatpush1.msra.mxu0 0.0
    %1598 = vmatprep.subr.mxu0 0.0
    %1599 = vmatpush1.msra.mxu0 0.0
    %1600 = vmatprep.subr.mxu0 0.0
    %1601 = vmatpush1.msra.mxu0 0.0
    %1602 = vmatprep.subr.mxu0 0.0
    %1603 = vmatpush1.msra.mxu0 0.0
    %1604 = vmatprep.subr.mxu0 0.0
    %1605 = vmatpush1.msra.mxu0 0.0
    %1606 = vmatprep.subr.mxu0 0.0
    %1607 = vmatpush1.msra.mxu0 0.0
    %1608 = vmatprep.subr.mxu0 0.0
    %1609 = vmatpush1.msra.mxu0 0.0
    %1610 = vmatprep.subr.mxu0 0.0
    %1611 = vmatpush1.msra.mxu0 0.0
    %1612 = vmatprep.subr.mxu0 0.0
    %1613 = vmatpush1.msra.mxu0 0.0
    %1614 = vmatprep.subr.mxu0 0.0
    %1615 = vmatpush1.msra.mxu0 0.0
    %1616 = vmatprep.subr.mxu0 0.0
    %1617 = vmatpush1.msra.mxu0 0.0
    %1618 = vmatprep.subr.mxu0 0.0
    %1619 = vmatpush1.msra.mxu0 0.0
    %1620 = vmatprep.subr.mxu0 0.0
    %1621 = vmatpush1.msra.mxu0 0.0
    %1622 = vmatprep.subr.mxu0 0.0
    %1623 = vmatpush1.msra.mxu0 0.0
    %1624 = vmatprep.subr.mxu0 0.0
    %1625 = vmatpush1.msra.mxu0 0.0
    %1626 = vmatprep.subr.mxu0 0.0
    %1627 = vmatpush1.msra.mxu0 0.0
    %1628 = vmatprep.subr.mxu0 0.0
    %1629 = vmatpush1.msra.mxu0 0.0
    %1630 = vmatprep.subr.mxu0 0.0
    %1631 = vmatpush1.msra.mxu0 0.0
    %1632 = vmatprep.subr.mxu0 0.0
    %1633 = vmatpush1.msra.mxu0 0.0
    %1634 = vmatprep.subr.mxu0 0.0
    %1635 = vmatpush1.msra.mxu0 0.0
    %1636 = vmatprep.subr.mxu0 0.0
    %1637 = vmatpush1.msra.mxu0 0.0
    %1638 = vmatprep.mubr.f32.mxu0 0.0
    %v1639 = vand.u32 %v1144, 4294901760
    %1640 = vmatmul.mubr.f32.gmra.mrb[0].mxu0 %v1639
    %v1641 = vpop.f32.mrb[0].mxu0
    %v1642 = vadd.f32 %v1563, %v1641
    %v1643 = vpop.f32.mrb[0].mxu0
    %1644 = vmatprep.mubr.f32.mxu0 0.0
    %v1645 = vand.u32 %v1147, 4294901760
    %1646 = vmatmul.mubr.f32.gmra.mrb[0].mxu0 %v1645
    %v1647 = vpop.f32.mrb[0].mxu0
    %v1648 = vadd.f32 %v1569, %v1647
    %v1649 = vpop.f32.mrb[0].mxu0
    %1650 = vdwg.mxu0
    %v1652 = vsel %vm126, %v29, 0
    %v1655 = vsel %vm126, %v30, 0
    %1657 = vmatprep.subr.mxu0 0.0
    %v1658 = vand.u32 %v124, 4294901760
    %1659 = vmatpush1.msra.mxu0 %v1658
    %1660 = vmatprep.subr.mxu0 0.0
    %v1661 = vand.u32 %v125, 4294901760
    %1662 = vmatpush1.msra.mxu0 %v1661
    %1663 = vmatprep.subr.mxu0 0.0
    %1664 = vmatpush1.msra.mxu0 0.0
    %1665 = vmatprep.subr.mxu0 0.0
    %1666 = vmatpush1.msra.mxu0 0.0
    %1667 = vmatprep.subr.mxu0 0.0
    %1668 = vmatpush1.msra.mxu0 0.0
    %1669 = vmatprep.subr.mxu0 0.0
    %1670 = vmatpush1.msra.mxu0 0.0
    %1671 = vmatprep.subr.mxu0 0.0
    %1672 = vmatpush1.msra.mxu0 0.0
    %1673 = vmatprep.subr.mxu0 0.0
    %1674 = vmatpush1.msra.mxu0 0.0
    %1675 = vmatprep.subr.mxu0 0.0
    %1676 = vmatpush1.msra.mxu0 0.0
    %1677 = vmatprep.subr.mxu0 0.0
    %1678 = vmatpush1.msra.mxu0 0.0
    %1679 = vmatprep.subr.mxu0 0.0
    %1680 = vmatpush1.msra.mxu0 0.0
    %1681 = vmatprep.subr.mxu0 0.0
    %1682 = vmatpush1.msra.mxu0 0.0
    %1683 = vmatprep.subr.mxu0 0.0
    %1684 = vmatpush1.msra.mxu0 0.0
    %1685 = vmatprep.subr.mxu0 0.0
    %1686 = vmatpush1.msra.mxu0 0.0
    %1687 = vmatprep.subr.mxu0 0.0
    %1688 = vmatpush1.msra.mxu0 0.0
    %1689 = vmatprep.subr.mxu0 0.0
    %1690 = vmatpush1.msra.mxu0 0.0
    %1691 = vmatprep.subr.mxu0 0.0
    %1692 = vmatpush1.msra.mxu0 0.0
    %1693 = vmatprep.subr.mxu0 0.0
    %1694 = vmatpush1.msra.mxu0 0.0
    %1695 = vmatprep.subr.mxu0 0.0
    %1696 = vmatpush1.msra.mxu0 0.0
    %1697 = vmatprep.subr.mxu0 0.0
    %1698 = vmatpush1.msra.mxu0 0.0
    %1699 = vmatprep.subr.mxu0 0.0
    %1700 = vmatpush1.msra.mxu0 0.0
    %1701 = vmatprep.subr.mxu0 0.0
    %1702 = vmatpush1.msra.mxu0 0.0
    %1703 = vmatprep.subr.mxu0 0.0
    %1704 = vmatpush1.msra.mxu0 0.0
    %1705 = vmatprep.subr.mxu0 0.0
    %1706 = vmatpush1.msra.mxu0 0.0
    %1707 = vmatprep.subr.mxu0 0.0
    %1708 = vmatpush1.msra.mxu0 0.0
    %1709 = vmatprep.subr.mxu0 0.0
    %1710 = vmatpush1.msra.mxu0 0.0
    %1711 = vmatprep.subr.mxu0 0.0
    %1712 = vmatpush1.msra.mxu0 0.0
    %1713 = vmatprep.subr.mxu0 0.0
    %1714 = vmatpush1.msra.mxu0 0.0
    %1715 = vmatprep.subr.mxu0 0.0
    %1716 = vmatpush1.msra.mxu0 0.0
    %1717 = vmatprep.subr.mxu0 0.0
    %1718 = vmatpush1.msra.mxu0 0.0
    %1719 = vmatprep.subr.mxu0 0.0
    %1720 = vmatpush1.msra.mxu0 0.0
    %1721 = vmatprep.subr.mxu0 0.0
    %1722 = vmatpush1.msra.mxu0 0.0
    %1723 = vmatprep.mubr.f32.mxu0 0.0
    %v1724 = vand.u32 %v1652, 4294901760
    %v1725 = vsub.f32 %v1652, %v1724
    %v1726 = vand.u32 %v1725, 4294901760
    %v1727 = vsub.f32 %v1725, %v1726
    %v1728 = vand.u32 %v1727, 4294901760
    %1729 = vmatmul.mubr.f32.gmra.mrb[0].mxu0 %v1728
    %v1730 = vpop.f32.mrb[0].mxu0
    %v1731 = vadd.f32 0.0, %v1730
    %v1732 = vpop.f32.mrb[0].mxu0
    %1733 = vmatprep.mubr.f32.mxu0 0.0
    %v1734 = vand.u32 %v1655, 4294901760
    %v1735 = vsub.f32 %v1655, %v1734
    %v1736 = vand.u32 %v1735, 4294901760
    %v1737 = vsub.f32 %v1735, %v1736
    %v1738 = vand.u32 %v1737, 4294901760
    %1739 = vmatmul.mubr.f32.gmra.mrb[0].mxu0 %v1738
    %v1740 = vpop.f32.mrb[0].mxu0
    %v1741 = vadd.f32 0.0, %v1740
    %v1742 = vpop.f32.mrb[0].mxu0
    %1743 = vdwg.mxu0
    %1744 = vmatprep.subr.mxu0 0.0
    %v1745 = vand.u32 %v124, 4294901760
    %v1746 = vsub.f32 %v124, %v1745
    %v1747 = vand.u32 %v1746, 4294901760
    %v1748 = vsub.f32 %v1746, %v1747
    %v1749 = vand.u32 %v1748, 4294901760
    %1750 = vmatpush1.msra.mxu0 %v1749
    %1751 = vmatprep.subr.mxu0 0.0
    %v1752 = vand.u32 %v125, 4294901760
    %v1753 = vsub.f32 %v125, %v1752
    %v1754 = vand.u32 %v1753, 4294901760
    %v1755 = vsub.f32 %v1753, %v1754
    %v1756 = vand.u32 %v1755, 4294901760
    %1757 = vmatpush1.msra.mxu0 %v1756
    %1758 = vmatprep.subr.mxu0 0.0
    %1759 = vmatpush1.msra.mxu0 0.0
    %1760 = vmatprep.subr.mxu0 0.0
    %1761 = vmatpush1.msra.mxu0 0.0
    %1762 = vmatprep.subr.mxu0 0.0
    %1763 = vmatpush1.msra.mxu0 0.0
    %1764 = vmatprep.subr.mxu0 0.0
    %1765 = vmatpush1.msra.mxu0 0.0
    %1766 = vmatprep.subr.mxu0 0.0
    %1767 = vmatpush1.msra.mxu0 0.0
    %1768 = vmatprep.subr.mxu0 0.0
    %1769 = vmatpush1.msra.mxu0 0.0
    %1770 = vmatprep.subr.mxu0 0.0
    %1771 = vmatpush1.msra.mxu0 0.0
    %1772 = vmatprep.subr.mxu0 0.0
    %1773 = vmatpush1.msra.mxu0 0.0
    %1774 = vmatprep.subr.mxu0 0.0
    %1775 = vmatpush1.msra.mxu0 0.0
    %1776 = vmatprep.subr.mxu0 0.0
    %1777 = vmatpush1.msra.mxu0 0.0
    %1778 = vmatprep.subr.mxu0 0.0
    %1779 = vmatpush1.msra.mxu0 0.0
    %1780 = vmatprep.subr.mxu0 0.0
    %1781 = vmatpush1.msra.mxu0 0.0
    %1782 = vmatprep.subr.mxu0 0.0
    %1783 = vmatpush1.msra.mxu0 0.0
    %1784 = vmatprep.subr.mxu0 0.0
    %1785 = vmatpush1.msra.mxu0 0.0
    %1786 = vmatprep.subr.mxu0 0.0
    %1787 = vmatpush1.msra.mxu0 0.0
    %1788 = vmatprep.subr.mxu0 0.0
    %1789 = vmatpush1.msra.mxu0 0.0
    %1790 = vmatprep.subr.mxu0 0.0
    %1791 = vmatpush1.msra.mxu0 0.0
    %1792 = vmatprep.subr.mxu0 0.0
    %1793 = vmatpush1.msra.mxu0 0.0
    %1794 = vmatprep.subr.mxu0 0.0
    %1795 = vmatpush1.msra.mxu0 0.0
    %1796 = vmatprep.subr.mxu0 0.0
    %1797 = vmatpush1.msra.mxu0 0.0
    %1798 = vmatprep.subr.mxu0 0.0
    %1799 = vmatpush1.msra.mxu0 0.0
    %1800 = vmatprep.subr.mxu0 0.0
    %1801 = vmatpush1.msra.mxu0 0.0
    %1802 = vmatprep.subr.mxu0 0.0
    %1803 = vmatpush1.msra.mxu0 0.0
    %1804 = vmatprep.subr.mxu0 0.0
    %1805 = vmatpush1.msra.mxu0 0.0
    %1806 = vmatprep.subr.mxu0 0.0
    %1807 = vmatpush1.msra.mxu0 0.0
    %1808 = vmatprep.subr.mxu0 0.0
    %1809 = vmatpush1.msra.mxu0 0.0
    %1810 = vmatprep.subr.mxu0 0.0
    %1811 = vmatpush1.msra.mxu0 0.0
    %1812 = vmatprep.subr.mxu0 0.0
    %1813 = vmatpush1.msra.mxu0 0.0
    %1814 = vmatprep.subr.mxu0 0.0
    %1815 = vmatpush1.msra.mxu0 0.0
    %1816 = vmatprep.subr.mxu0 0.0
    %1817 = vmatpush1.msra.mxu0 0.0
    %1818 = vmatprep.mubr.f32.mxu0 0.0
    %v1819 = vand.u32 %v1652, 4294901760
    %1820 = vmatmul.mubr.f32.gmra.mrb[0].mxu0 %v1819
    %v1821 = vpop.f32.mrb[0].mxu0
    %v1822 = vadd.f32 %v1731, %v1821
    %v1823 = vpop.f32.mrb[0].mxu0
    %1824 = vmatprep.mubr.f32.mxu0 0.0
    %v1825 = vand.u32 %v1655, 4294901760
    %1826 = vmatmul.mubr.f32.gmra.mrb[0].mxu0 %v1825
    %v1827 = vpop.f32.mrb[0].mxu0
    %v1828 = vadd.f32 %v1741, %v1827
    %v1829 = vpop.f32.mrb[0].mxu0
    %1830 = vdwg.mxu0
    %1831 = vmatprep.subr.mxu0 0.0
    %v1832 = vand.u32 %v124, 4294901760
    %v1833 = vsub.f32 %v124, %v1832
    %1834 = vmatpush1.msra.mxu0 %v1833
    %1835 = vmatprep.subr.mxu0 0.0
    %v1836 = vand.u32 %v125, 4294901760
    %v1837 = vsub.f32 %v125, %v1836
    %1838 = vmatpush1.msra.mxu0 %v1837
    %1839 = vmatprep.subr.mxu0 0.0
    %1840 = vmatpush1.msra.mxu0 0.0
    %1841 = vmatprep.subr.mxu0 0.0
    %1842 = vmatpush1.msra.mxu0 0.0
    %1843 = vmatprep.subr.mxu0 0.0
    %1844 = vmatpush1.msra.mxu0 0.0
    %1845 = vmatprep.subr.mxu0 0.0
    %1846 = vmatpush1.msra.mxu0 0.0
    %1847 = vmatprep.subr.mxu0 0.0
    %1848 = vmatpush1.msra.mxu0 0.0
    %1849 = vmatprep.subr.mxu0 0.0
    %1850 = vmatpush1.msra.mxu0 0.0
    %1851 = vmatprep.subr.mxu0 0.0
    %1852 = vmatpush1.msra.mxu0 0.0
    %1853 = vmatprep.subr.mxu0 0.0
    %1854 = vmatpush1.msra.mxu0 0.0
    %1855 = vmatprep.subr.mxu0 0.0
    %1856 = vmatpush1.msra.mxu0 0.0
    %1857 = vmatprep.subr.mxu0 0.0
    %1858 = vmatpush1.msra.mxu0 0.0
    %1859 = vmatprep.subr.mxu0 0.0
    %1860 = vmatpush1.msra.mxu0 0.0
    %1861 = vmatprep.subr.mxu0 0.0
    %1862 = vmatpush1.msra.mxu0 0.0
    %1863 = vmatprep.subr.mxu0 0.0
    %1864 = vmatpush1.msra.mxu0 0.0
    %1865 = vmatprep.subr.mxu0 0.0
    %1866 = vmatpush1.msra.mxu0 0.0
    %1867 = vmatprep.subr.mxu0 0.0
    %1868 = vmatpush1.msra.mxu0 0.0
    %1869 = vmatprep.subr.mxu0 0.0
    %1870 = vmatpush1.msra.mxu0 0.0
    %1871 = vmatprep.subr.mxu0 0.0
    %1872 = vmatpush1.msra.mxu0 0.0
    %1873 = vmatprep.subr.mxu0 0.0
    %1874 = vmatpush1.msra.mxu0 0.0
    %1875 = vmatprep.subr.mxu0 0.0
    %1876 = vmatpush1.msra.mxu0 0.0
    %1877 = vmatprep.subr.mxu0 0.0
    %1878 = vmatpush1.msra.mxu0 0.0
    %1879 = vmatprep.subr.mxu0 0.0
    %1880 = vmatpush1.msra.mxu0 0.0
    %1881 = vmatprep.subr.mxu0 0.0
    %1882 = vmatpush1.msra.mxu0 0.0
    %1883 = vmatprep.subr.mxu0 0.0
    %1884 = vmatpush1.msra.mxu0 0.0
    %1885 = vmatprep.subr.mxu0 0.0
    %1886 = vmatpush1.msra.mxu0 0.0
    %1887 = vmatprep.subr.mxu0 0.0
    %1888 = vmatpush1.msra.mxu0 0.0
    %1889 = vmatprep.subr.mxu0 0.0
    %1890 = vmatpush1.msra.mxu0 0.0
    %1891 = vmatprep.subr.mxu0 0.0
    %1892 = vmatpush1.msra.mxu0 0.0
    %1893 = vmatprep.subr.mxu0 0.0
    %1894 = vmatpush1.msra.mxu0 0.0
    %1895 = vmatprep.subr.mxu0 0.0
    %1896 = vmatpush1.msra.mxu0 0.0
    %1897 = vmatprep.subr.mxu0 0.0
    %1898 = vmatpush1.msra.mxu0 0.0
    %1899 = vmatprep.mubr.f32.mxu0 0.0
    %v1900 = vand.u32 %v1652, 4294901760
    %v1901 = vsub.f32 %v1652, %v1900
    %1902 = vmatmul.mubr.f32.gmra.mrb[0].mxu0 %v1901
    %v1903 = vpop.f32.mrb[0].mxu0
    %v1904 = vadd.f32 %v1822, %v1903
    %v1905 = vpop.f32.mrb[0].mxu0
    %1906 = vmatprep.mubr.f32.mxu0 0.0
    %v1907 = vand.u32 %v1655, 4294901760
    %v1908 = vsub.f32 %v1655, %v1907
    %1909 = vmatmul.mubr.f32.gmra.mrb[0].mxu0 %v1908
    %v1910 = vpop.f32.mrb[0].mxu0
    %v1911 = vadd.f32 %v1828, %v1910
    %v1912 = vpop.f32.mrb[0].mxu0
    %1913 = vdwg.mxu0
    %1914 = vmatprep.subr.mxu0 0.0
    %v1915 = vand.u32 %v124, 4294901760
    %1916 = vmatpush1.msra.mxu0 %v1915
    %1917 = vmatprep.subr.mxu0 0.0
    %v1918 = vand.u32 %v125, 4294901760
    %1919 = vmatpush1.msra.mxu0 %v1918
    %1920 = vmatprep.subr.mxu0 0.0
    %1921 = vmatpush1.msra.mxu0 0.0
    %1922 = vmatprep.subr.mxu0 0.0
    %1923 = vmatpush1.msra.mxu0 0.0
    %1924 = vmatprep.subr.mxu0 0.0
    %1925 = vmatpush1.msra.mxu0 0.0
    %1926 = vmatprep.subr.mxu0 0.0
    %1927 = vmatpush1.msra.mxu0 0.0
    %1928 = vmatprep.subr.mxu0 0.0
    %1929 = vmatpush1.msra.mxu0 0.0
    %1930 = vmatprep.subr.mxu0 0.0
    %1931 = vmatpush1.msra.mxu0 0.0
    %1932 = vmatprep.subr.mxu0 0.0
    %1933 = vmatpush1.msra.mxu0 0.0
    %1934 = vmatprep.subr.mxu0 0.0
    %1935 = vmatpush1.msra.mxu0 0.0
    %1936 = vmatprep.subr.mxu0 0.0
    %1937 = vmatpush1.msra.mxu0 0.0
    %1938 = vmatprep.subr.mxu0 0.0
    %1939 = vmatpush1.msra.mxu0 0.0
    %1940 = vmatprep.subr.mxu0 0.0
    %1941 = vmatpush1.msra.mxu0 0.0
    %1942 = vmatprep.subr.mxu0 0.0
    %1943 = vmatpush1.msra.mxu0 0.0
    %1944 = vmatprep.subr.mxu0 0.0
    %1945 = vmatpush1.msra.mxu0 0.0
    %1946 = vmatprep.subr.mxu0 0.0
    %1947 = vmatpush1.msra.mxu0 0.0
    %1948 = vmatprep.subr.mxu0 0.0
    %1949 = vmatpush1.msra.mxu0 0.0
    %1950 = vmatprep.subr.mxu0 0.0
    %1951 = vmatpush1.msra.mxu0 0.0
    %1952 = vmatprep.subr.mxu0 0.0
    %1953 = vmatpush1.msra.mxu0 0.0
    %1954 = vmatprep.subr.mxu0 0.0
    %1955 = vmatpush1.msra.mxu0 0.0
    %1956 = vmatprep.subr.mxu0 0.0
    %1957 = vmatpush1.msra.mxu0 0.0
    %1958 = vmatprep.subr.mxu0 0.0
    %1959 = vmatpush1.msra.mxu0 0.0
    %1960 = vmatprep.subr.mxu0 0.0
    %1961 = vmatpush1.msra.mxu0 0.0
    %1962 = vmatprep.subr.mxu0 0.0
    %1963 = vmatpush1.msra.mxu0 0.0
    %1964 = vmatprep.subr.mxu0 0.0
    %1965 = vmatpush1.msra.mxu0 0.0
    %1966 = vmatprep.subr.mxu0 0.0
    %1967 = vmatpush1.msra.mxu0 0.0
    %1968 = vmatprep.subr.mxu0 0.0
    %1969 = vmatpush1.msra.mxu0 0.0
    %1970 = vmatprep.subr.mxu0 0.0
    %1971 = vmatpush1.msra.mxu0 0.0
    %1972 = vmatprep.subr.mxu0 0.0
    %1973 = vmatpush1.msra.mxu0 0.0
    %1974 = vmatprep.subr.mxu0 0.0
    %1975 = vmatpush1.msra.mxu0 0.0
    %1976 = vmatprep.subr.mxu0 0.0
    %1977 = vmatpush1.msra.mxu0 0.0
    %1978 = vmatprep.subr.mxu0 0.0
    %1979 = vmatpush1.msra.mxu0 0.0
    %1980 = vmatprep.mubr.f32.mxu0 0.0
    %v1981 = vand.u32 %v1652, 4294901760
    %v1982 = vsub.f32 %v1652, %v1981
    %v1983 = vand.u32 %v1982, 4294901760
    %1984 = vmatmul.mubr.f32.gmra.mrb[0].mxu0 %v1983
    %v1985 = vpop.f32.mrb[0].mxu0
    %v1986 = vadd.f32 %v1904, %v1985
    %v1987 = vpop.f32.mrb[0].mxu0
    %1988 = vmatprep.mubr.f32.mxu0 0.0
    %v1989 = vand.u32 %v1655, 4294901760
    %v1990 = vsub.f32 %v1655, %v1989
    %v1991 = vand.u32 %v1990, 4294901760
    %1992 = vmatmul.mubr.f32.gmra.mrb[0].mxu0 %v1991
    %v1993 = vpop.f32.mrb[0].mxu0
    %v1994 = vadd.f32 %v1911, %v1993
    %v1995 = vpop.f32.mrb[0].mxu0
    %1996 = vdwg.mxu0
    %1997 = vmatprep.subr.mxu0 0.0
    %v1998 = vand.u32 %v124, 4294901760
    %v1999 = vsub.f32 %v124, %v1998
    %v2000 = vand.u32 %v1999, 4294901760
    %2001 = vmatpush1.msra.mxu0 %v2000
    %2002 = vmatprep.subr.mxu0 0.0
    %v2003 = vand.u32 %v125, 4294901760
    %v2004 = vsub.f32 %v125, %v2003
    %v2005 = vand.u32 %v2004, 4294901760
    %2006 = vmatpush1.msra.mxu0 %v2005
    %2007 = vmatprep.subr.mxu0 0.0
    %2008 = vmatpush1.msra.mxu0 0.0
    %2009 = vmatprep.subr.mxu0 0.0
    %2010 = vmatpush1.msra.mxu0 0.0
    %2011 = vmatprep.subr.mxu0 0.0
    %2012 = vmatpush1.msra.mxu0 0.0
    %2013 = vmatprep.subr.mxu0 0.0
    %2014 = vmatpush1.msra.mxu0 0.0
    %2015 = vmatprep.subr.mxu0 0.0
    %2016 = vmatpush1.msra.mxu0 0.0
    %2017 = vmatprep.subr.mxu0 0.0
    %2018 = vmatpush1.msra.mxu0 0.0
    %2019 = vmatprep.subr.mxu0 0.0
    %2020 = vmatpush1.msra.mxu0 0.0
    %2021 = vmatprep.subr.mxu0 0.0
    %2022 = vmatpush1.msra.mxu0 0.0
    %2023 = vmatprep.subr.mxu0 0.0
    %2024 = vmatpush1.msra.mxu0 0.0
    %2025 = vmatprep.subr.mxu0 0.0
    %2026 = vmatpush1.msra.mxu0 0.0
    %2027 = vmatprep.subr.mxu0 0.0
    %2028 = vmatpush1.msra.mxu0 0.0
    %2029 = vmatprep.subr.mxu0 0.0
    %2030 = vmatpush1.msra.mxu0 0.0
    %2031 = vmatprep.subr.mxu0 0.0
    %2032 = vmatpush1.msra.mxu0 0.0
    %2033 = vmatprep.subr.mxu0 0.0
    %2034 = vmatpush1.msra.mxu0 0.0
    %2035 = vmatprep.subr.mxu0 0.0
    %2036 = vmatpush1.msra.mxu0 0.0
    %2037 = vmatprep.subr.mxu0 0.0
    %2038 = vmatpush1.msra.mxu0 0.0
    %2039 = vmatprep.subr.mxu0 0.0
    %2040 = vmatpush1.msra.mxu0 0.0
    %2041 = vmatprep.subr.mxu0 0.0
    %2042 = vmatpush1.msra.mxu0 0.0
    %2043 = vmatprep.subr.mxu0 0.0
    %2044 = vmatpush1.msra.mxu0 0.0
    %2045 = vmatprep.subr.mxu0 0.0
    %2046 = vmatpush1.msra.mxu0 0.0
    %2047 = vmatprep.subr.mxu0 0.0
    %2048 = vmatpush1.msra.mxu0 0.0
    %2049 = vmatprep.subr.mxu0 0.0
    %2050 = vmatpush1.msra.mxu0 0.0
    %2051 = vmatprep.subr.mxu0 0.0
    %2052 = vmatpush1.msra.mxu0 0.0
    %2053 = vmatprep.subr.mxu0 0.0
    %2054 = vmatpush1.msra.mxu0 0.0
    %2055 = vmatprep.subr.mxu0 0.0
    %2056 = vmatpush1.msra.mxu0 0.0
    %2057 = vmatprep.subr.mxu0 0.0
    %2058 = vmatpush1.msra.mxu0 0.0
    %2059 = vmatprep.subr.mxu0 0.0
    %2060 = vmatpush1.msra.mxu0 0.0
    %2061 = vmatprep.subr.mxu0 0.0
    %2062 = vmatpush1.msra.mxu0 0.0
    %2063 = vmatprep.subr.mxu0 0.0
    %2064 = vmatpush1.msra.mxu0 0.0
    %2065 = vmatprep.subr.mxu0 0.0
    %2066 = vmatpush1.msra.mxu0 0.0
    %2067 = vmatprep.mubr.f32.mxu0 0.0
    %v2068 = vand.u32 %v1652, 4294901760
    %2069 = vmatmul.mubr.f32.gmra.mrb[0].mxu0 %v2068
    %v2070 = vpop.f32.mrb[0].mxu0
    %v2071 = vadd.f32 %v1986, %v2070
    %v2072 = vpop.f32.mrb[0].mxu0
    %2073 = vmatprep.mubr.f32.mxu0 0.0
    %v2074 = vand.u32 %v1655, 4294901760
    %2075 = vmatmul.mubr.f32.gmra.mrb[0].mxu0 %v2074
    %v2076 = vpop.f32.mrb[0].mxu0
    %v2077 = vadd.f32 %v1994, %v2076
    %v2078 = vpop.f32.mrb[0].mxu0
    %2079 = vdwg.mxu0
    %2080 = vmatprep.subr.mxu0 0.0
    %v2081 = vand.u32 %v124, 4294901760
    %2082 = vmatpush1.msra.mxu0 %v2081
    %2083 = vmatprep.subr.mxu0 0.0
    %v2084 = vand.u32 %v125, 4294901760
    %2085 = vmatpush1.msra.mxu0 %v2084
    %2086 = vmatprep.subr.mxu0 0.0
    %2087 = vmatpush1.msra.mxu0 0.0
    %2088 = vmatprep.subr.mxu0 0.0
    %2089 = vmatpush1.msra.mxu0 0.0
    %2090 = vmatprep.subr.mxu0 0.0
    %2091 = vmatpush1.msra.mxu0 0.0
    %2092 = vmatprep.subr.mxu0 0.0
    %2093 = vmatpush1.msra.mxu0 0.0
    %2094 = vmatprep.subr.mxu0 0.0
    %2095 = vmatpush1.msra.mxu0 0.0
    %2096 = vmatprep.subr.mxu0 0.0
    %2097 = vmatpush1.msra.mxu0 0.0
    %2098 = vmatprep.subr.mxu0 0.0
    %2099 = vmatpush1.msra.mxu0 0.0
    %2100 = vmatprep.subr.mxu0 0.0
    %2101 = vmatpush1.msra.mxu0 0.0
    %2102 = vmatprep.subr.mxu0 0.0
    %2103 = vmatpush1.msra.mxu0 0.0
    %2104 = vmatprep.subr.mxu0 0.0
    %2105 = vmatpush1.msra.mxu0 0.0
    %2106 = vmatprep.subr.mxu0 0.0
    %2107 = vmatpush1.msra.mxu0 0.0
    %2108 = vmatprep.subr.mxu0 0.0
    %2109 = vmatpush1.msra.mxu0 0.0
    %2110 = vmatprep.subr.mxu0 0.0
    %2111 = vmatpush1.msra.mxu0 0.0
    %2112 = vmatprep.subr.mxu0 0.0
    %2113 = vmatpush1.msra.mxu0 0.0
    %2114 = vmatprep.subr.mxu0 0.0
    %2115 = vmatpush1.msra.mxu0 0.0
    %2116 = vmatprep.subr.mxu0 0.0
    %2117 = vmatpush1.msra.mxu0 0.0
    %2118 = vmatprep.subr.mxu0 0.0
    %2119 = vmatpush1.msra.mxu0 0.0
    %2120 = vmatprep.subr.mxu0 0.0
    %2121 = vmatpush1.msra.mxu0 0.0
    %2122 = vmatprep.subr.mxu0 0.0
    %2123 = vmatpush1.msra.mxu0 0.0
    %2124 = vmatprep.subr.mxu0 0.0
    %2125 = vmatpush1.msra.mxu0 0.0
    %2126 = vmatprep.subr.mxu0 0.0
    %2127 = vmatpush1.msra.mxu0 0.0
    %2128 = vmatprep.subr.mxu0 0.0
    %2129 = vmatpush1.msra.mxu0 0.0
    %2130 = vmatprep.subr.mxu0 0.0
    %2131 = vmatpush1.msra.mxu0 0.0
    %2132 = vmatprep.subr.mxu0 0.0
    %2133 = vmatpush1.msra.mxu0 0.0
    %2134 = vmatprep.subr.mxu0 0.0
    %2135 = vmatpush1.msra.mxu0 0.0
    %2136 = vmatprep.subr.mxu0 0.0
    %2137 = vmatpush1.msra.mxu0 0.0
    %2138 = vmatprep.subr.mxu0 0.0
    %2139 = vmatpush1.msra.mxu0 0.0
    %2140 = vmatprep.subr.mxu0 0.0
    %2141 = vmatpush1.msra.mxu0 0.0
    %2142 = vmatprep.subr.mxu0 0.0
    %2143 = vmatpush1.msra.mxu0 0.0
    %2144 = vmatprep.subr.mxu0 0.0
    %2145 = vmatpush1.msra.mxu0 0.0
    %2146 = vmatprep.mubr.f32.mxu0 0.0
    %v2147 = vand.u32 %v1652, 4294901760
    %2148 = vmatmul.mubr.f32.gmra.mrb[0].mxu0 %v2147
    %v2149 = vpop.f32.mrb[0].mxu0
    %v2150 = vadd.f32 %v2071, %v2149
    %v2151 = vpop.f32.mrb[0].mxu0
    %2152 = vmatprep.mubr.f32.mxu0 0.0
    %v2153 = vand.u32 %v1655, 4294901760
    %2154 = vmatmul.mubr.f32.gmra.mrb[0].mxu0 %v2153
    %v2155 = vpop.f32.mrb[0].mxu0
    %v2156 = vadd.f32 %v2077, %v2155
    %v2157 = vpop.f32.mrb[0].mxu0
    %2158 = vdwg.mxu0
    %v2160 = vsel %vm126, %v31, 0
    %v2163 = vsel %vm126, %v32, 0
    %2165 = vmatprep.subr.mxu0 0.0
    %v2166 = vand.u32 %v124, 4294901760
    %2167 = vmatpush1.msra.mxu0 %v2166
    %2168 = vmatprep.subr.mxu0 0.0
    %v2169 = vand.u32 %v125, 4294901760
    %2170 = vmatpush1.msra.mxu0 %v2169
    %2171 = vmatprep.subr.mxu0 0.0
    %2172 = vmatpush1.msra.mxu0 0.0
    %2173 = vmatprep.subr.mxu0 0.0
    %2174 = vmatpush1.msra.mxu0 0.0
    %2175 = vmatprep.subr.mxu0 0.0
    %2176 = vmatpush1.msra.mxu0 0.0
    %2177 = vmatprep.subr.mxu0 0.0
    %2178 = vmatpush1.msra.mxu0 0.0
    %2179 = vmatprep.subr.mxu0 0.0
    %2180 = vmatpush1.msra.mxu0 0.0
    %2181 = vmatprep.subr.mxu0 0.0
    %2182 = vmatpush1.msra.mxu0 0.0
    %2183 = vmatprep.subr.mxu0 0.0
    %2184 = vmatpush1.msra.mxu0 0.0
    %2185 = vmatprep.subr.mxu0 0.0
    %2186 = vmatpush1.msra.mxu0 0.0
    %2187 = vmatprep.subr.mxu0 0.0
    %2188 = vmatpush1.msra.mxu0 0.0
    %2189 = vmatprep.subr.mxu0 0.0
    %2190 = vmatpush1.msra.mxu0 0.0
    %2191 = vmatprep.subr.mxu0 0.0
    %2192 = vmatpush1.msra.mxu0 0.0
    %2193 = vmatprep.subr.mxu0 0.0
    %2194 = vmatpush1.msra.mxu0 0.0
    %2195 = vmatprep.subr.mxu0 0.0
    %2196 = vmatpush1.msra.mxu0 0.0
    %2197 = vmatprep.subr.mxu0 0.0
    %2198 = vmatpush1.msra.mxu0 0.0
    %2199 = vmatprep.subr.mxu0 0.0
    %2200 = vmatpush1.msra.mxu0 0.0
    %2201 = vmatprep.subr.mxu0 0.0
    %2202 = vmatpush1.msra.mxu0 0.0
    %2203 = vmatprep.subr.mxu0 0.0
    %2204 = vmatpush1.msra.mxu0 0.0
    %2205 = vmatprep.subr.mxu0 0.0
    %2206 = vmatpush1.msra.mxu0 0.0
    %2207 = vmatprep.subr.mxu0 0.0
    %2208 = vmatpush1.msra.mxu0 0.0
    %2209 = vmatprep.subr.mxu0 0.0
    %2210 = vmatpush1.msra.mxu0 0.0
    %2211 = vmatprep.subr.mxu0 0.0
    %2212 = vmatpush1.msra.mxu0 0.0
    %2213 = vmatprep.subr.mxu0 0.0
    %2214 = vmatpush1.msra.mxu0 0.0
    %2215 = vmatprep.subr.mxu0 0.0
    %2216 = vmatpush1.msra.mxu0 0.0
    %2217 = vmatprep.subr.mxu0 0.0
    %2218 = vmatpush1.msra.mxu0 0.0
    %2219 = vmatprep.subr.mxu0 0.0
    %2220 = vmatpush1.msra.mxu0 0.0
    %2221 = vmatprep.subr.mxu0 0.0
    %2222 = vmatpush1.msra.mxu0 0.0
    %2223 = vmatprep.subr.mxu0 0.0
    %2224 = vmatpush1.msra.mxu0 0.0
    %2225 = vmatprep.subr.mxu0 0.0
    %2226 = vmatpush1.msra.mxu0 0.0
    %2227 = vmatprep.subr.mxu0 0.0
    %2228 = vmatpush1.msra.mxu0 0.0
    %2229 = vmatprep.subr.mxu0 0.0
    %2230 = vmatpush1.msra.mxu0 0.0
    %2231 = vmatprep.mubr.f32.mxu0 0.0
    %v2232 = vand.u32 %v2160, 4294901760
    %v2233 = vsub.f32 %v2160, %v2232
    %v2234 = vand.u32 %v2233, 4294901760
    %v2235 = vsub.f32 %v2233, %v2234
    %v2236 = vand.u32 %v2235, 4294901760
    %2237 = vmatmul.mubr.f32.gmra.mrb[0].mxu0 %v2236
    %v2238 = vpop.f32.mrb[0].mxu0
    %v2239 = vadd.f32 0.0, %v2238
    %v2240 = vpop.f32.mrb[0].mxu0
    %2241 = vmatprep.mubr.f32.mxu0 0.0
    %v2242 = vand.u32 %v2163, 4294901760
    %v2243 = vsub.f32 %v2163, %v2242
    %v2244 = vand.u32 %v2243, 4294901760
    %v2245 = vsub.f32 %v2243, %v2244
    %v2246 = vand.u32 %v2245, 4294901760
    %2247 = vmatmul.mubr.f32.gmra.mrb[0].mxu0 %v2246
    %v2248 = vpop.f32.mrb[0].mxu0
    %v2249 = vadd.f32 0.0, %v2248
    %v2250 = vpop.f32.mrb[0].mxu0
    %2251 = vdwg.mxu0
    %2252 = vmatprep.subr.mxu0 0.0
    %v2253 = vand.u32 %v124, 4294901760
    %v2254 = vsub.f32 %v124, %v2253
    %v2255 = vand.u32 %v2254, 4294901760
    %v2256 = vsub.f32 %v2254, %v2255
    %v2257 = vand.u32 %v2256, 4294901760
    %2258 = vmatpush1.msra.mxu0 %v2257
    %2259 = vmatprep.subr.mxu0 0.0
    %v2260 = vand.u32 %v125, 4294901760
    %v2261 = vsub.f32 %v125, %v2260
    %v2262 = vand.u32 %v2261, 4294901760
    %v2263 = vsub.f32 %v2261, %v2262
    %v2264 = vand.u32 %v2263, 4294901760
    %2265 = vmatpush1.msra.mxu0 %v2264
    %2266 = vmatprep.subr.mxu0 0.0
    %2267 = vmatpush1.msra.mxu0 0.0
    %2268 = vmatprep.subr.mxu0 0.0
    %2269 = vmatpush1.msra.mxu0 0.0
    %2270 = vmatprep.subr.mxu0 0.0
    %2271 = vmatpush1.msra.mxu0 0.0
    %2272 = vmatprep.subr.mxu0 0.0
    %2273 = vmatpush1.msra.mxu0 0.0
    %2274 = vmatprep.subr.mxu0 0.0
    %2275 = vmatpush1.msra.mxu0 0.0
    %2276 = vmatprep.subr.mxu0 0.0
    %2277 = vmatpush1.msra.mxu0 0.0
    %2278 = vmatprep.subr.mxu0 0.0
    %2279 = vmatpush1.msra.mxu0 0.0
    %2280 = vmatprep.subr.mxu0 0.0
    %2281 = vmatpush1.msra.mxu0 0.0
    %2282 = vmatprep.subr.mxu0 0.0
    %2283 = vmatpush1.msra.mxu0 0.0
    %2284 = vmatprep.subr.mxu0 0.0
    %2285 = vmatpush1.msra.mxu0 0.0
    %2286 = vmatprep.subr.mxu0 0.0
    %2287 = vmatpush1.msra.mxu0 0.0
    %2288 = vmatprep.subr.mxu0 0.0
    %2289 = vmatpush1.msra.mxu0 0.0
    %2290 = vmatprep.subr.mxu0 0.0
    %2291 = vmatpush1.msra.mxu0 0.0
    %2292 = vmatprep.subr.mxu0 0.0
    %2293 = vmatpush1.msra.mxu0 0.0
    %2294 = vmatprep.subr.mxu0 0.0
    %2295 = vmatpush1.msra.mxu0 0.0
    %2296 = vmatprep.subr.mxu0 0.0
    %2297 = vmatpush1.msra.mxu0 0.0
    %2298 = vmatprep.subr.mxu0 0.0
    %2299 = vmatpush1.msra.mxu0 0.0
    %2300 = vmatprep.subr.mxu0 0.0
    %2301 = vmatpush1.msra.mxu0 0.0
    %2302 = vmatprep.subr.mxu0 0.0
    %2303 = vmatpush1.msra.mxu0 0.0
    %2304 = vmatprep.subr.mxu0 0.0
    %2305 = vmatpush1.msra.mxu0 0.0
    %2306 = vmatprep.subr.mxu0 0.0
    %2307 = vmatpush1.msra.mxu0 0.0
    %2308 = vmatprep.subr.mxu0 0.0
    %2309 = vmatpush1.msra.mxu0 0.0
    %2310 = vmatprep.subr.mxu0 0.0
    %2311 = vmatpush1.msra.mxu0 0.0
    %2312 = vmatprep.subr.mxu0 0.0
    %2313 = vmatpush1.msra.mxu0 0.0
    %2314 = vmatprep.subr.mxu0 0.0
    %2315 = vmatpush1.msra.mxu0 0.0
    %2316 = vmatprep.subr.mxu0 0.0
    %2317 = vmatpush1.msra.mxu0 0.0
    %2318 = vmatprep.subr.mxu0 0.0
    %2319 = vmatpush1.msra.mxu0 0.0
    %2320 = vmatprep.subr.mxu0 0.0
    %2321 = vmatpush1.msra.mxu0 0.0
    %2322 = vmatprep.subr.mxu0 0.0
    %2323 = vmatpush1.msra.mxu0 0.0
    %2324 = vmatprep.subr.mxu0 0.0
    %2325 = vmatpush1.msra.mxu0 0.0
    %2326 = vmatprep.mubr.f32.mxu0 0.0
    %v2327 = vand.u32 %v2160, 4294901760
    %2328 = vmatmul.mubr.f32.gmra.mrb[0].mxu0 %v2327
    %v2329 = vpop.f32.mrb[0].mxu0
    %v2330 = vadd.f32 %v2239, %v2329
    %v2331 = vpop.f32.mrb[0].mxu0
    %2332 = vmatprep.mubr.f32.mxu0 0.0
    %v2333 = vand.u32 %v2163, 4294901760
    %2334 = vmatmul.mubr.f32.gmra.mrb[0].mxu0 %v2333
    %v2335 = vpop.f32.mrb[0].mxu0
    %v2336 = vadd.f32 %v2249, %v2335
    %v2337 = vpop.f32.mrb[0].mxu0
    %2338 = vdwg.mxu0
    %2339 = vmatprep.subr.mxu0 0.0
    %v2340 = vand.u32 %v124, 4294901760
    %v2341 = vsub.f32 %v124, %v2340
    %2342 = vmatpush1.msra.mxu0 %v2341
    %2343 = vmatprep.subr.mxu0 0.0
    %v2344 = vand.u32 %v125, 4294901760
    %v2345 = vsub.f32 %v125, %v2344
    %2346 = vmatpush1.msra.mxu0 %v2345
    %2347 = vmatprep.subr.mxu0 0.0
    %2348 = vmatpush1.msra.mxu0 0.0
    %2349 = vmatprep.subr.mxu0 0.0
    %2350 = vmatpush1.msra.mxu0 0.0
    %2351 = vmatprep.subr.mxu0 0.0
    %2352 = vmatpush1.msra.mxu0 0.0
    %2353 = vmatprep.subr.mxu0 0.0
    %2354 = vmatpush1.msra.mxu0 0.0
    %2355 = vmatprep.subr.mxu0 0.0
    %2356 = vmatpush1.msra.mxu0 0.0
    %2357 = vmatprep.subr.mxu0 0.0
    %2358 = vmatpush1.msra.mxu0 0.0
    %2359 = vmatprep.subr.mxu0 0.0
    %2360 = vmatpush1.msra.mxu0 0.0
    %2361 = vmatprep.subr.mxu0 0.0
    %2362 = vmatpush1.msra.mxu0 0.0
    %2363 = vmatprep.subr.mxu0 0.0
    %2364 = vmatpush1.msra.mxu0 0.0
    %2365 = vmatprep.subr.mxu0 0.0
    %2366 = vmatpush1.msra.mxu0 0.0
    %2367 = vmatprep.subr.mxu0 0.0
    %2368 = vmatpush1.msra.mxu0 0.0
    %2369 = vmatprep.subr.mxu0 0.0
    %2370 = vmatpush1.msra.mxu0 0.0
    %2371 = vmatprep.subr.mxu0 0.0
    %2372 = vmatpush1.msra.mxu0 0.0
    %2373 = vmatprep.subr.mxu0 0.0
    %2374 = vmatpush1.msra.mxu0 0.0
    %2375 = vmatprep.subr.mxu0 0.0
    %2376 = vmatpush1.msra.mxu0 0.0
    %2377 = vmatprep.subr.mxu0 0.0
    %2378 = vmatpush1.msra.mxu0 0.0
    %2379 = vmatprep.subr.mxu0 0.0
    %2380 = vmatpush1.msra.mxu0 0.0
    %2381 = vmatprep.subr.mxu0 0.0
    %2382 = vmatpush1.msra.mxu0 0.0
    %2383 = vmatprep.subr.mxu0 0.0
    %2384 = vmatpush1.msra.mxu0 0.0
    %2385 = vmatprep.subr.mxu0 0.0
    %2386 = vmatpush1.msra.mxu0 0.0
    %2387 = vmatprep.subr.mxu0 0.0
    %2388 = vmatpush1.msra.mxu0 0.0
    %2389 = vmatprep.subr.mxu0 0.0
    %2390 = vmatpush1.msra.mxu0 0.0
    %2391 = vmatprep.subr.mxu0 0.0
    %2392 = vmatpush1.msra.mxu0 0.0
    %2393 = vmatprep.subr.mxu0 0.0
    %2394 = vmatpush1.msra.mxu0 0.0
    %2395 = vmatprep.subr.mxu0 0.0
    %2396 = vmatpush1.msra.mxu0 0.0
    %2397 = vmatprep.subr.mxu0 0.0
    %2398 = vmatpush1.msra.mxu0 0.0
    %2399 = vmatprep.subr.mxu0 0.0
    %2400 = vmatpush1.msra.mxu0 0.0
    %2401 = vmatprep.subr.mxu0 0.0
    %2402 = vmatpush1.msra.mxu0 0.0
    %2403 = vmatprep.subr.mxu0 0.0
    %2404 = vmatpush1.msra.mxu0 0.0
    %2405 = vmatprep.subr.mxu0 0.0
    %2406 = vmatpush1.msra.mxu0 0.0
    %2407 = vmatprep.mubr.f32.mxu0 0.0
    %v2408 = vand.u32 %v2160, 4294901760
    %v2409 = vsub.f32 %v2160, %v2408
    %2410 = vmatmul.mubr.f32.gmra.mrb[0].mxu0 %v2409
    %v2411 = vpop.f32.mrb[0].mxu0
    %v2412 = vadd.f32 %v2330, %v2411
    %v2413 = vpop.f32.mrb[0].mxu0
    %2414 = vmatprep.mubr.f32.mxu0 0.0
    %v2415 = vand.u32 %v2163, 4294901760
    %v2416 = vsub.f32 %v2163, %v2415
    %2417 = vmatmul.mubr.f32.gmra.mrb[0].mxu0 %v2416
    %v2418 = vpop.f32.mrb[0].mxu0
    %v2419 = vadd.f32 %v2336, %v2418
    %v2420 = vpop.f32.mrb[0].mxu0
    %2421 = vdwg.mxu0
    %2422 = vmatprep.subr.mxu0 0.0
    %v2423 = vand.u32 %v124, 4294901760
    %2424 = vmatpush1.msra.mxu0 %v2423
    %2425 = vmatprep.subr.mxu0 0.0
    %v2426 = vand.u32 %v125, 4294901760
    %2427 = vmatpush1.msra.mxu0 %v2426
    %2428 = vmatprep.subr.mxu0 0.0
    %2429 = vmatpush1.msra.mxu0 0.0
    %2430 = vmatprep.subr.mxu0 0.0
    %2431 = vmatpush1.msra.mxu0 0.0
    %2432 = vmatprep.subr.mxu0 0.0
    %2433 = vmatpush1.msra.mxu0 0.0
    %2434 = vmatprep.subr.mxu0 0.0
    %2435 = vmatpush1.msra.mxu0 0.0
    %2436 = vmatprep.subr.mxu0 0.0
    %2437 = vmatpush1.msra.mxu0 0.0
    %2438 = vmatprep.subr.mxu0 0.0
    %2439 = vmatpush1.msra.mxu0 0.0
    %2440 = vmatprep.subr.mxu0 0.0
    %2441 = vmatpush1.msra.mxu0 0.0
    %2442 = vmatprep.subr.mxu0 0.0
    %2443 = vmatpush1.msra.mxu0 0.0
    %2444 = vmatprep.subr.mxu0 0.0
    %2445 = vmatpush1.msra.mxu0 0.0
    %2446 = vmatprep.subr.mxu0 0.0
    %2447 = vmatpush1.msra.mxu0 0.0
    %2448 = vmatprep.subr.mxu0 0.0
    %2449 = vmatpush1.msra.mxu0 0.0
    %2450 = vmatprep.subr.mxu0 0.0
    %2451 = vmatpush1.msra.mxu0 0.0
    %2452 = vmatprep.subr.mxu0 0.0
    %2453 = vmatpush1.msra.mxu0 0.0
    %2454 = vmatprep.subr.mxu0 0.0
    %2455 = vmatpush1.msra.mxu0 0.0
    %2456 = vmatprep.subr.mxu0 0.0
    %2457 = vmatpush1.msra.mxu0 0.0
    %2458 = vmatprep.subr.mxu0 0.0
    %2459 = vmatpush1.msra.mxu0 0.0
    %2460 = vmatprep.subr.mxu0 0.0
    %2461 = vmatpush1.msra.mxu0 0.0
    %2462 = vmatprep.subr.mxu0 0.0
    %2463 = vmatpush1.msra.mxu0 0.0
    %2464 = vmatprep.subr.mxu0 0.0
    %2465 = vmatpush1.msra.mxu0 0.0
    %2466 = vmatprep.subr.mxu0 0.0
    %2467 = vmatpush1.msra.mxu0 0.0
    %2468 = vmatprep.subr.mxu0 0.0
    %2469 = vmatpush1.msra.mxu0 0.0
    %2470 = vmatprep.subr.mxu0 0.0
    %2471 = vmatpush1.msra.mxu0 0.0
    %2472 = vmatprep.subr.mxu0 0.0
    %2473 = vmatpush1.msra.mxu0 0.0
    %2474 = vmatprep.subr.mxu0 0.0
    %2475 = vmatpush1.msra.mxu0 0.0
    %2476 = vmatprep.subr.mxu0 0.0
    %2477 = vmatpush1.msra.mxu0 0.0
    %2478 = vmatprep.subr.mxu0 0.0
    %2479 = vmatpush1.msra.mxu0 0.0
    %2480 = vmatprep.subr.mxu0 0.0
    %2481 = vmatpush1.msra.mxu0 0.0
    %2482 = vmatprep.subr.mxu0 0.0
    %2483 = vmatpush1.msra.mxu0 0.0
    %2484 = vmatprep.subr.mxu0 0.0
    %2485 = vmatpush1.msra.mxu0 0.0
    %2486 = vmatprep.subr.mxu0 0.0
    %2487 = vmatpush1.msra.mxu0 0.0
    %2488 = vmatprep.mubr.f32.mxu0 0.0
    %v2489 = vand.u32 %v2160, 4294901760
    %v2490 = vsub.f32 %v2160, %v2489
    %v2491 = vand.u32 %v2490, 4294901760
    %2492 = vmatmul.mubr.f32.gmra.mrb[0].mxu0 %v2491
    %v2493 = vpop.f32.mrb[0].mxu0
    %v2494 = vadd.f32 %v2412, %v2493
    %v2495 = vpop.f32.mrb[0].mxu0
    %2496 = vmatprep.mubr.f32.mxu0 0.0
    %v2497 = vand.u32 %v2163, 4294901760
    %v2498 = vsub.f32 %v2163, %v2497
    %v2499 = vand.u32 %v2498, 4294901760
    %2500 = vmatmul.mubr.f32.gmra.mrb[0].mxu0 %v2499
    %v2501 = vpop.f32.mrb[0].mxu0
    %v2502 = vadd.f32 %v2419, %v2501
    %v2503 = vpop.f32.mrb[0].mxu0
    %2504 = vdwg.mxu0
    %2505 = vmatprep.subr.mxu0 0.0
    %v2506 = vand.u32 %v124, 4294901760
    %v2507 = vsub.f32 %v124, %v2506
    %v2508 = vand.u32 %v2507, 4294901760
    %2509 = vmatpush1.msra.mxu0 %v2508
    %2510 = vmatprep.subr.mxu0 0.0
    %v2511 = vand.u32 %v125, 4294901760
    %v2512 = vsub.f32 %v125, %v2511
    %v2513 = vand.u32 %v2512, 4294901760
    %2514 = vmatpush1.msra.mxu0 %v2513
    %2515 = vmatprep.subr.mxu0 0.0
    %2516 = vmatpush1.msra.mxu0 0.0
    %2517 = vmatprep.subr.mxu0 0.0
    %2518 = vmatpush1.msra.mxu0 0.0
    %2519 = vmatprep.subr.mxu0 0.0
    %2520 = vmatpush1.msra.mxu0 0.0
    %2521 = vmatprep.subr.mxu0 0.0
    %2522 = vmatpush1.msra.mxu0 0.0
    %2523 = vmatprep.subr.mxu0 0.0
    %2524 = vmatpush1.msra.mxu0 0.0
    %2525 = vmatprep.subr.mxu0 0.0
    %2526 = vmatpush1.msra.mxu0 0.0
    %2527 = vmatprep.subr.mxu0 0.0
    %2528 = vmatpush1.msra.mxu0 0.0
    %2529 = vmatprep.subr.mxu0 0.0
    %2530 = vmatpush1.msra.mxu0 0.0
    %2531 = vmatprep.subr.mxu0 0.0
    %2532 = vmatpush1.msra.mxu0 0.0
    %2533 = vmatprep.subr.mxu0 0.0
    %2534 = vmatpush1.msra.mxu0 0.0
    %2535 = vmatprep.subr.mxu0 0.0
    %2536 = vmatpush1.msra.mxu0 0.0
    %2537 = vmatprep.subr.mxu0 0.0
    %2538 = vmatpush1.msra.mxu0 0.0
    %2539 = vmatprep.subr.mxu0 0.0
    %2540 = vmatpush1.msra.mxu0 0.0
    %2541 = vmatprep.subr.mxu0 0.0
    %2542 = vmatpush1.msra.mxu0 0.0
    %2543 = vmatprep.subr.mxu0 0.0
    %2544 = vmatpush1.msra.mxu0 0.0
    %2545 = vmatprep.subr.mxu0 0.0
    %2546 = vmatpush1.msra.mxu0 0.0
    %2547 = vmatprep.subr.mxu0 0.0
    %2548 = vmatpush1.msra.mxu0 0.0
    %2549 = vmatprep.subr.mxu0 0.0
    %2550 = vmatpush1.msra.mxu0 0.0
    %2551 = vmatprep.subr.mxu0 0.0
    %2552 = vmatpush1.msra.mxu0 0.0
    %2553 = vmatprep.subr.mxu0 0.0
    %2554 = vmatpush1.msra.mxu0 0.0
    %2555 = vmatprep.subr.mxu0 0.0
    %2556 = vmatpush1.msra.mxu0 0.0
    %2557 = vmatprep.subr.mxu0 0.0
    %2558 = vmatpush1.msra.mxu0 0.0
    %2559 = vmatprep.subr.mxu0 0.0
    %2560 = vmatpush1.msra.mxu0 0.0
    %2561 = vmatprep.subr.mxu0 0.0
    %2562 = vmatpush1.msra.mxu0 0.0
    %2563 = vmatprep.subr.mxu0 0.0
    %2564 = vmatpush1.msra.mxu0 0.0
    %2565 = vmatprep.subr.mxu0 0.0
    %2566 = vmatpush1.msra.mxu0 0.0
    %2567 = vmatprep.subr.mxu0 0.0
    %2568 = vmatpush1.msra.mxu0 0.0
    %2569 = vmatprep.subr.mxu0 0.0
    %2570 = vmatpush1.msra.mxu0 0.0
    %2571 = vmatprep.subr.mxu0 0.0
    %2572 = vmatpush1.msra.mxu0 0.0
    %2573 = vmatprep.subr.mxu0 0.0
    %2574 = vmatpush1.msra.mxu0 0.0
    %2575 = vmatprep.mubr.f32.mxu0 0.0
    %v2576 = vand.u32 %v2160, 4294901760
    %2577 = vmatmul.mubr.f32.gmra.mrb[0].mxu0 %v2576
    %v2578 = vpop.f32.mrb[0].mxu0
    %v2579 = vadd.f32 %v2494, %v2578
    %v2580 = vpop.f32.mrb[0].mxu0
    %2581 = vmatprep.mubr.f32.mxu0 0.0
    %v2582 = vand.u32 %v2163, 4294901760
    %2583 = vmatmul.mubr.f32.gmra.mrb[0].mxu0 %v2582
    %v2584 = vpop.f32.mrb[0].mxu0
    %v2585 = vadd.f32 %v2502, %v2584
    %v2586 = vpop.f32.mrb[0].mxu0
    %2587 = vdwg.mxu0
    %2588 = vmatprep.subr.mxu0 0.0
    %v2589 = vand.u32 %v124, 4294901760
    %2590 = vmatpush1.msra.mxu0 %v2589
    %2591 = vmatprep.subr.mxu0 0.0
    %v2592 = vand.u32 %v125, 4294901760
    %2593 = vmatpush1.msra.mxu0 %v2592
    %2594 = vmatprep.subr.mxu0 0.0
    %2595 = vmatpush1.msra.mxu0 0.0
    %2596 = vmatprep.subr.mxu0 0.0
    %2597 = vmatpush1.msra.mxu0 0.0
    %2598 = vmatprep.subr.mxu0 0.0
    %2599 = vmatpush1.msra.mxu0 0.0
    %2600 = vmatprep.subr.mxu0 0.0
    %2601 = vmatpush1.msra.mxu0 0.0
    %2602 = vmatprep.subr.mxu0 0.0
    %2603 = vmatpush1.msra.mxu0 0.0
    %2604 = vmatprep.subr.mxu0 0.0
    %2605 = vmatpush1.msra.mxu0 0.0
    %2606 = vmatprep.subr.mxu0 0.0
    %2607 = vmatpush1.msra.mxu0 0.0
    %2608 = vmatprep.subr.mxu0 0.0
    %2609 = vmatpush1.msra.mxu0 0.0
    %2610 = vmatprep.subr.mxu0 0.0
    %2611 = vmatpush1.msra.mxu0 0.0
    %2612 = vmatprep.subr.mxu0 0.0
    %2613 = vmatpush1.msra.mxu0 0.0
    %2614 = vmatprep.subr.mxu0 0.0
    %2615 = vmatpush1.msra.mxu0 0.0
    %2616 = vmatprep.subr.mxu0 0.0
    %2617 = vmatpush1.msra.mxu0 0.0
    %2618 = vmatprep.subr.mxu0 0.0
    %2619 = vmatpush1.msra.mxu0 0.0
    %2620 = vmatprep.subr.mxu0 0.0
    %2621 = vmatpush1.msra.mxu0 0.0
    %2622 = vmatprep.subr.mxu0 0.0
    %2623 = vmatpush1.msra.mxu0 0.0
    %2624 = vmatprep.subr.mxu0 0.0
    %2625 = vmatpush1.msra.mxu0 0.0
    %2626 = vmatprep.subr.mxu0 0.0
    %2627 = vmatpush1.msra.mxu0 0.0
    %2628 = vmatprep.subr.mxu0 0.0
    %2629 = vmatpush1.msra.mxu0 0.0
    %2630 = vmatprep.subr.mxu0 0.0
    %2631 = vmatpush1.msra.mxu0 0.0
    %2632 = vmatprep.subr.mxu0 0.0
    %2633 = vmatpush1.msra.mxu0 0.0
    %2634 = vmatprep.subr.mxu0 0.0
    %2635 = vmatpush1.msra.mxu0 0.0
    %2636 = vmatprep.subr.mxu0 0.0
    %2637 = vmatpush1.msra.mxu0 0.0
    %2638 = vmatprep.subr.mxu0 0.0
    %2639 = vmatpush1.msra.mxu0 0.0
    %2640 = vmatprep.subr.mxu0 0.0
    %2641 = vmatpush1.msra.mxu0 0.0
    %2642 = vmatprep.subr.mxu0 0.0
    %2643 = vmatpush1.msra.mxu0 0.0
    %2644 = vmatprep.subr.mxu0 0.0
    %2645 = vmatpush1.msra.mxu0 0.0
    %2646 = vmatprep.subr.mxu0 0.0
    %2647 = vmatpush1.msra.mxu0 0.0
    %2648 = vmatprep.subr.mxu0 0.0
    %2649 = vmatpush1.msra.mxu0 0.0
    %2650 = vmatprep.subr.mxu0 0.0
    %2651 = vmatpush1.msra.mxu0 0.0
    %2652 = vmatprep.subr.mxu0 0.0
    %2653 = vmatpush1.msra.mxu0 0.0
    %2654 = vmatprep.mubr.f32.mxu0 0.0
    %v2655 = vand.u32 %v2160, 4294901760
    %2656 = vmatmul.mubr.f32.gmra.mrb[0].mxu0 %v2655
    %v2657 = vpop.f32.mrb[0].mxu0
    %v2658 = vadd.f32 %v2579, %v2657
    %v2659 = vpop.f32.mrb[0].mxu0
    %2660 = vmatprep.mubr.f32.mxu0 0.0
    %v2661 = vand.u32 %v2163, 4294901760
    %2662 = vmatmul.mubr.f32.gmra.mrb[0].mxu0 %v2661
    %v2663 = vpop.f32.mrb[0].mxu0
    %v2664 = vadd.f32 %v2585, %v2663
    %v2665 = vpop.f32.mrb[0].mxu0
    %2666 = vdwg.mxu0
    %v2668 = vsel %vm126, %v33, 0
    %v2671 = vsel %vm126, %v34, 0
    %2673 = vmatprep.subr.mxu0 0.0
    %v2674 = vand.u32 %v124, 4294901760
    %2675 = vmatpush1.msra.mxu0 %v2674
    %2676 = vmatprep.subr.mxu0 0.0
    %v2677 = vand.u32 %v125, 4294901760
    %2678 = vmatpush1.msra.mxu0 %v2677
    %2679 = vmatprep.subr.mxu0 0.0
    %2680 = vmatpush1.msra.mxu0 0.0
    %2681 = vmatprep.subr.mxu0 0.0
    %2682 = vmatpush1.msra.mxu0 0.0
    %2683 = vmatprep.subr.mxu0 0.0
    %2684 = vmatpush1.msra.mxu0 0.0
    %2685 = vmatprep.subr.mxu0 0.0
    %2686 = vmatpush1.msra.mxu0 0.0
    %2687 = vmatprep.subr.mxu0 0.0
    %2688 = vmatpush1.msra.mxu0 0.0
    %2689 = vmatprep.subr.mxu0 0.0
    %2690 = vmatpush1.msra.mxu0 0.0
    %2691 = vmatprep.subr.mxu0 0.0
    %2692 = vmatpush1.msra.mxu0 0.0
    %2693 = vmatprep.subr.mxu0 0.0
    %2694 = vmatpush1.msra.mxu0 0.0
    %2695 = vmatprep.subr.mxu0 0.0
    %2696 = vmatpush1.msra.mxu0 0.0
    %2697 = vmatprep.subr.mxu0 0.0
    %2698 = vmatpush1.msra.mxu0 0.0
    %2699 = vmatprep.subr.mxu0 0.0
    %2700 = vmatpush1.msra.mxu0 0.0
    %2701 = vmatprep.subr.mxu0 0.0
    %2702 = vmatpush1.msra.mxu0 0.0
    %2703 = vmatprep.subr.mxu0 0.0
    %2704 = vmatpush1.msra.mxu0 0.0
    %2705 = vmatprep.subr.mxu0 0.0
    %2706 = vmatpush1.msra.mxu0 0.0
    %2707 = vmatprep.subr.mxu0 0.0
    %2708 = vmatpush1.msra.mxu0 0.0
    %2709 = vmatprep.subr.mxu0 0.0
    %2710 = vmatpush1.msra.mxu0 0.0
    %2711 = vmatprep.subr.mxu0 0.0
    %2712 = vmatpush1.msra.mxu0 0.0
    %2713 = vmatprep.subr.mxu0 0.0
    %2714 = vmatpush1.msra.mxu0 0.0
    %2715 = vmatprep.subr.mxu0 0.0
    %2716 = vmatpush1.msra.mxu0 0.0
    %2717 = vmatprep.subr.mxu0 0.0
    %2718 = vmatpush1.msra.mxu0 0.0
    %2719 = vmatprep.subr.mxu0 0.0
    %2720 = vmatpush1.msra.mxu0 0.0
    %2721 = vmatprep.subr.mxu0 0.0
    %2722 = vmatpush1.msra.mxu0 0.0
    %2723 = vmatprep.subr.mxu0 0.0
    %2724 = vmatpush1.msra.mxu0 0.0
    %2725 = vmatprep.subr.mxu0 0.0
    %2726 = vmatpush1.msra.mxu0 0.0
    %2727 = vmatprep.subr.mxu0 0.0
    %2728 = vmatpush1.msra.mxu0 0.0
    %2729 = vmatprep.subr.mxu0 0.0
    %2730 = vmatpush1.msra.mxu0 0.0
    %2731 = vmatprep.subr.mxu0 0.0
    %2732 = vmatpush1.msra.mxu0 0.0
    %2733 = vmatprep.subr.mxu0 0.0
    %2734 = vmatpush1.msra.mxu0 0.0
    %2735 = vmatprep.subr.mxu0 0.0
    %2736 = vmatpush1.msra.mxu0 0.0
    %2737 = vmatprep.subr.mxu0 0.0
    %2738 = vmatpush1.msra.mxu0 0.0
    %2739 = vmatprep.mubr.f32.mxu0 0.0
    %v2740 = vand.u32 %v2668, 4294901760
    %v2741 = vsub.f32 %v2668, %v2740
    %v2742 = vand.u32 %v2741, 4294901760
    %v2743 = vsub.f32 %v2741, %v2742
    %v2744 = vand.u32 %v2743, 4294901760
    %2745 = vmatmul.mubr.f32.gmra.mrb[0].mxu0 %v2744
    %v2746 = vpop.f32.mrb[0].mxu0
    %v2747 = vadd.f32 0.0, %v2746
    %v2748 = vpop.f32.mrb[0].mxu0
    %2749 = vmatprep.mubr.f32.mxu0 0.0
    %v2750 = vand.u32 %v2671, 4294901760
    %v2751 = vsub.f32 %v2671, %v2750
    %v2752 = vand.u32 %v2751, 4294901760
    %v2753 = vsub.f32 %v2751, %v2752
    %v2754 = vand.u32 %v2753, 4294901760
    %2755 = vmatmul.mubr.f32.gmra.mrb[0].mxu0 %v2754
    %v2756 = vpop.f32.mrb[0].mxu0
    %v2757 = vadd.f32 0.0, %v2756
    %v2758 = vpop.f32.mrb[0].mxu0
    %2759 = vdwg.mxu0
    %2760 = vmatprep.subr.mxu0 0.0
    %v2761 = vand.u32 %v124, 4294901760
    %v2762 = vsub.f32 %v124, %v2761
    %v2763 = vand.u32 %v2762, 4294901760
    %v2764 = vsub.f32 %v2762, %v2763
    %v2765 = vand.u32 %v2764, 4294901760
    %2766 = vmatpush1.msra.mxu0 %v2765
    %2767 = vmatprep.subr.mxu0 0.0
    %v2768 = vand.u32 %v125, 4294901760
    %v2769 = vsub.f32 %v125, %v2768
    %v2770 = vand.u32 %v2769, 4294901760
    %v2771 = vsub.f32 %v2769, %v2770
    %v2772 = vand.u32 %v2771, 4294901760
    %2773 = vmatpush1.msra.mxu0 %v2772
    %2774 = vmatprep.subr.mxu0 0.0
    %2775 = vmatpush1.msra.mxu0 0.0
    %2776 = vmatprep.subr.mxu0 0.0
    %2777 = vmatpush1.msra.mxu0 0.0
    %2778 = vmatprep.subr.mxu0 0.0
    %2779 = vmatpush1.msra.mxu0 0.0
    %2780 = vmatprep.subr.mxu0 0.0
    %2781 = vmatpush1.msra.mxu0 0.0
    %2782 = vmatprep.subr.mxu0 0.0
    %2783 = vmatpush1.msra.mxu0 0.0
    %2784 = vmatprep.subr.mxu0 0.0
    %2785 = vmatpush1.msra.mxu0 0.0
    %2786 = vmatprep.subr.mxu0 0.0
    %2787 = vmatpush1.msra.mxu0 0.0
    %2788 = vmatprep.subr.mxu0 0.0
    %2789 = vmatpush1.msra.mxu0 0.0
    %2790 = vmatprep.subr.mxu0 0.0
    %2791 = vmatpush1.msra.mxu0 0.0
    %2792 = vmatprep.subr.mxu0 0.0
    %2793 = vmatpush1.msra.mxu0 0.0
    %2794 = vmatprep.subr.mxu0 0.0
    %2795 = vmatpush1.msra.mxu0 0.0
    %2796 = vmatprep.subr.mxu0 0.0
    %2797 = vmatpush1.msra.mxu0 0.0
    %2798 = vmatprep.subr.mxu0 0.0
    %2799 = vmatpush1.msra.mxu0 0.0
    %2800 = vmatprep.subr.mxu0 0.0
    %2801 = vmatpush1.msra.mxu0 0.0
    %2802 = vmatprep.subr.mxu0 0.0
    %2803 = vmatpush1.msra.mxu0 0.0
    %2804 = vmatprep.subr.mxu0 0.0
    %2805 = vmatpush1.msra.mxu0 0.0
    %2806 = vmatprep.subr.mxu0 0.0
    %2807 = vmatpush1.msra.mxu0 0.0
    %2808 = vmatprep.subr.mxu0 0.0
    %2809 = vmatpush1.msra.mxu0 0.0
    %2810 = vmatprep.subr.mxu0 0.0
    %2811 = vmatpush1.msra.mxu0 0.0
    %2812 = vmatprep.subr.mxu0 0.0
    %2813 = vmatpush1.msra.mxu0 0.0
    %2814 = vmatprep.subr.mxu0 0.0
    %2815 = vmatpush1.msra.mxu0 0.0
    %2816 = vmatprep.subr.mxu0 0.0
    %2817 = vmatpush1.msra.mxu0 0.0
    %2818 = vmatprep.subr.mxu0 0.0
    %2819 = vmatpush1.msra.mxu0 0.0
    %2820 = vmatprep.subr.mxu0 0.0
    %2821 = vmatpush1.msra.mxu0 0.0
    %2822 = vmatprep.subr.mxu0 0.0
    %2823 = vmatpush1.msra.mxu0 0.0
    %2824 = vmatprep.subr.mxu0 0.0
    %2825 = vmatpush1.msra.mxu0 0.0
    %2826 = vmatprep.subr.mxu0 0.0
    %2827 = vmatpush1.msra.mxu0 0.0
    %2828 = vmatprep.subr.mxu0 0.0
    %2829 = vmatpush1.msra.mxu0 0.0
    %2830 = vmatprep.subr.mxu0 0.0
    %2831 = vmatpush1.msra.mxu0 0.0
    %2832 = vmatprep.subr.mxu0 0.0
    %2833 = vmatpush1.msra.mxu0 0.0
    %2834 = vmatprep.mubr.f32.mxu0 0.0
    %v2835 = vand.u32 %v2668, 4294901760
    %2836 = vmatmul.mubr.f32.gmra.mrb[0].mxu0 %v2835
    %v2837 = vpop.f32.mrb[0].mxu0
    %v2838 = vadd.f32 %v2747, %v2837
    %v2839 = vpop.f32.mrb[0].mxu0
    %2840 = vmatprep.mubr.f32.mxu0 0.0
    %v2841 = vand.u32 %v2671, 4294901760
    %2842 = vmatmul.mubr.f32.gmra.mrb[0].mxu0 %v2841
    %v2843 = vpop.f32.mrb[0].mxu0
    %v2844 = vadd.f32 %v2757, %v2843
    %v2845 = vpop.f32.mrb[0].mxu0
    %2846 = vdwg.mxu0
    %2847 = vmatprep.subr.mxu0 0.0
    %v2848 = vand.u32 %v124, 4294901760
    %v2849 = vsub.f32 %v124, %v2848
    %2850 = vmatpush1.msra.mxu0 %v2849
    %2851 = vmatprep.subr.mxu0 0.0
    %v2852 = vand.u32 %v125, 4294901760
    %v2853 = vsub.f32 %v125, %v2852
    %2854 = vmatpush1.msra.mxu0 %v2853
    %2855 = vmatprep.subr.mxu0 0.0
    %2856 = vmatpush1.msra.mxu0 0.0
    %2857 = vmatprep.subr.mxu0 0.0
    %2858 = vmatpush1.msra.mxu0 0.0
    %2859 = vmatprep.subr.mxu0 0.0
    %2860 = vmatpush1.msra.mxu0 0.0
    %2861 = vmatprep.subr.mxu0 0.0
    %2862 = vmatpush1.msra.mxu0 0.0
    %2863 = vmatprep.subr.mxu0 0.0
    %2864 = vmatpush1.msra.mxu0 0.0
    %2865 = vmatprep.subr.mxu0 0.0
    %2866 = vmatpush1.msra.mxu0 0.0
    %2867 = vmatprep.subr.mxu0 0.0
    %2868 = vmatpush1.msra.mxu0 0.0
    %2869 = vmatprep.subr.mxu0 0.0
    %2870 = vmatpush1.msra.mxu0 0.0
    %2871 = vmatprep.subr.mxu0 0.0
    %2872 = vmatpush1.msra.mxu0 0.0
    %2873 = vmatprep.subr.mxu0 0.0
    %2874 = vmatpush1.msra.mxu0 0.0
    %2875 = vmatprep.subr.mxu0 0.0
    %2876 = vmatpush1.msra.mxu0 0.0
    %2877 = vmatprep.subr.mxu0 0.0
    %2878 = vmatpush1.msra.mxu0 0.0
    %2879 = vmatprep.subr.mxu0 0.0
    %2880 = vmatpush1.msra.mxu0 0.0
    %2881 = vmatprep.subr.mxu0 0.0
    %2882 = vmatpush1.msra.mxu0 0.0
    %2883 = vmatprep.subr.mxu0 0.0
    %2884 = vmatpush1.msra.mxu0 0.0
    %2885 = vmatprep.subr.mxu0 0.0
    %2886 = vmatpush1.msra.mxu0 0.0
    %2887 = vmatprep.subr.mxu0 0.0
    %2888 = vmatpush1.msra.mxu0 0.0
    %2889 = vmatprep.subr.mxu0 0.0
    %2890 = vmatpush1.msra.mxu0 0.0
    %2891 = vmatprep.subr.mxu0 0.0
    %2892 = vmatpush1.msra.mxu0 0.0
    %2893 = vmatprep.subr.mxu0 0.0
    %2894 = vmatpush1.msra.mxu0 0.0
    %2895 = vmatprep.subr.mxu0 0.0
    %2896 = vmatpush1.msra.mxu0 0.0
    %2897 = vmatprep.subr.mxu0 0.0
    %2898 = vmatpush1.msra.mxu0 0.0
    %2899 = vmatprep.subr.mxu0 0.0
    %2900 = vmatpush1.msra.mxu0 0.0
    %2901 = vmatprep.subr.mxu0 0.0
    %2902 = vmatpush1.msra.mxu0 0.0
    %2903 = vmatprep.subr.mxu0 0.0
    %2904 = vmatpush1.msra.mxu0 0.0
    %2905 = vmatprep.subr.mxu0 0.0
    %2906 = vmatpush1.msra.mxu0 0.0
    %2907 = vmatprep.subr.mxu0 0.0
    %2908 = vmatpush1.msra.mxu0 0.0
    %2909 = vmatprep.subr.mxu0 0.0
    %2910 = vmatpush1.msra.mxu0 0.0
    %2911 = vmatprep.subr.mxu0 0.0
    %2912 = vmatpush1.msra.mxu0 0.0
    %2913 = vmatprep.subr.mxu0 0.0
    %2914 = vmatpush1.msra.mxu0 0.0
    %2915 = vmatprep.mubr.f32.mxu0 0.0
    %v2916 = vand.u32 %v2668, 4294901760
    %v2917 = vsub.f32 %v2668, %v2916
    %2918 = vmatmul.mubr.f32.gmra.mrb[0].mxu0 %v2917
    %v2919 = vpop.f32.mrb[0].mxu0
    %v2920 = vadd.f32 %v2838, %v2919
    %v2921 = vpop.f32.mrb[0].mxu0
    %2922 = vmatprep.mubr.f32.mxu0 0.0
    %v2923 = vand.u32 %v2671, 4294901760
    %v2924 = vsub.f32 %v2671, %v2923
    %2925 = vmatmul.mubr.f32.gmra.mrb[0].mxu0 %v2924
    %v2926 = vpop.f32.mrb[0].mxu0
    %v2927 = vadd.f32 %v2844, %v2926
    %v2928 = vpop.f32.mrb[0].mxu0
    %2929 = vdwg.mxu0
    %2930 = vmatprep.subr.mxu0 0.0
    %v2931 = vand.u32 %v124, 4294901760
    %2932 = vmatpush1.msra.mxu0 %v2931
    %2933 = vmatprep.subr.mxu0 0.0
    %v2934 = vand.u32 %v125, 4294901760
    %2935 = vmatpush1.msra.mxu0 %v2934
    %2936 = vmatprep.subr.mxu0 0.0
    %2937 = vmatpush1.msra.mxu0 0.0
    %2938 = vmatprep.subr.mxu0 0.0
    %2939 = vmatpush1.msra.mxu0 0.0
    %2940 = vmatprep.subr.mxu0 0.0
    %2941 = vmatpush1.msra.mxu0 0.0
    %2942 = vmatprep.subr.mxu0 0.0
    %2943 = vmatpush1.msra.mxu0 0.0
    %2944 = vmatprep.subr.mxu0 0.0
    %2945 = vmatpush1.msra.mxu0 0.0
    %2946 = vmatprep.subr.mxu0 0.0
    %2947 = vmatpush1.msra.mxu0 0.0
    %2948 = vmatprep.subr.mxu0 0.0
    %2949 = vmatpush1.msra.mxu0 0.0
    %2950 = vmatprep.subr.mxu0 0.0
    %2951 = vmatpush1.msra.mxu0 0.0
    %2952 = vmatprep.subr.mxu0 0.0
    %2953 = vmatpush1.msra.mxu0 0.0
    %2954 = vmatprep.subr.mxu0 0.0
    %2955 = vmatpush1.msra.mxu0 0.0
    %2956 = vmatprep.subr.mxu0 0.0
    %2957 = vmatpush1.msra.mxu0 0.0
    %2958 = vmatprep.subr.mxu0 0.0
    %2959 = vmatpush1.msra.mxu0 0.0
    %2960 = vmatprep.subr.mxu0 0.0
    %2961 = vmatpush1.msra.mxu0 0.0
    %2962 = vmatprep.subr.mxu0 0.0
    %2963 = vmatpush1.msra.mxu0 0.0
    %2964 = vmatprep.subr.mxu0 0.0
    %2965 = vmatpush1.msra.mxu0 0.0
    %2966 = vmatprep.subr.mxu0 0.0
    %2967 = vmatpush1.msra.mxu0 0.0
    %2968 = vmatprep.subr.mxu0 0.0
    %2969 = vmatpush1.msra.mxu0 0.0
    %2970 = vmatprep.subr.mxu0 0.0
    %2971 = vmatpush1.msra.mxu0 0.0
    %2972 = vmatprep.subr.mxu0 0.0
    %2973 = vmatpush1.msra.mxu0 0.0
    %2974 = vmatprep.subr.mxu0 0.0
    %2975 = vmatpush1.msra.mxu0 0.0
    %2976 = vmatprep.subr.mxu0 0.0
    %2977 = vmatpush1.msra.mxu0 0.0
    %2978 = vmatprep.subr.mxu0 0.0
    %2979 = vmatpush1.msra.mxu0 0.0
    %2980 = vmatprep.subr.mxu0 0.0
    %2981 = vmatpush1.msra.mxu0 0.0
    %2982 = vmatprep.subr.mxu0 0.0
    %2983 = vmatpush1.msra.mxu0 0.0
    %2984 = vmatprep.subr.mxu0 0.0
    %2985 = vmatpush1.msra.mxu0 0.0
    %2986 = vmatprep.subr.mxu0 0.0
    %2987 = vmatpush1.msra.mxu0 0.0
    %2988 = vmatprep.subr.mxu0 0.0
    %2989 = vmatpush1.msra.mxu0 0.0
    %2990 = vmatprep.subr.mxu0 0.0
    %2991 = vmatpush1.msra.mxu0 0.0
    %2992 = vmatprep.subr.mxu0 0.0
    %2993 = vmatpush1.msra.mxu0 0.0
    %2994 = vmatprep.subr.mxu0 0.0
    %2995 = vmatpush1.msra.mxu0 0.0
    %2996 = vmatprep.mubr.f32.mxu0 0.0
    %v2997 = vand.u32 %v2668, 4294901760
    %v2998 = vsub.f32 %v2668, %v2997
    %v2999 = vand.u32 %v2998, 4294901760
    %3000 = vmatmul.mubr.f32.gmra.mrb[0].mxu0 %v2999
    %v3001 = vpop.f32.mrb[0].mxu0
    %v3002 = vadd.f32 %v2920, %v3001
    %v3003 = vpop.f32.mrb[0].mxu0
    %3004 = vmatprep.mubr.f32.mxu0 0.0
    %v3005 = vand.u32 %v2671, 4294901760
    %v3006 = vsub.f32 %v2671, %v3005
    %v3007 = vand.u32 %v3006, 4294901760
    %3008 = vmatmul.mubr.f32.gmra.mrb[0].mxu0 %v3007
    %v3009 = vpop.f32.mrb[0].mxu0
    %v3010 = vadd.f32 %v2927, %v3009
    %v3011 = vpop.f32.mrb[0].mxu0
    %3012 = vdwg.mxu0
    %3013 = vmatprep.subr.mxu0 0.0
    %v3014 = vand.u32 %v124, 4294901760
    %v3015 = vsub.f32 %v124, %v3014
    %v3016 = vand.u32 %v3015, 4294901760
    %3017 = vmatpush1.msra.mxu0 %v3016
    %3018 = vmatprep.subr.mxu0 0.0
    %v3019 = vand.u32 %v125, 4294901760
    %v3020 = vsub.f32 %v125, %v3019
    %v3021 = vand.u32 %v3020, 4294901760
    %3022 = vmatpush1.msra.mxu0 %v3021
    %3023 = vmatprep.subr.mxu0 0.0
    %3024 = vmatpush1.msra.mxu0 0.0
    %3025 = vmatprep.subr.mxu0 0.0
    %3026 = vmatpush1.msra.mxu0 0.0
    %3027 = vmatprep.subr.mxu0 0.0
    %3028 = vmatpush1.msra.mxu0 0.0
    %3029 = vmatprep.subr.mxu0 0.0
    %3030 = vmatpush1.msra.mxu0 0.0
    %3031 = vmatprep.subr.mxu0 0.0
    %3032 = vmatpush1.msra.mxu0 0.0
    %3033 = vmatprep.subr.mxu0 0.0
    %3034 = vmatpush1.msra.mxu0 0.0
    %3035 = vmatprep.subr.mxu0 0.0
    %3036 = vmatpush1.msra.mxu0 0.0
    %3037 = vmatprep.subr.mxu0 0.0
    %3038 = vmatpush1.msra.mxu0 0.0
    %3039 = vmatprep.subr.mxu0 0.0
    %3040 = vmatpush1.msra.mxu0 0.0
    %3041 = vmatprep.subr.mxu0 0.0
    %3042 = vmatpush1.msra.mxu0 0.0
    %3043 = vmatprep.subr.mxu0 0.0
    %3044 = vmatpush1.msra.mxu0 0.0
    %3045 = vmatprep.subr.mxu0 0.0
    %3046 = vmatpush1.msra.mxu0 0.0
    %3047 = vmatprep.subr.mxu0 0.0
    %3048 = vmatpush1.msra.mxu0 0.0
    %3049 = vmatprep.subr.mxu0 0.0
    %3050 = vmatpush1.msra.mxu0 0.0
    %3051 = vmatprep.subr.mxu0 0.0
    %3052 = vmatpush1.msra.mxu0 0.0
    %3053 = vmatprep.subr.mxu0 0.0
    %3054 = vmatpush1.msra.mxu0 0.0
    %3055 = vmatprep.subr.mxu0 0.0
    %3056 = vmatpush1.msra.mxu0 0.0
    %3057 = vmatprep.subr.mxu0 0.0
    %3058 = vmatpush1.msra.mxu0 0.0
    %3059 = vmatprep.subr.mxu0 0.0
    %3060 = vmatpush1.msra.mxu0 0.0
    %3061 = vmatprep.subr.mxu0 0.0
    %3062 = vmatpush1.msra.mxu0 0.0
    %3063 = vmatprep.subr.mxu0 0.0
    %3064 = vmatpush1.msra.mxu0 0.0
    %3065 = vmatprep.subr.mxu0 0.0
    %3066 = vmatpush1.msra.mxu0 0.0
    %3067 = vmatprep.subr.mxu0 0.0
    %3068 = vmatpush1.msra.mxu0 0.0
    %3069 = vmatprep.subr.mxu0 0.0
    %3070 = vmatpush1.msra.mxu0 0.0
    %3071 = vmatprep.subr.mxu0 0.0
    %3072 = vmatpush1.msra.mxu0 0.0
    %3073 = vmatprep.subr.mxu0 0.0
    %3074 = vmatpush1.msra.mxu0 0.0
    %3075 = vmatprep.subr.mxu0 0.0
    %3076 = vmatpush1.msra.mxu0 0.0
    %3077 = vmatprep.subr.mxu0 0.0
    %3078 = vmatpush1.msra.mxu0 0.0
    %3079 = vmatprep.subr.mxu0 0.0
    %3080 = vmatpush1.msra.mxu0 0.0
    %3081 = vmatprep.subr.mxu0 0.0
    %3082 = vmatpush1.msra.mxu0 0.0
    %3083 = vmatprep.mubr.f32.mxu0 0.0
    %v3084 = vand.u32 %v2668, 4294901760
    %3085 = vmatmul.mubr.f32.gmra.mrb[0].mxu0 %v3084
    %v3086 = vpop.f32.mrb[0].mxu0
    %v3087 = vadd.f32 %v3002, %v3086
    %v3088 = vpop.f32.mrb[0].mxu0
    %3089 = vmatprep.mubr.f32.mxu0 0.0
    %v3090 = vand.u32 %v2671, 4294901760
    %3091 = vmatmul.mubr.f32.gmra.mrb[0].mxu0 %v3090
    %v3092 = vpop.f32.mrb[0].mxu0
    %v3093 = vadd.f32 %v3010, %v3092
    %v3094 = vpop.f32.mrb[0].mxu0
    %3095 = vdwg.mxu0
    %3096 = vmatprep.subr.mxu0 0.0
    %v3097 = vand.u32 %v124, 4294901760
    %3098 = vmatpush1.msra.mxu0 %v3097
    %3099 = vmatprep.subr.mxu0 0.0
    %v3100 = vand.u32 %v125, 4294901760
    %3101 = vmatpush1.msra.mxu0 %v3100
    %3102 = vmatprep.subr.mxu0 0.0
    %3103 = vmatpush1.msra.mxu0 0.0
    %3104 = vmatprep.subr.mxu0 0.0
    %3105 = vmatpush1.msra.mxu0 0.0
    %3106 = vmatprep.subr.mxu0 0.0
    %3107 = vmatpush1.msra.mxu0 0.0
    %3108 = vmatprep.subr.mxu0 0.0
    %3109 = vmatpush1.msra.mxu0 0.0
    %3110 = vmatprep.subr.mxu0 0.0
    %3111 = vmatpush1.msra.mxu0 0.0
    %3112 = vmatprep.subr.mxu0 0.0
    %3113 = vmatpush1.msra.mxu0 0.0
    %3114 = vmatprep.subr.mxu0 0.0
    %3115 = vmatpush1.msra.mxu0 0.0
    %3116 = vmatprep.subr.mxu0 0.0
    %3117 = vmatpush1.msra.mxu0 0.0
    %3118 = vmatprep.subr.mxu0 0.0
    %3119 = vmatpush1.msra.mxu0 0.0
    %3120 = vmatprep.subr.mxu0 0.0
    %3121 = vmatpush1.msra.mxu0 0.0
    %3122 = vmatprep.subr.mxu0 0.0
    %3123 = vmatpush1.msra.mxu0 0.0
    %3124 = vmatprep.subr.mxu0 0.0
    %3125 = vmatpush1.msra.mxu0 0.0
    %3126 = vmatprep.subr.mxu0 0.0
    %3127 = vmatpush1.msra.mxu0 0.0
    %3128 = vmatprep.subr.mxu0 0.0
    %3129 = vmatpush1.msra.mxu0 0.0
    %3130 = vmatprep.subr.mxu0 0.0
    %3131 = vmatpush1.msra.mxu0 0.0
    %3132 = vmatprep.subr.mxu0 0.0
    %3133 = vmatpush1.msra.mxu0 0.0
    %3134 = vmatprep.subr.mxu0 0.0
    %3135 = vmatpush1.msra.mxu0 0.0
    %3136 = vmatprep.subr.mxu0 0.0
    %3137 = vmatpush1.msra.mxu0 0.0
    %3138 = vmatprep.subr.mxu0 0.0
    %3139 = vmatpush1.msra.mxu0 0.0
    %3140 = vmatprep.subr.mxu0 0.0
    %3141 = vmatpush1.msra.mxu0 0.0
    %3142 = vmatprep.subr.mxu0 0.0
    %3143 = vmatpush1.msra.mxu0 0.0
    %3144 = vmatprep.subr.mxu0 0.0
    %3145 = vmatpush1.msra.mxu0 0.0
    %3146 = vmatprep.subr.mxu0 0.0
    %3147 = vmatpush1.msra.mxu0 0.0
    %3148 = vmatprep.subr.mxu0 0.0
    %3149 = vmatpush1.msra.mxu0 0.0
    %3150 = vmatprep.subr.mxu0 0.0
    %3151 = vmatpush1.msra.mxu0 0.0
    %3152 = vmatprep.subr.mxu0 0.0
    %3153 = vmatpush1.msra.mxu0 0.0
    %3154 = vmatprep.subr.mxu0 0.0
    %3155 = vmatpush1.msra.mxu0 0.0
    %3156 = vmatprep.subr.mxu0 0.0
    %3157 = vmatpush1.msra.mxu0 0.0
    %3158 = vmatprep.subr.mxu0 0.0
    %3159 = vmatpush1.msra.mxu0 0.0
    %3160 = vmatprep.subr.mxu0 0.0
    %3161 = vmatpush1.msra.mxu0 0.0
    %3162 = vmatprep.mubr.f32.mxu0 0.0
    %v3163 = vand.u32 %v2668, 4294901760
    %3164 = vmatmul.mubr.f32.gmra.mrb[0].mxu0 %v3163
    %v3165 = vpop.f32.mrb[0].mxu0
    %v3166 = vadd.f32 %v3087, %v3165
    %v3167 = vpop.f32.mrb[0].mxu0
    %3168 = vmatprep.mubr.f32.mxu0 0.0
    %v3169 = vand.u32 %v2671, 4294901760
    %3170 = vmatmul.mubr.f32.gmra.mrb[0].mxu0 %v3169
    %v3171 = vpop.f32.mrb[0].mxu0
    %v3172 = vadd.f32 %v3093, %v3171
    %v3173 = vpop.f32.mrb[0].mxu0
    %3174 = vdwg.mxu0
    %v3176 = vsel %vm126, %v35, 0
    %v3179 = vsel %vm126, %v36, 0
    %3181 = vmatprep.subr.mxu0 0.0
    %v3182 = vand.u32 %v124, 4294901760
    %3183 = vmatpush1.msra.mxu0 %v3182
    %3184 = vmatprep.subr.mxu0 0.0
    %v3185 = vand.u32 %v125, 4294901760
    %3186 = vmatpush1.msra.mxu0 %v3185
    %3187 = vmatprep.subr.mxu0 0.0
    %3188 = vmatpush1.msra.mxu0 0.0
    %3189 = vmatprep.subr.mxu0 0.0
    %3190 = vmatpush1.msra.mxu0 0.0
    %3191 = vmatprep.subr.mxu0 0.0
    %3192 = vmatpush1.msra.mxu0 0.0
    %3193 = vmatprep.subr.mxu0 0.0
    %3194 = vmatpush1.msra.mxu0 0.0
    %3195 = vmatprep.subr.mxu0 0.0
    %3196 = vmatpush1.msra.mxu0 0.0
    %3197 = vmatprep.subr.mxu0 0.0
    %3198 = vmatpush1.msra.mxu0 0.0
    %3199 = vmatprep.subr.mxu0 0.0
    %3200 = vmatpush1.msra.mxu0 0.0
    %3201 = vmatprep.subr.mxu0 0.0
    %3202 = vmatpush1.msra.mxu0 0.0
    %3203 = vmatprep.subr.mxu0 0.0
    %3204 = vmatpush1.msra.mxu0 0.0
    %3205 = vmatprep.subr.mxu0 0.0
    %3206 = vmatpush1.msra.mxu0 0.0
    %3207 = vmatprep.subr.mxu0 0.0
    %3208 = vmatpush1.msra.mxu0 0.0
    %3209 = vmatprep.subr.mxu0 0.0
    %3210 = vmatpush1.msra.mxu0 0.0
    %3211 = vmatprep.subr.mxu0 0.0
    %3212 = vmatpush1.msra.mxu0 0.0
    %3213 = vmatprep.subr.mxu0 0.0
    %3214 = vmatpush1.msra.mxu0 0.0
    %3215 = vmatprep.subr.mxu0 0.0
    %3216 = vmatpush1.msra.mxu0 0.0
    %3217 = vmatprep.subr.mxu0 0.0
    %3218 = vmatpush1.msra.mxu0 0.0
    %3219 = vmatprep.subr.mxu0 0.0
    %3220 = vmatpush1.msra.mxu0 0.0
    %3221 = vmatprep.subr.mxu0 0.0
    %3222 = vmatpush1.msra.mxu0 0.0
    %3223 = vmatprep.subr.mxu0 0.0
    %3224 = vmatpush1.msra.mxu0 0.0
    %3225 = vmatprep.subr.mxu0 0.0
    %3226 = vmatpush1.msra.mxu0 0.0
    %3227 = vmatprep.subr.mxu0 0.0
    %3228 = vmatpush1.msra.mxu0 0.0
    %3229 = vmatprep.subr.mxu0 0.0
    %3230 = vmatpush1.msra.mxu0 0.0
    %3231 = vmatprep.subr.mxu0 0.0
    %3232 = vmatpush1.msra.mxu0 0.0
    %3233 = vmatprep.subr.mxu0 0.0
    %3234 = vmatpush1.msra.mxu0 0.0
    %3235 = vmatprep.subr.mxu0 0.0
    %3236 = vmatpush1.msra.mxu0 0.0
    %3237 = vmatprep.subr.mxu0 0.0
    %3238 = vmatpush1.msra.mxu0 0.0
    %3239 = vmatprep.subr.mxu0 0.0
    %3240 = vmatpush1.msra.mxu0 0.0
    %3241 = vmatprep.subr.mxu0 0.0
    %3242 = vmatpush1.msra.mxu0 0.0
    %3243 = vmatprep.subr.mxu0 0.0
    %3244 = vmatpush1.msra.mxu0 0.0
    %3245 = vmatprep.subr.mxu0 0.0
    %3246 = vmatpush1.msra.mxu0 0.0
    %3247 = vmatprep.mubr.f32.mxu0 0.0
    %v3248 = vand.u32 %v3176, 4294901760
    %v3249 = vsub.f32 %v3176, %v3248
    %v3250 = vand.u32 %v3249, 4294901760
    %v3251 = vsub.f32 %v3249, %v3250
    %v3252 = vand.u32 %v3251, 4294901760
    %3253 = vmatmul.mubr.f32.gmra.mrb[0].mxu0 %v3252
    %v3254 = vpop.f32.mrb[0].mxu0
    %v3255 = vadd.f32 0.0, %v3254
    %v3256 = vpop.f32.mrb[0].mxu0
    %3257 = vmatprep.mubr.f32.mxu0 0.0
    %v3258 = vand.u32 %v3179, 4294901760
    %v3259 = vsub.f32 %v3179, %v3258
    %v3260 = vand.u32 %v3259, 4294901760
    %v3261 = vsub.f32 %v3259, %v3260
    %v3262 = vand.u32 %v3261, 4294901760
    %3263 = vmatmul.mubr.f32.gmra.mrb[0].mxu0 %v3262
    %v3264 = vpop.f32.mrb[0].mxu0
    %v3265 = vadd.f32 0.0, %v3264
    %v3266 = vpop.f32.mrb[0].mxu0
    %3267 = vdwg.mxu0
    %3268 = vmatprep.subr.mxu0 0.0
    %v3269 = vand.u32 %v124, 4294901760
    %v3270 = vsub.f32 %v124, %v3269
    %v3271 = vand.u32 %v3270, 4294901760
    %v3272 = vsub.f32 %v3270, %v3271
    %v3273 = vand.u32 %v3272, 4294901760
    %3274 = vmatpush1.msra.mxu0 %v3273
    %3275 = vmatprep.subr.mxu0 0.0
    %v3276 = vand.u32 %v125, 4294901760
    %v3277 = vsub.f32 %v125, %v3276
    %v3278 = vand.u32 %v3277, 4294901760
    %v3279 = vsub.f32 %v3277, %v3278
    %v3280 = vand.u32 %v3279, 4294901760
    %3281 = vmatpush1.msra.mxu0 %v3280
    %3282 = vmatprep.subr.mxu0 0.0
    %3283 = vmatpush1.msra.mxu0 0.0
    %3284 = vmatprep.subr.mxu0 0.0
    %3285 = vmatpush1.msra.mxu0 0.0
    %3286 = vmatprep.subr.mxu0 0.0
    %3287 = vmatpush1.msra.mxu0 0.0
    %3288 = vmatprep.subr.mxu0 0.0
    %3289 = vmatpush1.msra.mxu0 0.0
    %3290 = vmatprep.subr.mxu0 0.0
    %3291 = vmatpush1.msra.mxu0 0.0
    %3292 = vmatprep.subr.mxu0 0.0
    %3293 = vmatpush1.msra.mxu0 0.0
    %3294 = vmatprep.subr.mxu0 0.0
    %3295 = vmatpush1.msra.mxu0 0.0
    %3296 = vmatprep.subr.mxu0 0.0
    %3297 = vmatpush1.msra.mxu0 0.0
    %3298 = vmatprep.subr.mxu0 0.0
    %3299 = vmatpush1.msra.mxu0 0.0
    %3300 = vmatprep.subr.mxu0 0.0
    %3301 = vmatpush1.msra.mxu0 0.0
    %3302 = vmatprep.subr.mxu0 0.0
    %3303 = vmatpush1.msra.mxu0 0.0
    %3304 = vmatprep.subr.mxu0 0.0
    %3305 = vmatpush1.msra.mxu0 0.0
    %3306 = vmatprep.subr.mxu0 0.0
    %3307 = vmatpush1.msra.mxu0 0.0
    %3308 = vmatprep.subr.mxu0 0.0
    %3309 = vmatpush1.msra.mxu0 0.0
    %3310 = vmatprep.subr.mxu0 0.0
    %3311 = vmatpush1.msra.mxu0 0.0
    %3312 = vmatprep.subr.mxu0 0.0
    %3313 = vmatpush1.msra.mxu0 0.0
    %3314 = vmatprep.subr.mxu0 0.0
    %3315 = vmatpush1.msra.mxu0 0.0
    %3316 = vmatprep.subr.mxu0 0.0
    %3317 = vmatpush1.msra.mxu0 0.0
    %3318 = vmatprep.subr.mxu0 0.0
    %3319 = vmatpush1.msra.mxu0 0.0
    %3320 = vmatprep.subr.mxu0 0.0
    %3321 = vmatpush1.msra.mxu0 0.0
    %3322 = vmatprep.subr.mxu0 0.0
    %3323 = vmatpush1.msra.mxu0 0.0
    %3324 = vmatprep.subr.mxu0 0.0
    %3325 = vmatpush1.msra.mxu0 0.0
    %3326 = vmatprep.subr.mxu0 0.0
    %3327 = vmatpush1.msra.mxu0 0.0
    %3328 = vmatprep.subr.mxu0 0.0
    %3329 = vmatpush1.msra.mxu0 0.0
    %3330 = vmatprep.subr.mxu0 0.0
    %3331 = vmatpush1.msra.mxu0 0.0
    %3332 = vmatprep.subr.mxu0 0.0
    %3333 = vmatpush1.msra.mxu0 0.0
    %3334 = vmatprep.subr.mxu0 0.0
    %3335 = vmatpush1.msra.mxu0 0.0
    %3336 = vmatprep.subr.mxu0 0.0
    %3337 = vmatpush1.msra.mxu0 0.0
    %3338 = vmatprep.subr.mxu0 0.0
    %3339 = vmatpush1.msra.mxu0 0.0
    %3340 = vmatprep.subr.mxu0 0.0
    %3341 = vmatpush1.msra.mxu0 0.0
    %3342 = vmatprep.mubr.f32.mxu0 0.0
    %v3343 = vand.u32 %v3176, 4294901760
    %3344 = vmatmul.mubr.f32.gmra.mrb[0].mxu0 %v3343
    %v3345 = vpop.f32.mrb[0].mxu0
    %v3346 = vadd.f32 %v3255, %v3345
    %v3347 = vpop.f32.mrb[0].mxu0
    %3348 = vmatprep.mubr.f32.mxu0 0.0
    %v3349 = vand.u32 %v3179, 4294901760
    %3350 = vmatmul.mubr.f32.gmra.mrb[0].mxu0 %v3349
    %v3351 = vpop.f32.mrb[0].mxu0
    %v3352 = vadd.f32 %v3265, %v3351
    %v3353 = vpop.f32.mrb[0].mxu0
    %3354 = vdwg.mxu0
    %3355 = vmatprep.subr.mxu0 0.0
    %v3356 = vand.u32 %v124, 4294901760
    %v3357 = vsub.f32 %v124, %v3356
    %3358 = vmatpush1.msra.mxu0 %v3357
    %3359 = vmatprep.subr.mxu0 0.0
    %v3360 = vand.u32 %v125, 4294901760
    %v3361 = vsub.f32 %v125, %v3360
    %3362 = vmatpush1.msra.mxu0 %v3361
    %3363 = vmatprep.subr.mxu0 0.0
    %3364 = vmatpush1.msra.mxu0 0.0
    %3365 = vmatprep.subr.mxu0 0.0
    %3366 = vmatpush1.msra.mxu0 0.0
    %3367 = vmatprep.subr.mxu0 0.0
    %3368 = vmatpush1.msra.mxu0 0.0
    %3369 = vmatprep.subr.mxu0 0.0
    %3370 = vmatpush1.msra.mxu0 0.0
    %3371 = vmatprep.subr.mxu0 0.0
    %3372 = vmatpush1.msra.mxu0 0.0
    %3373 = vmatprep.subr.mxu0 0.0
    %3374 = vmatpush1.msra.mxu0 0.0
    %3375 = vmatprep.subr.mxu0 0.0
    %3376 = vmatpush1.msra.mxu0 0.0
    %3377 = vmatprep.subr.mxu0 0.0
    %3378 = vmatpush1.msra.mxu0 0.0
    %3379 = vmatprep.subr.mxu0 0.0
    %3380 = vmatpush1.msra.mxu0 0.0
    %3381 = vmatprep.subr.mxu0 0.0
    %3382 = vmatpush1.msra.mxu0 0.0
    %3383 = vmatprep.subr.mxu0 0.0
    %3384 = vmatpush1.msra.mxu0 0.0
    %3385 = vmatprep.subr.mxu0 0.0
    %3386 = vmatpush1.msra.mxu0 0.0
    %3387 = vmatprep.subr.mxu0 0.0
    %3388 = vmatpush1.msra.mxu0 0.0
    %3389 = vmatprep.subr.mxu0 0.0
    %3390 = vmatpush1.msra.mxu0 0.0
    %3391 = vmatprep.subr.mxu0 0.0
    %3392 = vmatpush1.msra.mxu0 0.0
    %3393 = vmatprep.subr.mxu0 0.0
    %3394 = vmatpush1.msra.mxu0 0.0
    %3395 = vmatprep.subr.mxu0 0.0
    %3396 = vmatpush1.msra.mxu0 0.0
    %3397 = vmatprep.subr.mxu0 0.0
    %3398 = vmatpush1.msra.mxu0 0.0
    %3399 = vmatprep.subr.mxu0 0.0
    %3400 = vmatpush1.msra.mxu0 0.0
    %3401 = vmatprep.subr.mxu0 0.0
    %3402 = vmatpush1.msra.mxu0 0.0
    %3403 = vmatprep.subr.mxu0 0.0
    %3404 = vmatpush1.msra.mxu0 0.0
    %3405 = vmatprep.subr.mxu0 0.0
    %3406 = vmatpush1.msra.mxu0 0.0
    %3407 = vmatprep.subr.mxu0 0.0
    %3408 = vmatpush1.msra.mxu0 0.0
    %3409 = vmatprep.subr.mxu0 0.0
    %3410 = vmatpush1.msra.mxu0 0.0
    %3411 = vmatprep.subr.mxu0 0.0
    %3412 = vmatpush1.msra.mxu0 0.0
    %3413 = vmatprep.subr.mxu0 0.0
    %3414 = vmatpush1.msra.mxu0 0.0
    %3415 = vmatprep.subr.mxu0 0.0
    %3416 = vmatpush1.msra.mxu0 0.0
    %3417 = vmatprep.subr.mxu0 0.0
    %3418 = vmatpush1.msra.mxu0 0.0
    %3419 = vmatprep.subr.mxu0 0.0
    %3420 = vmatpush1.msra.mxu0 0.0
    %3421 = vmatprep.subr.mxu0 0.0
    %3422 = vmatpush1.msra.mxu0 0.0
    %3423 = vmatprep.mubr.f32.mxu0 0.0
    %v3424 = vand.u32 %v3176, 4294901760
    %v3425 = vsub.f32 %v3176, %v3424
    %3426 = vmatmul.mubr.f32.gmra.mrb[0].mxu0 %v3425
    %v3427 = vpop.f32.mrb[0].mxu0
    %v3428 = vadd.f32 %v3346, %v3427
    %v3429 = vpop.f32.mrb[0].mxu0
    %3430 = vmatprep.mubr.f32.mxu0 0.0
    %v3431 = vand.u32 %v3179, 4294901760
    %v3432 = vsub.f32 %v3179, %v3431
    %3433 = vmatmul.mubr.f32.gmra.mrb[0].mxu0 %v3432
    %v3434 = vpop.f32.mrb[0].mxu0
    %v3435 = vadd.f32 %v3352, %v3434
    %v3436 = vpop.f32.mrb[0].mxu0
    %3437 = vdwg.mxu0
    %3438 = vmatprep.subr.mxu0 0.0
    %v3439 = vand.u32 %v124, 4294901760
    %3440 = vmatpush1.msra.mxu0 %v3439
    %3441 = vmatprep.subr.mxu0 0.0
    %v3442 = vand.u32 %v125, 4294901760
    %3443 = vmatpush1.msra.mxu0 %v3442
    %3444 = vmatprep.subr.mxu0 0.0
    %3445 = vmatpush1.msra.mxu0 0.0
    %3446 = vmatprep.subr.mxu0 0.0
    %3447 = vmatpush1.msra.mxu0 0.0
    %3448 = vmatprep.subr.mxu0 0.0
    %3449 = vmatpush1.msra.mxu0 0.0
    %3450 = vmatprep.subr.mxu0 0.0
    %3451 = vmatpush1.msra.mxu0 0.0
    %3452 = vmatprep.subr.mxu0 0.0
    %3453 = vmatpush1.msra.mxu0 0.0
    %3454 = vmatprep.subr.mxu0 0.0
    %3455 = vmatpush1.msra.mxu0 0.0
    %3456 = vmatprep.subr.mxu0 0.0
    %3457 = vmatpush1.msra.mxu0 0.0
    %3458 = vmatprep.subr.mxu0 0.0
    %3459 = vmatpush1.msra.mxu0 0.0
    %3460 = vmatprep.subr.mxu0 0.0
    %3461 = vmatpush1.msra.mxu0 0.0
    %3462 = vmatprep.subr.mxu0 0.0
    %3463 = vmatpush1.msra.mxu0 0.0
    %3464 = vmatprep.subr.mxu0 0.0
    %3465 = vmatpush1.msra.mxu0 0.0
    %3466 = vmatprep.subr.mxu0 0.0
    %3467 = vmatpush1.msra.mxu0 0.0
    %3468 = vmatprep.subr.mxu0 0.0
    %3469 = vmatpush1.msra.mxu0 0.0
    %3470 = vmatprep.subr.mxu0 0.0
    %3471 = vmatpush1.msra.mxu0 0.0
    %3472 = vmatprep.subr.mxu0 0.0
    %3473 = vmatpush1.msra.mxu0 0.0
    %3474 = vmatprep.subr.mxu0 0.0
    %3475 = vmatpush1.msra.mxu0 0.0
    %3476 = vmatprep.subr.mxu0 0.0
    %3477 = vmatpush1.msra.mxu0 0.0
    %3478 = vmatprep.subr.mxu0 0.0
    %3479 = vmatpush1.msra.mxu0 0.0
    %3480 = vmatprep.subr.mxu0 0.0
    %3481 = vmatpush1.msra.mxu0 0.0
    %3482 = vmatprep.subr.mxu0 0.0
    %3483 = vmatpush1.msra.mxu0 0.0
    %3484 = vmatprep.subr.mxu0 0.0
    %3485 = vmatpush1.msra.mxu0 0.0
    %3486 = vmatprep.subr.mxu0 0.0
    %3487 = vmatpush1.msra.mxu0 0.0
    %3488 = vmatprep.subr.mxu0 0.0
    %3489 = vmatpush1.msra.mxu0 0.0
    %3490 = vmatprep.subr.mxu0 0.0
    %3491 = vmatpush1.msra.mxu0 0.0
    %3492 = vmatprep.subr.mxu0 0.0
    %3493 = vmatpush1.msra.mxu0 0.0
    %3494 = vmatprep.subr.mxu0 0.0
    %3495 = vmatpush1.msra.mxu0 0.0
    %3496 = vmatprep.subr.mxu0 0.0
    %3497 = vmatpush1.msra.mxu0 0.0
    %3498 = vmatprep.subr.mxu0 0.0
    %3499 = vmatpush1.msra.mxu0 0.0
    %3500 = vmatprep.subr.mxu0 0.0
    %3501 = vmatpush1.msra.mxu0 0.0
    %3502 = vmatprep.subr.mxu0 0.0
    %3503 = vmatpush1.msra.mxu0 0.0
    %3504 = vmatprep.mubr.f32.mxu0 0.0
    %v3505 = vand.u32 %v3176, 4294901760
    %v3506 = vsub.f32 %v3176, %v3505
    %v3507 = vand.u32 %v3506, 4294901760
    %3508 = vmatmul.mubr.f32.gmra.mrb[0].mxu0 %v3507
    %v3509 = vpop.f32.mrb[0].mxu0
    %v3510 = vadd.f32 %v3428, %v3509
    %v3511 = vpop.f32.mrb[0].mxu0
    %3512 = vmatprep.mubr.f32.mxu0 0.0
    %v3513 = vand.u32 %v3179, 4294901760
    %v3514 = vsub.f32 %v3179, %v3513
    %v3515 = vand.u32 %v3514, 4294901760
    %3516 = vmatmul.mubr.f32.gmra.mrb[0].mxu0 %v3515
    %v3517 = vpop.f32.mrb[0].mxu0
    %v3518 = vadd.f32 %v3435, %v3517
    %v3519 = vpop.f32.mrb[0].mxu0
    %3520 = vdwg.mxu0
    %3521 = vmatprep.subr.mxu0 0.0
    %v3522 = vand.u32 %v124, 4294901760
    %v3523 = vsub.f32 %v124, %v3522
    %v3524 = vand.u32 %v3523, 4294901760
    %3525 = vmatpush1.msra.mxu0 %v3524
    %3526 = vmatprep.subr.mxu0 0.0
    %v3527 = vand.u32 %v125, 4294901760
    %v3528 = vsub.f32 %v125, %v3527
    %v3529 = vand.u32 %v3528, 4294901760
    %3530 = vmatpush1.msra.mxu0 %v3529
    %3531 = vmatprep.subr.mxu0 0.0
    %3532 = vmatpush1.msra.mxu0 0.0
    %3533 = vmatprep.subr.mxu0 0.0
    %3534 = vmatpush1.msra.mxu0 0.0
    %3535 = vmatprep.subr.mxu0 0.0
    %3536 = vmatpush1.msra.mxu0 0.0
    %3537 = vmatprep.subr.mxu0 0.0
    %3538 = vmatpush1.msra.mxu0 0.0
    %3539 = vmatprep.subr.mxu0 0.0
    %3540 = vmatpush1.msra.mxu0 0.0
    %3541 = vmatprep.subr.mxu0 0.0
    %3542 = vmatpush1.msra.mxu0 0.0
    %3543 = vmatprep.subr.mxu0 0.0
    %3544 = vmatpush1.msra.mxu0 0.0
    %3545 = vmatprep.subr.mxu0 0.0
    %3546 = vmatpush1.msra.mxu0 0.0
    %3547 = vmatprep.subr.mxu0 0.0
    %3548 = vmatpush1.msra.mxu0 0.0
    %3549 = vmatprep.subr.mxu0 0.0
    %3550 = vmatpush1.msra.mxu0 0.0
    %3551 = vmatprep.subr.mxu0 0.0
    %3552 = vmatpush1.msra.mxu0 0.0
    %3553 = vmatprep.subr.mxu0 0.0
    %3554 = vmatpush1.msra.mxu0 0.0
    %3555 = vmatprep.subr.mxu0 0.0
    %3556 = vmatpush1.msra.mxu0 0.0
    %3557 = vmatprep.subr.mxu0 0.0
    %3558 = vmatpush1.msra.mxu0 0.0
    %3559 = vmatprep.subr.mxu0 0.0
    %3560 = vmatpush1.msra.mxu0 0.0
    %3561 = vmatprep.subr.mxu0 0.0
    %3562 = vmatpush1.msra.mxu0 0.0
    %3563 = vmatprep.subr.mxu0 0.0
    %3564 = vmatpush1.msra.mxu0 0.0
    %3565 = vmatprep.subr.mxu0 0.0
    %3566 = vmatpush1.msra.mxu0 0.0
    %3567 = vmatprep.subr.mxu0 0.0
    %3568 = vmatpush1.msra.mxu0 0.0
    %3569 = vmatprep.subr.mxu0 0.0
    %3570 = vmatpush1.msra.mxu0 0.0
    %3571 = vmatprep.subr.mxu0 0.0
    %3572 = vmatpush1.msra.mxu0 0.0
    %3573 = vmatprep.subr.mxu0 0.0
    %3574 = vmatpush1.msra.mxu0 0.0
    %3575 = vmatprep.subr.mxu0 0.0
    %3576 = vmatpush1.msra.mxu0 0.0
    %3577 = vmatprep.subr.mxu0 0.0
    %3578 = vmatpush1.msra.mxu0 0.0
    %3579 = vmatprep.subr.mxu0 0.0
    %3580 = vmatpush1.msra.mxu0 0.0
    %3581 = vmatprep.subr.mxu0 0.0
    %3582 = vmatpush1.msra.mxu0 0.0
    %3583 = vmatprep.subr.mxu0 0.0
    %3584 = vmatpush1.msra.mxu0 0.0
    %3585 = vmatprep.subr.mxu0 0.0
    %3586 = vmatpush1.msra.mxu0 0.0
    %3587 = vmatprep.subr.mxu0 0.0
    %3588 = vmatpush1.msra.mxu0 0.0
    %3589 = vmatprep.subr.mxu0 0.0
    %3590 = vmatpush1.msra.mxu0 0.0
    %3591 = vmatprep.mubr.f32.mxu0 0.0
    %v3592 = vand.u32 %v3176, 4294901760
    %3593 = vmatmul.mubr.f32.gmra.mrb[0].mxu0 %v3592
    %v3594 = vpop.f32.mrb[0].mxu0
    %v3595 = vadd.f32 %v3510, %v3594
    %v3596 = vpop.f32.mrb[0].mxu0
    %3597 = vmatprep.mubr.f32.mxu0 0.0
    %v3598 = vand.u32 %v3179, 4294901760
    %3599 = vmatmul.mubr.f32.gmra.mrb[0].mxu0 %v3598
    %v3600 = vpop.f32.mrb[0].mxu0
    %v3601 = vadd.f32 %v3518, %v3600
    %v3602 = vpop.f32.mrb[0].mxu0
    %3603 = vdwg.mxu0
    %3604 = vmatprep.subr.mxu0 0.0
    %v3605 = vand.u32 %v124, 4294901760
    %3606 = vmatpush1.msra.mxu0 %v3605
    %3607 = vmatprep.subr.mxu0 0.0
    %v3608 = vand.u32 %v125, 4294901760
    %3609 = vmatpush1.msra.mxu0 %v3608
    %3610 = vmatprep.subr.mxu0 0.0
    %3611 = vmatpush1.msra.mxu0 0.0
    %3612 = vmatprep.subr.mxu0 0.0
    %3613 = vmatpush1.msra.mxu0 0.0
    %3614 = vmatprep.subr.mxu0 0.0
    %3615 = vmatpush1.msra.mxu0 0.0
    %3616 = vmatprep.subr.mxu0 0.0
    %3617 = vmatpush1.msra.mxu0 0.0
    %3618 = vmatprep.subr.mxu0 0.0
    %3619 = vmatpush1.msra.mxu0 0.0
    %3620 = vmatprep.subr.mxu0 0.0
    %3621 = vmatpush1.msra.mxu0 0.0
    %3622 = vmatprep.subr.mxu0 0.0
    %3623 = vmatpush1.msra.mxu0 0.0
    %3624 = vmatprep.subr.mxu0 0.0
    %3625 = vmatpush1.msra.mxu0 0.0
    %3626 = vmatprep.subr.mxu0 0.0
    %3627 = vmatpush1.msra.mxu0 0.0
    %3628 = vmatprep.subr.mxu0 0.0
    %3629 = vmatpush1.msra.mxu0 0.0
    %3630 = vmatprep.subr.mxu0 0.0
    %3631 = vmatpush1.msra.mxu0 0.0
    %3632 = vmatprep.subr.mxu0 0.0
    %3633 = vmatpush1.msra.mxu0 0.0
    %3634 = vmatprep.subr.mxu0 0.0
    %3635 = vmatpush1.msra.mxu0 0.0
    %3636 = vmatprep.subr.mxu0 0.0
    %3637 = vmatpush1.msra.mxu0 0.0
    %3638 = vmatprep.subr.mxu0 0.0
    %3639 = vmatpush1.msra.mxu0 0.0
    %3640 = vmatprep.subr.mxu0 0.0
    %3641 = vmatpush1.msra.mxu0 0.0
    %3642 = vmatprep.subr.mxu0 0.0
    %3643 = vmatpush1.msra.mxu0 0.0
    %3644 = vmatprep.subr.mxu0 0.0
    %3645 = vmatpush1.msra.mxu0 0.0
    %3646 = vmatprep.subr.mxu0 0.0
    %3647 = vmatpush1.msra.mxu0 0.0
    %3648 = vmatprep.subr.mxu0 0.0
    %3649 = vmatpush1.msra.mxu0 0.0
    %3650 = vmatprep.subr.mxu0 0.0
    %3651 = vmatpush1.msra.mxu0 0.0
    %3652 = vmatprep.subr.mxu0 0.0
    %3653 = vmatpush1.msra.mxu0 0.0
    %3654 = vmatprep.subr.mxu0 0.0
    %3655 = vmatpush1.msra.mxu0 0.0
    %3656 = vmatprep.subr.mxu0 0.0
    %3657 = vmatpush1.msra.mxu0 0.0
    %3658 = vmatprep.subr.mxu0 0.0
    %3659 = vmatpush1.msra.mxu0 0.0
    %3660 = vmatprep.subr.mxu0 0.0
    %3661 = vmatpush1.msra.mxu0 0.0
    %3662 = vmatprep.subr.mxu0 0.0
    %3663 = vmatpush1.msra.mxu0 0.0
    %3664 = vmatprep.subr.mxu0 0.0
    %3665 = vmatpush1.msra.mxu0 0.0
    %3666 = vmatprep.subr.mxu0 0.0
    %3667 = vmatpush1.msra.mxu0 0.0
    %3668 = vmatprep.subr.mxu0 0.0
    %3669 = vmatpush1.msra.mxu0 0.0
    %3670 = vmatprep.mubr.f32.mxu0 0.0
    %v3671 = vand.u32 %v3176, 4294901760
    %3672 = vmatmul.mubr.f32.gmra.mrb[0].mxu0 %v3671
    %v3673 = vpop.f32.mrb[0].mxu0
    %v3674 = vadd.f32 %v3595, %v3673
    %v3675 = vpop.f32.mrb[0].mxu0
    %3676 = vmatprep.mubr.f32.mxu0 0.0
    %v3677 = vand.u32 %v3179, 4294901760
    %3678 = vmatmul.mubr.f32.gmra.mrb[0].mxu0 %v3677
    %v3679 = vpop.f32.mrb[0].mxu0
    %v3680 = vadd.f32 %v3601, %v3679
    %v3681 = vpop.f32.mrb[0].mxu0
    %3682 = vdwg.mxu0
    %v3684 = vsel %vm126, %v37, 0
    %v3687 = vsel %vm126, %v38, 0
    %3689 = vmatprep.subr.mxu0 0.0
    %v3690 = vand.u32 %v124, 4294901760
    %3691 = vmatpush1.msra.mxu0 %v3690
    %3692 = vmatprep.subr.mxu0 0.0
    %v3693 = vand.u32 %v125, 4294901760
    %3694 = vmatpush1.msra.mxu0 %v3693
    %3695 = vmatprep.subr.mxu0 0.0
    %3696 = vmatpush1.msra.mxu0 0.0
    %3697 = vmatprep.subr.mxu0 0.0
    %3698 = vmatpush1.msra.mxu0 0.0
    %3699 = vmatprep.subr.mxu0 0.0
    %3700 = vmatpush1.msra.mxu0 0.0
    %3701 = vmatprep.subr.mxu0 0.0
    %3702 = vmatpush1.msra.mxu0 0.0
    %3703 = vmatprep.subr.mxu0 0.0
    %3704 = vmatpush1.msra.mxu0 0.0
    %3705 = vmatprep.subr.mxu0 0.0
    %3706 = vmatpush1.msra.mxu0 0.0
    %3707 = vmatprep.subr.mxu0 0.0
    %3708 = vmatpush1.msra.mxu0 0.0
    %3709 = vmatprep.subr.mxu0 0.0
    %3710 = vmatpush1.msra.mxu0 0.0
    %3711 = vmatprep.subr.mxu0 0.0
    %3712 = vmatpush1.msra.mxu0 0.0
    %3713 = vmatprep.subr.mxu0 0.0
    %3714 = vmatpush1.msra.mxu0 0.0
    %3715 = vmatprep.subr.mxu0 0.0
    %3716 = vmatpush1.msra.mxu0 0.0
    %3717 = vmatprep.subr.mxu0 0.0
    %3718 = vmatpush1.msra.mxu0 0.0
    %3719 = vmatprep.subr.mxu0 0.0
    %3720 = vmatpush1.msra.mxu0 0.0
    %3721 = vmatprep.subr.mxu0 0.0
    %3722 = vmatpush1.msra.mxu0 0.0
    %3723 = vmatprep.subr.mxu0 0.0
    %3724 = vmatpush1.msra.mxu0 0.0
    %3725 = vmatprep.subr.mxu0 0.0
    %3726 = vmatpush1.msra.mxu0 0.0
    %3727 = vmatprep.subr.mxu0 0.0
    %3728 = vmatpush1.msra.mxu0 0.0
    %3729 = vmatprep.subr.mxu0 0.0
    %3730 = vmatpush1.msra.mxu0 0.0
    %3731 = vmatprep.subr.mxu0 0.0
    %3732 = vmatpush1.msra.mxu0 0.0
    %3733 = vmatprep.subr.mxu0 0.0
    %3734 = vmatpush1.msra.mxu0 0.0
    %3735 = vmatprep.subr.mxu0 0.0
    %3736 = vmatpush1.msra.mxu0 0.0
    %3737 = vmatprep.subr.mxu0 0.0
    %3738 = vmatpush1.msra.mxu0 0.0
    %3739 = vmatprep.subr.mxu0 0.0
    %3740 = vmatpush1.msra.mxu0 0.0
    %3741 = vmatprep.subr.mxu0 0.0
    %3742 = vmatpush1.msra.mxu0 0.0
    %3743 = vmatprep.subr.mxu0 0.0
    %3744 = vmatpush1.msra.mxu0 0.0
    %3745 = vmatprep.subr.mxu0 0.0
    %3746 = vmatpush1.msra.mxu0 0.0
    %3747 = vmatprep.subr.mxu0 0.0
    %3748 = vmatpush1.msra.mxu0 0.0
    %3749 = vmatprep.subr.mxu0 0.0
    %3750 = vmatpush1.msra.mxu0 0.0
    %3751 = vmatprep.subr.mxu0 0.0
    %3752 = vmatpush1.msra.mxu0 0.0
    %3753 = vmatprep.subr.mxu0 0.0
    %3754 = vmatpush1.msra.mxu0 0.0
    %3755 = vmatprep.mubr.f32.mxu0 0.0
    %v3756 = vand.u32 %v3684, 4294901760
    %v3757 = vsub.f32 %v3684, %v3756
    %v3758 = vand.u32 %v3757, 4294901760
    %v3759 = vsub.f32 %v3757, %v3758
    %v3760 = vand.u32 %v3759, 4294901760
    %3761 = vmatmul.mubr.f32.gmra.mrb[0].mxu0 %v3760
    %v3762 = vpop.f32.mrb[0].mxu0
    %v3763 = vadd.f32 0.0, %v3762
    %v3764 = vpop.f32.mrb[0].mxu0
    %3765 = vmatprep.mubr.f32.mxu0 0.0
    %v3766 = vand.u32 %v3687, 4294901760
    %v3767 = vsub.f32 %v3687, %v3766
    %v3768 = vand.u32 %v3767, 4294901760
    %v3769 = vsub.f32 %v3767, %v3768
    %v3770 = vand.u32 %v3769, 4294901760
    %3771 = vmatmul.mubr.f32.gmra.mrb[0].mxu0 %v3770
    %v3772 = vpop.f32.mrb[0].mxu0
    %v3773 = vadd.f32 0.0, %v3772
    %v3774 = vpop.f32.mrb[0].mxu0
    %3775 = vdwg.mxu0
    %3776 = vmatprep.subr.mxu0 0.0
    %v3777 = vand.u32 %v124, 4294901760
    %v3778 = vsub.f32 %v124, %v3777
    %v3779 = vand.u32 %v3778, 4294901760
    %v3780 = vsub.f32 %v3778, %v3779
    %v3781 = vand.u32 %v3780, 4294901760
    %3782 = vmatpush1.msra.mxu0 %v3781
    %3783 = vmatprep.subr.mxu0 0.0
    %v3784 = vand.u32 %v125, 4294901760
    %v3785 = vsub.f32 %v125, %v3784
    %v3786 = vand.u32 %v3785, 4294901760
    %v3787 = vsub.f32 %v3785, %v3786
    %v3788 = vand.u32 %v3787, 4294901760
    %3789 = vmatpush1.msra.mxu0 %v3788
    %3790 = vmatprep.subr.mxu0 0.0
    %3791 = vmatpush1.msra.mxu0 0.0
    %3792 = vmatprep.subr.mxu0 0.0
    %3793 = vmatpush1.msra.mxu0 0.0
    %3794 = vmatprep.subr.mxu0 0.0
    %3795 = vmatpush1.msra.mxu0 0.0
    %3796 = vmatprep.subr.mxu0 0.0
    %3797 = vmatpush1.msra.mxu0 0.0
    %3798 = vmatprep.subr.mxu0 0.0
    %3799 = vmatpush1.msra.mxu0 0.0
    %3800 = vmatprep.subr.mxu0 0.0
    %3801 = vmatpush1.msra.mxu0 0.0
    %3802 = vmatprep.subr.mxu0 0.0
    %3803 = vmatpush1.msra.mxu0 0.0
    %3804 = vmatprep.subr.mxu0 0.0
    %3805 = vmatpush1.msra.mxu0 0.0
    %3806 = vmatprep.subr.mxu0 0.0
    %3807 = vmatpush1.msra.mxu0 0.0
    %3808 = vmatprep.subr.mxu0 0.0
    %3809 = vmatpush1.msra.mxu0 0.0
    %3810 = vmatprep.subr.mxu0 0.0
    %3811 = vmatpush1.msra.mxu0 0.0
    %3812 = vmatprep.subr.mxu0 0.0
    %3813 = vmatpush1.msra.mxu0 0.0
    %3814 = vmatprep.subr.mxu0 0.0
    %3815 = vmatpush1.msra.mxu0 0.0
    %3816 = vmatprep.subr.mxu0 0.0
    %3817 = vmatpush1.msra.mxu0 0.0
    %3818 = vmatprep.subr.mxu0 0.0
    %3819 = vmatpush1.msra.mxu0 0.0
    %3820 = vmatprep.subr.mxu0 0.0
    %3821 = vmatpush1.msra.mxu0 0.0
    %3822 = vmatprep.subr.mxu0 0.0
    %3823 = vmatpush1.msra.mxu0 0.0
    %3824 = vmatprep.subr.mxu0 0.0
    %3825 = vmatpush1.msra.mxu0 0.0
    %3826 = vmatprep.subr.mxu0 0.0
    %3827 = vmatpush1.msra.mxu0 0.0
    %3828 = vmatprep.subr.mxu0 0.0
    %3829 = vmatpush1.msra.mxu0 0.0
    %3830 = vmatprep.subr.mxu0 0.0
    %3831 = vmatpush1.msra.mxu0 0.0
    %3832 = vmatprep.subr.mxu0 0.0
    %3833 = vmatpush1.msra.mxu0 0.0
    %3834 = vmatprep.subr.mxu0 0.0
    %3835 = vmatpush1.msra.mxu0 0.0
    %3836 = vmatprep.subr.mxu0 0.0
    %3837 = vmatpush1.msra.mxu0 0.0
    %3838 = vmatprep.subr.mxu0 0.0
    %3839 = vmatpush1.msra.mxu0 0.0
    %3840 = vmatprep.subr.mxu0 0.0
    %3841 = vmatpush1.msra.mxu0 0.0
    %3842 = vmatprep.subr.mxu0 0.0
    %3843 = vmatpush1.msra.mxu0 0.0
    %3844 = vmatprep.subr.mxu0 0.0
    %3845 = vmatpush1.msra.mxu0 0.0
    %3846 = vmatprep.subr.mxu0 0.0
    %3847 = vmatpush1.msra.mxu0 0.0
    %3848 = vmatprep.subr.mxu0 0.0
    %3849 = vmatpush1.msra.mxu0 0.0
    %3850 = vmatprep.mubr.f32.mxu0 0.0
    %v3851 = vand.u32 %v3684, 4294901760
    %3852 = vmatmul.mubr.f32.gmra.mrb[0].mxu0 %v3851
    %v3853 = vpop.f32.mrb[0].mxu0
    %v3854 = vadd.f32 %v3763, %v3853
    %v3855 = vpop.f32.mrb[0].mxu0
    %3856 = vmatprep.mubr.f32.mxu0 0.0
    %v3857 = vand.u32 %v3687, 4294901760
    %3858 = vmatmul.mubr.f32.gmra.mrb[0].mxu0 %v3857
    %v3859 = vpop.f32.mrb[0].mxu0
    %v3860 = vadd.f32 %v3773, %v3859
    %v3861 = vpop.f32.mrb[0].mxu0
    %3862 = vdwg.mxu0
    %3863 = vmatprep.subr.mxu0 0.0
    %v3864 = vand.u32 %v124, 4294901760
    %v3865 = vsub.f32 %v124, %v3864
    %3866 = vmatpush1.msra.mxu0 %v3865
    %3867 = vmatprep.subr.mxu0 0.0
    %v3868 = vand.u32 %v125, 4294901760
    %v3869 = vsub.f32 %v125, %v3868
    %3870 = vmatpush1.msra.mxu0 %v3869
    %3871 = vmatprep.subr.mxu0 0.0
    %3872 = vmatpush1.msra.mxu0 0.0
    %3873 = vmatprep.subr.mxu0 0.0
    %3874 = vmatpush1.msra.mxu0 0.0
    %3875 = vmatprep.subr.mxu0 0.0
    %3876 = vmatpush1.msra.mxu0 0.0
    %3877 = vmatprep.subr.mxu0 0.0
    %3878 = vmatpush1.msra.mxu0 0.0
    %3879 = vmatprep.subr.mxu0 0.0
    %3880 = vmatpush1.msra.mxu0 0.0
    %3881 = vmatprep.subr.mxu0 0.0
    %3882 = vmatpush1.msra.mxu0 0.0
    %3883 = vmatprep.subr.mxu0 0.0
    %3884 = vmatpush1.msra.mxu0 0.0
    %3885 = vmatprep.subr.mxu0 0.0
    %3886 = vmatpush1.msra.mxu0 0.0
    %3887 = vmatprep.subr.mxu0 0.0
    %3888 = vmatpush1.msra.mxu0 0.0
    %3889 = vmatprep.subr.mxu0 0.0
    %3890 = vmatpush1.msra.mxu0 0.0
    %3891 = vmatprep.subr.mxu0 0.0
    %3892 = vmatpush1.msra.mxu0 0.0
    %3893 = vmatprep.subr.mxu0 0.0
    %3894 = vmatpush1.msra.mxu0 0.0
    %3895 = vmatprep.subr.mxu0 0.0
    %3896 = vmatpush1.msra.mxu0 0.0
    %3897 = vmatprep.subr.mxu0 0.0
    %3898 = vmatpush1.msra.mxu0 0.0
    %3899 = vmatprep.subr.mxu0 0.0
    %3900 = vmatpush1.msra.mxu0 0.0
    %3901 = vmatprep.subr.mxu0 0.0
    %3902 = vmatpush1.msra.mxu0 0.0
    %3903 = vmatprep.subr.mxu0 0.0
    %3904 = vmatpush1.msra.mxu0 0.0
    %3905 = vmatprep.subr.mxu0 0.0
    %3906 = vmatpush1.msra.mxu0 0.0
    %3907 = vmatprep.subr.mxu0 0.0
    %3908 = vmatpush1.msra.mxu0 0.0
    %3909 = vmatprep.subr.mxu0 0.0
    %3910 = vmatpush1.msra.mxu0 0.0
    %3911 = vmatprep.subr.mxu0 0.0
    %3912 = vmatpush1.msra.mxu0 0.0
    %3913 = vmatprep.subr.mxu0 0.0
    %3914 = vmatpush1.msra.mxu0 0.0
    %3915 = vmatprep.subr.mxu0 0.0
    %3916 = vmatpush1.msra.mxu0 0.0
    %3917 = vmatprep.subr.mxu0 0.0
    %3918 = vmatpush1.msra.mxu0 0.0
    %3919 = vmatprep.subr.mxu0 0.0
    %3920 = vmatpush1.msra.mxu0 0.0
    %3921 = vmatprep.subr.mxu0 0.0
    %3922 = vmatpush1.msra.mxu0 0.0
    %3923 = vmatprep.subr.mxu0 0.0
    %3924 = vmatpush1.msra.mxu0 0.0
    %3925 = vmatprep.subr.mxu0 0.0
    %3926 = vmatpush1.msra.mxu0 0.0
    %3927 = vmatprep.subr.mxu0 0.0
    %3928 = vmatpush1.msra.mxu0 0.0
    %3929 = vmatprep.subr.mxu0 0.0
    %3930 = vmatpush1.msra.mxu0 0.0
    %3931 = vmatprep.mubr.f32.mxu0 0.0
    %v3932 = vand.u32 %v3684, 4294901760
    %v3933 = vsub.f32 %v3684, %v3932
    %3934 = vmatmul.mubr.f32.gmra.mrb[0].mxu0 %v3933
    %v3935 = vpop.f32.mrb[0].mxu0
    %v3936 = vadd.f32 %v3854, %v3935
    %v3937 = vpop.f32.mrb[0].mxu0
    %3938 = vmatprep.mubr.f32.mxu0 0.0
    %v3939 = vand.u32 %v3687, 4294901760
    %v3940 = vsub.f32 %v3687, %v3939
    %3941 = vmatmul.mubr.f32.gmra.mrb[0].mxu0 %v3940
    %v3942 = vpop.f32.mrb[0].mxu0
    %v3943 = vadd.f32 %v3860, %v3942
    %v3944 = vpop.f32.mrb[0].mxu0
    %3945 = vdwg.mxu0
    %3946 = vmatprep.subr.mxu0 0.0
    %v3947 = vand.u32 %v124, 4294901760
    %3948 = vmatpush1.msra.mxu0 %v3947
    %3949 = vmatprep.subr.mxu0 0.0
    %v3950 = vand.u32 %v125, 4294901760
    %3951 = vmatpush1.msra.mxu0 %v3950
    %3952 = vmatprep.subr.mxu0 0.0
    %3953 = vmatpush1.msra.mxu0 0.0
    %3954 = vmatprep.subr.mxu0 0.0
    %3955 = vmatpush1.msra.mxu0 0.0
    %3956 = vmatprep.subr.mxu0 0.0
    %3957 = vmatpush1.msra.mxu0 0.0
    %3958 = vmatprep.subr.mxu0 0.0
    %3959 = vmatpush1.msra.mxu0 0.0
    %3960 = vmatprep.subr.mxu0 0.0
    %3961 = vmatpush1.msra.mxu0 0.0
    %3962 = vmatprep.subr.mxu0 0.0
    %3963 = vmatpush1.msra.mxu0 0.0
    %3964 = vmatprep.subr.mxu0 0.0
    %3965 = vmatpush1.msra.mxu0 0.0
    %3966 = vmatprep.subr.mxu0 0.0
    %3967 = vmatpush1.msra.mxu0 0.0
    %3968 = vmatprep.subr.mxu0 0.0
    %3969 = vmatpush1.msra.mxu0 0.0
    %3970 = vmatprep.subr.mxu0 0.0
    %3971 = vmatpush1.msra.mxu0 0.0
    %3972 = vmatprep.subr.mxu0 0.0
    %3973 = vmatpush1.msra.mxu0 0.0
    %3974 = vmatprep.subr.mxu0 0.0
    %3975 = vmatpush1.msra.mxu0 0.0
    %3976 = vmatprep.subr.mxu0 0.0
    %3977 = vmatpush1.msra.mxu0 0.0
    %3978 = vmatprep.subr.mxu0 0.0
    %3979 = vmatpush1.msra.mxu0 0.0
    %3980 = vmatprep.subr.mxu0 0.0
    %3981 = vmatpush1.msra.mxu0 0.0
    %3982 = vmatprep.subr.mxu0 0.0
    %3983 = vmatpush1.msra.mxu0 0.0
    %3984 = vmatprep.subr.mxu0 0.0
    %3985 = vmatpush1.msra.mxu0 0.0
    %3986 = vmatprep.subr.mxu0 0.0
    %3987 = vmatpush1.msra.mxu0 0.0
    %3988 = vmatprep.subr.mxu0 0.0
    %3989 = vmatpush1.msra.mxu0 0.0
    %3990 = vmatprep.subr.mxu0 0.0
    %3991 = vmatpush1.msra.mxu0 0.0
    %3992 = vmatprep.subr.mxu0 0.0
    %3993 = vmatpush1.msra.mxu0 0.0
    %3994 = vmatprep.subr.mxu0 0.0
    %3995 = vmatpush1.msra.mxu0 0.0
    %3996 = vmatprep.subr.mxu0 0.0
    %3997 = vmatpush1.msra.mxu0 0.0
    %3998 = vmatprep.subr.mxu0 0.0
    %3999 = vmatpush1.msra.mxu0 0.0
    %4000 = vmatprep.subr.mxu0 0.0
    %4001 = vmatpush1.msra.mxu0 0.0
    %4002 = vmatprep.subr.mxu0 0.0
    %4003 = vmatpush1.msra.mxu0 0.0
    %4004 = vmatprep.subr.mxu0 0.0
    %4005 = vmatpush1.msra.mxu0 0.0
    %4006 = vmatprep.subr.mxu0 0.0
    %4007 = vmatpush1.msra.mxu0 0.0
    %4008 = vmatprep.subr.mxu0 0.0
    %4009 = vmatpush1.msra.mxu0 0.0
    %4010 = vmatprep.subr.mxu0 0.0
    %4011 = vmatpush1.msra.mxu0 0.0
    %4012 = vmatprep.mubr.f32.mxu0 0.0
    %v4013 = vand.u32 %v3684, 4294901760
    %v4014 = vsub.f32 %v3684, %v4013
    %v4015 = vand.u32 %v4014, 4294901760
    %4016 = vmatmul.mubr.f32.gmra.mrb[0].mxu0 %v4015
    %v4017 = vpop.f32.mrb[0].mxu0
    %v4018 = vadd.f32 %v3936, %v4017
    %v4019 = vpop.f32.mrb[0].mxu0
    %4020 = vmatprep.mubr.f32.mxu0 0.0
    %v4021 = vand.u32 %v3687, 4294901760
    %v4022 = vsub.f32 %v3687, %v4021
    %v4023 = vand.u32 %v4022, 4294901760
    %4024 = vmatmul.mubr.f32.gmra.mrb[0].mxu0 %v4023
    %v4025 = vpop.f32.mrb[0].mxu0
    %v4026 = vadd.f32 %v3943, %v4025
    %v4027 = vpop.f32.mrb[0].mxu0
    %4028 = vdwg.mxu0
    %4029 = vmatprep.subr.mxu0 0.0
    %v4030 = vand.u32 %v124, 4294901760
    %v4031 = vsub.f32 %v124, %v4030
    %v4032 = vand.u32 %v4031, 4294901760
    %4033 = vmatpush1.msra.mxu0 %v4032
    %4034 = vmatprep.subr.mxu0 0.0
    %v4035 = vand.u32 %v125, 4294901760
    %v4036 = vsub.f32 %v125, %v4035
    %v4037 = vand.u32 %v4036, 4294901760
    %4038 = vmatpush1.msra.mxu0 %v4037
    %4039 = vmatprep.subr.mxu0 0.0
    %4040 = vmatpush1.msra.mxu0 0.0
    %4041 = vmatprep.subr.mxu0 0.0
    %4042 = vmatpush1.msra.mxu0 0.0
    %4043 = vmatprep.subr.mxu0 0.0
    %4044 = vmatpush1.msra.mxu0 0.0
    %4045 = vmatprep.subr.mxu0 0.0
    %4046 = vmatpush1.msra.mxu0 0.0
    %4047 = vmatprep.subr.mxu0 0.0
    %4048 = vmatpush1.msra.mxu0 0.0
    %4049 = vmatprep.subr.mxu0 0.0
    %4050 = vmatpush1.msra.mxu0 0.0
    %4051 = vmatprep.subr.mxu0 0.0
    %4052 = vmatpush1.msra.mxu0 0.0
    %4053 = vmatprep.subr.mxu0 0.0
    %4054 = vmatpush1.msra.mxu0 0.0
    %4055 = vmatprep.subr.mxu0 0.0
    %4056 = vmatpush1.msra.mxu0 0.0
    %4057 = vmatprep.subr.mxu0 0.0
    %4058 = vmatpush1.msra.mxu0 0.0
    %4059 = vmatprep.subr.mxu0 0.0
    %4060 = vmatpush1.msra.mxu0 0.0
    %4061 = vmatprep.subr.mxu0 0.0
    %4062 = vmatpush1.msra.mxu0 0.0
    %4063 = vmatprep.subr.mxu0 0.0
    %4064 = vmatpush1.msra.mxu0 0.0
    %4065 = vmatprep.subr.mxu0 0.0
    %4066 = vmatpush1.msra.mxu0 0.0
    %4067 = vmatprep.subr.mxu0 0.0
    %4068 = vmatpush1.msra.mxu0 0.0
    %4069 = vmatprep.subr.mxu0 0.0
    %4070 = vmatpush1.msra.mxu0 0.0
    %4071 = vmatprep.subr.mxu0 0.0
    %4072 = vmatpush1.msra.mxu0 0.0
    %4073 = vmatprep.subr.mxu0 0.0
    %4074 = vmatpush1.msra.mxu0 0.0
    %4075 = vmatprep.subr.mxu0 0.0
    %4076 = vmatpush1.msra.mxu0 0.0
    %4077 = vmatprep.subr.mxu0 0.0
    %4078 = vmatpush1.msra.mxu0 0.0
    %4079 = vmatprep.subr.mxu0 0.0
    %4080 = vmatpush1.msra.mxu0 0.0
    %4081 = vmatprep.subr.mxu0 0.0
    %4082 = vmatpush1.msra.mxu0 0.0
    %4083 = vmatprep.subr.mxu0 0.0
    %4084 = vmatpush1.msra.mxu0 0.0
    %4085 = vmatprep.subr.mxu0 0.0
    %4086 = vmatpush1.msra.mxu0 0.0
    %4087 = vmatprep.subr.mxu0 0.0
    %4088 = vmatpush1.msra.mxu0 0.0
    %4089 = vmatprep.subr.mxu0 0.0
    %4090 = vmatpush1.msra.mxu0 0.0
    %4091 = vmatprep.subr.mxu0 0.0
    %4092 = vmatpush1.msra.mxu0 0.0
    %4093 = vmatprep.subr.mxu0 0.0
    %4094 = vmatpush1.msra.mxu0 0.0
    %4095 = vmatprep.subr.mxu0 0.0
    %4096 = vmatpush1.msra.mxu0 0.0
    %4097 = vmatprep.subr.mxu0 0.0
    %4098 = vmatpush1.msra.mxu0 0.0
    %4099 = vmatprep.mubr.f32.mxu0 0.0
    %v4100 = vand.u32 %v3684, 4294901760
    %4101 = vmatmul.mubr.f32.gmra.mrb[0].mxu0 %v4100
    %v4102 = vpop.f32.mrb[0].mxu0
    %v4103 = vadd.f32 %v4018, %v4102
    %v4104 = vpop.f32.mrb[0].mxu0
    %4105 = vmatprep.mubr.f32.mxu0 0.0
    %v4106 = vand.u32 %v3687, 4294901760
    %4107 = vmatmul.mubr.f32.gmra.mrb[0].mxu0 %v4106
    %v4108 = vpop.f32.mrb[0].mxu0
    %v4109 = vadd.f32 %v4026, %v4108
    %v4110 = vpop.f32.mrb[0].mxu0
    %4111 = vdwg.mxu0
    %4112 = vmatprep.subr.mxu0 0.0
    %v4113 = vand.u32 %v124, 4294901760
    %4114 = vmatpush1.msra.mxu0 %v4113
    %4115 = vmatprep.subr.mxu0 0.0
    %v4116 = vand.u32 %v125, 4294901760
    %4117 = vmatpush1.msra.mxu0 %v4116
    %4118 = vmatprep.subr.mxu0 0.0
    %4119 = vmatpush1.msra.mxu0 0.0
    %4120 = vmatprep.subr.mxu0 0.0
    %4121 = vmatpush1.msra.mxu0 0.0
    %4122 = vmatprep.subr.mxu0 0.0
    %4123 = vmatpush1.msra.mxu0 0.0
    %4124 = vmatprep.subr.mxu0 0.0
    %4125 = vmatpush1.msra.mxu0 0.0
    %4126 = vmatprep.subr.mxu0 0.0
    %4127 = vmatpush1.msra.mxu0 0.0
    %4128 = vmatprep.subr.mxu0 0.0
    %4129 = vmatpush1.msra.mxu0 0.0
    %4130 = vmatprep.subr.mxu0 0.0
    %4131 = vmatpush1.msra.mxu0 0.0
    %4132 = vmatprep.subr.mxu0 0.0
    %4133 = vmatpush1.msra.mxu0 0.0
    %4134 = vmatprep.subr.mxu0 0.0
    %4135 = vmatpush1.msra.mxu0 0.0
    %4136 = vmatprep.subr.mxu0 0.0
    %4137 = vmatpush1.msra.mxu0 0.0
    %4138 = vmatprep.subr.mxu0 0.0
    %4139 = vmatpush1.msra.mxu0 0.0
    %4140 = vmatprep.subr.mxu0 0.0
    %4141 = vmatpush1.msra.mxu0 0.0
    %4142 = vmatprep.subr.mxu0 0.0
    %4143 = vmatpush1.msra.mxu0 0.0
    %4144 = vmatprep.subr.mxu0 0.0
    %4145 = vmatpush1.msra.mxu0 0.0
    %4146 = vmatprep.subr.mxu0 0.0
    %4147 = vmatpush1.msra.mxu0 0.0
    %4148 = vmatprep.subr.mxu0 0.0
    %4149 = vmatpush1.msra.mxu0 0.0
    %4150 = vmatprep.subr.mxu0 0.0
    %4151 = vmatpush1.msra.mxu0 0.0
    %4152 = vmatprep.subr.mxu0 0.0
    %4153 = vmatpush1.msra.mxu0 0.0
    %4154 = vmatprep.subr.mxu0 0.0
    %4155 = vmatpush1.msra.mxu0 0.0
    %4156 = vmatprep.subr.mxu0 0.0
    %4157 = vmatpush1.msra.mxu0 0.0
    %4158 = vmatprep.subr.mxu0 0.0
    %4159 = vmatpush1.msra.mxu0 0.0
    %4160 = vmatprep.subr.mxu0 0.0
    %4161 = vmatpush1.msra.mxu0 0.0
    %4162 = vmatprep.subr.mxu0 0.0
    %4163 = vmatpush1.msra.mxu0 0.0
    %4164 = vmatprep.subr.mxu0 0.0
    %4165 = vmatpush1.msra.mxu0 0.0
    %4166 = vmatprep.subr.mxu0 0.0
    %4167 = vmatpush1.msra.mxu0 0.0
    %4168 = vmatprep.subr.mxu0 0.0
    %4169 = vmatpush1.msra.mxu0 0.0
    %4170 = vmatprep.subr.mxu0 0.0
    %4171 = vmatpush1.msra.mxu0 0.0
    %4172 = vmatprep.subr.mxu0 0.0
    %4173 = vmatpush1.msra.mxu0 0.0
    %4174 = vmatprep.subr.mxu0 0.0
    %4175 = vmatpush1.msra.mxu0 0.0
    %4176 = vmatprep.subr.mxu0 0.0
    %4177 = vmatpush1.msra.mxu0 0.0
    %4178 = vmatprep.mubr.f32.mxu0 0.0
    %v4179 = vand.u32 %v3684, 4294901760
    %4180 = vmatmul.mubr.f32.gmra.mrb[0].mxu0 %v4179
    %v4181 = vpop.f32.mrb[0].mxu0
    %v4182 = vadd.f32 %v4103, %v4181
    %v4183 = vpop.f32.mrb[0].mxu0
    %4184 = vmatprep.mubr.f32.mxu0 0.0
    %v4185 = vand.u32 %v3687, 4294901760
    %4186 = vmatmul.mubr.f32.gmra.mrb[0].mxu0 %v4185
    %v4187 = vpop.f32.mrb[0].mxu0
    %v4188 = vadd.f32 %v4109, %v4187
    %v4189 = vpop.f32.mrb[0].mxu0
    %4190 = vdwg.mxu0
    %v4192 = vsel %vm126, %v103, 0
    %v4195 = vsel %vm126, %v104, 0
    %v4198 = vsel %vm126, %v105, 0
    %v4201 = vsel %vm126, %v106, 0
    %4203 = vmatprep.subr.mxu0 0.0
    %v4204 = vand.u32 %v626, 4294901760
    %4205 = vmatpush1.msra.mxu0 %v4204
    %4206 = vmatprep.subr.mxu0 0.0
    %v4207 = vand.u32 %v632, 4294901760
    %4208 = vmatpush1.msra.mxu0 %v4207
    %4209 = vmatprep.subr.mxu0 0.0
    %4210 = vmatpush1.msra.mxu0 0.0
    %4211 = vmatprep.subr.mxu0 0.0
    %4212 = vmatpush1.msra.mxu0 0.0
    %4213 = vmatprep.subr.mxu0 0.0
    %4214 = vmatpush1.msra.mxu0 0.0
    %4215 = vmatprep.subr.mxu0 0.0
    %4216 = vmatpush1.msra.mxu0 0.0
    %4217 = vmatprep.subr.mxu0 0.0
    %4218 = vmatpush1.msra.mxu0 0.0
    %4219 = vmatprep.subr.mxu0 0.0
    %4220 = vmatpush1.msra.mxu0 0.0
    %4221 = vmatprep.subr.mxu0 0.0
    %4222 = vmatpush1.msra.mxu0 0.0
    %4223 = vmatprep.subr.mxu0 0.0
    %4224 = vmatpush1.msra.mxu0 0.0
    %4225 = vmatprep.subr.mxu0 0.0
    %4226 = vmatpush1.msra.mxu0 0.0
    %4227 = vmatprep.subr.mxu0 0.0
    %4228 = vmatpush1.msra.mxu0 0.0
    %4229 = vmatprep.subr.mxu0 0.0
    %4230 = vmatpush1.msra.mxu0 0.0
    %4231 = vmatprep.subr.mxu0 0.0
    %4232 = vmatpush1.msra.mxu0 0.0
    %4233 = vmatprep.subr.mxu0 0.0
    %4234 = vmatpush1.msra.mxu0 0.0
    %4235 = vmatprep.subr.mxu0 0.0
    %4236 = vmatpush1.msra.mxu0 0.0
    %4237 = vmatprep.subr.mxu0 0.0
    %4238 = vmatpush1.msra.mxu0 0.0
    %4239 = vmatprep.subr.mxu0 0.0
    %4240 = vmatpush1.msra.mxu0 0.0
    %4241 = vmatprep.subr.mxu0 0.0
    %4242 = vmatpush1.msra.mxu0 0.0
    %4243 = vmatprep.subr.mxu0 0.0
    %4244 = vmatpush1.msra.mxu0 0.0
    %4245 = vmatprep.subr.mxu0 0.0
    %4246 = vmatpush1.msra.mxu0 0.0
    %4247 = vmatprep.subr.mxu0 0.0
    %4248 = vmatpush1.msra.mxu0 0.0
    %4249 = vmatprep.subr.mxu0 0.0
    %4250 = vmatpush1.msra.mxu0 0.0
    %4251 = vmatprep.subr.mxu0 0.0
    %4252 = vmatpush1.msra.mxu0 0.0
    %4253 = vmatprep.subr.mxu0 0.0
    %4254 = vmatpush1.msra.mxu0 0.0
    %4255 = vmatprep.subr.mxu0 0.0
    %4256 = vmatpush1.msra.mxu0 0.0
    %4257 = vmatprep.subr.mxu0 0.0
    %4258 = vmatpush1.msra.mxu0 0.0
    %4259 = vmatprep.subr.mxu0 0.0
    %4260 = vmatpush1.msra.mxu0 0.0
    %4261 = vmatprep.subr.mxu0 0.0
    %4262 = vmatpush1.msra.mxu0 0.0
    %4263 = vmatprep.subr.mxu0 0.0
    %4264 = vmatpush1.msra.mxu0 0.0
    %4265 = vmatprep.subr.mxu0 0.0
    %4266 = vmatpush1.msra.mxu0 0.0
    %4267 = vmatprep.subr.mxu0 0.0
    %4268 = vmatpush1.msra.mxu0 0.0
    %4269 = vmatprep.mubr.f32.mxu0 0.0
    %v4270 = vand.u32 %v4192, 4294901760
    %v4271 = vsub.f32 %v4192, %v4270
    %v4272 = vand.u32 %v4271, 4294901760
    %v4273 = vsub.f32 %v4271, %v4272
    %v4274 = vand.u32 %v4273, 4294901760
    %4275 = vmatmul.mubr.f32.gmra.mrb[0].mxu0 %v4274
    %v4276 = vpop.f32.mrb[0].mxu0
    %v4277 = vadd.f32 0.0, %v4276
    %v4278 = vpop.f32.mrb[0].mxu0
    %4279 = vmatprep.mubr.f32.mxu0 0.0
    %v4280 = vand.u32 %v4195, 4294901760
    %v4281 = vsub.f32 %v4195, %v4280
    %v4282 = vand.u32 %v4281, 4294901760
    %v4283 = vsub.f32 %v4281, %v4282
    %v4284 = vand.u32 %v4283, 4294901760
    %4285 = vmatmul.mubr.f32.gmra.mrb[0].mxu0 %v4284
    %v4286 = vpop.f32.mrb[0].mxu0
    %v4287 = vadd.f32 0.0, %v4286
    %v4288 = vpop.f32.mrb[0].mxu0
    %4289 = vmatprep.mubr.f32.mxu0 0.0
    %v4290 = vand.u32 %v4198, 4294901760
    %v4291 = vsub.f32 %v4198, %v4290
    %v4292 = vand.u32 %v4291, 4294901760
    %v4293 = vsub.f32 %v4291, %v4292
    %v4294 = vand.u32 %v4293, 4294901760
    %4295 = vmatmul.mubr.f32.gmra.mrb[0].mxu0 %v4294
    %v4296 = vpop.f32.mrb[0].mxu0
    %v4297 = vadd.f32 0.0, %v4296
    %v4298 = vpop.f32.mrb[0].mxu0
    %4299 = vmatprep.mubr.f32.mxu0 0.0
    %v4300 = vand.u32 %v4201, 4294901760
    %v4301 = vsub.f32 %v4201, %v4300
    %v4302 = vand.u32 %v4301, 4294901760
    %v4303 = vsub.f32 %v4301, %v4302
    %v4304 = vand.u32 %v4303, 4294901760
    %4305 = vmatmul.mubr.f32.gmra.mrb[0].mxu0 %v4304
    %v4306 = vpop.f32.mrb[0].mxu0
    %v4307 = vadd.f32 0.0, %v4306
    %v4308 = vpop.f32.mrb[0].mxu0
    %4309 = vdwg.mxu0
    %4310 = vmatprep.subr.mxu0 0.0
    %v4311 = vand.u32 %v626, 4294901760
    %v4312 = vsub.f32 %v626, %v4311
    %v4313 = vand.u32 %v4312, 4294901760
    %v4314 = vsub.f32 %v4312, %v4313
    %v4315 = vand.u32 %v4314, 4294901760
    %4316 = vmatpush1.msra.mxu0 %v4315
    %4317 = vmatprep.subr.mxu0 0.0
    %v4318 = vand.u32 %v632, 4294901760
    %v4319 = vsub.f32 %v632, %v4318
    %v4320 = vand.u32 %v4319, 4294901760
    %v4321 = vsub.f32 %v4319, %v4320
    %v4322 = vand.u32 %v4321, 4294901760
    %4323 = vmatpush1.msra.mxu0 %v4322
    %4324 = vmatprep.subr.mxu0 0.0
    %4325 = vmatpush1.msra.mxu0 0.0
    %4326 = vmatprep.subr.mxu0 0.0
    %4327 = vmatpush1.msra.mxu0 0.0
    %4328 = vmatprep.subr.mxu0 0.0
    %4329 = vmatpush1.msra.mxu0 0.0
    %4330 = vmatprep.subr.mxu0 0.0
    %4331 = vmatpush1.msra.mxu0 0.0
    %4332 = vmatprep.subr.mxu0 0.0
    %4333 = vmatpush1.msra.mxu0 0.0
    %4334 = vmatprep.subr.mxu0 0.0
    %4335 = vmatpush1.msra.mxu0 0.0
    %4336 = vmatprep.subr.mxu0 0.0
    %4337 = vmatpush1.msra.mxu0 0.0
    %4338 = vmatprep.subr.mxu0 0.0
    %4339 = vmatpush1.msra.mxu0 0.0
    %4340 = vmatprep.subr.mxu0 0.0
    %4341 = vmatpush1.msra.mxu0 0.0
    %4342 = vmatprep.subr.mxu0 0.0
    %4343 = vmatpush1.msra.mxu0 0.0
    %4344 = vmatprep.subr.mxu0 0.0
    %4345 = vmatpush1.msra.mxu0 0.0
    %4346 = vmatprep.subr.mxu0 0.0
    %4347 = vmatpush1.msra.mxu0 0.0
    %4348 = vmatprep.subr.mxu0 0.0
    %4349 = vmatpush1.msra.mxu0 0.0
    %4350 = vmatprep.subr.mxu0 0.0
    %4351 = vmatpush1.msra.mxu0 0.0
    %4352 = vmatprep.subr.mxu0 0.0
    %4353 = vmatpush1.msra.mxu0 0.0
    %4354 = vmatprep.subr.mxu0 0.0
    %4355 = vmatpush1.msra.mxu0 0.0
    %4356 = vmatprep.subr.mxu0 0.0
    %4357 = vmatpush1.msra.mxu0 0.0
    %4358 = vmatprep.subr.mxu0 0.0
    %4359 = vmatpush1.msra.mxu0 0.0
    %4360 = vmatprep.subr.mxu0 0.0
    %4361 = vmatpush1.msra.mxu0 0.0
    %4362 = vmatprep.subr.mxu0 0.0
    %4363 = vmatpush1.msra.mxu0 0.0
    %4364 = vmatprep.subr.mxu0 0.0
    %4365 = vmatpush1.msra.mxu0 0.0
    %4366 = vmatprep.subr.mxu0 0.0
    %4367 = vmatpush1.msra.mxu0 0.0
    %4368 = vmatprep.subr.mxu0 0.0
    %4369 = vmatpush1.msra.mxu0 0.0
    %4370 = vmatprep.subr.mxu0 0.0
    %4371 = vmatpush1.msra.mxu0 0.0
    %4372 = vmatprep.subr.mxu0 0.0
    %4373 = vmatpush1.msra.mxu0 0.0
    %4374 = vmatprep.subr.mxu0 0.0
    %4375 = vmatpush1.msra.mxu0 0.0
    %4376 = vmatprep.subr.mxu0 0.0
    %4377 = vmatpush1.msra.mxu0 0.0
    %4378 = vmatprep.subr.mxu0 0.0
    %4379 = vmatpush1.msra.mxu0 0.0
    %4380 = vmatprep.subr.mxu0 0.0
    %4381 = vmatpush1.msra.mxu0 0.0
    %4382 = vmatprep.subr.mxu0 0.0
    %4383 = vmatpush1.msra.mxu0 0.0
    %4384 = vmatprep.mubr.f32.mxu0 0.0
    %v4385 = vand.u32 %v4192, 4294901760
    %4386 = vmatmul.mubr.f32.gmra.mrb[0].mxu0 %v4385
    %v4387 = vpop.f32.mrb[0].mxu0
    %v4388 = vadd.f32 %v4277, %v4387
    %v4389 = vpop.f32.mrb[0].mxu0
    %4390 = vmatprep.mubr.f32.mxu0 0.0
    %v4391 = vand.u32 %v4195, 4294901760
    %4392 = vmatmul.mubr.f32.gmra.mrb[0].mxu0 %v4391
    %v4393 = vpop.f32.mrb[0].mxu0
    %v4394 = vadd.f32 %v4287, %v4393
    %v4395 = vpop.f32.mrb[0].mxu0
    %4396 = vmatprep.mubr.f32.mxu0 0.0
    %v4397 = vand.u32 %v4198, 4294901760
    %4398 = vmatmul.mubr.f32.gmra.mrb[0].mxu0 %v4397
    %v4399 = vpop.f32.mrb[0].mxu0
    %v4400 = vadd.f32 %v4297, %v4399
    %v4401 = vpop.f32.mrb[0].mxu0
    %4402 = vmatprep.mubr.f32.mxu0 0.0
    %v4403 = vand.u32 %v4201, 4294901760
    %4404 = vmatmul.mubr.f32.gmra.mrb[0].mxu0 %v4403
    %v4405 = vpop.f32.mrb[0].mxu0
    %v4406 = vadd.f32 %v4307, %v4405
    %v4407 = vpop.f32.mrb[0].mxu0
    %4408 = vdwg.mxu0
    %4409 = vmatprep.subr.mxu0 0.0
    %v4410 = vand.u32 %v626, 4294901760
    %v4411 = vsub.f32 %v626, %v4410
    %4412 = vmatpush1.msra.mxu0 %v4411
    %4413 = vmatprep.subr.mxu0 0.0
    %v4414 = vand.u32 %v632, 4294901760
    %v4415 = vsub.f32 %v632, %v4414
    %4416 = vmatpush1.msra.mxu0 %v4415
    %4417 = vmatprep.subr.mxu0 0.0
    %4418 = vmatpush1.msra.mxu0 0.0
    %4419 = vmatprep.subr.mxu0 0.0
    %4420 = vmatpush1.msra.mxu0 0.0
    %4421 = vmatprep.subr.mxu0 0.0
    %4422 = vmatpush1.msra.mxu0 0.0
    %4423 = vmatprep.subr.mxu0 0.0
    %4424 = vmatpush1.msra.mxu0 0.0
    %4425 = vmatprep.subr.mxu0 0.0
    %4426 = vmatpush1.msra.mxu0 0.0
    %4427 = vmatprep.subr.mxu0 0.0
    %4428 = vmatpush1.msra.mxu0 0.0
    %4429 = vmatprep.subr.mxu0 0.0
    %4430 = vmatpush1.msra.mxu0 0.0
    %4431 = vmatprep.subr.mxu0 0.0
    %4432 = vmatpush1.msra.mxu0 0.0
    %4433 = vmatprep.subr.mxu0 0.0
    %4434 = vmatpush1.msra.mxu0 0.0
    %4435 = vmatprep.subr.mxu0 0.0
    %4436 = vmatpush1.msra.mxu0 0.0
    %4437 = vmatprep.subr.mxu0 0.0
    %4438 = vmatpush1.msra.mxu0 0.0
    %4439 = vmatprep.subr.mxu0 0.0
    %4440 = vmatpush1.msra.mxu0 0.0
    %4441 = vmatprep.subr.mxu0 0.0
    %4442 = vmatpush1.msra.mxu0 0.0
    %4443 = vmatprep.subr.mxu0 0.0
    %4444 = vmatpush1.msra.mxu0 0.0
    %4445 = vmatprep.subr.mxu0 0.0
    %4446 = vmatpush1.msra.mxu0 0.0
    %4447 = vmatprep.subr.mxu0 0.0
    %4448 = vmatpush1.msra.mxu0 0.0
    %4449 = vmatprep.subr.mxu0 0.0
    %4450 = vmatpush1.msra.mxu0 0.0
    %4451 = vmatprep.subr.mxu0 0.0
    %4452 = vmatpush1.msra.mxu0 0.0
    %4453 = vmatprep.subr.mxu0 0.0
    %4454 = vmatpush1.msra.mxu0 0.0
    %4455 = vmatprep.subr.mxu0 0.0
    %4456 = vmatpush1.msra.mxu0 0.0
    %4457 = vmatprep.subr.mxu0 0.0
    %4458 = vmatpush1.msra.mxu0 0.0
    %4459 = vmatprep.subr.mxu0 0.0
    %4460 = vmatpush1.msra.mxu0 0.0
    %4461 = vmatprep.subr.mxu0 0.0
    %4462 = vmatpush1.msra.mxu0 0.0
    %4463 = vmatprep.subr.mxu0 0.0
    %4464 = vmatpush1.msra.mxu0 0.0
    %4465 = vmatprep.subr.mxu0 0.0
    %4466 = vmatpush1.msra.mxu0 0.0
    %4467 = vmatprep.subr.mxu0 0.0
    %4468 = vmatpush1.msra.mxu0 0.0
    %4469 = vmatprep.subr.mxu0 0.0
    %4470 = vmatpush1.msra.mxu0 0.0
    %4471 = vmatprep.subr.mxu0 0.0
    %4472 = vmatpush1.msra.mxu0 0.0
    %4473 = vmatprep.subr.mxu0 0.0
    %4474 = vmatpush1.msra.mxu0 0.0
    %4475 = vmatprep.subr.mxu0 0.0
    %4476 = vmatpush1.msra.mxu0 0.0
    %4477 = vmatprep.mubr.f32.mxu0 0.0
    %v4478 = vand.u32 %v4192, 4294901760
    %v4479 = vsub.f32 %v4192, %v4478
    %4480 = vmatmul.mubr.f32.gmra.mrb[0].mxu0 %v4479
    %v4481 = vpop.f32.mrb[0].mxu0
    %v4482 = vadd.f32 %v4388, %v4481
    %v4483 = vpop.f32.mrb[0].mxu0
    %4484 = vmatprep.mubr.f32.mxu0 0.0
    %v4485 = vand.u32 %v4195, 4294901760
    %v4486 = vsub.f32 %v4195, %v4485
    %4487 = vmatmul.mubr.f32.gmra.mrb[0].mxu0 %v4486
    %v4488 = vpop.f32.mrb[0].mxu0
    %v4489 = vadd.f32 %v4394, %v4488
    %v4490 = vpop.f32.mrb[0].mxu0
    %4491 = vmatprep.mubr.f32.mxu0 0.0
    %v4492 = vand.u32 %v4198, 4294901760
    %v4493 = vsub.f32 %v4198, %v4492
    %4494 = vmatmul.mubr.f32.gmra.mrb[0].mxu0 %v4493
    %v4495 = vpop.f32.mrb[0].mxu0
    %v4496 = vadd.f32 %v4400, %v4495
    %v4497 = vpop.f32.mrb[0].mxu0
    %4498 = vmatprep.mubr.f32.mxu0 0.0
    %v4499 = vand.u32 %v4201, 4294901760
    %v4500 = vsub.f32 %v4201, %v4499
    %4501 = vmatmul.mubr.f32.gmra.mrb[0].mxu0 %v4500
    %v4502 = vpop.f32.mrb[0].mxu0
    %v4503 = vadd.f32 %v4406, %v4502
    %v4504 = vpop.f32.mrb[0].mxu0
    %4505 = vdwg.mxu0
    %4506 = vmatprep.subr.mxu0 0.0
    %v4507 = vand.u32 %v626, 4294901760
    %4508 = vmatpush1.msra.mxu0 %v4507
    %4509 = vmatprep.subr.mxu0 0.0
    %v4510 = vand.u32 %v632, 4294901760
    %4511 = vmatpush1.msra.mxu0 %v4510
    %4512 = vmatprep.subr.mxu0 0.0
    %4513 = vmatpush1.msra.mxu0 0.0
    %4514 = vmatprep.subr.mxu0 0.0
    %4515 = vmatpush1.msra.mxu0 0.0
    %4516 = vmatprep.subr.mxu0 0.0
    %4517 = vmatpush1.msra.mxu0 0.0
    %4518 = vmatprep.subr.mxu0 0.0
    %4519 = vmatpush1.msra.mxu0 0.0
    %4520 = vmatprep.subr.mxu0 0.0
    %4521 = vmatpush1.msra.mxu0 0.0
    %4522 = vmatprep.subr.mxu0 0.0
    %4523 = vmatpush1.msra.mxu0 0.0
    %4524 = vmatprep.subr.mxu0 0.0
    %4525 = vmatpush1.msra.mxu0 0.0
    %4526 = vmatprep.subr.mxu0 0.0
    %4527 = vmatpush1.msra.mxu0 0.0
    %4528 = vmatprep.subr.mxu0 0.0
    %4529 = vmatpush1.msra.mxu0 0.0
    %4530 = vmatprep.subr.mxu0 0.0
    %4531 = vmatpush1.msra.mxu0 0.0
    %4532 = vmatprep.subr.mxu0 0.0
    %4533 = vmatpush1.msra.mxu0 0.0
    %4534 = vmatprep.subr.mxu0 0.0
    %4535 = vmatpush1.msra.mxu0 0.0
    %4536 = vmatprep.subr.mxu0 0.0
    %4537 = vmatpush1.msra.mxu0 0.0
    %4538 = vmatprep.subr.mxu0 0.0
    %4539 = vmatpush1.msra.mxu0 0.0
    %4540 = vmatprep.subr.mxu0 0.0
    %4541 = vmatpush1.msra.mxu0 0.0
    %4542 = vmatprep.subr.mxu0 0.0
    %4543 = vmatpush1.msra.mxu0 0.0
    %4544 = vmatprep.subr.mxu0 0.0
    %4545 = vmatpush1.msra.mxu0 0.0
    %4546 = vmatprep.subr.mxu0 0.0
    %4547 = vmatpush1.msra.mxu0 0.0
    %4548 = vmatprep.subr.mxu0 0.0
    %4549 = vmatpush1.msra.mxu0 0.0
    %4550 = vmatprep.subr.mxu0 0.0
    %4551 = vmatpush1.msra.mxu0 0.0
    %4552 = vmatprep.subr.mxu0 0.0
    %4553 = vmatpush1.msra.mxu0 0.0
    %4554 = vmatprep.subr.mxu0 0.0
    %4555 = vmatpush1.msra.mxu0 0.0
    %4556 = vmatprep.subr.mxu0 0.0
    %4557 = vmatpush1.msra.mxu0 0.0
    %4558 = vmatprep.subr.mxu0 0.0
    %4559 = vmatpush1.msra.mxu0 0.0
    %4560 = vmatprep.subr.mxu0 0.0
    %4561 = vmatpush1.msra.mxu0 0.0
    %4562 = vmatprep.subr.mxu0 0.0
    %4563 = vmatpush1.msra.mxu0 0.0
    %4564 = vmatprep.subr.mxu0 0.0
    %4565 = vmatpush1.msra.mxu0 0.0
    %4566 = vmatprep.subr.mxu0 0.0
    %4567 = vmatpush1.msra.mxu0 0.0
    %4568 = vmatprep.subr.mxu0 0.0
    %4569 = vmatpush1.msra.mxu0 0.0
    %4570 = vmatprep.subr.mxu0 0.0
    %4571 = vmatpush1.msra.mxu0 0.0
    %4572 = vmatprep.mubr.f32.mxu0 0.0
    %v4573 = vand.u32 %v4192, 4294901760
    %v4574 = vsub.f32 %v4192, %v4573
    %v4575 = vand.u32 %v4574, 4294901760
    %4576 = vmatmul.mubr.f32.gmra.mrb[0].mxu0 %v4575
    %v4577 = vpop.f32.mrb[0].mxu0
    %v4578 = vadd.f32 %v4482, %v4577
    %v4579 = vpop.f32.mrb[0].mxu0
    %4580 = vmatprep.mubr.f32.mxu0 0.0
    %v4581 = vand.u32 %v4195, 4294901760
    %v4582 = vsub.f32 %v4195, %v4581
    %v4583 = vand.u32 %v4582, 4294901760
    %4584 = vmatmul.mubr.f32.gmra.mrb[0].mxu0 %v4583
    %v4585 = vpop.f32.mrb[0].mxu0
    %v4586 = vadd.f32 %v4489, %v4585
    %v4587 = vpop.f32.mrb[0].mxu0
    %4588 = vmatprep.mubr.f32.mxu0 0.0
    %v4589 = vand.u32 %v4198, 4294901760
    %v4590 = vsub.f32 %v4198, %v4589
    %v4591 = vand.u32 %v4590, 4294901760
    %4592 = vmatmul.mubr.f32.gmra.mrb[0].mxu0 %v4591
    %v4593 = vpop.f32.mrb[0].mxu0
    %v4594 = vadd.f32 %v4496, %v4593
    %v4595 = vpop.f32.mrb[0].mxu0
    %4596 = vmatprep.mubr.f32.mxu0 0.0
    %v4597 = vand.u32 %v4201, 4294901760
    %v4598 = vsub.f32 %v4201, %v4597
    %v4599 = vand.u32 %v4598, 4294901760
    %4600 = vmatmul.mubr.f32.gmra.mrb[0].mxu0 %v4599
    %v4601 = vpop.f32.mrb[0].mxu0
    %v4602 = vadd.f32 %v4503, %v4601
    %v4603 = vpop.f32.mrb[0].mxu0
    %4604 = vdwg.mxu0
    %4605 = vmatprep.subr.mxu0 0.0
    %v4606 = vand.u32 %v626, 4294901760
    %v4607 = vsub.f32 %v626, %v4606
    %v4608 = vand.u32 %v4607, 4294901760
    %4609 = vmatpush1.msra.mxu0 %v4608
    %4610 = vmatprep.subr.mxu0 0.0
    %v4611 = vand.u32 %v632, 4294901760
    %v4612 = vsub.f32 %v632, %v4611
    %v4613 = vand.u32 %v4612, 4294901760
    %4614 = vmatpush1.msra.mxu0 %v4613
    %4615 = vmatprep.subr.mxu0 0.0
    %4616 = vmatpush1.msra.mxu0 0.0
    %4617 = vmatprep.subr.mxu0 0.0
    %4618 = vmatpush1.msra.mxu0 0.0
    %4619 = vmatprep.subr.mxu0 0.0
    %4620 = vmatpush1.msra.mxu0 0.0
    %4621 = vmatprep.subr.mxu0 0.0
    %4622 = vmatpush1.msra.mxu0 0.0
    %4623 = vmatprep.subr.mxu0 0.0
    %4624 = vmatpush1.msra.mxu0 0.0
    %4625 = vmatprep.subr.mxu0 0.0
    %4626 = vmatpush1.msra.mxu0 0.0
    %4627 = vmatprep.subr.mxu0 0.0
    %4628 = vmatpush1.msra.mxu0 0.0
    %4629 = vmatprep.subr.mxu0 0.0
    %4630 = vmatpush1.msra.mxu0 0.0
    %4631 = vmatprep.subr.mxu0 0.0
    %4632 = vmatpush1.msra.mxu0 0.0
    %4633 = vmatprep.subr.mxu0 0.0
    %4634 = vmatpush1.msra.mxu0 0.0
    %4635 = vmatprep.subr.mxu0 0.0
    %4636 = vmatpush1.msra.mxu0 0.0
    %4637 = vmatprep.subr.mxu0 0.0
    %4638 = vmatpush1.msra.mxu0 0.0
    %4639 = vmatprep.subr.mxu0 0.0
    %4640 = vmatpush1.msra.mxu0 0.0
    %4641 = vmatprep.subr.mxu0 0.0
    %4642 = vmatpush1.msra.mxu0 0.0
    %4643 = vmatprep.subr.mxu0 0.0
    %4644 = vmatpush1.msra.mxu0 0.0
    %4645 = vmatprep.subr.mxu0 0.0
    %4646 = vmatpush1.msra.mxu0 0.0
    %4647 = vmatprep.subr.mxu0 0.0
    %4648 = vmatpush1.msra.mxu0 0.0
    %4649 = vmatprep.subr.mxu0 0.0
    %4650 = vmatpush1.msra.mxu0 0.0
    %4651 = vmatprep.subr.mxu0 0.0
    %4652 = vmatpush1.msra.mxu0 0.0
    %4653 = vmatprep.subr.mxu0 0.0
    %4654 = vmatpush1.msra.mxu0 0.0
    %4655 = vmatprep.subr.mxu0 0.0
    %4656 = vmatpush1.msra.mxu0 0.0
    %4657 = vmatprep.subr.mxu0 0.0
    %4658 = vmatpush1.msra.mxu0 0.0
    %4659 = vmatprep.subr.mxu0 0.0
    %4660 = vmatpush1.msra.mxu0 0.0
    %4661 = vmatprep.subr.mxu0 0.0
    %4662 = vmatpush1.msra.mxu0 0.0
    %4663 = vmatprep.subr.mxu0 0.0
    %4664 = vmatpush1.msra.mxu0 0.0
    %4665 = vmatprep.subr.mxu0 0.0
    %4666 = vmatpush1.msra.mxu0 0.0
    %4667 = vmatprep.subr.mxu0 0.0
    %4668 = vmatpush1.msra.mxu0 0.0
    %4669 = vmatprep.subr.mxu0 0.0
    %4670 = vmatpush1.msra.mxu0 0.0
    %4671 = vmatprep.subr.mxu0 0.0
    %4672 = vmatpush1.msra.mxu0 0.0
    %4673 = vmatprep.subr.mxu0 0.0
    %4674 = vmatpush1.msra.mxu0 0.0
    %4675 = vmatprep.mubr.f32.mxu0 0.0
    %v4676 = vand.u32 %v4192, 4294901760
    %4677 = vmatmul.mubr.f32.gmra.mrb[0].mxu0 %v4676
    %v4678 = vpop.f32.mrb[0].mxu0
    %v4679 = vadd.f32 %v4578, %v4678
    %v4680 = vpop.f32.mrb[0].mxu0
    %4681 = vmatprep.mubr.f32.mxu0 0.0
    %v4682 = vand.u32 %v4195, 4294901760
    %4683 = vmatmul.mubr.f32.gmra.mrb[0].mxu0 %v4682
    %v4684 = vpop.f32.mrb[0].mxu0
    %v4685 = vadd.f32 %v4586, %v4684
    %v4686 = vpop.f32.mrb[0].mxu0
    %4687 = vmatprep.mubr.f32.mxu0 0.0
    %v4688 = vand.u32 %v4198, 4294901760
    %4689 = vmatmul.mubr.f32.gmra.mrb[0].mxu0 %v4688
    %v4690 = vpop.f32.mrb[0].mxu0
    %v4691 = vadd.f32 %v4594, %v4690
    %v4692 = vpop.f32.mrb[0].mxu0
    %4693 = vmatprep.mubr.f32.mxu0 0.0
    %v4694 = vand.u32 %v4201, 4294901760
    %4695 = vmatmul.mubr.f32.gmra.mrb[0].mxu0 %v4694
    %v4696 = vpop.f32.mrb[0].mxu0
    %v4697 = vadd.f32 %v4602, %v4696
    %v4698 = vpop.f32.mrb[0].mxu0
    %4699 = vdwg.mxu0
    %4700 = vmatprep.subr.mxu0 0.0
    %v4701 = vand.u32 %v626, 4294901760
    %4702 = vmatpush1.msra.mxu0 %v4701
    %4703 = vmatprep.subr.mxu0 0.0
    %v4704 = vand.u32 %v632, 4294901760
    %4705 = vmatpush1.msra.mxu0 %v4704
    %4706 = vmatprep.subr.mxu0 0.0
    %4707 = vmatpush1.msra.mxu0 0.0
    %4708 = vmatprep.subr.mxu0 0.0
    %4709 = vmatpush1.msra.mxu0 0.0
    %4710 = vmatprep.subr.mxu0 0.0
    %4711 = vmatpush1.msra.mxu0 0.0
    %4712 = vmatprep.subr.mxu0 0.0
    %4713 = vmatpush1.msra.mxu0 0.0
    %4714 = vmatprep.subr.mxu0 0.0
    %4715 = vmatpush1.msra.mxu0 0.0
    %4716 = vmatprep.subr.mxu0 0.0
    %4717 = vmatpush1.msra.mxu0 0.0
    %4718 = vmatprep.subr.mxu0 0.0
    %4719 = vmatpush1.msra.mxu0 0.0
    %4720 = vmatprep.subr.mxu0 0.0
    %4721 = vmatpush1.msra.mxu0 0.0
    %4722 = vmatprep.subr.mxu0 0.0
    %4723 = vmatpush1.msra.mxu0 0.0
    %4724 = vmatprep.subr.mxu0 0.0
    %4725 = vmatpush1.msra.mxu0 0.0
    %4726 = vmatprep.subr.mxu0 0.0
    %4727 = vmatpush1.msra.mxu0 0.0
    %4728 = vmatprep.subr.mxu0 0.0
    %4729 = vmatpush1.msra.mxu0 0.0
    %4730 = vmatprep.subr.mxu0 0.0
    %4731 = vmatpush1.msra.mxu0 0.0
    %4732 = vmatprep.subr.mxu0 0.0
    %4733 = vmatpush1.msra.mxu0 0.0
    %4734 = vmatprep.subr.mxu0 0.0
    %4735 = vmatpush1.msra.mxu0 0.0
    %4736 = vmatprep.subr.mxu0 0.0
    %4737 = vmatpush1.msra.mxu0 0.0
    %4738 = vmatprep.subr.mxu0 0.0
    %4739 = vmatpush1.msra.mxu0 0.0
    %4740 = vmatprep.subr.mxu0 0.0
    %4741 = vmatpush1.msra.mxu0 0.0
    %4742 = vmatprep.subr.mxu0 0.0
    %4743 = vmatpush1.msra.mxu0 0.0
    %4744 = vmatprep.subr.mxu0 0.0
    %4745 = vmatpush1.msra.mxu0 0.0
    %4746 = vmatprep.subr.mxu0 0.0
    %4747 = vmatpush1.msra.mxu0 0.0
    %4748 = vmatprep.subr.mxu0 0.0
    %4749 = vmatpush1.msra.mxu0 0.0
    %4750 = vmatprep.subr.mxu0 0.0
    %4751 = vmatpush1.msra.mxu0 0.0
    %4752 = vmatprep.subr.mxu0 0.0
    %4753 = vmatpush1.msra.mxu0 0.0
    %4754 = vmatprep.subr.mxu0 0.0
    %4755 = vmatpush1.msra.mxu0 0.0
    %4756 = vmatprep.subr.mxu0 0.0
    %4757 = vmatpush1.msra.mxu0 0.0
    %4758 = vmatprep.subr.mxu0 0.0
    %4759 = vmatpush1.msra.mxu0 0.0
    %4760 = vmatprep.subr.mxu0 0.0
    %4761 = vmatpush1.msra.mxu0 0.0
    %4762 = vmatprep.subr.mxu0 0.0
    %4763 = vmatpush1.msra.mxu0 0.0
    %4764 = vmatprep.subr.mxu0 0.0
    %4765 = vmatpush1.msra.mxu0 0.0
    %4766 = vmatprep.mubr.f32.mxu0 0.0
    %v4767 = vand.u32 %v4192, 4294901760
    %4768 = vmatmul.mubr.f32.gmra.mrb[0].mxu0 %v4767
    %v4769 = vpop.f32.mrb[0].mxu0
    %v4770 = vadd.f32 %v4679, %v4769
    %v4771 = vpop.f32.mrb[0].mxu0
    %4772 = vmatprep.mubr.f32.mxu0 0.0
    %v4773 = vand.u32 %v4195, 4294901760
    %4774 = vmatmul.mubr.f32.gmra.mrb[0].mxu0 %v4773
    %v4775 = vpop.f32.mrb[0].mxu0
    %v4776 = vadd.f32 %v4685, %v4775
    %v4777 = vpop.f32.mrb[0].mxu0
    %4778 = vmatprep.mubr.f32.mxu0 0.0
    %v4779 = vand.u32 %v4198, 4294901760
    %4780 = vmatmul.mubr.f32.gmra.mrb[0].mxu0 %v4779
    %v4781 = vpop.f32.mrb[0].mxu0
    %v4782 = vadd.f32 %v4691, %v4781
    %v4783 = vpop.f32.mrb[0].mxu0
    %4784 = vmatprep.mubr.f32.mxu0 0.0
    %v4785 = vand.u32 %v4201, 4294901760
    %4786 = vmatmul.mubr.f32.gmra.mrb[0].mxu0 %v4785
    %v4787 = vpop.f32.mrb[0].mxu0
    %v4788 = vadd.f32 %v4697, %v4787
    %v4789 = vpop.f32.mrb[0].mxu0
    %4790 = vdwg.mxu0
    %4791 = vmatprep.subr.mxu0 0.0
    %v4792 = vand.u32 %v1134, 4294901760
    %4793 = vmatpush1.msra.mxu0 %v4792
    %4794 = vmatprep.subr.mxu0 0.0
    %v4795 = vand.u32 %v1140, 4294901760
    %4796 = vmatpush1.msra.mxu0 %v4795
    %4797 = vmatprep.subr.mxu0 0.0
    %4798 = vmatpush1.msra.mxu0 0.0
    %4799 = vmatprep.subr.mxu0 0.0
    %4800 = vmatpush1.msra.mxu0 0.0
    %4801 = vmatprep.subr.mxu0 0.0
    %4802 = vmatpush1.msra.mxu0 0.0
    %4803 = vmatprep.subr.mxu0 0.0
    %4804 = vmatpush1.msra.mxu0 0.0
    %4805 = vmatprep.subr.mxu0 0.0
    %4806 = vmatpush1.msra.mxu0 0.0
    %4807 = vmatprep.subr.mxu0 0.0
    %4808 = vmatpush1.msra.mxu0 0.0
    %4809 = vmatprep.subr.mxu0 0.0
    %4810 = vmatpush1.msra.mxu0 0.0
    %4811 = vmatprep.subr.mxu0 0.0
    %4812 = vmatpush1.msra.mxu0 0.0
    %4813 = vmatprep.subr.mxu0 0.0
    %4814 = vmatpush1.msra.mxu0 0.0
    %4815 = vmatprep.subr.mxu0 0.0
    %4816 = vmatpush1.msra.mxu0 0.0
    %4817 = vmatprep.subr.mxu0 0.0
    %4818 = vmatpush1.msra.mxu0 0.0
    %4819 = vmatprep.subr.mxu0 0.0
    %4820 = vmatpush1.msra.mxu0 0.0
    %4821 = vmatprep.subr.mxu0 0.0
    %4822 = vmatpush1.msra.mxu0 0.0
    %4823 = vmatprep.subr.mxu0 0.0
    %4824 = vmatpush1.msra.mxu0 0.0
    %4825 = vmatprep.subr.mxu0 0.0
    %4826 = vmatpush1.msra.mxu0 0.0
    %4827 = vmatprep.subr.mxu0 0.0
    %4828 = vmatpush1.msra.mxu0 0.0
    %4829 = vmatprep.subr.mxu0 0.0
    %4830 = vmatpush1.msra.mxu0 0.0
    %4831 = vmatprep.subr.mxu0 0.0
    %4832 = vmatpush1.msra.mxu0 0.0
    %4833 = vmatprep.subr.mxu0 0.0
    %4834 = vmatpush1.msra.mxu0 0.0
    %4835 = vmatprep.subr.mxu0 0.0
    %4836 = vmatpush1.msra.mxu0 0.0
    %4837 = vmatprep.subr.mxu0 0.0
    %4838 = vmatpush1.msra.mxu0 0.0
    %4839 = vmatprep.subr.mxu0 0.0
    %4840 = vmatpush1.msra.mxu0 0.0
    %4841 = vmatprep.subr.mxu0 0.0
    %4842 = vmatpush1.msra.mxu0 0.0
    %4843 = vmatprep.subr.mxu0 0.0
    %4844 = vmatpush1.msra.mxu0 0.0
    %4845 = vmatprep.subr.mxu0 0.0
    %4846 = vmatpush1.msra.mxu0 0.0
    %4847 = vmatprep.subr.mxu0 0.0
    %4848 = vmatpush1.msra.mxu0 0.0
    %4849 = vmatprep.subr.mxu0 0.0
    %4850 = vmatpush1.msra.mxu0 0.0
    %4851 = vmatprep.subr.mxu0 0.0
    %4852 = vmatpush1.msra.mxu0 0.0
    %4853 = vmatprep.subr.mxu0 0.0
    %4854 = vmatpush1.msra.mxu0 0.0
    %4855 = vmatprep.subr.mxu0 0.0
    %4856 = vmatpush1.msra.mxu0 0.0
    %4857 = vmatprep.mubr.f32.mxu0 0.0
    %v4858 = vand.u32 %v4192, 4294901760
    %v4859 = vsub.f32 %v4192, %v4858
    %v4860 = vand.u32 %v4859, 4294901760
    %v4861 = vsub.f32 %v4859, %v4860
    %v4862 = vand.u32 %v4861, 4294901760
    %4863 = vmatmul.mubr.f32.gmra.mrb[0].mxu0 %v4862
    %v4864 = vpop.f32.mrb[0].mxu0
    %v4865 = vadd.f32 0.0, %v4864
    %v4866 = vpop.f32.mrb[0].mxu0
    %4867 = vmatprep.mubr.f32.mxu0 0.0
    %v4868 = vand.u32 %v4195, 4294901760
    %v4869 = vsub.f32 %v4195, %v4868
    %v4870 = vand.u32 %v4869, 4294901760
    %v4871 = vsub.f32 %v4869, %v4870
    %v4872 = vand.u32 %v4871, 4294901760
    %4873 = vmatmul.mubr.f32.gmra.mrb[0].mxu0 %v4872
    %v4874 = vpop.f32.mrb[0].mxu0
    %v4875 = vadd.f32 0.0, %v4874
    %v4876 = vpop.f32.mrb[0].mxu0
    %4877 = vmatprep.mubr.f32.mxu0 0.0
    %v4878 = vand.u32 %v4198, 4294901760
    %v4879 = vsub.f32 %v4198, %v4878
    %v4880 = vand.u32 %v4879, 4294901760
    %v4881 = vsub.f32 %v4879, %v4880
    %v4882 = vand.u32 %v4881, 4294901760
    %4883 = vmatmul.mubr.f32.gmra.mrb[0].mxu0 %v4882
    %v4884 = vpop.f32.mrb[0].mxu0
    %v4885 = vadd.f32 0.0, %v4884
    %v4886 = vpop.f32.mrb[0].mxu0
    %4887 = vmatprep.mubr.f32.mxu0 0.0
    %v4888 = vand.u32 %v4201, 4294901760
    %v4889 = vsub.f32 %v4201, %v4888
    %v4890 = vand.u32 %v4889, 4294901760
    %v4891 = vsub.f32 %v4889, %v4890
    %v4892 = vand.u32 %v4891, 4294901760
    %4893 = vmatmul.mubr.f32.gmra.mrb[0].mxu0 %v4892
    %v4894 = vpop.f32.mrb[0].mxu0
    %v4895 = vadd.f32 0.0, %v4894
    %v4896 = vpop.f32.mrb[0].mxu0
    %4897 = vdwg.mxu0
    %4898 = vmatprep.subr.mxu0 0.0
    %v4899 = vand.u32 %v1134, 4294901760
    %v4900 = vsub.f32 %v1134, %v4899
    %v4901 = vand.u32 %v4900, 4294901760
    %v4902 = vsub.f32 %v4900, %v4901
    %v4903 = vand.u32 %v4902, 4294901760
    %4904 = vmatpush1.msra.mxu0 %v4903
    %4905 = vmatprep.subr.mxu0 0.0
    %v4906 = vand.u32 %v1140, 4294901760
    %v4907 = vsub.f32 %v1140, %v4906
    %v4908 = vand.u32 %v4907, 4294901760
    %v4909 = vsub.f32 %v4907, %v4908
    %v4910 = vand.u32 %v4909, 4294901760
    %4911 = vmatpush1.msra.mxu0 %v4910
    %4912 = vmatprep.subr.mxu0 0.0
    %4913 = vmatpush1.msra.mxu0 0.0
    %4914 = vmatprep.subr.mxu0 0.0
    %4915 = vmatpush1.msra.mxu0 0.0
    %4916 = vmatprep.subr.mxu0 0.0
    %4917 = vmatpush1.msra.mxu0 0.0
    %4918 = vmatprep.subr.mxu0 0.0
    %4919 = vmatpush1.msra.mxu0 0.0
    %4920 = vmatprep.subr.mxu0 0.0
    %4921 = vmatpush1.msra.mxu0 0.0
    %4922 = vmatprep.subr.mxu0 0.0
    %4923 = vmatpush1.msra.mxu0 0.0
    %4924 = vmatprep.subr.mxu0 0.0
    %4925 = vmatpush1.msra.mxu0 0.0
    %4926 = vmatprep.subr.mxu0 0.0
    %4927 = vmatpush1.msra.mxu0 0.0
    %4928 = vmatprep.subr.mxu0 0.0
    %4929 = vmatpush1.msra.mxu0 0.0
    %4930 = vmatprep.subr.mxu0 0.0
    %4931 = vmatpush1.msra.mxu0 0.0
    %4932 = vmatprep.subr.mxu0 0.0
    %4933 = vmatpush1.msra.mxu0 0.0
    %4934 = vmatprep.subr.mxu0 0.0
    %4935 = vmatpush1.msra.mxu0 0.0
    %4936 = vmatprep.subr.mxu0 0.0
    %4937 = vmatpush1.msra.mxu0 0.0
    %4938 = vmatprep.subr.mxu0 0.0
    %4939 = vmatpush1.msra.mxu0 0.0
    %4940 = vmatprep.subr.mxu0 0.0
    %4941 = vmatpush1.msra.mxu0 0.0
    %4942 = vmatprep.subr.mxu0 0.0
    %4943 = vmatpush1.msra.mxu0 0.0
    %4944 = vmatprep.subr.mxu0 0.0
    %4945 = vmatpush1.msra.mxu0 0.0
    %4946 = vmatprep.subr.mxu0 0.0
    %4947 = vmatpush1.msra.mxu0 0.0
    %4948 = vmatprep.subr.mxu0 0.0
    %4949 = vmatpush1.msra.mxu0 0.0
    %4950 = vmatprep.subr.mxu0 0.0
    %4951 = vmatpush1.msra.mxu0 0.0
    %4952 = vmatprep.subr.mxu0 0.0
    %4953 = vmatpush1.msra.mxu0 0.0
    %4954 = vmatprep.subr.mxu0 0.0
    %4955 = vmatpush1.msra.mxu0 0.0
    %4956 = vmatprep.subr.mxu0 0.0
    %4957 = vmatpush1.msra.mxu0 0.0
    %4958 = vmatprep.subr.mxu0 0.0
    %4959 = vmatpush1.msra.mxu0 0.0
    %4960 = vmatprep.subr.mxu0 0.0
    %4961 = vmatpush1.msra.mxu0 0.0
    %4962 = vmatprep.subr.mxu0 0.0
    %4963 = vmatpush1.msra.mxu0 0.0
    %4964 = vmatprep.subr.mxu0 0.0
    %4965 = vmatpush1.msra.mxu0 0.0
    %4966 = vmatprep.subr.mxu0 0.0
    %4967 = vmatpush1.msra.mxu0 0.0
    %4968 = vmatprep.subr.mxu0 0.0
    %4969 = vmatpush1.msra.mxu0 0.0
    %4970 = vmatprep.subr.mxu0 0.0
    %4971 = vmatpush1.msra.mxu0 0.0
    %4972 = vmatprep.mubr.f32.mxu0 0.0
    %v4973 = vand.u32 %v4192, 4294901760
    %4974 = vmatmul.mubr.f32.gmra.mrb[0].mxu0 %v4973
    %v4975 = vpop.f32.mrb[0].mxu0
    %v4976 = vadd.f32 %v4865, %v4975
    %v4977 = vpop.f32.mrb[0].mxu0
    %4978 = vmatprep.mubr.f32.mxu0 0.0
    %v4979 = vand.u32 %v4195, 4294901760
    %4980 = vmatmul.mubr.f32.gmra.mrb[0].mxu0 %v4979
    %v4981 = vpop.f32.mrb[0].mxu0
    %v4982 = vadd.f32 %v4875, %v4981
    %v4983 = vpop.f32.mrb[0].mxu0
    %4984 = vmatprep.mubr.f32.mxu0 0.0
    %v4985 = vand.u32 %v4198, 4294901760
    %4986 = vmatmul.mubr.f32.gmra.mrb[0].mxu0 %v4985
    %v4987 = vpop.f32.mrb[0].mxu0
    %v4988 = vadd.f32 %v4885, %v4987
    %v4989 = vpop.f32.mrb[0].mxu0
    %4990 = vmatprep.mubr.f32.mxu0 0.0
    %v4991 = vand.u32 %v4201, 4294901760
    %4992 = vmatmul.mubr.f32.gmra.mrb[0].mxu0 %v4991
    %v4993 = vpop.f32.mrb[0].mxu0
    %v4994 = vadd.f32 %v4895, %v4993
    %v4995 = vpop.f32.mrb[0].mxu0
    %4996 = vdwg.mxu0
    %4997 = vmatprep.subr.mxu0 0.0
    %v4998 = vand.u32 %v1134, 4294901760
    %v4999 = vsub.f32 %v1134, %v4998
    %5000 = vmatpush1.msra.mxu0 %v4999
    %5001 = vmatprep.subr.mxu0 0.0
    %v5002 = vand.u32 %v1140, 4294901760
    %v5003 = vsub.f32 %v1140, %v5002
    %5004 = vmatpush1.msra.mxu0 %v5003
    %5005 = vmatprep.subr.mxu0 0.0
    %5006 = vmatpush1.msra.mxu0 0.0
    %5007 = vmatprep.subr.mxu0 0.0
    %5008 = vmatpush1.msra.mxu0 0.0
    %5009 = vmatprep.subr.mxu0 0.0
    %5010 = vmatpush1.msra.mxu0 0.0
    %5011 = vmatprep.subr.mxu0 0.0
    %5012 = vmatpush1.msra.mxu0 0.0
    %5013 = vmatprep.subr.mxu0 0.0
    %5014 = vmatpush1.msra.mxu0 0.0
    %5015 = vmatprep.subr.mxu0 0.0
    %5016 = vmatpush1.msra.mxu0 0.0
    %5017 = vmatprep.subr.mxu0 0.0
    %5018 = vmatpush1.msra.mxu0 0.0
    %5019 = vmatprep.subr.mxu0 0.0
    %5020 = vmatpush1.msra.mxu0 0.0
    %5021 = vmatprep.subr.mxu0 0.0
    %5022 = vmatpush1.msra.mxu0 0.0
    %5023 = vmatprep.subr.mxu0 0.0
    %5024 = vmatpush1.msra.mxu0 0.0
    %5025 = vmatprep.subr.mxu0 0.0
    %5026 = vmatpush1.msra.mxu0 0.0
    %5027 = vmatprep.subr.mxu0 0.0
    %5028 = vmatpush1.msra.mxu0 0.0
    %5029 = vmatprep.subr.mxu0 0.0
    %5030 = vmatpush1.msra.mxu0 0.0
    %5031 = vmatprep.subr.mxu0 0.0
    %5032 = vmatpush1.msra.mxu0 0.0
    %5033 = vmatprep.subr.mxu0 0.0
    %5034 = vmatpush1.msra.mxu0 0.0
    %5035 = vmatprep.subr.mxu0 0.0
    %5036 = vmatpush1.msra.mxu0 0.0
    %5037 = vmatprep.subr.mxu0 0.0
    %5038 = vmatpush1.msra.mxu0 0.0
    %5039 = vmatprep.subr.mxu0 0.0
    %5040 = vmatpush1.msra.mxu0 0.0
    %5041 = vmatprep.subr.mxu0 0.0
    %5042 = vmatpush1.msra.mxu0 0.0
    %5043 = vmatprep.subr.mxu0 0.0
    %5044 = vmatpush1.msra.mxu0 0.0
    %5045 = vmatprep.subr.mxu0 0.0
    %5046 = vmatpush1.msra.mxu0 0.0
    %5047 = vmatprep.subr.mxu0 0.0
    %5048 = vmatpush1.msra.mxu0 0.0
    %5049 = vmatprep.subr.mxu0 0.0
    %5050 = vmatpush1.msra.mxu0 0.0
    %5051 = vmatprep.subr.mxu0 0.0
    %5052 = vmatpush1.msra.mxu0 0.0
    %5053 = vmatprep.subr.mxu0 0.0
    %5054 = vmatpush1.msra.mxu0 0.0
    %5055 = vmatprep.subr.mxu0 0.0
    %5056 = vmatpush1.msra.mxu0 0.0
    %5057 = vmatprep.subr.mxu0 0.0
    %5058 = vmatpush1.msra.mxu0 0.0
    %5059 = vmatprep.subr.mxu0 0.0
    %5060 = vmatpush1.msra.mxu0 0.0
    %5061 = vmatprep.subr.mxu0 0.0
    %5062 = vmatpush1.msra.mxu0 0.0
    %5063 = vmatprep.subr.mxu0 0.0
    %5064 = vmatpush1.msra.mxu0 0.0
    %5065 = vmatprep.mubr.f32.mxu0 0.0
    %v5066 = vand.u32 %v4192, 4294901760
    %v5067 = vsub.f32 %v4192, %v5066
    %5068 = vmatmul.mubr.f32.gmra.mrb[0].mxu0 %v5067
    %v5069 = vpop.f32.mrb[0].mxu0
    %v5070 = vadd.f32 %v4976, %v5069
    %v5071 = vpop.f32.mrb[0].mxu0
    %5072 = vmatprep.mubr.f32.mxu0 0.0
    %v5073 = vand.u32 %v4195, 4294901760
    %v5074 = vsub.f32 %v4195, %v5073
    %5075 = vmatmul.mubr.f32.gmra.mrb[0].mxu0 %v5074
    %v5076 = vpop.f32.mrb[0].mxu0
    %v5077 = vadd.f32 %v4982, %v5076
    %v5078 = vpop.f32.mrb[0].mxu0
    %5079 = vmatprep.mubr.f32.mxu0 0.0
    %v5080 = vand.u32 %v4198, 4294901760
    %v5081 = vsub.f32 %v4198, %v5080
    %5082 = vmatmul.mubr.f32.gmra.mrb[0].mxu0 %v5081
    %v5083 = vpop.f32.mrb[0].mxu0
    %v5084 = vadd.f32 %v4988, %v5083
    %v5085 = vpop.f32.mrb[0].mxu0
    %5086 = vmatprep.mubr.f32.mxu0 0.0
    %v5087 = vand.u32 %v4201, 4294901760
    %v5088 = vsub.f32 %v4201, %v5087
    %5089 = vmatmul.mubr.f32.gmra.mrb[0].mxu0 %v5088
    %v5090 = vpop.f32.mrb[0].mxu0
    %v5091 = vadd.f32 %v4994, %v5090
    %v5092 = vpop.f32.mrb[0].mxu0
    %5093 = vdwg.mxu0
    %5094 = vmatprep.subr.mxu0 0.0
    %v5095 = vand.u32 %v1134, 4294901760
    %5096 = vmatpush1.msra.mxu0 %v5095
    %5097 = vmatprep.subr.mxu0 0.0
    %v5098 = vand.u32 %v1140, 4294901760
    %5099 = vmatpush1.msra.mxu0 %v5098
    %5100 = vmatprep.subr.mxu0 0.0
    %5101 = vmatpush1.msra.mxu0 0.0
    %5102 = vmatprep.subr.mxu0 0.0
    %5103 = vmatpush1.msra.mxu0 0.0
    %5104 = vmatprep.subr.mxu0 0.0
    %5105 = vmatpush1.msra.mxu0 0.0
    %5106 = vmatprep.subr.mxu0 0.0
    %5107 = vmatpush1.msra.mxu0 0.0
    %5108 = vmatprep.subr.mxu0 0.0
    %5109 = vmatpush1.msra.mxu0 0.0
    %5110 = vmatprep.subr.mxu0 0.0
    %5111 = vmatpush1.msra.mxu0 0.0
    %5112 = vmatprep.subr.mxu0 0.0
    %5113 = vmatpush1.msra.mxu0 0.0
    %5114 = vmatprep.subr.mxu0 0.0
    %5115 = vmatpush1.msra.mxu0 0.0
    %5116 = vmatprep.subr.mxu0 0.0
    %5117 = vmatpush1.msra.mxu0 0.0
    %5118 = vmatprep.subr.mxu0 0.0
    %5119 = vmatpush1.msra.mxu0 0.0
    %5120 = vmatprep.subr.mxu0 0.0
    %5121 = vmatpush1.msra.mxu0 0.0
    %5122 = vmatprep.subr.mxu0 0.0
    %5123 = vmatpush1.msra.mxu0 0.0
    %5124 = vmatprep.subr.mxu0 0.0
    %5125 = vmatpush1.msra.mxu0 0.0
    %5126 = vmatprep.subr.mxu0 0.0
    %5127 = vmatpush1.msra.mxu0 0.0
    %5128 = vmatprep.subr.mxu0 0.0
    %5129 = vmatpush1.msra.mxu0 0.0
    %5130 = vmatprep.subr.mxu0 0.0
    %5131 = vmatpush1.msra.mxu0 0.0
    %5132 = vmatprep.subr.mxu0 0.0
    %5133 = vmatpush1.msra.mxu0 0.0
    %5134 = vmatprep.subr.mxu0 0.0
    %5135 = vmatpush1.msra.mxu0 0.0
    %5136 = vmatprep.subr.mxu0 0.0
    %5137 = vmatpush1.msra.mxu0 0.0
    %5138 = vmatprep.subr.mxu0 0.0
    %5139 = vmatpush1.msra.mxu0 0.0
    %5140 = vmatprep.subr.mxu0 0.0
    %5141 = vmatpush1.msra.mxu0 0.0
    %5142 = vmatprep.subr.mxu0 0.0
    %5143 = vmatpush1.msra.mxu0 0.0
    %5144 = vmatprep.subr.mxu0 0.0
    %5145 = vmatpush1.msra.mxu0 0.0
    %5146 = vmatprep.subr.mxu0 0.0
    %5147 = vmatpush1.msra.mxu0 0.0
    %5148 = vmatprep.subr.mxu0 0.0
    %5149 = vmatpush1.msra.mxu0 0.0
    %5150 = vmatprep.subr.mxu0 0.0
    %5151 = vmatpush1.msra.mxu0 0.0
    %5152 = vmatprep.subr.mxu0 0.0
    %5153 = vmatpush1.msra.mxu0 0.0
    %5154 = vmatprep.subr.mxu0 0.0
    %5155 = vmatpush1.msra.mxu0 0.0
    %5156 = vmatprep.subr.mxu0 0.0
    %5157 = vmatpush1.msra.mxu0 0.0
    %5158 = vmatprep.subr.mxu0 0.0
    %5159 = vmatpush1.msra.mxu0 0.0
    %5160 = vmatprep.mubr.f32.mxu0 0.0
    %v5161 = vand.u32 %v4192, 4294901760
    %v5162 = vsub.f32 %v4192, %v5161
    %v5163 = vand.u32 %v5162, 4294901760
    %5164 = vmatmul.mubr.f32.gmra.mrb[0].mxu0 %v5163
    %v5165 = vpop.f32.mrb[0].mxu0
    %v5166 = vadd.f32 %v5070, %v5165
    %v5167 = vpop.f32.mrb[0].mxu0
    %5168 = vmatprep.mubr.f32.mxu0 0.0
    %v5169 = vand.u32 %v4195, 4294901760
    %v5170 = vsub.f32 %v4195, %v5169
    %v5171 = vand.u32 %v5170, 4294901760
    %5172 = vmatmul.mubr.f32.gmra.mrb[0].mxu0 %v5171
    %v5173 = vpop.f32.mrb[0].mxu0
    %v5174 = vadd.f32 %v5077, %v5173
    %v5175 = vpop.f32.mrb[0].mxu0
    %5176 = vmatprep.mubr.f32.mxu0 0.0
    %v5177 = vand.u32 %v4198, 4294901760
    %v5178 = vsub.f32 %v4198, %v5177
    %v5179 = vand.u32 %v5178, 4294901760
    %5180 = vmatmul.mubr.f32.gmra.mrb[0].mxu0 %v5179
    %v5181 = vpop.f32.mrb[0].mxu0
    %v5182 = vadd.f32 %v5084, %v5181
    %v5183 = vpop.f32.mrb[0].mxu0
    %5184 = vmatprep.mubr.f32.mxu0 0.0
    %v5185 = vand.u32 %v4201, 4294901760
    %v5186 = vsub.f32 %v4201, %v5185
    %v5187 = vand.u32 %v5186, 4294901760
    %5188 = vmatmul.mubr.f32.gmra.mrb[0].mxu0 %v5187
    %v5189 = vpop.f32.mrb[0].mxu0
    %v5190 = vadd.f32 %v5091, %v5189
    %v5191 = vpop.f32.mrb[0].mxu0
    %5192 = vdwg.mxu0
    %5193 = vmatprep.subr.mxu0 0.0
    %v5194 = vand.u32 %v1134, 4294901760
    %v5195 = vsub.f32 %v1134, %v5194
    %v5196 = vand.u32 %v5195, 4294901760
    %5197 = vmatpush1.msra.mxu0 %v5196
    %5198 = vmatprep.subr.mxu0 0.0
    %v5199 = vand.u32 %v1140, 4294901760
    %v5200 = vsub.f32 %v1140, %v5199
    %v5201 = vand.u32 %v5200, 4294901760
    %5202 = vmatpush1.msra.mxu0 %v5201
    %5203 = vmatprep.subr.mxu0 0.0
    %5204 = vmatpush1.msra.mxu0 0.0
    %5205 = vmatprep.subr.mxu0 0.0
    %5206 = vmatpush1.msra.mxu0 0.0
    %5207 = vmatprep.subr.mxu0 0.0
    %5208 = vmatpush1.msra.mxu0 0.0
    %5209 = vmatprep.subr.mxu0 0.0
    %5210 = vmatpush1.msra.mxu0 0.0
    %5211 = vmatprep.subr.mxu0 0.0
    %5212 = vmatpush1.msra.mxu0 0.0
    %5213 = vmatprep.subr.mxu0 0.0
    %5214 = vmatpush1.msra.mxu0 0.0
    %5215 = vmatprep.subr.mxu0 0.0
    %5216 = vmatpush1.msra.mxu0 0.0
    %5217 = vmatprep.subr.mxu0 0.0
    %5218 = vmatpush1.msra.mxu0 0.0
    %5219 = vmatprep.subr.mxu0 0.0
    %5220 = vmatpush1.msra.mxu0 0.0
    %5221 = vmatprep.subr.mxu0 0.0
    %5222 = vmatpush1.msra.mxu0 0.0
    %5223 = vmatprep.subr.mxu0 0.0
    %5224 = vmatpush1.msra.mxu0 0.0
    %5225 = vmatprep.subr.mxu0 0.0
    %5226 = vmatpush1.msra.mxu0 0.0
    %5227 = vmatprep.subr.mxu0 0.0
    %5228 = vmatpush1.msra.mxu0 0.0
    %5229 = vmatprep.subr.mxu0 0.0
    %5230 = vmatpush1.msra.mxu0 0.0
    %5231 = vmatprep.subr.mxu0 0.0
    %5232 = vmatpush1.msra.mxu0 0.0
    %5233 = vmatprep.subr.mxu0 0.0
    %5234 = vmatpush1.msra.mxu0 0.0
    %5235 = vmatprep.subr.mxu0 0.0
    %5236 = vmatpush1.msra.mxu0 0.0
    %5237 = vmatprep.subr.mxu0 0.0
    %5238 = vmatpush1.msra.mxu0 0.0
    %5239 = vmatprep.subr.mxu0 0.0
    %5240 = vmatpush1.msra.mxu0 0.0
    %5241 = vmatprep.subr.mxu0 0.0
    %5242 = vmatpush1.msra.mxu0 0.0
    %5243 = vmatprep.subr.mxu0 0.0
    %5244 = vmatpush1.msra.mxu0 0.0
    %5245 = vmatprep.subr.mxu0 0.0
    %5246 = vmatpush1.msra.mxu0 0.0
    %5247 = vmatprep.subr.mxu0 0.0
    %5248 = vmatpush1.msra.mxu0 0.0
    %5249 = vmatprep.subr.mxu0 0.0
    %5250 = vmatpush1.msra.mxu0 0.0
    %5251 = vmatprep.subr.mxu0 0.0
    %5252 = vmatpush1.msra.mxu0 0.0
    %5253 = vmatprep.subr.mxu0 0.0
    %5254 = vmatpush1.msra.mxu0 0.0
    %5255 = vmatprep.subr.mxu0 0.0
    %5256 = vmatpush1.msra.mxu0 0.0
    %5257 = vmatprep.subr.mxu0 0.0
    %5258 = vmatpush1.msra.mxu0 0.0
    %5259 = vmatprep.subr.mxu0 0.0
    %5260 = vmatpush1.msra.mxu0 0.0
    %5261 = vmatprep.subr.mxu0 0.0
    %5262 = vmatpush1.msra.mxu0 0.0
    %5263 = vmatprep.mubr.f32.mxu0 0.0
    %v5264 = vand.u32 %v4192, 4294901760
    %5265 = vmatmul.mubr.f32.gmra.mrb[0].mxu0 %v5264
    %v5266 = vpop.f32.mrb[0].mxu0
    %v5267 = vadd.f32 %v5166, %v5266
    %v5268 = vpop.f32.mrb[0].mxu0
    %5269 = vmatprep.mubr.f32.mxu0 0.0
    %v5270 = vand.u32 %v4195, 4294901760
    %5271 = vmatmul.mubr.f32.gmra.mrb[0].mxu0 %v5270
    %v5272 = vpop.f32.mrb[0].mxu0
    %v5273 = vadd.f32 %v5174, %v5272
    %v5274 = vpop.f32.mrb[0].mxu0
    %5275 = vmatprep.mubr.f32.mxu0 0.0
    %v5276 = vand.u32 %v4198, 4294901760
    %5277 = vmatmul.mubr.f32.gmra.mrb[0].mxu0 %v5276
    %v5278 = vpop.f32.mrb[0].mxu0
    %v5279 = vadd.f32 %v5182, %v5278
    %v5280 = vpop.f32.mrb[0].mxu0
    %5281 = vmatprep.mubr.f32.mxu0 0.0
    %v5282 = vand.u32 %v4201, 4294901760
    %5283 = vmatmul.mubr.f32.gmra.mrb[0].mxu0 %v5282
    %v5284 = vpop.f32.mrb[0].mxu0
    %v5285 = vadd.f32 %v5190, %v5284
    %v5286 = vpop.f32.mrb[0].mxu0
    %5287 = vdwg.mxu0
    %5288 = vmatprep.subr.mxu0 0.0
    %v5289 = vand.u32 %v1134, 4294901760
    %5290 = vmatpush1.msra.mxu0 %v5289
    %5291 = vmatprep.subr.mxu0 0.0
    %v5292 = vand.u32 %v1140, 4294901760
    %5293 = vmatpush1.msra.mxu0 %v5292
    %5294 = vmatprep.subr.mxu0 0.0
    %5295 = vmatpush1.msra.mxu0 0.0
    %5296 = vmatprep.subr.mxu0 0.0
    %5297 = vmatpush1.msra.mxu0 0.0
    %5298 = vmatprep.subr.mxu0 0.0
    %5299 = vmatpush1.msra.mxu0 0.0
    %5300 = vmatprep.subr.mxu0 0.0
    %5301 = vmatpush1.msra.mxu0 0.0
    %5302 = vmatprep.subr.mxu0 0.0
    %5303 = vmatpush1.msra.mxu0 0.0
    %5304 = vmatprep.subr.mxu0 0.0
    %5305 = vmatpush1.msra.mxu0 0.0
    %5306 = vmatprep.subr.mxu0 0.0
    %5307 = vmatpush1.msra.mxu0 0.0
    %5308 = vmatprep.subr.mxu0 0.0
    %5309 = vmatpush1.msra.mxu0 0.0
    %5310 = vmatprep.subr.mxu0 0.0
    %5311 = vmatpush1.msra.mxu0 0.0
    %5312 = vmatprep.subr.mxu0 0.0
    %5313 = vmatpush1.msra.mxu0 0.0
    %5314 = vmatprep.subr.mxu0 0.0
    %5315 = vmatpush1.msra.mxu0 0.0
    %5316 = vmatprep.subr.mxu0 0.0
    %5317 = vmatpush1.msra.mxu0 0.0
    %5318 = vmatprep.subr.mxu0 0.0
    %5319 = vmatpush1.msra.mxu0 0.0
    %5320 = vmatprep.subr.mxu0 0.0
    %5321 = vmatpush1.msra.mxu0 0.0
    %5322 = vmatprep.subr.mxu0 0.0
    %5323 = vmatpush1.msra.mxu0 0.0
    %5324 = vmatprep.subr.mxu0 0.0
    %5325 = vmatpush1.msra.mxu0 0.0
    %5326 = vmatprep.subr.mxu0 0.0
    %5327 = vmatpush1.msra.mxu0 0.0
    %5328 = vmatprep.subr.mxu0 0.0
    %5329 = vmatpush1.msra.mxu0 0.0
    %5330 = vmatprep.subr.mxu0 0.0
    %5331 = vmatpush1.msra.mxu0 0.0
    %5332 = vmatprep.subr.mxu0 0.0
    %5333 = vmatpush1.msra.mxu0 0.0
    %5334 = vmatprep.subr.mxu0 0.0
    %5335 = vmatpush1.msra.mxu0 0.0
    %5336 = vmatprep.subr.mxu0 0.0
    %5337 = vmatpush1.msra.mxu0 0.0
    %5338 = vmatprep.subr.mxu0 0.0
    %5339 = vmatpush1.msra.mxu0 0.0
    %5340 = vmatprep.subr.mxu0 0.0
    %5341 = vmatpush1.msra.mxu0 0.0
    %5342 = vmatprep.subr.mxu0 0.0
    %5343 = vmatpush1.msra.mxu0 0.0
    %5344 = vmatprep.subr.mxu0 0.0
    %5345 = vmatpush1.msra.mxu0 0.0
    %5346 = vmatprep.subr.mxu0 0.0
    %5347 = vmatpush1.msra.mxu0 0.0
    %5348 = vmatprep.subr.mxu0 0.0
    %5349 = vmatpush1.msra.mxu0 0.0
    %5350 = vmatprep.subr.mxu0 0.0
    %5351 = vmatpush1.msra.mxu0 0.0
    %5352 = vmatprep.subr.mxu0 0.0
    %5353 = vmatpush1.msra.mxu0 0.0
    %5354 = vmatprep.mubr.f32.mxu0 0.0
    %v5355 = vand.u32 %v4192, 4294901760
    %5356 = vmatmul.mubr.f32.gmra.mrb[0].mxu0 %v5355
    %v5357 = vpop.f32.mrb[0].mxu0
    %v5358 = vadd.f32 %v5267, %v5357
    %v5359 = vpop.f32.mrb[0].mxu0
    %5360 = vmatprep.mubr.f32.mxu0 0.0
    %v5361 = vand.u32 %v4195, 4294901760
    %5362 = vmatmul.mubr.f32.gmra.mrb[0].mxu0 %v5361
    %v5363 = vpop.f32.mrb[0].mxu0
    %v5364 = vadd.f32 %v5273, %v5363
    %v5365 = vpop.f32.mrb[0].mxu0
    %5366 = vmatprep.mubr.f32.mxu0 0.0
    %v5367 = vand.u32 %v4198, 4294901760
    %5368 = vmatmul.mubr.f32.gmra.mrb[0].mxu0 %v5367
    %v5369 = vpop.f32.mrb[0].mxu0
    %v5370 = vadd.f32 %v5279, %v5369
    %v5371 = vpop.f32.mrb[0].mxu0
    %5372 = vmatprep.mubr.f32.mxu0 0.0
    %v5373 = vand.u32 %v4201, 4294901760
    %5374 = vmatmul.mubr.f32.gmra.mrb[0].mxu0 %v5373
    %v5375 = vpop.f32.mrb[0].mxu0
    %v5376 = vadd.f32 %v5285, %v5375
    %v5377 = vpop.f32.mrb[0].mxu0
    %5378 = vdwg.mxu0
    %5379 = vmatprep.subr.mxu0 0.0
    %v5380 = vand.u32 %v1642, 4294901760
    %5381 = vmatpush1.msra.mxu0 %v5380
    %5382 = vmatprep.subr.mxu0 0.0
    %v5383 = vand.u32 %v1648, 4294901760
    %5384 = vmatpush1.msra.mxu0 %v5383
    %5385 = vmatprep.subr.mxu0 0.0
    %5386 = vmatpush1.msra.mxu0 0.0
    %5387 = vmatprep.subr.mxu0 0.0
    %5388 = vmatpush1.msra.mxu0 0.0
    %5389 = vmatprep.subr.mxu0 0.0
    %5390 = vmatpush1.msra.mxu0 0.0
    %5391 = vmatprep.subr.mxu0 0.0
    %5392 = vmatpush1.msra.mxu0 0.0
    %5393 = vmatprep.subr.mxu0 0.0
    %5394 = vmatpush1.msra.mxu0 0.0
    %5395 = vmatprep.subr.mxu0 0.0
    %5396 = vmatpush1.msra.mxu0 0.0
    %5397 = vmatprep.subr.mxu0 0.0
    %5398 = vmatpush1.msra.mxu0 0.0
    %5399 = vmatprep.subr.mxu0 0.0
    %5400 = vmatpush1.msra.mxu0 0.0
    %5401 = vmatprep.subr.mxu0 0.0
    %5402 = vmatpush1.msra.mxu0 0.0
    %5403 = vmatprep.subr.mxu0 0.0
    %5404 = vmatpush1.msra.mxu0 0.0
    %5405 = vmatprep.subr.mxu0 0.0
    %5406 = vmatpush1.msra.mxu0 0.0
    %5407 = vmatprep.subr.mxu0 0.0
    %5408 = vmatpush1.msra.mxu0 0.0
    %5409 = vmatprep.subr.mxu0 0.0
    %5410 = vmatpush1.msra.mxu0 0.0
    %5411 = vmatprep.subr.mxu0 0.0
    %5412 = vmatpush1.msra.mxu0 0.0
    %5413 = vmatprep.subr.mxu0 0.0
    %5414 = vmatpush1.msra.mxu0 0.0
    %5415 = vmatprep.subr.mxu0 0.0
    %5416 = vmatpush1.msra.mxu0 0.0
    %5417 = vmatprep.subr.mxu0 0.0
    %5418 = vmatpush1.msra.mxu0 0.0
    %5419 = vmatprep.subr.mxu0 0.0
    %5420 = vmatpush1.msra.mxu0 0.0
    %5421 = vmatprep.subr.mxu0 0.0
    %5422 = vmatpush1.msra.mxu0 0.0
    %5423 = vmatprep.subr.mxu0 0.0
    %5424 = vmatpush1.msra.mxu0 0.0
    %5425 = vmatprep.subr.mxu0 0.0
    %5426 = vmatpush1.msra.mxu0 0.0
    %5427 = vmatprep.subr.mxu0 0.0
    %5428 = vmatpush1.msra.mxu0 0.0
    %5429 = vmatprep.subr.mxu0 0.0
    %5430 = vmatpush1.msra.mxu0 0.0
    %5431 = vmatprep.subr.mxu0 0.0
    %5432 = vmatpush1.msra.mxu0 0.0
    %5433 = vmatprep.subr.mxu0 0.0
    %5434 = vmatpush1.msra.mxu0 0.0
    %5435 = vmatprep.subr.mxu0 0.0
    %5436 = vmatpush1.msra.mxu0 0.0
    %5437 = vmatprep.subr.mxu0 0.0
    %5438 = vmatpush1.msra.mxu0 0.0
    %5439 = vmatprep.subr.mxu0 0.0
    %5440 = vmatpush1.msra.mxu0 0.0
    %5441 = vmatprep.subr.mxu0 0.0
    %5442 = vmatpush1.msra.mxu0 0.0
    %5443 = vmatprep.subr.mxu0 0.0
    %5444 = vmatpush1.msra.mxu0 0.0
    %5445 = vmatprep.mubr.f32.mxu0 0.0
    %v5446 = vand.u32 %v4192, 4294901760
    %v5447 = vsub.f32 %v4192, %v5446
    %v5448 = vand.u32 %v5447, 4294901760
    %v5449 = vsub.f32 %v5447, %v5448
    %v5450 = vand.u32 %v5449, 4294901760
    %5451 = vmatmul.mubr.f32.gmra.mrb[0].mxu0 %v5450
    %v5452 = vpop.f32.mrb[0].mxu0
    %v5453 = vadd.f32 0.0, %v5452
    %v5454 = vpop.f32.mrb[0].mxu0
    %5455 = vmatprep.mubr.f32.mxu0 0.0
    %v5456 = vand.u32 %v4195, 4294901760
    %v5457 = vsub.f32 %v4195, %v5456
    %v5458 = vand.u32 %v5457, 4294901760
    %v5459 = vsub.f32 %v5457, %v5458
    %v5460 = vand.u32 %v5459, 4294901760
    %5461 = vmatmul.mubr.f32.gmra.mrb[0].mxu0 %v5460
    %v5462 = vpop.f32.mrb[0].mxu0
    %v5463 = vadd.f32 0.0, %v5462
    %v5464 = vpop.f32.mrb[0].mxu0
    %5465 = vmatprep.mubr.f32.mxu0 0.0
    %v5466 = vand.u32 %v4198, 4294901760
    %v5467 = vsub.f32 %v4198, %v5466
    %v5468 = vand.u32 %v5467, 4294901760
    %v5469 = vsub.f32 %v5467, %v5468
    %v5470 = vand.u32 %v5469, 4294901760
    %5471 = vmatmul.mubr.f32.gmra.mrb[0].mxu0 %v5470
    %v5472 = vpop.f32.mrb[0].mxu0
    %v5473 = vadd.f32 0.0, %v5472
    %v5474 = vpop.f32.mrb[0].mxu0
    %5475 = vmatprep.mubr.f32.mxu0 0.0
    %v5476 = vand.u32 %v4201, 4294901760
    %v5477 = vsub.f32 %v4201, %v5476
    %v5478 = vand.u32 %v5477, 4294901760
    %v5479 = vsub.f32 %v5477, %v5478
    %v5480 = vand.u32 %v5479, 4294901760
    %5481 = vmatmul.mubr.f32.gmra.mrb[0].mxu0 %v5480
    %v5482 = vpop.f32.mrb[0].mxu0
    %v5483 = vadd.f32 0.0, %v5482
    %v5484 = vpop.f32.mrb[0].mxu0
    %5485 = vdwg.mxu0
    %5486 = vmatprep.subr.mxu0 0.0
    %v5487 = vand.u32 %v1642, 4294901760
    %v5488 = vsub.f32 %v1642, %v5487
    %v5489 = vand.u32 %v5488, 4294901760
    %v5490 = vsub.f32 %v5488, %v5489
    %v5491 = vand.u32 %v5490, 4294901760
    %5492 = vmatpush1.msra.mxu0 %v5491
    %5493 = vmatprep.subr.mxu0 0.0
    %v5494 = vand.u32 %v1648, 4294901760
    %v5495 = vsub.f32 %v1648, %v5494
    %v5496 = vand.u32 %v5495, 4294901760
    %v5497 = vsub.f32 %v5495, %v5496
    %v5498 = vand.u32 %v5497, 4294901760
    %5499 = vmatpush1.msra.mxu0 %v5498
    %5500 = vmatprep.subr.mxu0 0.0
    %5501 = vmatpush1.msra.mxu0 0.0
    %5502 = vmatprep.subr.mxu0 0.0
    %5503 = vmatpush1.msra.mxu0 0.0
    %5504 = vmatprep.subr.mxu0 0.0
    %5505 = vmatpush1.msra.mxu0 0.0
    %5506 = vmatprep.subr.mxu0 0.0
    %5507 = vmatpush1.msra.mxu0 0.0
    %5508 = vmatprep.subr.mxu0 0.0
    %5509 = vmatpush1.msra.mxu0 0.0
    %5510 = vmatprep.subr.mxu0 0.0
    %5511 = vmatpush1.msra.mxu0 0.0
    %5512 = vmatprep.subr.mxu0 0.0
    %5513 = vmatpush1.msra.mxu0 0.0
    %5514 = vmatprep.subr.mxu0 0.0
    %5515 = vmatpush1.msra.mxu0 0.0
    %5516 = vmatprep.subr.mxu0 0.0
    %5517 = vmatpush1.msra.mxu0 0.0
    %5518 = vmatprep.subr.mxu0 0.0
    %5519 = vmatpush1.msra.mxu0 0.0
    %5520 = vmatprep.subr.mxu0 0.0
    %5521 = vmatpush1.msra.mxu0 0.0
    %5522 = vmatprep.subr.mxu0 0.0
    %5523 = vmatpush1.msra.mxu0 0.0
    %5524 = vmatprep.subr.mxu0 0.0
    %5525 = vmatpush1.msra.mxu0 0.0
    %5526 = vmatprep.subr.mxu0 0.0
    %5527 = vmatpush1.msra.mxu0 0.0
    %5528 = vmatprep.subr.mxu0 0.0
    %5529 = vmatpush1.msra.mxu0 0.0
    %5530 = vmatprep.subr.mxu0 0.0
    %5531 = vmatpush1.msra.mxu0 0.0
    %5532 = vmatprep.subr.mxu0 0.0
    %5533 = vmatpush1.msra.mxu0 0.0
    %5534 = vmatprep.subr.mxu0 0.0
    %5535 = vmatpush1.msra.mxu0 0.0
    %5536 = vmatprep.subr.mxu0 0.0
    %5537 = vmatpush1.msra.mxu0 0.0
    %5538 = vmatprep.subr.mxu0 0.0
    %5539 = vmatpush1.msra.mxu0 0.0
    %5540 = vmatprep.subr.mxu0 0.0
    %5541 = vmatpush1.msra.mxu0 0.0
    %5542 = vmatprep.subr.mxu0 0.0
    %5543 = vmatpush1.msra.mxu0 0.0
    %5544 = vmatprep.subr.mxu0 0.0
    %5545 = vmatpush1.msra.mxu0 0.0
    %5546 = vmatprep.subr.mxu0 0.0
    %5547 = vmatpush1.msra.mxu0 0.0
    %5548 = vmatprep.subr.mxu0 0.0
    %5549 = vmatpush1.msra.mxu0 0.0
    %5550 = vmatprep.subr.mxu0 0.0
    %5551 = vmatpush1.msra.mxu0 0.0
    %5552 = vmatprep.subr.mxu0 0.0
    %5553 = vmatpush1.msra.mxu0 0.0
    %5554 = vmatprep.subr.mxu0 0.0
    %5555 = vmatpush1.msra.mxu0 0.0
    %5556 = vmatprep.subr.mxu0 0.0
    %5557 = vmatpush1.msra.mxu0 0.0
    %5558 = vmatprep.subr.mxu0 0.0
    %5559 = vmatpush1.msra.mxu0 0.0
    %5560 = vmatprep.mubr.f32.mxu0 0.0
    %v5561 = vand.u32 %v4192, 4294901760
    %5562 = vmatmul.mubr.f32.gmra.mrb[0].mxu0 %v5561
    %v5563 = vpop.f32.mrb[0].mxu0
    %v5564 = vadd.f32 %v5453, %v5563
    %v5565 = vpop.f32.mrb[0].mxu0
    %5566 = vmatprep.mubr.f32.mxu0 0.0
    %v5567 = vand.u32 %v4195, 4294901760
    %5568 = vmatmul.mubr.f32.gmra.mrb[0].mxu0 %v5567
    %v5569 = vpop.f32.mrb[0].mxu0
    %v5570 = vadd.f32 %v5463, %v5569
    %v5571 = vpop.f32.mrb[0].mxu0
    %5572 = vmatprep.mubr.f32.mxu0 0.0
    %v5573 = vand.u32 %v4198, 4294901760
    %5574 = vmatmul.mubr.f32.gmra.mrb[0].mxu0 %v5573
    %v5575 = vpop.f32.mrb[0].mxu0
    %v5576 = vadd.f32 %v5473, %v5575
    %v5577 = vpop.f32.mrb[0].mxu0
    %5578 = vmatprep.mubr.f32.mxu0 0.0
    %v5579 = vand.u32 %v4201, 4294901760
    %5580 = vmatmul.mubr.f32.gmra.mrb[0].mxu0 %v5579
    %v5581 = vpop.f32.mrb[0].mxu0
    %v5582 = vadd.f32 %v5483, %v5581
    %v5583 = vpop.f32.mrb[0].mxu0
    %5584 = vdwg.mxu0
    %5585 = vmatprep.subr.mxu0 0.0
    %v5586 = vand.u32 %v1642, 4294901760
    %v5587 = vsub.f32 %v1642, %v5586
    %5588 = vmatpush1.msra.mxu0 %v5587
    %5589 = vmatprep.subr.mxu0 0.0
    %v5590 = vand.u32 %v1648, 4294901760
    %v5591 = vsub.f32 %v1648, %v5590
    %5592 = vmatpush1.msra.mxu0 %v5591
    %5593 = vmatprep.subr.mxu0 0.0
    %5594 = vmatpush1.msra.mxu0 0.0
    %5595 = vmatprep.subr.mxu0 0.0
    %5596 = vmatpush1.msra.mxu0 0.0
    %5597 = vmatprep.subr.mxu0 0.0
    %5598 = vmatpush1.msra.mxu0 0.0
    %5599 = vmatprep.subr.mxu0 0.0
    %5600 = vmatpush1.msra.mxu0 0.0
    %5601 = vmatprep.subr.mxu0 0.0
    %5602 = vmatpush1.msra.mxu0 0.0
    %5603 = vmatprep.subr.mxu0 0.0
    %5604 = vmatpush1.msra.mxu0 0.0
    %5605 = vmatprep.subr.mxu0 0.0
    %5606 = vmatpush1.msra.mxu0 0.0
    %5607 = vmatprep.subr.mxu0 0.0
    %5608 = vmatpush1.msra.mxu0 0.0
    %5609 = vmatprep.subr.mxu0 0.0
    %5610 = vmatpush1.msra.mxu0 0.0
    %5611 = vmatprep.subr.mxu0 0.0
    %5612 = vmatpush1.msra.mxu0 0.0
    %5613 = vmatprep.subr.mxu0 0.0
    %5614 = vmatpush1.msra.mxu0 0.0
    %5615 = vmatprep.subr.mxu0 0.0
    %5616 = vmatpush1.msra.mxu0 0.0
    %5617 = vmatprep.subr.mxu0 0.0
    %5618 = vmatpush1.msra.mxu0 0.0
    %5619 = vmatprep.subr.mxu0 0.0
    %5620 = vmatpush1.msra.mxu0 0.0
    %5621 = vmatprep.subr.mxu0 0.0
    %5622 = vmatpush1.msra.mxu0 0.0
    %5623 = vmatprep.subr.mxu0 0.0
    %5624 = vmatpush1.msra.mxu0 0.0
    %5625 = vmatprep.subr.mxu0 0.0
    %5626 = vmatpush1.msra.mxu0 0.0
    %5627 = vmatprep.subr.mxu0 0.0
    %5628 = vmatpush1.msra.mxu0 0.0
    %5629 = vmatprep.subr.mxu0 0.0
    %5630 = vmatpush1.msra.mxu0 0.0
    %5631 = vmatprep.subr.mxu0 0.0
    %5632 = vmatpush1.msra.mxu0 0.0
    %5633 = vmatprep.subr.mxu0 0.0
    %5634 = vmatpush1.msra.mxu0 0.0
    %5635 = vmatprep.subr.mxu0 0.0
    %5636 = vmatpush1.msra.mxu0 0.0
    %5637 = vmatprep.subr.mxu0 0.0
    %5638 = vmatpush1.msra.mxu0 0.0
    %5639 = vmatprep.subr.mxu0 0.0
    %5640 = vmatpush1.msra.mxu0 0.0
    %5641 = vmatprep.subr.mxu0 0.0
    %5642 = vmatpush1.msra.mxu0 0.0
    %5643 = vmatprep.subr.mxu0 0.0
    %5644 = vmatpush1.msra.mxu0 0.0
    %5645 = vmatprep.subr.mxu0 0.0
    %5646 = vmatpush1.msra.mxu0 0.0
    %5647 = vmatprep.subr.mxu0 0.0
    %5648 = vmatpush1.msra.mxu0 0.0
    %5649 = vmatprep.subr.mxu0 0.0
    %5650 = vmatpush1.msra.mxu0 0.0
    %5651 = vmatprep.subr.mxu0 0.0
    %5652 = vmatpush1.msra.mxu0 0.0
    %5653 = vmatprep.mubr.f32.mxu0 0.0
    %v5654 = vand.u32 %v4192, 4294901760
    %v5655 = vsub.f32 %v4192, %v5654
    %5656 = vmatmul.mubr.f32.gmra.mrb[0].mxu0 %v5655
    %v5657 = vpop.f32.mrb[0].mxu0
    %v5658 = vadd.f32 %v5564, %v5657
    %v5659 = vpop.f32.mrb[0].mxu0
    %5660 = vmatprep.mubr.f32.mxu0 0.0
    %v5661 = vand.u32 %v4195, 4294901760
    %v5662 = vsub.f32 %v4195, %v5661
    %5663 = vmatmul.mubr.f32.gmra.mrb[0].mxu0 %v5662
    %v5664 = vpop.f32.mrb[0].mxu0
    %v5665 = vadd.f32 %v5570, %v5664
    %v5666 = vpop.f32.mrb[0].mxu0
    %5667 = vmatprep.mubr.f32.mxu0 0.0
    %v5668 = vand.u32 %v4198, 4294901760
    %v5669 = vsub.f32 %v4198, %v5668
    %5670 = vmatmul.mubr.f32.gmra.mrb[0].mxu0 %v5669
    %v5671 = vpop.f32.mrb[0].mxu0
    %v5672 = vadd.f32 %v5576, %v5671
    %v5673 = vpop.f32.mrb[0].mxu0
    %5674 = vmatprep.mubr.f32.mxu0 0.0
    %v5675 = vand.u32 %v4201, 4294901760
    %v5676 = vsub.f32 %v4201, %v5675
    %5677 = vmatmul.mubr.f32.gmra.mrb[0].mxu0 %v5676
    %v5678 = vpop.f32.mrb[0].mxu0
    %v5679 = vadd.f32 %v5582, %v5678
    %v5680 = vpop.f32.mrb[0].mxu0
    %5681 = vdwg.mxu0
    %5682 = vmatprep.subr.mxu0 0.0
    %v5683 = vand.u32 %v1642, 4294901760
    %5684 = vmatpush1.msra.mxu0 %v5683
    %5685 = vmatprep.subr.mxu0 0.0
    %v5686 = vand.u32 %v1648, 4294901760
    %5687 = vmatpush1.msra.mxu0 %v5686
    %5688 = vmatprep.subr.mxu0 0.0
    %5689 = vmatpush1.msra.mxu0 0.0
    %5690 = vmatprep.subr.mxu0 0.0
    %5691 = vmatpush1.msra.mxu0 0.0
    %5692 = vmatprep.subr.mxu0 0.0
    %5693 = vmatpush1.msra.mxu0 0.0
    %5694 = vmatprep.subr.mxu0 0.0
    %5695 = vmatpush1.msra.mxu0 0.0
    %5696 = vmatprep.subr.mxu0 0.0
    %5697 = vmatpush1.msra.mxu0 0.0
    %5698 = vmatprep.subr.mxu0 0.0
    %5699 = vmatpush1.msra.mxu0 0.0
    %5700 = vmatprep.subr.mxu0 0.0
    %5701 = vmatpush1.msra.mxu0 0.0
    %5702 = vmatprep.subr.mxu0 0.0
    %5703 = vmatpush1.msra.mxu0 0.0
    %5704 = vmatprep.subr.mxu0 0.0
    %5705 = vmatpush1.msra.mxu0 0.0
    %5706 = vmatprep.subr.mxu0 0.0
    %5707 = vmatpush1.msra.mxu0 0.0
    %5708 = vmatprep.subr.mxu0 0.0
    %5709 = vmatpush1.msra.mxu0 0.0
    %5710 = vmatprep.subr.mxu0 0.0
    %5711 = vmatpush1.msra.mxu0 0.0
    %5712 = vmatprep.subr.mxu0 0.0
    %5713 = vmatpush1.msra.mxu0 0.0
    %5714 = vmatprep.subr.mxu0 0.0
    %5715 = vmatpush1.msra.mxu0 0.0
    %5716 = vmatprep.subr.mxu0 0.0
    %5717 = vmatpush1.msra.mxu0 0.0
    %5718 = vmatprep.subr.mxu0 0.0
    %5719 = vmatpush1.msra.mxu0 0.0
    %5720 = vmatprep.subr.mxu0 0.0
    %5721 = vmatpush1.msra.mxu0 0.0
    %5722 = vmatprep.subr.mxu0 0.0
    %5723 = vmatpush1.msra.mxu0 0.0
    %5724 = vmatprep.subr.mxu0 0.0
    %5725 = vmatpush1.msra.mxu0 0.0
    %5726 = vmatprep.subr.mxu0 0.0
    %5727 = vmatpush1.msra.mxu0 0.0
    %5728 = vmatprep.subr.mxu0 0.0
    %5729 = vmatpush1.msra.mxu0 0.0
    %5730 = vmatprep.subr.mxu0 0.0
    %5731 = vmatpush1.msra.mxu0 0.0
    %5732 = vmatprep.subr.mxu0 0.0
    %5733 = vmatpush1.msra.mxu0 0.0
    %5734 = vmatprep.subr.mxu0 0.0
    %5735 = vmatpush1.msra.mxu0 0.0
    %5736 = vmatprep.subr.mxu0 0.0
    %5737 = vmatpush1.msra.mxu0 0.0
    %5738 = vmatprep.subr.mxu0 0.0
    %5739 = vmatpush1.msra.mxu0 0.0
    %5740 = vmatprep.subr.mxu0 0.0
    %5741 = vmatpush1.msra.mxu0 0.0
    %5742 = vmatprep.subr.mxu0 0.0
    %5743 = vmatpush1.msra.mxu0 0.0
    %5744 = vmatprep.subr.mxu0 0.0
    %5745 = vmatpush1.msra.mxu0 0.0
    %5746 = vmatprep.subr.mxu0 0.0
    %5747 = vmatpush1.msra.mxu0 0.0
    %5748 = vmatprep.mubr.f32.mxu0 0.0
    %v5749 = vand.u32 %v4192, 4294901760
    %v5750 = vsub.f32 %v4192, %v5749
    %v5751 = vand.u32 %v5750, 4294901760
    %5752 = vmatmul.mubr.f32.gmra.mrb[0].mxu0 %v5751
    %v5753 = vpop.f32.mrb[0].mxu0
    %v5754 = vadd.f32 %v5658, %v5753
    %v5755 = vpop.f32.mrb[0].mxu0
    %5756 = vmatprep.mubr.f32.mxu0 0.0
    %v5757 = vand.u32 %v4195, 4294901760
    %v5758 = vsub.f32 %v4195, %v5757
    %v5759 = vand.u32 %v5758, 4294901760
    %5760 = vmatmul.mubr.f32.gmra.mrb[0].mxu0 %v5759
    %v5761 = vpop.f32.mrb[0].mxu0
    %v5762 = vadd.f32 %v5665, %v5761
    %v5763 = vpop.f32.mrb[0].mxu0
    %5764 = vmatprep.mubr.f32.mxu0 0.0
    %v5765 = vand.u32 %v4198, 4294901760
    %v5766 = vsub.f32 %v4198, %v5765
    %v5767 = vand.u32 %v5766, 4294901760
    %5768 = vmatmul.mubr.f32.gmra.mrb[0].mxu0 %v5767
    %v5769 = vpop.f32.mrb[0].mxu0
    %v5770 = vadd.f32 %v5672, %v5769
    %v5771 = vpop.f32.mrb[0].mxu0
    %5772 = vmatprep.mubr.f32.mxu0 0.0
    %v5773 = vand.u32 %v4201, 4294901760
    %v5774 = vsub.f32 %v4201, %v5773
    %v5775 = vand.u32 %v5774, 4294901760
    %5776 = vmatmul.mubr.f32.gmra.mrb[0].mxu0 %v5775
    %v5777 = vpop.f32.mrb[0].mxu0
    %v5778 = vadd.f32 %v5679, %v5777
    %v5779 = vpop.f32.mrb[0].mxu0
    %5780 = vdwg.mxu0
    %5781 = vmatprep.subr.mxu0 0.0
    %v5782 = vand.u32 %v1642, 4294901760
    %v5783 = vsub.f32 %v1642, %v5782
    %v5784 = vand.u32 %v5783, 4294901760
    %5785 = vmatpush1.msra.mxu0 %v5784
    %5786 = vmatprep.subr.mxu0 0.0
    %v5787 = vand.u32 %v1648, 4294901760
    %v5788 = vsub.f32 %v1648, %v5787
    %v5789 = vand.u32 %v5788, 4294901760
    %5790 = vmatpush1.msra.mxu0 %v5789
    %5791 = vmatprep.subr.mxu0 0.0
    %5792 = vmatpush1.msra.mxu0 0.0
    %5793 = vmatprep.subr.mxu0 0.0
    %5794 = vmatpush1.msra.mxu0 0.0
    %5795 = vmatprep.subr.mxu0 0.0
    %5796 = vmatpush1.msra.mxu0 0.0
    %5797 = vmatprep.subr.mxu0 0.0
    %5798 = vmatpush1.msra.mxu0 0.0
    %5799 = vmatprep.subr.mxu0 0.0
    %5800 = vmatpush1.msra.mxu0 0.0
    %5801 = vmatprep.subr.mxu0 0.0
    %5802 = vmatpush1.msra.mxu0 0.0
    %5803 = vmatprep.subr.mxu0 0.0
    %5804 = vmatpush1.msra.mxu0 0.0
    %5805 = vmatprep.subr.mxu0 0.0
    %5806 = vmatpush1.msra.mxu0 0.0
    %5807 = vmatprep.subr.mxu0 0.0
    %5808 = vmatpush1.msra.mxu0 0.0
    %5809 = vmatprep.subr.mxu0 0.0
    %5810 = vmatpush1.msra.mxu0 0.0
    %5811 = vmatprep.subr.mxu0 0.0
    %5812 = vmatpush1.msra.mxu0 0.0
    %5813 = vmatprep.subr.mxu0 0.0
    %5814 = vmatpush1.msra.mxu0 0.0
    %5815 = vmatprep.subr.mxu0 0.0
    %5816 = vmatpush1.msra.mxu0 0.0
    %5817 = vmatprep.subr.mxu0 0.0
    %5818 = vmatpush1.msra.mxu0 0.0
    %5819 = vmatprep.subr.mxu0 0.0
    %5820 = vmatpush1.msra.mxu0 0.0
    %5821 = vmatprep.subr.mxu0 0.0
    %5822 = vmatpush1.msra.mxu0 0.0
    %5823 = vmatprep.subr.mxu0 0.0
    %5824 = vmatpush1.msra.mxu0 0.0
    %5825 = vmatprep.subr.mxu0 0.0
    %5826 = vmatpush1.msra.mxu0 0.0
    %5827 = vmatprep.subr.mxu0 0.0
    %5828 = vmatpush1.msra.mxu0 0.0
    %5829 = vmatprep.subr.mxu0 0.0
    %5830 = vmatpush1.msra.mxu0 0.0
    %5831 = vmatprep.subr.mxu0 0.0
    %5832 = vmatpush1.msra.mxu0 0.0
    %5833 = vmatprep.subr.mxu0 0.0
    %5834 = vmatpush1.msra.mxu0 0.0
    %5835 = vmatprep.subr.mxu0 0.0
    %5836 = vmatpush1.msra.mxu0 0.0
    %5837 = vmatprep.subr.mxu0 0.0
    %5838 = vmatpush1.msra.mxu0 0.0
    %5839 = vmatprep.subr.mxu0 0.0
    %5840 = vmatpush1.msra.mxu0 0.0
    %5841 = vmatprep.subr.mxu0 0.0
    %5842 = vmatpush1.msra.mxu0 0.0
    %5843 = vmatprep.subr.mxu0 0.0
    %5844 = vmatpush1.msra.mxu0 0.0
    %5845 = vmatprep.subr.mxu0 0.0
    %5846 = vmatpush1.msra.mxu0 0.0
    %5847 = vmatprep.subr.mxu0 0.0
    %5848 = vmatpush1.msra.mxu0 0.0
    %5849 = vmatprep.subr.mxu0 0.0
    %5850 = vmatpush1.msra.mxu0 0.0
    %5851 = vmatprep.mubr.f32.mxu0 0.0
    %v5852 = vand.u32 %v4192, 4294901760
    %5853 = vmatmul.mubr.f32.gmra.mrb[0].mxu0 %v5852
    %v5854 = vpop.f32.mrb[0].mxu0
    %v5855 = vadd.f32 %v5754, %v5854
    %v5856 = vpop.f32.mrb[0].mxu0
    %5857 = vmatprep.mubr.f32.mxu0 0.0
    %v5858 = vand.u32 %v4195, 4294901760
    %5859 = vmatmul.mubr.f32.gmra.mrb[0].mxu0 %v5858
    %v5860 = vpop.f32.mrb[0].mxu0
    %v5861 = vadd.f32 %v5762, %v5860
    %v5862 = vpop.f32.mrb[0].mxu0
    %5863 = vmatprep.mubr.f32.mxu0 0.0
    %v5864 = vand.u32 %v4198, 4294901760
    %5865 = vmatmul.mubr.f32.gmra.mrb[0].mxu0 %v5864
    %v5866 = vpop.f32.mrb[0].mxu0
    %v5867 = vadd.f32 %v5770, %v5866
    %v5868 = vpop.f32.mrb[0].mxu0
    %5869 = vmatprep.mubr.f32.mxu0 0.0
    %v5870 = vand.u32 %v4201, 4294901760
    %5871 = vmatmul.mubr.f32.gmra.mrb[0].mxu0 %v5870
    %v5872 = vpop.f32.mrb[0].mxu0
    %v5873 = vadd.f32 %v5778, %v5872
    %v5874 = vpop.f32.mrb[0].mxu0
    %5875 = vdwg.mxu0
    %5876 = vmatprep.subr.mxu0 0.0
    %v5877 = vand.u32 %v1642, 4294901760
    %5878 = vmatpush1.msra.mxu0 %v5877
    %5879 = vmatprep.subr.mxu0 0.0
    %v5880 = vand.u32 %v1648, 4294901760
    %5881 = vmatpush1.msra.mxu0 %v5880
    %5882 = vmatprep.subr.mxu0 0.0
    %5883 = vmatpush1.msra.mxu0 0.0
    %5884 = vmatprep.subr.mxu0 0.0
    %5885 = vmatpush1.msra.mxu0 0.0
    %5886 = vmatprep.subr.mxu0 0.0
    %5887 = vmatpush1.msra.mxu0 0.0
    %5888 = vmatprep.subr.mxu0 0.0
    %5889 = vmatpush1.msra.mxu0 0.0
    %5890 = vmatprep.subr.mxu0 0.0
    %5891 = vmatpush1.msra.mxu0 0.0
    %5892 = vmatprep.subr.mxu0 0.0
    %5893 = vmatpush1.msra.mxu0 0.0
    %5894 = vmatprep.subr.mxu0 0.0
    %5895 = vmatpush1.msra.mxu0 0.0
    %5896 = vmatprep.subr.mxu0 0.0
    %5897 = vmatpush1.msra.mxu0 0.0
    %5898 = vmatprep.subr.mxu0 0.0
    %5899 = vmatpush1.msra.mxu0 0.0
    %5900 = vmatprep.subr.mxu0 0.0
    %5901 = vmatpush1.msra.mxu0 0.0
    %5902 = vmatprep.subr.mxu0 0.0
    %5903 = vmatpush1.msra.mxu0 0.0
    %5904 = vmatprep.subr.mxu0 0.0
    %5905 = vmatpush1.msra.mxu0 0.0
    %5906 = vmatprep.subr.mxu0 0.0
    %5907 = vmatpush1.msra.mxu0 0.0
    %5908 = vmatprep.subr.mxu0 0.0
    %5909 = vmatpush1.msra.mxu0 0.0
    %5910 = vmatprep.subr.mxu0 0.0
    %5911 = vmatpush1.msra.mxu0 0.0
    %5912 = vmatprep.subr.mxu0 0.0
    %5913 = vmatpush1.msra.mxu0 0.0
    %5914 = vmatprep.subr.mxu0 0.0
    %5915 = vmatpush1.msra.mxu0 0.0
    %5916 = vmatprep.subr.mxu0 0.0
    %5917 = vmatpush1.msra.mxu0 0.0
    %5918 = vmatprep.subr.mxu0 0.0
    %5919 = vmatpush1.msra.mxu0 0.0
    %5920 = vmatprep.subr.mxu0 0.0
    %5921 = vmatpush1.msra.mxu0 0.0
    %5922 = vmatprep.subr.mxu0 0.0
    %5923 = vmatpush1.msra.mxu0 0.0
    %5924 = vmatprep.subr.mxu0 0.0
    %5925 = vmatpush1.msra.mxu0 0.0
    %5926 = vmatprep.subr.mxu0 0.0
    %5927 = vmatpush1.msra.mxu0 0.0
    %5928 = vmatprep.subr.mxu0 0.0
    %5929 = vmatpush1.msra.mxu0 0.0
    %5930 = vmatprep.subr.mxu0 0.0
    %5931 = vmatpush1.msra.mxu0 0.0
    %5932 = vmatprep.subr.mxu0 0.0
    %5933 = vmatpush1.msra.mxu0 0.0
    %5934 = vmatprep.subr.mxu0 0.0
    %5935 = vmatpush1.msra.mxu0 0.0
    %5936 = vmatprep.subr.mxu0 0.0
    %5937 = vmatpush1.msra.mxu0 0.0
    %5938 = vmatprep.subr.mxu0 0.0
    %5939 = vmatpush1.msra.mxu0 0.0
    %5940 = vmatprep.subr.mxu0 0.0
    %5941 = vmatpush1.msra.mxu0 0.0
    %5942 = vmatprep.mubr.f32.mxu0 0.0
    %v5943 = vand.u32 %v4192, 4294901760
    %5944 = vmatmul.mubr.f32.gmra.mrb[0].mxu0 %v5943
    %v5945 = vpop.f32.mrb[0].mxu0
    %v5946 = vadd.f32 %v5855, %v5945
    %v5947 = vpop.f32.mrb[0].mxu0
    %5948 = vmatprep.mubr.f32.mxu0 0.0
    %v5949 = vand.u32 %v4195, 4294901760
    %5950 = vmatmul.mubr.f32.gmra.mrb[0].mxu0 %v5949
    %v5951 = vpop.f32.mrb[0].mxu0
    %v5952 = vadd.f32 %v5861, %v5951
    %v5953 = vpop.f32.mrb[0].mxu0
    %5954 = vmatprep.mubr.f32.mxu0 0.0
    %v5955 = vand.u32 %v4198, 4294901760
    %5956 = vmatmul.mubr.f32.gmra.mrb[0].mxu0 %v5955
    %v5957 = vpop.f32.mrb[0].mxu0
    %v5958 = vadd.f32 %v5867, %v5957
    %v5959 = vpop.f32.mrb[0].mxu0
    %5960 = vmatprep.mubr.f32.mxu0 0.0
    %v5961 = vand.u32 %v4201, 4294901760
    %5962 = vmatmul.mubr.f32.gmra.mrb[0].mxu0 %v5961
    %v5963 = vpop.f32.mrb[0].mxu0
    %v5964 = vadd.f32 %v5873, %v5963
    %v5965 = vpop.f32.mrb[0].mxu0
    %5966 = vdwg.mxu0
    %5967 = vmatprep.subr.mxu0 0.0
    %v5968 = vand.u32 %v2150, 4294901760
    %5969 = vmatpush1.msra.mxu0 %v5968
    %5970 = vmatprep.subr.mxu0 0.0
    %v5971 = vand.u32 %v2156, 4294901760
    %5972 = vmatpush1.msra.mxu0 %v5971
    %5973 = vmatprep.subr.mxu0 0.0
    %5974 = vmatpush1.msra.mxu0 0.0
    %5975 = vmatprep.subr.mxu0 0.0
    %5976 = vmatpush1.msra.mxu0 0.0
    %5977 = vmatprep.subr.mxu0 0.0
    %5978 = vmatpush1.msra.mxu0 0.0
    %5979 = vmatprep.subr.mxu0 0.0
    %5980 = vmatpush1.msra.mxu0 0.0
    %5981 = vmatprep.subr.mxu0 0.0
    %5982 = vmatpush1.msra.mxu0 0.0
    %5983 = vmatprep.subr.mxu0 0.0
    %5984 = vmatpush1.msra.mxu0 0.0
    %5985 = vmatprep.subr.mxu0 0.0
    %5986 = vmatpush1.msra.mxu0 0.0
    %5987 = vmatprep.subr.mxu0 0.0
    %5988 = vmatpush1.msra.mxu0 0.0
    %5989 = vmatprep.subr.mxu0 0.0
    %5990 = vmatpush1.msra.mxu0 0.0
    %5991 = vmatprep.subr.mxu0 0.0
    %5992 = vmatpush1.msra.mxu0 0.0
    %5993 = vmatprep.subr.mxu0 0.0
    %5994 = vmatpush1.msra.mxu0 0.0
    %5995 = vmatprep.subr.mxu0 0.0
    %5996 = vmatpush1.msra.mxu0 0.0
    %5997 = vmatprep.subr.mxu0 0.0
    %5998 = vmatpush1.msra.mxu0 0.0
    %5999 = vmatprep.subr.mxu0 0.0
    %6000 = vmatpush1.msra.mxu0 0.0
    %6001 = vmatprep.subr.mxu0 0.0
    %6002 = vmatpush1.msra.mxu0 0.0
    %6003 = vmatprep.subr.mxu0 0.0
    %6004 = vmatpush1.msra.mxu0 0.0
    %6005 = vmatprep.subr.mxu0 0.0
    %6006 = vmatpush1.msra.mxu0 0.0
    %6007 = vmatprep.subr.mxu0 0.0
    %6008 = vmatpush1.msra.mxu0 0.0
    %6009 = vmatprep.subr.mxu0 0.0
    %6010 = vmatpush1.msra.mxu0 0.0
    %6011 = vmatprep.subr.mxu0 0.0
    %6012 = vmatpush1.msra.mxu0 0.0
    %6013 = vmatprep.subr.mxu0 0.0
    %6014 = vmatpush1.msra.mxu0 0.0
    %6015 = vmatprep.subr.mxu0 0.0
    %6016 = vmatpush1.msra.mxu0 0.0
    %6017 = vmatprep.subr.mxu0 0.0
    %6018 = vmatpush1.msra.mxu0 0.0
    %6019 = vmatprep.subr.mxu0 0.0
    %6020 = vmatpush1.msra.mxu0 0.0
    %6021 = vmatprep.subr.mxu0 0.0
    %6022 = vmatpush1.msra.mxu0 0.0
    %6023 = vmatprep.subr.mxu0 0.0
    %6024 = vmatpush1.msra.mxu0 0.0
    %6025 = vmatprep.subr.mxu0 0.0
    %6026 = vmatpush1.msra.mxu0 0.0
    %6027 = vmatprep.subr.mxu0 0.0
    %6028 = vmatpush1.msra.mxu0 0.0
    %6029 = vmatprep.subr.mxu0 0.0
    %6030 = vmatpush1.msra.mxu0 0.0
    %6031 = vmatprep.subr.mxu0 0.0
    %6032 = vmatpush1.msra.mxu0 0.0
    %6033 = vmatprep.mubr.f32.mxu0 0.0
    %v6034 = vand.u32 %v4192, 4294901760
    %v6035 = vsub.f32 %v4192, %v6034
    %v6036 = vand.u32 %v6035, 4294901760
    %v6037 = vsub.f32 %v6035, %v6036
    %v6038 = vand.u32 %v6037, 4294901760
    %6039 = vmatmul.mubr.f32.gmra.mrb[0].mxu0 %v6038
    %v6040 = vpop.f32.mrb[0].mxu0
    %v6041 = vadd.f32 0.0, %v6040
    %v6042 = vpop.f32.mrb[0].mxu0
    %6043 = vmatprep.mubr.f32.mxu0 0.0
    %v6044 = vand.u32 %v4195, 4294901760
    %v6045 = vsub.f32 %v4195, %v6044
    %v6046 = vand.u32 %v6045, 4294901760
    %v6047 = vsub.f32 %v6045, %v6046
    %v6048 = vand.u32 %v6047, 4294901760
    %6049 = vmatmul.mubr.f32.gmra.mrb[0].mxu0 %v6048
    %v6050 = vpop.f32.mrb[0].mxu0
    %v6051 = vadd.f32 0.0, %v6050
    %v6052 = vpop.f32.mrb[0].mxu0
    %6053 = vmatprep.mubr.f32.mxu0 0.0
    %v6054 = vand.u32 %v4198, 4294901760
    %v6055 = vsub.f32 %v4198, %v6054
    %v6056 = vand.u32 %v6055, 4294901760
    %v6057 = vsub.f32 %v6055, %v6056
    %v6058 = vand.u32 %v6057, 4294901760
    %6059 = vmatmul.mubr.f32.gmra.mrb[0].mxu0 %v6058
    %v6060 = vpop.f32.mrb[0].mxu0
    %v6061 = vadd.f32 0.0, %v6060
    %v6062 = vpop.f32.mrb[0].mxu0
    %6063 = vmatprep.mubr.f32.mxu0 0.0
    %v6064 = vand.u32 %v4201, 4294901760
    %v6065 = vsub.f32 %v4201, %v6064
    %v6066 = vand.u32 %v6065, 4294901760
    %v6067 = vsub.f32 %v6065, %v6066
    %v6068 = vand.u32 %v6067, 4294901760
    %6069 = vmatmul.mubr.f32.gmra.mrb[0].mxu0 %v6068
    %v6070 = vpop.f32.mrb[0].mxu0
    %v6071 = vadd.f32 0.0, %v6070
    %v6072 = vpop.f32.mrb[0].mxu0
    %6073 = vdwg.mxu0
    %6074 = vmatprep.subr.mxu0 0.0
    %v6075 = vand.u32 %v2150, 4294901760
    %v6076 = vsub.f32 %v2150, %v6075
    %v6077 = vand.u32 %v6076, 4294901760
    %v6078 = vsub.f32 %v6076, %v6077
    %v6079 = vand.u32 %v6078, 4294901760
    %6080 = vmatpush1.msra.mxu0 %v6079
    %6081 = vmatprep.subr.mxu0 0.0
    %v6082 = vand.u32 %v2156, 4294901760
    %v6083 = vsub.f32 %v2156, %v6082
    %v6084 = vand.u32 %v6083, 4294901760
    %v6085 = vsub.f32 %v6083, %v6084
    %v6086 = vand.u32 %v6085, 4294901760
    %6087 = vmatpush1.msra.mxu0 %v6086
    %6088 = vmatprep.subr.mxu0 0.0
    %6089 = vmatpush1.msra.mxu0 0.0
    %6090 = vmatprep.subr.mxu0 0.0
    %6091 = vmatpush1.msra.mxu0 0.0
    %6092 = vmatprep.subr.mxu0 0.0
    %6093 = vmatpush1.msra.mxu0 0.0
    %6094 = vmatprep.subr.mxu0 0.0
    %6095 = vmatpush1.msra.mxu0 0.0
    %6096 = vmatprep.subr.mxu0 0.0
    %6097 = vmatpush1.msra.mxu0 0.0
    %6098 = vmatprep.subr.mxu0 0.0
    %6099 = vmatpush1.msra.mxu0 0.0
    %6100 = vmatprep.subr.mxu0 0.0
    %6101 = vmatpush1.msra.mxu0 0.0
    %6102 = vmatprep.subr.mxu0 0.0
    %6103 = vmatpush1.msra.mxu0 0.0
    %6104 = vmatprep.subr.mxu0 0.0
    %6105 = vmatpush1.msra.mxu0 0.0
    %6106 = vmatprep.subr.mxu0 0.0
    %6107 = vmatpush1.msra.mxu0 0.0
    %6108 = vmatprep.subr.mxu0 0.0
    %6109 = vmatpush1.msra.mxu0 0.0
    %6110 = vmatprep.subr.mxu0 0.0
    %6111 = vmatpush1.msra.mxu0 0.0
    %6112 = vmatprep.subr.mxu0 0.0
    %6113 = vmatpush1.msra.mxu0 0.0
    %6114 = vmatprep.subr.mxu0 0.0
    %6115 = vmatpush1.msra.mxu0 0.0
    %6116 = vmatprep.subr.mxu0 0.0
    %6117 = vmatpush1.msra.mxu0 0.0
    %6118 = vmatprep.subr.mxu0 0.0
    %6119 = vmatpush1.msra.mxu0 0.0
    %6120 = vmatprep.subr.mxu0 0.0
    %6121 = vmatpush1.msra.mxu0 0.0
    %6122 = vmatprep.subr.mxu0 0.0
    %6123 = vmatpush1.msra.mxu0 0.0
    %6124 = vmatprep.subr.mxu0 0.0
    %6125 = vmatpush1.msra.mxu0 0.0
    %6126 = vmatprep.subr.mxu0 0.0
    %6127 = vmatpush1.msra.mxu0 0.0
    %6128 = vmatprep.subr.mxu0 0.0
    %6129 = vmatpush1.msra.mxu0 0.0
    %6130 = vmatprep.subr.mxu0 0.0
    %6131 = vmatpush1.msra.mxu0 0.0
    %6132 = vmatprep.subr.mxu0 0.0
    %6133 = vmatpush1.msra.mxu0 0.0
    %6134 = vmatprep.subr.mxu0 0.0
    %6135 = vmatpush1.msra.mxu0 0.0
    %6136 = vmatprep.subr.mxu0 0.0
    %6137 = vmatpush1.msra.mxu0 0.0
    %6138 = vmatprep.subr.mxu0 0.0
    %6139 = vmatpush1.msra.mxu0 0.0
    %6140 = vmatprep.subr.mxu0 0.0
    %6141 = vmatpush1.msra.mxu0 0.0
    %6142 = vmatprep.subr.mxu0 0.0
    %6143 = vmatpush1.msra.mxu0 0.0
    %6144 = vmatprep.subr.mxu0 0.0
    %6145 = vmatpush1.msra.mxu0 0.0
    %6146 = vmatprep.subr.mxu0 0.0
    %6147 = vmatpush1.msra.mxu0 0.0
    %6148 = vmatprep.mubr.f32.mxu0 0.0
    %v6149 = vand.u32 %v4192, 4294901760
    %6150 = vmatmul.mubr.f32.gmra.mrb[0].mxu0 %v6149
    %v6151 = vpop.f32.mrb[0].mxu0
    %v6152 = vadd.f32 %v6041, %v6151
    %v6153 = vpop.f32.mrb[0].mxu0
    %6154 = vmatprep.mubr.f32.mxu0 0.0
    %v6155 = vand.u32 %v4195, 4294901760
    %6156 = vmatmul.mubr.f32.gmra.mrb[0].mxu0 %v6155
    %v6157 = vpop.f32.mrb[0].mxu0
    %v6158 = vadd.f32 %v6051, %v6157
    %v6159 = vpop.f32.mrb[0].mxu0
    %6160 = vmatprep.mubr.f32.mxu0 0.0
    %v6161 = vand.u32 %v4198, 4294901760
    %6162 = vmatmul.mubr.f32.gmra.mrb[0].mxu0 %v6161
    %v6163 = vpop.f32.mrb[0].mxu0
    %v6164 = vadd.f32 %v6061, %v6163
    %v6165 = vpop.f32.mrb[0].mxu0
    %6166 = vmatprep.mubr.f32.mxu0 0.0
    %v6167 = vand.u32 %v4201, 4294901760
    %6168 = vmatmul.mubr.f32.gmra.mrb[0].mxu0 %v6167
    %v6169 = vpop.f32.mrb[0].mxu0
    %v6170 = vadd.f32 %v6071, %v6169
    %v6171 = vpop.f32.mrb[0].mxu0
    %6172 = vdwg.mxu0
    %6173 = vmatprep.subr.mxu0 0.0
    %v6174 = vand.u32 %v2150, 4294901760
    %v6175 = vsub.f32 %v2150, %v6174
    %6176 = vmatpush1.msra.mxu0 %v6175
    %6177 = vmatprep.subr.mxu0 0.0
    %v6178 = vand.u32 %v2156, 4294901760
    %v6179 = vsub.f32 %v2156, %v6178
    %6180 = vmatpush1.msra.mxu0 %v6179
    %6181 = vmatprep.subr.mxu0 0.0
    %6182 = vmatpush1.msra.mxu0 0.0
    %6183 = vmatprep.subr.mxu0 0.0
    %6184 = vmatpush1.msra.mxu0 0.0
    %6185 = vmatprep.subr.mxu0 0.0
    %6186 = vmatpush1.msra.mxu0 0.0
    %6187 = vmatprep.subr.mxu0 0.0
    %6188 = vmatpush1.msra.mxu0 0.0
    %6189 = vmatprep.subr.mxu0 0.0
    %6190 = vmatpush1.msra.mxu0 0.0
    %6191 = vmatprep.subr.mxu0 0.0
    %6192 = vmatpush1.msra.mxu0 0.0
    %6193 = vmatprep.subr.mxu0 0.0
    %6194 = vmatpush1.msra.mxu0 0.0
    %6195 = vmatprep.subr.mxu0 0.0
    %6196 = vmatpush1.msra.mxu0 0.0
    %6197 = vmatprep.subr.mxu0 0.0
    %6198 = vmatpush1.msra.mxu0 0.0
    %6199 = vmatprep.subr.mxu0 0.0
    %6200 = vmatpush1.msra.mxu0 0.0
    %6201 = vmatprep.subr.mxu0 0.0
    %6202 = vmatpush1.msra.mxu0 0.0
    %6203 = vmatprep.subr.mxu0 0.0
    %6204 = vmatpush1.msra.mxu0 0.0
    %6205 = vmatprep.subr.mxu0 0.0
    %6206 = vmatpush1.msra.mxu0 0.0
    %6207 = vmatprep.subr.mxu0 0.0
    %6208 = vmatpush1.msra.mxu0 0.0
    %6209 = vmatprep.subr.mxu0 0.0
    %6210 = vmatpush1.msra.mxu0 0.0
    %6211 = vmatprep.subr.mxu0 0.0
    %6212 = vmatpush1.msra.mxu0 0.0
    %6213 = vmatprep.subr.mxu0 0.0
    %6214 = vmatpush1.msra.mxu0 0.0
    %6215 = vmatprep.subr.mxu0 0.0
    %6216 = vmatpush1.msra.mxu0 0.0
    %6217 = vmatprep.subr.mxu0 0.0
    %6218 = vmatpush1.msra.mxu0 0.0
    %6219 = vmatprep.subr.mxu0 0.0
    %6220 = vmatpush1.msra.mxu0 0.0
    %6221 = vmatprep.subr.mxu0 0.0
    %6222 = vmatpush1.msra.mxu0 0.0
    %6223 = vmatprep.subr.mxu0 0.0
    %6224 = vmatpush1.msra.mxu0 0.0
    %6225 = vmatprep.subr.mxu0 0.0
    %6226 = vmatpush1.msra.mxu0 0.0
    %6227 = vmatprep.subr.mxu0 0.0
    %6228 = vmatpush1.msra.mxu0 0.0
    %6229 = vmatprep.subr.mxu0 0.0
    %6230 = vmatpush1.msra.mxu0 0.0
    %6231 = vmatprep.subr.mxu0 0.0
    %6232 = vmatpush1.msra.mxu0 0.0
    %6233 = vmatprep.subr.mxu0 0.0
    %6234 = vmatpush1.msra.mxu0 0.0
    %6235 = vmatprep.subr.mxu0 0.0
    %6236 = vmatpush1.msra.mxu0 0.0
    %6237 = vmatprep.subr.mxu0 0.0
    %6238 = vmatpush1.msra.mxu0 0.0
    %6239 = vmatprep.subr.mxu0 0.0
    %6240 = vmatpush1.msra.mxu0 0.0
    %6241 = vmatprep.mubr.f32.mxu0 0.0
    %v6242 = vand.u32 %v4192, 4294901760
    %v6243 = vsub.f32 %v4192, %v6242
    %6244 = vmatmul.mubr.f32.gmra.mrb[0].mxu0 %v6243
    %v6245 = vpop.f32.mrb[0].mxu0
    %v6246 = vadd.f32 %v6152, %v6245
    %v6247 = vpop.f32.mrb[0].mxu0
    %6248 = vmatprep.mubr.f32.mxu0 0.0
    %v6249 = vand.u32 %v4195, 4294901760
    %v6250 = vsub.f32 %v4195, %v6249
    %6251 = vmatmul.mubr.f32.gmra.mrb[0].mxu0 %v6250
    %v6252 = vpop.f32.mrb[0].mxu0
    %v6253 = vadd.f32 %v6158, %v6252
    %v6254 = vpop.f32.mrb[0].mxu0
    %6255 = vmatprep.mubr.f32.mxu0 0.0
    %v6256 = vand.u32 %v4198, 4294901760
    %v6257 = vsub.f32 %v4198, %v6256
    %6258 = vmatmul.mubr.f32.gmra.mrb[0].mxu0 %v6257
    %v6259 = vpop.f32.mrb[0].mxu0
    %v6260 = vadd.f32 %v6164, %v6259
    %v6261 = vpop.f32.mrb[0].mxu0
    %6262 = vmatprep.mubr.f32.mxu0 0.0
    %v6263 = vand.u32 %v4201, 4294901760
    %v6264 = vsub.f32 %v4201, %v6263
    %6265 = vmatmul.mubr.f32.gmra.mrb[0].mxu0 %v6264
    %v6266 = vpop.f32.mrb[0].mxu0
    %v6267 = vadd.f32 %v6170, %v6266
    %v6268 = vpop.f32.mrb[0].mxu0
    %6269 = vdwg.mxu0
    %6270 = vmatprep.subr.mxu0 0.0
    %v6271 = vand.u32 %v2150, 4294901760
    %6272 = vmatpush1.msra.mxu0 %v6271
    %6273 = vmatprep.subr.mxu0 0.0
    %v6274 = vand.u32 %v2156, 4294901760
    %6275 = vmatpush1.msra.mxu0 %v6274
    %6276 = vmatprep.subr.mxu0 0.0
    %6277 = vmatpush1.msra.mxu0 0.0
    %6278 = vmatprep.subr.mxu0 0.0
    %6279 = vmatpush1.msra.mxu0 0.0
    %6280 = vmatprep.subr.mxu0 0.0
    %6281 = vmatpush1.msra.mxu0 0.0
    %6282 = vmatprep.subr.mxu0 0.0
    %6283 = vmatpush1.msra.mxu0 0.0
    %6284 = vmatprep.subr.mxu0 0.0
    %6285 = vmatpush1.msra.mxu0 0.0
    %6286 = vmatprep.subr.mxu0 0.0
    %6287 = vmatpush1.msra.mxu0 0.0
    %6288 = vmatprep.subr.mxu0 0.0
    %6289 = vmatpush1.msra.mxu0 0.0
    %6290 = vmatprep.subr.mxu0 0.0
    %6291 = vmatpush1.msra.mxu0 0.0
    %6292 = vmatprep.subr.mxu0 0.0
    %6293 = vmatpush1.msra.mxu0 0.0
    %6294 = vmatprep.subr.mxu0 0.0
    %6295 = vmatpush1.msra.mxu0 0.0
    %6296 = vmatprep.subr.mxu0 0.0
    %6297 = vmatpush1.msra.mxu0 0.0
    %6298 = vmatprep.subr.mxu0 0.0
    %6299 = vmatpush1.msra.mxu0 0.0
    %6300 = vmatprep.subr.mxu0 0.0
    %6301 = vmatpush1.msra.mxu0 0.0
    %6302 = vmatprep.subr.mxu0 0.0
    %6303 = vmatpush1.msra.mxu0 0.0
    %6304 = vmatprep.subr.mxu0 0.0
    %6305 = vmatpush1.msra.mxu0 0.0
    %6306 = vmatprep.subr.mxu0 0.0
    %6307 = vmatpush1.msra.mxu0 0.0
    %6308 = vmatprep.subr.mxu0 0.0
    %6309 = vmatpush1.msra.mxu0 0.0
    %6310 = vmatprep.subr.mxu0 0.0
    %6311 = vmatpush1.msra.mxu0 0.0
    %6312 = vmatprep.subr.mxu0 0.0
    %6313 = vmatpush1.msra.mxu0 0.0
    %6314 = vmatprep.subr.mxu0 0.0
    %6315 = vmatpush1.msra.mxu0 0.0
    %6316 = vmatprep.subr.mxu0 0.0
    %6317 = vmatpush1.msra.mxu0 0.0
    %6318 = vmatprep.subr.mxu0 0.0
    %6319 = vmatpush1.msra.mxu0 0.0
    %6320 = vmatprep.subr.mxu0 0.0
    %6321 = vmatpush1.msra.mxu0 0.0
    %6322 = vmatprep.subr.mxu0 0.0
    %6323 = vmatpush1.msra.mxu0 0.0
    %6324 = vmatprep.subr.mxu0 0.0
    %6325 = vmatpush1.msra.mxu0 0.0
    %6326 = vmatprep.subr.mxu0 0.0
    %6327 = vmatpush1.msra.mxu0 0.0
    %6328 = vmatprep.subr.mxu0 0.0
    %6329 = vmatpush1.msra.mxu0 0.0
    %6330 = vmatprep.subr.mxu0 0.0
    %6331 = vmatpush1.msra.mxu0 0.0
    %6332 = vmatprep.subr.mxu0 0.0
    %6333 = vmatpush1.msra.mxu0 0.0
    %6334 = vmatprep.subr.mxu0 0.0
    %6335 = vmatpush1.msra.mxu0 0.0
    %6336 = vmatprep.mubr.f32.mxu0 0.0
    %v6337 = vand.u32 %v4192, 4294901760
    %v6338 = vsub.f32 %v4192, %v6337
    %v6339 = vand.u32 %v6338, 4294901760
    %6340 = vmatmul.mubr.f32.gmra.mrb[0].mxu0 %v6339
    %v6341 = vpop.f32.mrb[0].mxu0
    %v6342 = vadd.f32 %v6246, %v6341
    %v6343 = vpop.f32.mrb[0].mxu0
    %6344 = vmatprep.mubr.f32.mxu0 0.0
    %v6345 = vand.u32 %v4195, 4294901760
    %v6346 = vsub.f32 %v4195, %v6345
    %v6347 = vand.u32 %v6346, 4294901760
    %6348 = vmatmul.mubr.f32.gmra.mrb[0].mxu0 %v6347
    %v6349 = vpop.f32.mrb[0].mxu0
    %v6350 = vadd.f32 %v6253, %v6349
    %v6351 = vpop.f32.mrb[0].mxu0
    %6352 = vmatprep.mubr.f32.mxu0 0.0
    %v6353 = vand.u32 %v4198, 4294901760
    %v6354 = vsub.f32 %v4198, %v6353
    %v6355 = vand.u32 %v6354, 4294901760
    %6356 = vmatmul.mubr.f32.gmra.mrb[0].mxu0 %v6355
    %v6357 = vpop.f32.mrb[0].mxu0
    %v6358 = vadd.f32 %v6260, %v6357
    %v6359 = vpop.f32.mrb[0].mxu0
    %6360 = vmatprep.mubr.f32.mxu0 0.0
    %v6361 = vand.u32 %v4201, 4294901760
    %v6362 = vsub.f32 %v4201, %v6361
    %v6363 = vand.u32 %v6362, 4294901760
    %6364 = vmatmul.mubr.f32.gmra.mrb[0].mxu0 %v6363
    %v6365 = vpop.f32.mrb[0].mxu0
    %v6366 = vadd.f32 %v6267, %v6365
    %v6367 = vpop.f32.mrb[0].mxu0
    %6368 = vdwg.mxu0
    %6369 = vmatprep.subr.mxu0 0.0
    %v6370 = vand.u32 %v2150, 4294901760
    %v6371 = vsub.f32 %v2150, %v6370
    %v6372 = vand.u32 %v6371, 4294901760
    %6373 = vmatpush1.msra.mxu0 %v6372
    %6374 = vmatprep.subr.mxu0 0.0
    %v6375 = vand.u32 %v2156, 4294901760
    %v6376 = vsub.f32 %v2156, %v6375
    %v6377 = vand.u32 %v6376, 4294901760
    %6378 = vmatpush1.msra.mxu0 %v6377
    %6379 = vmatprep.subr.mxu0 0.0
    %6380 = vmatpush1.msra.mxu0 0.0
    %6381 = vmatprep.subr.mxu0 0.0
    %6382 = vmatpush1.msra.mxu0 0.0
    %6383 = vmatprep.subr.mxu0 0.0
    %6384 = vmatpush1.msra.mxu0 0.0
    %6385 = vmatprep.subr.mxu0 0.0
    %6386 = vmatpush1.msra.mxu0 0.0
    %6387 = vmatprep.subr.mxu0 0.0
    %6388 = vmatpush1.msra.mxu0 0.0
    %6389 = vmatprep.subr.mxu0 0.0
    %6390 = vmatpush1.msra.mxu0 0.0
    %6391 = vmatprep.subr.mxu0 0.0
    %6392 = vmatpush1.msra.mxu0 0.0
    %6393 = vmatprep.subr.mxu0 0.0
    %6394 = vmatpush1.msra.mxu0 0.0
    %6395 = vmatprep.subr.mxu0 0.0
    %6396 = vmatpush1.msra.mxu0 0.0
    %6397 = vmatprep.subr.mxu0 0.0
    %6398 = vmatpush1.msra.mxu0 0.0
    %6399 = vmatprep.subr.mxu0 0.0
    %6400 = vmatpush1.msra.mxu0 0.0
    %6401 = vmatprep.subr.mxu0 0.0
    %6402 = vmatpush1.msra.mxu0 0.0
    %6403 = vmatprep.subr.mxu0 0.0
    %6404 = vmatpush1.msra.mxu0 0.0
    %6405 = vmatprep.subr.mxu0 0.0
    %6406 = vmatpush1.msra.mxu0 0.0
    %6407 = vmatprep.subr.mxu0 0.0
    %6408 = vmatpush1.msra.mxu0 0.0
    %6409 = vmatprep.subr.mxu0 0.0
    %6410 = vmatpush1.msra.mxu0 0.0
    %6411 = vmatprep.subr.mxu0 0.0
    %6412 = vmatpush1.msra.mxu0 0.0
    %6413 = vmatprep.subr.mxu0 0.0
    %6414 = vmatpush1.msra.mxu0 0.0
    %6415 = vmatprep.subr.mxu0 0.0
    %6416 = vmatpush1.msra.mxu0 0.0
    %6417 = vmatprep.subr.mxu0 0.0
    %6418 = vmatpush1.msra.mxu0 0.0
    %6419 = vmatprep.subr.mxu0 0.0
    %6420 = vmatpush1.msra.mxu0 0.0
    %6421 = vmatprep.subr.mxu0 0.0
    %6422 = vmatpush1.msra.mxu0 0.0
    %6423 = vmatprep.subr.mxu0 0.0
    %6424 = vmatpush1.msra.mxu0 0.0
    %6425 = vmatprep.subr.mxu0 0.0
    %6426 = vmatpush1.msra.mxu0 0.0
    %6427 = vmatprep.subr.mxu0 0.0
    %6428 = vmatpush1.msra.mxu0 0.0
    %6429 = vmatprep.subr.mxu0 0.0
    %6430 = vmatpush1.msra.mxu0 0.0
    %6431 = vmatprep.subr.mxu0 0.0
    %6432 = vmatpush1.msra.mxu0 0.0
    %6433 = vmatprep.subr.mxu0 0.0
    %6434 = vmatpush1.msra.mxu0 0.0
    %6435 = vmatprep.subr.mxu0 0.0
    %6436 = vmatpush1.msra.mxu0 0.0
    %6437 = vmatprep.subr.mxu0 0.0
    %6438 = vmatpush1.msra.mxu0 0.0
    %6439 = vmatprep.mubr.f32.mxu0 0.0
    %v6440 = vand.u32 %v4192, 4294901760
    %6441 = vmatmul.mubr.f32.gmra.mrb[0].mxu0 %v6440
    %v6442 = vpop.f32.mrb[0].mxu0
    %v6443 = vadd.f32 %v6342, %v6442
    %v6444 = vpop.f32.mrb[0].mxu0
    %6445 = vmatprep.mubr.f32.mxu0 0.0
    %v6446 = vand.u32 %v4195, 4294901760
    %6447 = vmatmul.mubr.f32.gmra.mrb[0].mxu0 %v6446
    %v6448 = vpop.f32.mrb[0].mxu0
    %v6449 = vadd.f32 %v6350, %v6448
    %v6450 = vpop.f32.mrb[0].mxu0
    %6451 = vmatprep.mubr.f32.mxu0 0.0
    %v6452 = vand.u32 %v4198, 4294901760
    %6453 = vmatmul.mubr.f32.gmra.mrb[0].mxu0 %v6452
    %v6454 = vpop.f32.mrb[0].mxu0
    %v6455 = vadd.f32 %v6358, %v6454
    %v6456 = vpop.f32.mrb[0].mxu0
    %6457 = vmatprep.mubr.f32.mxu0 0.0
    %v6458 = vand.u32 %v4201, 4294901760
    %6459 = vmatmul.mubr.f32.gmra.mrb[0].mxu0 %v6458
    %v6460 = vpop.f32.mrb[0].mxu0
    %v6461 = vadd.f32 %v6366, %v6460
    %v6462 = vpop.f32.mrb[0].mxu0
    %6463 = vdwg.mxu0
    %6464 = vmatprep.subr.mxu0 0.0
    %v6465 = vand.u32 %v2150, 4294901760
    %6466 = vmatpush1.msra.mxu0 %v6465
    %6467 = vmatprep.subr.mxu0 0.0
    %v6468 = vand.u32 %v2156, 4294901760
    %6469 = vmatpush1.msra.mxu0 %v6468
    %6470 = vmatprep.subr.mxu0 0.0
    %6471 = vmatpush1.msra.mxu0 0.0
    %6472 = vmatprep.subr.mxu0 0.0
    %6473 = vmatpush1.msra.mxu0 0.0
    %6474 = vmatprep.subr.mxu0 0.0
    %6475 = vmatpush1.msra.mxu0 0.0
    %6476 = vmatprep.subr.mxu0 0.0
    %6477 = vmatpush1.msra.mxu0 0.0
    %6478 = vmatprep.subr.mxu0 0.0
    %6479 = vmatpush1.msra.mxu0 0.0
    %6480 = vmatprep.subr.mxu0 0.0
    %6481 = vmatpush1.msra.mxu0 0.0
    %6482 = vmatprep.subr.mxu0 0.0
    %6483 = vmatpush1.msra.mxu0 0.0
    %6484 = vmatprep.subr.mxu0 0.0
    %6485 = vmatpush1.msra.mxu0 0.0
    %6486 = vmatprep.subr.mxu0 0.0
    %6487 = vmatpush1.msra.mxu0 0.0
    %6488 = vmatprep.subr.mxu0 0.0
    %6489 = vmatpush1.msra.mxu0 0.0
    %6490 = vmatprep.subr.mxu0 0.0
    %6491 = vmatpush1.msra.mxu0 0.0
    %6492 = vmatprep.subr.mxu0 0.0
    %6493 = vmatpush1.msra.mxu0 0.0
    %6494 = vmatprep.subr.mxu0 0.0
    %6495 = vmatpush1.msra.mxu0 0.0
    %6496 = vmatprep.subr.mxu0 0.0
    %6497 = vmatpush1.msra.mxu0 0.0
    %6498 = vmatprep.subr.mxu0 0.0
    %6499 = vmatpush1.msra.mxu0 0.0
    %6500 = vmatprep.subr.mxu0 0.0
    %6501 = vmatpush1.msra.mxu0 0.0
    %6502 = vmatprep.subr.mxu0 0.0
    %6503 = vmatpush1.msra.mxu0 0.0
    %6504 = vmatprep.subr.mxu0 0.0
    %6505 = vmatpush1.msra.mxu0 0.0
    %6506 = vmatprep.subr.mxu0 0.0
    %6507 = vmatpush1.msra.mxu0 0.0
    %6508 = vmatprep.subr.mxu0 0.0
    %6509 = vmatpush1.msra.mxu0 0.0
    %6510 = vmatprep.subr.mxu0 0.0
    %6511 = vmatpush1.msra.mxu0 0.0
    %6512 = vmatprep.subr.mxu0 0.0
    %6513 = vmatpush1.msra.mxu0 0.0
    %6514 = vmatprep.subr.mxu0 0.0
    %6515 = vmatpush1.msra.mxu0 0.0
    %6516 = vmatprep.subr.mxu0 0.0
    %6517 = vmatpush1.msra.mxu0 0.0
    %6518 = vmatprep.subr.mxu0 0.0
    %6519 = vmatpush1.msra.mxu0 0.0
    %6520 = vmatprep.subr.mxu0 0.0
    %6521 = vmatpush1.msra.mxu0 0.0
    %6522 = vmatprep.subr.mxu0 0.0
    %6523 = vmatpush1.msra.mxu0 0.0
    %6524 = vmatprep.subr.mxu0 0.0
    %6525 = vmatpush1.msra.mxu0 0.0
    %6526 = vmatprep.subr.mxu0 0.0
    %6527 = vmatpush1.msra.mxu0 0.0
    %6528 = vmatprep.subr.mxu0 0.0
    %6529 = vmatpush1.msra.mxu0 0.0
    %6530 = vmatprep.mubr.f32.mxu0 0.0
    %v6531 = vand.u32 %v4192, 4294901760
    %6532 = vmatmul.mubr.f32.gmra.mrb[0].mxu0 %v6531
    %v6533 = vpop.f32.mrb[0].mxu0
    %v6534 = vadd.f32 %v6443, %v6533
    %v6535 = vpop.f32.mrb[0].mxu0
    %6536 = vmatprep.mubr.f32.mxu0 0.0
    %v6537 = vand.u32 %v4195, 4294901760
    %6538 = vmatmul.mubr.f32.gmra.mrb[0].mxu0 %v6537
    %v6539 = vpop.f32.mrb[0].mxu0
    %v6540 = vadd.f32 %v6449, %v6539
    %v6541 = vpop.f32.mrb[0].mxu0
    %6542 = vmatprep.mubr.f32.mxu0 0.0
    %v6543 = vand.u32 %v4198, 4294901760
    %6544 = vmatmul.mubr.f32.gmra.mrb[0].mxu0 %v6543
    %v6545 = vpop.f32.mrb[0].mxu0
    %v6546 = vadd.f32 %v6455, %v6545
    %v6547 = vpop.f32.mrb[0].mxu0
    %6548 = vmatprep.mubr.f32.mxu0 0.0
    %v6549 = vand.u32 %v4201, 4294901760
    %6550 = vmatmul.mubr.f32.gmra.mrb[0].mxu0 %v6549
    %v6551 = vpop.f32.mrb[0].mxu0
    %v6552 = vadd.f32 %v6461, %v6551
    %v6553 = vpop.f32.mrb[0].mxu0
    %6554 = vdwg.mxu0
    %6555 = vmatprep.subr.mxu0 0.0
    %v6556 = vand.u32 %v2658, 4294901760
    %6557 = vmatpush1.msra.mxu0 %v6556
    %6558 = vmatprep.subr.mxu0 0.0
    %v6559 = vand.u32 %v2664, 4294901760
    %6560 = vmatpush1.msra.mxu0 %v6559
    %6561 = vmatprep.subr.mxu0 0.0
    %6562 = vmatpush1.msra.mxu0 0.0
    %6563 = vmatprep.subr.mxu0 0.0
    %6564 = vmatpush1.msra.mxu0 0.0
    %6565 = vmatprep.subr.mxu0 0.0
    %6566 = vmatpush1.msra.mxu0 0.0
    %6567 = vmatprep.subr.mxu0 0.0
    %6568 = vmatpush1.msra.mxu0 0.0
    %6569 = vmatprep.subr.mxu0 0.0
    %6570 = vmatpush1.msra.mxu0 0.0
    %6571 = vmatprep.subr.mxu0 0.0
    %6572 = vmatpush1.msra.mxu0 0.0
    %6573 = vmatprep.subr.mxu0 0.0
    %6574 = vmatpush1.msra.mxu0 0.0
    %6575 = vmatprep.subr.mxu0 0.0
    %6576 = vmatpush1.msra.mxu0 0.0
    %6577 = vmatprep.subr.mxu0 0.0
    %6578 = vmatpush1.msra.mxu0 0.0
    %6579 = vmatprep.subr.mxu0 0.0
    %6580 = vmatpush1.msra.mxu0 0.0
    %6581 = vmatprep.subr.mxu0 0.0
    %6582 = vmatpush1.msra.mxu0 0.0
    %6583 = vmatprep.subr.mxu0 0.0
    %6584 = vmatpush1.msra.mxu0 0.0
    %6585 = vmatprep.subr.mxu0 0.0
    %6586 = vmatpush1.msra.mxu0 0.0
    %6587 = vmatprep.subr.mxu0 0.0
    %6588 = vmatpush1.msra.mxu0 0.0
    %6589 = vmatprep.subr.mxu0 0.0
    %6590 = vmatpush1.msra.mxu0 0.0
    %6591 = vmatprep.subr.mxu0 0.0
    %6592 = vmatpush1.msra.mxu0 0.0
    %6593 = vmatprep.subr.mxu0 0.0
    %6594 = vmatpush1.msra.mxu0 0.0
    %6595 = vmatprep.subr.mxu0 0.0
    %6596 = vmatpush1.msra.mxu0 0.0
    %6597 = vmatprep.subr.mxu0 0.0
    %6598 = vmatpush1.msra.mxu0 0.0
    %6599 = vmatprep.subr.mxu0 0.0
    %6600 = vmatpush1.msra.mxu0 0.0
    %6601 = vmatprep.subr.mxu0 0.0
    %6602 = vmatpush1.msra.mxu0 0.0
    %6603 = vmatprep.subr.mxu0 0.0
    %6604 = vmatpush1.msra.mxu0 0.0
    %6605 = vmatprep.subr.mxu0 0.0
    %6606 = vmatpush1.msra.mxu0 0.0
    %6607 = vmatprep.subr.mxu0 0.0
    %6608 = vmatpush1.msra.mxu0 0.0
    %6609 = vmatprep.subr.mxu0 0.0
    %6610 = vmatpush1.msra.mxu0 0.0
    %6611 = vmatprep.subr.mxu0 0.0
    %6612 = vmatpush1.msra.mxu0 0.0
    %6613 = vmatprep.subr.mxu0 0.0
    %6614 = vmatpush1.msra.mxu0 0.0
    %6615 = vmatprep.subr.mxu0 0.0
    %6616 = vmatpush1.msra.mxu0 0.0
    %6617 = vmatprep.subr.mxu0 0.0
    %6618 = vmatpush1.msra.mxu0 0.0
    %6619 = vmatprep.subr.mxu0 0.0
    %6620 = vmatpush1.msra.mxu0 0.0
    %6621 = vmatprep.mubr.f32.mxu0 0.0
    %v6622 = vand.u32 %v4192, 4294901760
    %v6623 = vsub.f32 %v4192, %v6622
    %v6624 = vand.u32 %v6623, 4294901760
    %v6625 = vsub.f32 %v6623, %v6624
    %v6626 = vand.u32 %v6625, 4294901760
    %6627 = vmatmul.mubr.f32.gmra.mrb[0].mxu0 %v6626
    %v6628 = vpop.f32.mrb[0].mxu0
    %v6629 = vadd.f32 0.0, %v6628
    %v6630 = vpop.f32.mrb[0].mxu0
    %6631 = vmatprep.mubr.f32.mxu0 0.0
    %v6632 = vand.u32 %v4195, 4294901760
    %v6633 = vsub.f32 %v4195, %v6632
    %v6634 = vand.u32 %v6633, 4294901760
    %v6635 = vsub.f32 %v6633, %v6634
    %v6636 = vand.u32 %v6635, 4294901760
    %6637 = vmatmul.mubr.f32.gmra.mrb[0].mxu0 %v6636
    %v6638 = vpop.f32.mrb[0].mxu0
    %v6639 = vadd.f32 0.0, %v6638
    %v6640 = vpop.f32.mrb[0].mxu0
    %6641 = vmatprep.mubr.f32.mxu0 0.0
    %v6642 = vand.u32 %v4198, 4294901760
    %v6643 = vsub.f32 %v4198, %v6642
    %v6644 = vand.u32 %v6643, 4294901760
    %v6645 = vsub.f32 %v6643, %v6644
    %v6646 = vand.u32 %v6645, 4294901760
    %6647 = vmatmul.mubr.f32.gmra.mrb[0].mxu0 %v6646
    %v6648 = vpop.f32.mrb[0].mxu0
    %v6649 = vadd.f32 0.0, %v6648
    %v6650 = vpop.f32.mrb[0].mxu0
    %6651 = vmatprep.mubr.f32.mxu0 0.0
    %v6652 = vand.u32 %v4201, 4294901760
    %v6653 = vsub.f32 %v4201, %v6652
    %v6654 = vand.u32 %v6653, 4294901760
    %v6655 = vsub.f32 %v6653, %v6654
    %v6656 = vand.u32 %v6655, 4294901760
    %6657 = vmatmul.mubr.f32.gmra.mrb[0].mxu0 %v6656
    %v6658 = vpop.f32.mrb[0].mxu0
    %v6659 = vadd.f32 0.0, %v6658
    %v6660 = vpop.f32.mrb[0].mxu0
    %6661 = vdwg.mxu0
    %6662 = vmatprep.subr.mxu0 0.0
    %v6663 = vand.u32 %v2658, 4294901760
    %v6664 = vsub.f32 %v2658, %v6663
    %v6665 = vand.u32 %v6664, 4294901760
    %v6666 = vsub.f32 %v6664, %v6665
    %v6667 = vand.u32 %v6666, 4294901760
    %6668 = vmatpush1.msra.mxu0 %v6667
    %6669 = vmatprep.subr.mxu0 0.0
    %v6670 = vand.u32 %v2664, 4294901760
    %v6671 = vsub.f32 %v2664, %v6670
    %v6672 = vand.u32 %v6671, 4294901760
    %v6673 = vsub.f32 %v6671, %v6672
    %v6674 = vand.u32 %v6673, 4294901760
    %6675 = vmatpush1.msra.mxu0 %v6674
    %6676 = vmatprep.subr.mxu0 0.0
    %6677 = vmatpush1.msra.mxu0 0.0
    %6678 = vmatprep.subr.mxu0 0.0
    %6679 = vmatpush1.msra.mxu0 0.0
    %6680 = vmatprep.subr.mxu0 0.0
    %6681 = vmatpush1.msra.mxu0 0.0
    %6682 = vmatprep.subr.mxu0 0.0
    %6683 = vmatpush1.msra.mxu0 0.0
    %6684 = vmatprep.subr.mxu0 0.0
    %6685 = vmatpush1.msra.mxu0 0.0
    %6686 = vmatprep.subr.mxu0 0.0
    %6687 = vmatpush1.msra.mxu0 0.0
    %6688 = vmatprep.subr.mxu0 0.0
    %6689 = vmatpush1.msra.mxu0 0.0
    %6690 = vmatprep.subr.mxu0 0.0
    %6691 = vmatpush1.msra.mxu0 0.0
    %6692 = vmatprep.subr.mxu0 0.0
    %6693 = vmatpush1.msra.mxu0 0.0
    %6694 = vmatprep.subr.mxu0 0.0
    %6695 = vmatpush1.msra.mxu0 0.0
    %6696 = vmatprep.subr.mxu0 0.0
    %6697 = vmatpush1.msra.mxu0 0.0
    %6698 = vmatprep.subr.mxu0 0.0
    %6699 = vmatpush1.msra.mxu0 0.0
    %6700 = vmatprep.subr.mxu0 0.0
    %6701 = vmatpush1.msra.mxu0 0.0
    %6702 = vmatprep.subr.mxu0 0.0
    %6703 = vmatpush1.msra.mxu0 0.0
    %6704 = vmatprep.subr.mxu0 0.0
    %6705 = vmatpush1.msra.mxu0 0.0
    %6706 = vmatprep.subr.mxu0 0.0
    %6707 = vmatpush1.msra.mxu0 0.0
    %6708 = vmatprep.subr.mxu0 0.0
    %6709 = vmatpush1.msra.mxu0 0.0
    %6710 = vmatprep.subr.mxu0 0.0
    %6711 = vmatpush1.msra.mxu0 0.0
    %6712 = vmatprep.subr.mxu0 0.0
    %6713 = vmatpush1.msra.mxu0 0.0
    %6714 = vmatprep.subr.mxu0 0.0
    %6715 = vmatpush1.msra.mxu0 0.0
    %6716 = vmatprep.subr.mxu0 0.0
    %6717 = vmatpush1.msra.mxu0 0.0
    %6718 = vmatprep.subr.mxu0 0.0
    %6719 = vmatpush1.msra.mxu0 0.0
    %6720 = vmatprep.subr.mxu0 0.0
    %6721 = vmatpush1.msra.mxu0 0.0
    %6722 = vmatprep.subr.mxu0 0.0
    %6723 = vmatpush1.msra.mxu0 0.0
    %6724 = vmatprep.subr.mxu0 0.0
    %6725 = vmatpush1.msra.mxu0 0.0
    %6726 = vmatprep.subr.mxu0 0.0
    %6727 = vmatpush1.msra.mxu0 0.0
    %6728 = vmatprep.subr.mxu0 0.0
    %6729 = vmatpush1.msra.mxu0 0.0
    %6730 = vmatprep.subr.mxu0 0.0
    %6731 = vmatpush1.msra.mxu0 0.0
    %6732 = vmatprep.subr.mxu0 0.0
    %6733 = vmatpush1.msra.mxu0 0.0
    %6734 = vmatprep.subr.mxu0 0.0
    %6735 = vmatpush1.msra.mxu0 0.0
    %6736 = vmatprep.mubr.f32.mxu0 0.0
    %v6737 = vand.u32 %v4192, 4294901760
    %6738 = vmatmul.mubr.f32.gmra.mrb[0].mxu0 %v6737
    %v6739 = vpop.f32.mrb[0].mxu0
    %v6740 = vadd.f32 %v6629, %v6739
    %v6741 = vpop.f32.mrb[0].mxu0
    %6742 = vmatprep.mubr.f32.mxu0 0.0
    %v6743 = vand.u32 %v4195, 4294901760
    %6744 = vmatmul.mubr.f32.gmra.mrb[0].mxu0 %v6743
    %v6745 = vpop.f32.mrb[0].mxu0
    %v6746 = vadd.f32 %v6639, %v6745
    %v6747 = vpop.f32.mrb[0].mxu0
    %6748 = vmatprep.mubr.f32.mxu0 0.0
    %v6749 = vand.u32 %v4198, 4294901760
    %6750 = vmatmul.mubr.f32.gmra.mrb[0].mxu0 %v6749
    %v6751 = vpop.f32.mrb[0].mxu0
    %v6752 = vadd.f32 %v6649, %v6751
    %v6753 = vpop.f32.mrb[0].mxu0
    %6754 = vmatprep.mubr.f32.mxu0 0.0
    %v6755 = vand.u32 %v4201, 4294901760
    %6756 = vmatmul.mubr.f32.gmra.mrb[0].mxu0 %v6755
    %v6757 = vpop.f32.mrb[0].mxu0
    %v6758 = vadd.f32 %v6659, %v6757
    %v6759 = vpop.f32.mrb[0].mxu0
    %6760 = vdwg.mxu0
    %6761 = vmatprep.subr.mxu0 0.0
    %v6762 = vand.u32 %v2658, 4294901760
    %v6763 = vsub.f32 %v2658, %v6762
    %6764 = vmatpush1.msra.mxu0 %v6763
    %6765 = vmatprep.subr.mxu0 0.0
    %v6766 = vand.u32 %v2664, 4294901760
    %v6767 = vsub.f32 %v2664, %v6766
    %6768 = vmatpush1.msra.mxu0 %v6767
    %6769 = vmatprep.subr.mxu0 0.0
    %6770 = vmatpush1.msra.mxu0 0.0
    %6771 = vmatprep.subr.mxu0 0.0
    %6772 = vmatpush1.msra.mxu0 0.0
    %6773 = vmatprep.subr.mxu0 0.0
    %6774 = vmatpush1.msra.mxu0 0.0
    %6775 = vmatprep.subr.mxu0 0.0
    %6776 = vmatpush1.msra.mxu0 0.0
    %6777 = vmatprep.subr.mxu0 0.0
    %6778 = vmatpush1.msra.mxu0 0.0
    %6779 = vmatprep.subr.mxu0 0.0
    %6780 = vmatpush1.msra.mxu0 0.0
    %6781 = vmatprep.subr.mxu0 0.0
    %6782 = vmatpush1.msra.mxu0 0.0
    %6783 = vmatprep.subr.mxu0 0.0
    %6784 = vmatpush1.msra.mxu0 0.0
    %6785 = vmatprep.subr.mxu0 0.0
    %6786 = vmatpush1.msra.mxu0 0.0
    %6787 = vmatprep.subr.mxu0 0.0
    %6788 = vmatpush1.msra.mxu0 0.0
    %6789 = vmatprep.subr.mxu0 0.0
    %6790 = vmatpush1.msra.mxu0 0.0
    %6791 = vmatprep.subr.mxu0 0.0
    %6792 = vmatpush1.msra.mxu0 0.0
    %6793 = vmatprep.subr.mxu0 0.0
    %6794 = vmatpush1.msra.mxu0 0.0
    %6795 = vmatprep.subr.mxu0 0.0
    %6796 = vmatpush1.msra.mxu0 0.0
    %6797 = vmatprep.subr.mxu0 0.0
    %6798 = vmatpush1.msra.mxu0 0.0
    %6799 = vmatprep.subr.mxu0 0.0
    %6800 = vmatpush1.msra.mxu0 0.0
    %6801 = vmatprep.subr.mxu0 0.0
    %6802 = vmatpush1.msra.mxu0 0.0
    %6803 = vmatprep.subr.mxu0 0.0
    %6804 = vmatpush1.msra.mxu0 0.0
    %6805 = vmatprep.subr.mxu0 0.0
    %6806 = vmatpush1.msra.mxu0 0.0
    %6807 = vmatprep.subr.mxu0 0.0
    %6808 = vmatpush1.msra.mxu0 0.0
    %6809 = vmatprep.subr.mxu0 0.0
    %6810 = vmatpush1.msra.mxu0 0.0
    %6811 = vmatprep.subr.mxu0 0.0
    %6812 = vmatpush1.msra.mxu0 0.0
    %6813 = vmatprep.subr.mxu0 0.0
    %6814 = vmatpush1.msra.mxu0 0.0
    %6815 = vmatprep.subr.mxu0 0.0
    %6816 = vmatpush1.msra.mxu0 0.0
    %6817 = vmatprep.subr.mxu0 0.0
    %6818 = vmatpush1.msra.mxu0 0.0
    %6819 = vmatprep.subr.mxu0 0.0
    %6820 = vmatpush1.msra.mxu0 0.0
    %6821 = vmatprep.subr.mxu0 0.0
    %6822 = vmatpush1.msra.mxu0 0.0
    %6823 = vmatprep.subr.mxu0 0.0
    %6824 = vmatpush1.msra.mxu0 0.0
    %6825 = vmatprep.subr.mxu0 0.0
    %6826 = vmatpush1.msra.mxu0 0.0
    %6827 = vmatprep.subr.mxu0 0.0
    %6828 = vmatpush1.msra.mxu0 0.0
    %6829 = vmatprep.mubr.f32.mxu0 0.0
    %v6830 = vand.u32 %v4192, 4294901760
    %v6831 = vsub.f32 %v4192, %v6830
    %6832 = vmatmul.mubr.f32.gmra.mrb[0].mxu0 %v6831
    %v6833 = vpop.f32.mrb[0].mxu0
    %v6834 = vadd.f32 %v6740, %v6833
    %v6835 = vpop.f32.mrb[0].mxu0
    %6836 = vmatprep.mubr.f32.mxu0 0.0
    %v6837 = vand.u32 %v4195, 4294901760
    %v6838 = vsub.f32 %v4195, %v6837
    %6839 = vmatmul.mubr.f32.gmra.mrb[0].mxu0 %v6838
    %v6840 = vpop.f32.mrb[0].mxu0
    %v6841 = vadd.f32 %v6746, %v6840
    %v6842 = vpop.f32.mrb[0].mxu0
    %6843 = vmatprep.mubr.f32.mxu0 0.0
    %v6844 = vand.u32 %v4198, 4294901760
    %v6845 = vsub.f32 %v4198, %v6844
    %6846 = vmatmul.mubr.f32.gmra.mrb[0].mxu0 %v6845
    %v6847 = vpop.f32.mrb[0].mxu0
    %v6848 = vadd.f32 %v6752, %v6847
    %v6849 = vpop.f32.mrb[0].mxu0
    %6850 = vmatprep.mubr.f32.mxu0 0.0
    %v6851 = vand.u32 %v4201, 4294901760
    %v6852 = vsub.f32 %v4201, %v6851
    %6853 = vmatmul.mubr.f32.gmra.mrb[0].mxu0 %v6852
    %v6854 = vpop.f32.mrb[0].mxu0
    %v6855 = vadd.f32 %v6758, %v6854
    %v6856 = vpop.f32.mrb[0].mxu0
    %6857 = vdwg.mxu0
    %6858 = vmatprep.subr.mxu0 0.0
    %v6859 = vand.u32 %v2658, 4294901760
    %6860 = vmatpush1.msra.mxu0 %v6859
    %6861 = vmatprep.subr.mxu0 0.0
    %v6862 = vand.u32 %v2664, 4294901760
    %6863 = vmatpush1.msra.mxu0 %v6862
    %6864 = vmatprep.subr.mxu0 0.0
    %6865 = vmatpush1.msra.mxu0 0.0
    %6866 = vmatprep.subr.mxu0 0.0
    %6867 = vmatpush1.msra.mxu0 0.0
    %6868 = vmatprep.subr.mxu0 0.0
    %6869 = vmatpush1.msra.mxu0 0.0
    %6870 = vmatprep.subr.mxu0 0.0
    %6871 = vmatpush1.msra.mxu0 0.0
    %6872 = vmatprep.subr.mxu0 0.0
    %6873 = vmatpush1.msra.mxu0 0.0
    %6874 = vmatprep.subr.mxu0 0.0
    %6875 = vmatpush1.msra.mxu0 0.0
    %6876 = vmatprep.subr.mxu0 0.0
    %6877 = vmatpush1.msra.mxu0 0.0
    %6878 = vmatprep.subr.mxu0 0.0
    %6879 = vmatpush1.msra.mxu0 0.0
    %6880 = vmatprep.subr.mxu0 0.0
    %6881 = vmatpush1.msra.mxu0 0.0
    %6882 = vmatprep.subr.mxu0 0.0
    %6883 = vmatpush1.msra.mxu0 0.0
    %6884 = vmatprep.subr.mxu0 0.0
    %6885 = vmatpush1.msra.mxu0 0.0
    %6886 = vmatprep.subr.mxu0 0.0
    %6887 = vmatpush1.msra.mxu0 0.0
    %6888 = vmatprep.subr.mxu0 0.0
    %6889 = vmatpush1.msra.mxu0 0.0
    %6890 = vmatprep.subr.mxu0 0.0
    %6891 = vmatpush1.msra.mxu0 0.0
    %6892 = vmatprep.subr.mxu0 0.0
    %6893 = vmatpush1.msra.mxu0 0.0
    %6894 = vmatprep.subr.mxu0 0.0
    %6895 = vmatpush1.msra.mxu0 0.0
    %6896 = vmatprep.subr.mxu0 0.0
    %6897 = vmatpush1.msra.mxu0 0.0
    %6898 = vmatprep.subr.mxu0 0.0
    %6899 = vmatpush1.msra.mxu0 0.0
    %6900 = vmatprep.subr.mxu0 0.0
    %6901 = vmatpush1.msra.mxu0 0.0
    %6902 = vmatprep.subr.mxu0 0.0
    %6903 = vmatpush1.msra.mxu0 0.0
    %6904 = vmatprep.subr.mxu0 0.0
    %6905 = vmatpush1.msra.mxu0 0.0
    %6906 = vmatprep.subr.mxu0 0.0
    %6907 = vmatpush1.msra.mxu0 0.0
    %6908 = vmatprep.subr.mxu0 0.0
    %6909 = vmatpush1.msra.mxu0 0.0
    %6910 = vmatprep.subr.mxu0 0.0
    %6911 = vmatpush1.msra.mxu0 0.0
    %6912 = vmatprep.subr.mxu0 0.0
    %6913 = vmatpush1.msra.mxu0 0.0
    %6914 = vmatprep.subr.mxu0 0.0
    %6915 = vmatpush1.msra.mxu0 0.0
    %6916 = vmatprep.subr.mxu0 0.0
    %6917 = vmatpush1.msra.mxu0 0.0
    %6918 = vmatprep.subr.mxu0 0.0
    %6919 = vmatpush1.msra.mxu0 0.0
    %6920 = vmatprep.subr.mxu0 0.0
    %6921 = vmatpush1.msra.mxu0 0.0
    %6922 = vmatprep.subr.mxu0 0.0
    %6923 = vmatpush1.msra.mxu0 0.0
    %6924 = vmatprep.mubr.f32.mxu0 0.0
    %v6925 = vand.u32 %v4192, 4294901760
    %v6926 = vsub.f32 %v4192, %v6925
    %v6927 = vand.u32 %v6926, 4294901760
    %6928 = vmatmul.mubr.f32.gmra.mrb[0].mxu0 %v6927
    %v6929 = vpop.f32.mrb[0].mxu0
    %v6930 = vadd.f32 %v6834, %v6929
    %v6931 = vpop.f32.mrb[0].mxu0
    %6932 = vmatprep.mubr.f32.mxu0 0.0
    %v6933 = vand.u32 %v4195, 4294901760
    %v6934 = vsub.f32 %v4195, %v6933
    %v6935 = vand.u32 %v6934, 4294901760
    %6936 = vmatmul.mubr.f32.gmra.mrb[0].mxu0 %v6935
    %v6937 = vpop.f32.mrb[0].mxu0
    %v6938 = vadd.f32 %v6841, %v6937
    %v6939 = vpop.f32.mrb[0].mxu0
    %6940 = vmatprep.mubr.f32.mxu0 0.0
    %v6941 = vand.u32 %v4198, 4294901760
    %v6942 = vsub.f32 %v4198, %v6941
    %v6943 = vand.u32 %v6942, 4294901760
    %6944 = vmatmul.mubr.f32.gmra.mrb[0].mxu0 %v6943
    %v6945 = vpop.f32.mrb[0].mxu0
    %v6946 = vadd.f32 %v6848, %v6945
    %v6947 = vpop.f32.mrb[0].mxu0
    %6948 = vmatprep.mubr.f32.mxu0 0.0
    %v6949 = vand.u32 %v4201, 4294901760
    %v6950 = vsub.f32 %v4201, %v6949
    %v6951 = vand.u32 %v6950, 4294901760
    %6952 = vmatmul.mubr.f32.gmra.mrb[0].mxu0 %v6951
    %v6953 = vpop.f32.mrb[0].mxu0
    %v6954 = vadd.f32 %v6855, %v6953
    %v6955 = vpop.f32.mrb[0].mxu0
    %6956 = vdwg.mxu0
    %6957 = vmatprep.subr.mxu0 0.0
    %v6958 = vand.u32 %v2658, 4294901760
    %v6959 = vsub.f32 %v2658, %v6958
    %v6960 = vand.u32 %v6959, 4294901760
    %6961 = vmatpush1.msra.mxu0 %v6960
    %6962 = vmatprep.subr.mxu0 0.0
    %v6963 = vand.u32 %v2664, 4294901760
    %v6964 = vsub.f32 %v2664, %v6963
    %v6965 = vand.u32 %v6964, 4294901760
    %6966 = vmatpush1.msra.mxu0 %v6965
    %6967 = vmatprep.subr.mxu0 0.0
    %6968 = vmatpush1.msra.mxu0 0.0
    %6969 = vmatprep.subr.mxu0 0.0
    %6970 = vmatpush1.msra.mxu0 0.0
    %6971 = vmatprep.subr.mxu0 0.0
    %6972 = vmatpush1.msra.mxu0 0.0
    %6973 = vmatprep.subr.mxu0 0.0
    %6974 = vmatpush1.msra.mxu0 0.0
    %6975 = vmatprep.subr.mxu0 0.0
    %6976 = vmatpush1.msra.mxu0 0.0
    %6977 = vmatprep.subr.mxu0 0.0
    %6978 = vmatpush1.msra.mxu0 0.0
    %6979 = vmatprep.subr.mxu0 0.0
    %6980 = vmatpush1.msra.mxu0 0.0
    %6981 = vmatprep.subr.mxu0 0.0
    %6982 = vmatpush1.msra.mxu0 0.0
    %6983 = vmatprep.subr.mxu0 0.0
    %6984 = vmatpush1.msra.mxu0 0.0
    %6985 = vmatprep.subr.mxu0 0.0
    %6986 = vmatpush1.msra.mxu0 0.0
    %6987 = vmatprep.subr.mxu0 0.0
    %6988 = vmatpush1.msra.mxu0 0.0
    %6989 = vmatprep.subr.mxu0 0.0
    %6990 = vmatpush1.msra.mxu0 0.0
    %6991 = vmatprep.subr.mxu0 0.0
    %6992 = vmatpush1.msra.mxu0 0.0
    %6993 = vmatprep.subr.mxu0 0.0
    %6994 = vmatpush1.msra.mxu0 0.0
    %6995 = vmatprep.subr.mxu0 0.0
    %6996 = vmatpush1.msra.mxu0 0.0
    %6997 = vmatprep.subr.mxu0 0.0
    %6998 = vmatpush1.msra.mxu0 0.0
    %6999 = vmatprep.subr.mxu0 0.0
    %7000 = vmatpush1.msra.mxu0 0.0
    %7001 = vmatprep.subr.mxu0 0.0
    %7002 = vmatpush1.msra.mxu0 0.0
    %7003 = vmatprep.subr.mxu0 0.0
    %7004 = vmatpush1.msra.mxu0 0.0
    %7005 = vmatprep.subr.mxu0 0.0
    %7006 = vmatpush1.msra.mxu0 0.0
    %7007 = vmatprep.subr.mxu0 0.0
    %7008 = vmatpush1.msra.mxu0 0.0
    %7009 = vmatprep.subr.mxu0 0.0
    %7010 = vmatpush1.msra.mxu0 0.0
    %7011 = vmatprep.subr.mxu0 0.0
    %7012 = vmatpush1.msra.mxu0 0.0
    %7013 = vmatprep.subr.mxu0 0.0
    %7014 = vmatpush1.msra.mxu0 0.0
    %7015 = vmatprep.subr.mxu0 0.0
    %7016 = vmatpush1.msra.mxu0 0.0
    %7017 = vmatprep.subr.mxu0 0.0
    %7018 = vmatpush1.msra.mxu0 0.0
    %7019 = vmatprep.subr.mxu0 0.0
    %7020 = vmatpush1.msra.mxu0 0.0
    %7021 = vmatprep.subr.mxu0 0.0
    %7022 = vmatpush1.msra.mxu0 0.0
    %7023 = vmatprep.subr.mxu0 0.0
    %7024 = vmatpush1.msra.mxu0 0.0
    %7025 = vmatprep.subr.mxu0 0.0
    %7026 = vmatpush1.msra.mxu0 0.0
    %7027 = vmatprep.mubr.f32.mxu0 0.0
    %v7028 = vand.u32 %v4192, 4294901760
    %7029 = vmatmul.mubr.f32.gmra.mrb[0].mxu0 %v7028
    %v7030 = vpop.f32.mrb[0].mxu0
    %v7031 = vadd.f32 %v6930, %v7030
    %v7032 = vpop.f32.mrb[0].mxu0
    %7033 = vmatprep.mubr.f32.mxu0 0.0
    %v7034 = vand.u32 %v4195, 4294901760
    %7035 = vmatmul.mubr.f32.gmra.mrb[0].mxu0 %v7034
    %v7036 = vpop.f32.mrb[0].mxu0
    %v7037 = vadd.f32 %v6938, %v7036
    %v7038 = vpop.f32.mrb[0].mxu0
    %7039 = vmatprep.mubr.f32.mxu0 0.0
    %v7040 = vand.u32 %v4198, 4294901760
    %7041 = vmatmul.mubr.f32.gmra.mrb[0].mxu0 %v7040
    %v7042 = vpop.f32.mrb[0].mxu0
    %v7043 = vadd.f32 %v6946, %v7042
    %v7044 = vpop.f32.mrb[0].mxu0
    %7045 = vmatprep.mubr.f32.mxu0 0.0
    %v7046 = vand.u32 %v4201, 4294901760
    %7047 = vmatmul.mubr.f32.gmra.mrb[0].mxu0 %v7046
    %v7048 = vpop.f32.mrb[0].mxu0
    %v7049 = vadd.f32 %v6954, %v7048
    %v7050 = vpop.f32.mrb[0].mxu0
    %7051 = vdwg.mxu0
    %7052 = vmatprep.subr.mxu0 0.0
    %v7053 = vand.u32 %v2658, 4294901760
    %7054 = vmatpush1.msra.mxu0 %v7053
    %7055 = vmatprep.subr.mxu0 0.0
    %v7056 = vand.u32 %v2664, 4294901760
    %7057 = vmatpush1.msra.mxu0 %v7056
    %7058 = vmatprep.subr.mxu0 0.0
    %7059 = vmatpush1.msra.mxu0 0.0
    %7060 = vmatprep.subr.mxu0 0.0
    %7061 = vmatpush1.msra.mxu0 0.0
    %7062 = vmatprep.subr.mxu0 0.0
    %7063 = vmatpush1.msra.mxu0 0.0
    %7064 = vmatprep.subr.mxu0 0.0
    %7065 = vmatpush1.msra.mxu0 0.0
    %7066 = vmatprep.subr.mxu0 0.0
    %7067 = vmatpush1.msra.mxu0 0.0
    %7068 = vmatprep.subr.mxu0 0.0
    %7069 = vmatpush1.msra.mxu0 0.0
    %7070 = vmatprep.subr.mxu0 0.0
    %7071 = vmatpush1.msra.mxu0 0.0
    %7072 = vmatprep.subr.mxu0 0.0
    %7073 = vmatpush1.msra.mxu0 0.0
    %7074 = vmatprep.subr.mxu0 0.0
    %7075 = vmatpush1.msra.mxu0 0.0
    %7076 = vmatprep.subr.mxu0 0.0
    %7077 = vmatpush1.msra.mxu0 0.0
    %7078 = vmatprep.subr.mxu0 0.0
    %7079 = vmatpush1.msra.mxu0 0.0
    %7080 = vmatprep.subr.mxu0 0.0
    %7081 = vmatpush1.msra.mxu0 0.0
    %7082 = vmatprep.subr.mxu0 0.0
    %7083 = vmatpush1.msra.mxu0 0.0
    %7084 = vmatprep.subr.mxu0 0.0
    %7085 = vmatpush1.msra.mxu0 0.0
    %7086 = vmatprep.subr.mxu0 0.0
    %7087 = vmatpush1.msra.mxu0 0.0
    %7088 = vmatprep.subr.mxu0 0.0
    %7089 = vmatpush1.msra.mxu0 0.0
    %7090 = vmatprep.subr.mxu0 0.0
    %7091 = vmatpush1.msra.mxu0 0.0
    %7092 = vmatprep.subr.mxu0 0.0
    %7093 = vmatpush1.msra.mxu0 0.0
    %7094 = vmatprep.subr.mxu0 0.0
    %7095 = vmatpush1.msra.mxu0 0.0
    %7096 = vmatprep.subr.mxu0 0.0
    %7097 = vmatpush1.msra.mxu0 0.0
    %7098 = vmatprep.subr.mxu0 0.0
    %7099 = vmatpush1.msra.mxu0 0.0
    %7100 = vmatprep.subr.mxu0 0.0
    %7101 = vmatpush1.msra.mxu0 0.0
    %7102 = vmatprep.subr.mxu0 0.0
    %7103 = vmatpush1.msra.mxu0 0.0
    %7104 = vmatprep.subr.mxu0 0.0
    %7105 = vmatpush1.msra.mxu0 0.0
    %7106 = vmatprep.subr.mxu0 0.0
    %7107 = vmatpush1.msra.mxu0 0.0
    %7108 = vmatprep.subr.mxu0 0.0
    %7109 = vmatpush1.msra.mxu0 0.0
    %7110 = vmatprep.subr.mxu0 0.0
    %7111 = vmatpush1.msra.mxu0 0.0
    %7112 = vmatprep.subr.mxu0 0.0
    %7113 = vmatpush1.msra.mxu0 0.0
    %7114 = vmatprep.subr.mxu0 0.0
    %7115 = vmatpush1.msra.mxu0 0.0
    %7116 = vmatprep.subr.mxu0 0.0
    %7117 = vmatpush1.msra.mxu0 0.0
    %7118 = vmatprep.mubr.f32.mxu0 0.0
    %v7119 = vand.u32 %v4192, 4294901760
    %7120 = vmatmul.mubr.f32.gmra.mrb[0].mxu0 %v7119
    %v7121 = vpop.f32.mrb[0].mxu0
    %v7122 = vadd.f32 %v7031, %v7121
    %v7123 = vpop.f32.mrb[0].mxu0
    %7124 = vmatprep.mubr.f32.mxu0 0.0
    %v7125 = vand.u32 %v4195, 4294901760
    %7126 = vmatmul.mubr.f32.gmra.mrb[0].mxu0 %v7125
    %v7127 = vpop.f32.mrb[0].mxu0
    %v7128 = vadd.f32 %v7037, %v7127
    %v7129 = vpop.f32.mrb[0].mxu0
    %7130 = vmatprep.mubr.f32.mxu0 0.0
    %v7131 = vand.u32 %v4198, 4294901760
    %7132 = vmatmul.mubr.f32.gmra.mrb[0].mxu0 %v7131
    %v7133 = vpop.f32.mrb[0].mxu0
    %v7134 = vadd.f32 %v7043, %v7133
    %v7135 = vpop.f32.mrb[0].mxu0
    %7136 = vmatprep.mubr.f32.mxu0 0.0
    %v7137 = vand.u32 %v4201, 4294901760
    %7138 = vmatmul.mubr.f32.gmra.mrb[0].mxu0 %v7137
    %v7139 = vpop.f32.mrb[0].mxu0
    %v7140 = vadd.f32 %v7049, %v7139
    %v7141 = vpop.f32.mrb[0].mxu0
    %7142 = vdwg.mxu0
    %7143 = vmatprep.subr.mxu0 0.0
    %v7144 = vand.u32 %v3166, 4294901760
    %7145 = vmatpush1.msra.mxu0 %v7144
    %7146 = vmatprep.subr.mxu0 0.0
    %v7147 = vand.u32 %v3172, 4294901760
    %7148 = vmatpush1.msra.mxu0 %v7147
    %7149 = vmatprep.subr.mxu0 0.0
    %7150 = vmatpush1.msra.mxu0 0.0
    %7151 = vmatprep.subr.mxu0 0.0
    %7152 = vmatpush1.msra.mxu0 0.0
    %7153 = vmatprep.subr.mxu0 0.0
    %7154 = vmatpush1.msra.mxu0 0.0
    %7155 = vmatprep.subr.mxu0 0.0
    %7156 = vmatpush1.msra.mxu0 0.0
    %7157 = vmatprep.subr.mxu0 0.0
    %7158 = vmatpush1.msra.mxu0 0.0
    %7159 = vmatprep.subr.mxu0 0.0
    %7160 = vmatpush1.msra.mxu0 0.0
    %7161 = vmatprep.subr.mxu0 0.0
    %7162 = vmatpush1.msra.mxu0 0.0
    %7163 = vmatprep.subr.mxu0 0.0
    %7164 = vmatpush1.msra.mxu0 0.0
    %7165 = vmatprep.subr.mxu0 0.0
    %7166 = vmatpush1.msra.mxu0 0.0
    %7167 = vmatprep.subr.mxu0 0.0
    %7168 = vmatpush1.msra.mxu0 0.0
    %7169 = vmatprep.subr.mxu0 0.0
    %7170 = vmatpush1.msra.mxu0 0.0
    %7171 = vmatprep.subr.mxu0 0.0
    %7172 = vmatpush1.msra.mxu0 0.0
    %7173 = vmatprep.subr.mxu0 0.0
    %7174 = vmatpush1.msra.mxu0 0.0
    %7175 = vmatprep.subr.mxu0 0.0
    %7176 = vmatpush1.msra.mxu0 0.0
    %7177 = vmatprep.subr.mxu0 0.0
    %7178 = vmatpush1.msra.mxu0 0.0
    %7179 = vmatprep.subr.mxu0 0.0
    %7180 = vmatpush1.msra.mxu0 0.0
    %7181 = vmatprep.subr.mxu0 0.0
    %7182 = vmatpush1.msra.mxu0 0.0
    %7183 = vmatprep.subr.mxu0 0.0
    %7184 = vmatpush1.msra.mxu0 0.0
    %7185 = vmatprep.subr.mxu0 0.0
    %7186 = vmatpush1.msra.mxu0 0.0
    %7187 = vmatprep.subr.mxu0 0.0
    %7188 = vmatpush1.msra.mxu0 0.0
    %7189 = vmatprep.subr.mxu0 0.0
    %7190 = vmatpush1.msra.mxu0 0.0
    %7191 = vmatprep.subr.mxu0 0.0
    %7192 = vmatpush1.msra.mxu0 0.0
    %7193 = vmatprep.subr.mxu0 0.0
    %7194 = vmatpush1.msra.mxu0 0.0
    %7195 = vmatprep.subr.mxu0 0.0
    %7196 = vmatpush1.msra.mxu0 0.0
    %7197 = vmatprep.subr.mxu0 0.0
    %7198 = vmatpush1.msra.mxu0 0.0
    %7199 = vmatprep.subr.mxu0 0.0
    %7200 = vmatpush1.msra.mxu0 0.0
    %7201 = vmatprep.subr.mxu0 0.0
    %7202 = vmatpush1.msra.mxu0 0.0
    %7203 = vmatprep.subr.mxu0 0.0
    %7204 = vmatpush1.msra.mxu0 0.0
    %7205 = vmatprep.subr.mxu0 0.0
    %7206 = vmatpush1.msra.mxu0 0.0
    %7207 = vmatprep.subr.mxu0 0.0
    %7208 = vmatpush1.msra.mxu0 0.0
    %7209 = vmatprep.mubr.f32.mxu0 0.0
    %v7210 = vand.u32 %v4192, 4294901760
    %v7211 = vsub.f32 %v4192, %v7210
    %v7212 = vand.u32 %v7211, 4294901760
    %v7213 = vsub.f32 %v7211, %v7212
    %v7214 = vand.u32 %v7213, 4294901760
    %7215 = vmatmul.mubr.f32.gmra.mrb[0].mxu0 %v7214
    %v7216 = vpop.f32.mrb[0].mxu0
    %v7217 = vadd.f32 0.0, %v7216
    %v7218 = vpop.f32.mrb[0].mxu0
    %7219 = vmatprep.mubr.f32.mxu0 0.0
    %v7220 = vand.u32 %v4195, 4294901760
    %v7221 = vsub.f32 %v4195, %v7220
    %v7222 = vand.u32 %v7221, 4294901760
    %v7223 = vsub.f32 %v7221, %v7222
    %v7224 = vand.u32 %v7223, 4294901760
    %7225 = vmatmul.mubr.f32.gmra.mrb[0].mxu0 %v7224
    %v7226 = vpop.f32.mrb[0].mxu0
    %v7227 = vadd.f32 0.0, %v7226
    %v7228 = vpop.f32.mrb[0].mxu0
    %7229 = vmatprep.mubr.f32.mxu0 0.0
    %v7230 = vand.u32 %v4198, 4294901760
    %v7231 = vsub.f32 %v4198, %v7230
    %v7232 = vand.u32 %v7231, 4294901760
    %v7233 = vsub.f32 %v7231, %v7232
    %v7234 = vand.u32 %v7233, 4294901760
    %7235 = vmatmul.mubr.f32.gmra.mrb[0].mxu0 %v7234
    %v7236 = vpop.f32.mrb[0].mxu0
    %v7237 = vadd.f32 0.0, %v7236
    %v7238 = vpop.f32.mrb[0].mxu0
    %7239 = vmatprep.mubr.f32.mxu0 0.0
    %v7240 = vand.u32 %v4201, 4294901760
    %v7241 = vsub.f32 %v4201, %v7240
    %v7242 = vand.u32 %v7241, 4294901760
    %v7243 = vsub.f32 %v7241, %v7242
    %v7244 = vand.u32 %v7243, 4294901760
    %7245 = vmatmul.mubr.f32.gmra.mrb[0].mxu0 %v7244
    %v7246 = vpop.f32.mrb[0].mxu0
    %v7247 = vadd.f32 0.0, %v7246
    %v7248 = vpop.f32.mrb[0].mxu0
    %7249 = vdwg.mxu0
    %7250 = vmatprep.subr.mxu0 0.0
    %v7251 = vand.u32 %v3166, 4294901760
    %v7252 = vsub.f32 %v3166, %v7251
    %v7253 = vand.u32 %v7252, 4294901760
    %v7254 = vsub.f32 %v7252, %v7253
    %v7255 = vand.u32 %v7254, 4294901760
    %7256 = vmatpush1.msra.mxu0 %v7255
    %7257 = vmatprep.subr.mxu0 0.0
    %v7258 = vand.u32 %v3172, 4294901760
    %v7259 = vsub.f32 %v3172, %v7258
    %v7260 = vand.u32 %v7259, 4294901760
    %v7261 = vsub.f32 %v7259, %v7260
    %v7262 = vand.u32 %v7261, 4294901760
    %7263 = vmatpush1.msra.mxu0 %v7262
    %7264 = vmatprep.subr.mxu0 0.0
    %7265 = vmatpush1.msra.mxu0 0.0
    %7266 = vmatprep.subr.mxu0 0.0
    %7267 = vmatpush1.msra.mxu0 0.0
    %7268 = vmatprep.subr.mxu0 0.0
    %7269 = vmatpush1.msra.mxu0 0.0
    %7270 = vmatprep.subr.mxu0 0.0
    %7271 = vmatpush1.msra.mxu0 0.0
    %7272 = vmatprep.subr.mxu0 0.0
    %7273 = vmatpush1.msra.mxu0 0.0
    %7274 = vmatprep.subr.mxu0 0.0
    %7275 = vmatpush1.msra.mxu0 0.0
    %7276 = vmatprep.subr.mxu0 0.0
    %7277 = vmatpush1.msra.mxu0 0.0
    %7278 = vmatprep.subr.mxu0 0.0
    %7279 = vmatpush1.msra.mxu0 0.0
    %7280 = vmatprep.subr.mxu0 0.0
    %7281 = vmatpush1.msra.mxu0 0.0
    %7282 = vmatprep.subr.mxu0 0.0
    %7283 = vmatpush1.msra.mxu0 0.0
    %7284 = vmatprep.subr.mxu0 0.0
    %7285 = vmatpush1.msra.mxu0 0.0
    %7286 = vmatprep.subr.mxu0 0.0
    %7287 = vmatpush1.msra.mxu0 0.0
    %7288 = vmatprep.subr.mxu0 0.0
    %7289 = vmatpush1.msra.mxu0 0.0
    %7290 = vmatprep.subr.mxu0 0.0
    %7291 = vmatpush1.msra.mxu0 0.0
    %7292 = vmatprep.subr.mxu0 0.0
    %7293 = vmatpush1.msra.mxu0 0.0
    %7294 = vmatprep.subr.mxu0 0.0
    %7295 = vmatpush1.msra.mxu0 0.0
    %7296 = vmatprep.subr.mxu0 0.0
    %7297 = vmatpush1.msra.mxu0 0.0
    %7298 = vmatprep.subr.mxu0 0.0
    %7299 = vmatpush1.msra.mxu0 0.0
    %7300 = vmatprep.subr.mxu0 0.0
    %7301 = vmatpush1.msra.mxu0 0.0
    %7302 = vmatprep.subr.mxu0 0.0
    %7303 = vmatpush1.msra.mxu0 0.0
    %7304 = vmatprep.subr.mxu0 0.0
    %7305 = vmatpush1.msra.mxu0 0.0
    %7306 = vmatprep.subr.mxu0 0.0
    %7307 = vmatpush1.msra.mxu0 0.0
    %7308 = vmatprep.subr.mxu0 0.0
    %7309 = vmatpush1.msra.mxu0 0.0
    %7310 = vmatprep.subr.mxu0 0.0
    %7311 = vmatpush1.msra.mxu0 0.0
    %7312 = vmatprep.subr.mxu0 0.0
    %7313 = vmatpush1.msra.mxu0 0.0
    %7314 = vmatprep.subr.mxu0 0.0
    %7315 = vmatpush1.msra.mxu0 0.0
    %7316 = vmatprep.subr.mxu0 0.0
    %7317 = vmatpush1.msra.mxu0 0.0
    %7318 = vmatprep.subr.mxu0 0.0
    %7319 = vmatpush1.msra.mxu0 0.0
    %7320 = vmatprep.subr.mxu0 0.0
    %7321 = vmatpush1.msra.mxu0 0.0
    %7322 = vmatprep.subr.mxu0 0.0
    %7323 = vmatpush1.msra.mxu0 0.0
    %7324 = vmatprep.mubr.f32.mxu0 0.0
    %v7325 = vand.u32 %v4192, 4294901760
    %7326 = vmatmul.mubr.f32.gmra.mrb[0].mxu0 %v7325
    %v7327 = vpop.f32.mrb[0].mxu0
    %v7328 = vadd.f32 %v7217, %v7327
    %v7329 = vpop.f32.mrb[0].mxu0
    %7330 = vmatprep.mubr.f32.mxu0 0.0
    %v7331 = vand.u32 %v4195, 4294901760
    %7332 = vmatmul.mubr.f32.gmra.mrb[0].mxu0 %v7331
    %v7333 = vpop.f32.mrb[0].mxu0
    %v7334 = vadd.f32 %v7227, %v7333
    %v7335 = vpop.f32.mrb[0].mxu0
    %7336 = vmatprep.mubr.f32.mxu0 0.0
    %v7337 = vand.u32 %v4198, 4294901760
    %7338 = vmatmul.mubr.f32.gmra.mrb[0].mxu0 %v7337
    %v7339 = vpop.f32.mrb[0].mxu0
    %v7340 = vadd.f32 %v7237, %v7339
    %v7341 = vpop.f32.mrb[0].mxu0
    %7342 = vmatprep.mubr.f32.mxu0 0.0
    %v7343 = vand.u32 %v4201, 4294901760
    %7344 = vmatmul.mubr.f32.gmra.mrb[0].mxu0 %v7343
    %v7345 = vpop.f32.mrb[0].mxu0
    %v7346 = vadd.f32 %v7247, %v7345
    %v7347 = vpop.f32.mrb[0].mxu0
    %7348 = vdwg.mxu0
    %7349 = vmatprep.subr.mxu0 0.0
    %v7350 = vand.u32 %v3166, 4294901760
    %v7351 = vsub.f32 %v3166, %v7350
    %7352 = vmatpush1.msra.mxu0 %v7351
    %7353 = vmatprep.subr.mxu0 0.0
    %v7354 = vand.u32 %v3172, 4294901760
    %v7355 = vsub.f32 %v3172, %v7354
    %7356 = vmatpush1.msra.mxu0 %v7355
    %7357 = vmatprep.subr.mxu0 0.0
    %7358 = vmatpush1.msra.mxu0 0.0
    %7359 = vmatprep.subr.mxu0 0.0
    %7360 = vmatpush1.msra.mxu0 0.0
    %7361 = vmatprep.subr.mxu0 0.0
    %7362 = vmatpush1.msra.mxu0 0.0
    %7363 = vmatprep.subr.mxu0 0.0
    %7364 = vmatpush1.msra.mxu0 0.0
    %7365 = vmatprep.subr.mxu0 0.0
    %7366 = vmatpush1.msra.mxu0 0.0
    %7367 = vmatprep.subr.mxu0 0.0
    %7368 = vmatpush1.msra.mxu0 0.0
    %7369 = vmatprep.subr.mxu0 0.0
    %7370 = vmatpush1.msra.mxu0 0.0
    %7371 = vmatprep.subr.mxu0 0.0
    %7372 = vmatpush1.msra.mxu0 0.0
    %7373 = vmatprep.subr.mxu0 0.0
    %7374 = vmatpush1.msra.mxu0 0.0
    %7375 = vmatprep.subr.mxu0 0.0
    %7376 = vmatpush1.msra.mxu0 0.0
    %7377 = vmatprep.subr.mxu0 0.0
    %7378 = vmatpush1.msra.mxu0 0.0
    %7379 = vmatprep.subr.mxu0 0.0
    %7380 = vmatpush1.msra.mxu0 0.0
    %7381 = vmatprep.subr.mxu0 0.0
    %7382 = vmatpush1.msra.mxu0 0.0
    %7383 = vmatprep.subr.mxu0 0.0
    %7384 = vmatpush1.msra.mxu0 0.0
    %7385 = vmatprep.subr.mxu0 0.0
    %7386 = vmatpush1.msra.mxu0 0.0
    %7387 = vmatprep.subr.mxu0 0.0
    %7388 = vmatpush1.msra.mxu0 0.0
    %7389 = vmatprep.subr.mxu0 0.0
    %7390 = vmatpush1.msra.mxu0 0.0
    %7391 = vmatprep.subr.mxu0 0.0
    %7392 = vmatpush1.msra.mxu0 0.0
    %7393 = vmatprep.subr.mxu0 0.0
    %7394 = vmatpush1.msra.mxu0 0.0
    %7395 = vmatprep.subr.mxu0 0.0
    %7396 = vmatpush1.msra.mxu0 0.0
    %7397 = vmatprep.subr.mxu0 0.0
    %7398 = vmatpush1.msra.mxu0 0.0
    %7399 = vmatprep.subr.mxu0 0.0
    %7400 = vmatpush1.msra.mxu0 0.0
    %7401 = vmatprep.subr.mxu0 0.0
    %7402 = vmatpush1.msra.mxu0 0.0
    %7403 = vmatprep.subr.mxu0 0.0
    %7404 = vmatpush1.msra.mxu0 0.0
    %7405 = vmatprep.subr.mxu0 0.0
    %7406 = vmatpush1.msra.mxu0 0.0
    %7407 = vmatprep.subr.mxu0 0.0
    %7408 = vmatpush1.msra.mxu0 0.0
    %7409 = vmatprep.subr.mxu0 0.0
    %7410 = vmatpush1.msra.mxu0 0.0
    %7411 = vmatprep.subr.mxu0 0.0
    %7412 = vmatpush1.msra.mxu0 0.0
    %7413 = vmatprep.subr.mxu0 0.0
    %7414 = vmatpush1.msra.mxu0 0.0
    %7415 = vmatprep.subr.mxu0 0.0
    %7416 = vmatpush1.msra.mxu0 0.0
    %7417 = vmatprep.mubr.f32.mxu0 0.0
    %v7418 = vand.u32 %v4192, 4294901760
    %v7419 = vsub.f32 %v4192, %v7418
    %7420 = vmatmul.mubr.f32.gmra.mrb[0].mxu0 %v7419
    %v7421 = vpop.f32.mrb[0].mxu0
    %v7422 = vadd.f32 %v7328, %v7421
    %v7423 = vpop.f32.mrb[0].mxu0
    %7424 = vmatprep.mubr.f32.mxu0 0.0
    %v7425 = vand.u32 %v4195, 4294901760
    %v7426 = vsub.f32 %v4195, %v7425
    %7427 = vmatmul.mubr.f32.gmra.mrb[0].mxu0 %v7426
    %v7428 = vpop.f32.mrb[0].mxu0
    %v7429 = vadd.f32 %v7334, %v7428
    %v7430 = vpop.f32.mrb[0].mxu0
    %7431 = vmatprep.mubr.f32.mxu0 0.0
    %v7432 = vand.u32 %v4198, 4294901760
    %v7433 = vsub.f32 %v4198, %v7432
    %7434 = vmatmul.mubr.f32.gmra.mrb[0].mxu0 %v7433
    %v7435 = vpop.f32.mrb[0].mxu0
    %v7436 = vadd.f32 %v7340, %v7435
    %v7437 = vpop.f32.mrb[0].mxu0
    %7438 = vmatprep.mubr.f32.mxu0 0.0
    %v7439 = vand.u32 %v4201, 4294901760
    %v7440 = vsub.f32 %v4201, %v7439
    %7441 = vmatmul.mubr.f32.gmra.mrb[0].mxu0 %v7440
    %v7442 = vpop.f32.mrb[0].mxu0
    %v7443 = vadd.f32 %v7346, %v7442
    %v7444 = vpop.f32.mrb[0].mxu0
    %7445 = vdwg.mxu0
    %7446 = vmatprep.subr.mxu0 0.0
    %v7447 = vand.u32 %v3166, 4294901760
    %7448 = vmatpush1.msra.mxu0 %v7447
    %7449 = vmatprep.subr.mxu0 0.0
    %v7450 = vand.u32 %v3172, 4294901760
    %7451 = vmatpush1.msra.mxu0 %v7450
    %7452 = vmatprep.subr.mxu0 0.0
    %7453 = vmatpush1.msra.mxu0 0.0
    %7454 = vmatprep.subr.mxu0 0.0
    %7455 = vmatpush1.msra.mxu0 0.0
    %7456 = vmatprep.subr.mxu0 0.0
    %7457 = vmatpush1.msra.mxu0 0.0
    %7458 = vmatprep.subr.mxu0 0.0
    %7459 = vmatpush1.msra.mxu0 0.0
    %7460 = vmatprep.subr.mxu0 0.0
    %7461 = vmatpush1.msra.mxu0 0.0
    %7462 = vmatprep.subr.mxu0 0.0
    %7463 = vmatpush1.msra.mxu0 0.0
    %7464 = vmatprep.subr.mxu0 0.0
    %7465 = vmatpush1.msra.mxu0 0.0
    %7466 = vmatprep.subr.mxu0 0.0
    %7467 = vmatpush1.msra.mxu0 0.0
    %7468 = vmatprep.subr.mxu0 0.0
    %7469 = vmatpush1.msra.mxu0 0.0
    %7470 = vmatprep.subr.mxu0 0.0
    %7471 = vmatpush1.msra.mxu0 0.0
    %7472 = vmatprep.subr.mxu0 0.0
    %7473 = vmatpush1.msra.mxu0 0.0
    %7474 = vmatprep.subr.mxu0 0.0
    %7475 = vmatpush1.msra.mxu0 0.0
    %7476 = vmatprep.subr.mxu0 0.0
    %7477 = vmatpush1.msra.mxu0 0.0
    %7478 = vmatprep.subr.mxu0 0.0
    %7479 = vmatpush1.msra.mxu0 0.0
    %7480 = vmatprep.subr.mxu0 0.0
    %7481 = vmatpush1.msra.mxu0 0.0
    %7482 = vmatprep.subr.mxu0 0.0
    %7483 = vmatpush1.msra.mxu0 0.0
    %7484 = vmatprep.subr.mxu0 0.0
    %7485 = vmatpush1.msra.mxu0 0.0
    %7486 = vmatprep.subr.mxu0 0.0
    %7487 = vmatpush1.msra.mxu0 0.0
    %7488 = vmatprep.subr.mxu0 0.0
    %7489 = vmatpush1.msra.mxu0 0.0
    %7490 = vmatprep.subr.mxu0 0.0
    %7491 = vmatpush1.msra.mxu0 0.0
    %7492 = vmatprep.subr.mxu0 0.0
    %7493 = vmatpush1.msra.mxu0 0.0
    %7494 = vmatprep.subr.mxu0 0.0
    %7495 = vmatpush1.msra.mxu0 0.0
    %7496 = vmatprep.subr.mxu0 0.0
    %7497 = vmatpush1.msra.mxu0 0.0
    %7498 = vmatprep.subr.mxu0 0.0
    %7499 = vmatpush1.msra.mxu0 0.0
    %7500 = vmatprep.subr.mxu0 0.0
    %7501 = vmatpush1.msra.mxu0 0.0
    %7502 = vmatprep.subr.mxu0 0.0
    %7503 = vmatpush1.msra.mxu0 0.0
    %7504 = vmatprep.subr.mxu0 0.0
    %7505 = vmatpush1.msra.mxu0 0.0
    %7506 = vmatprep.subr.mxu0 0.0
    %7507 = vmatpush1.msra.mxu0 0.0
    %7508 = vmatprep.subr.mxu0 0.0
    %7509 = vmatpush1.msra.mxu0 0.0
    %7510 = vmatprep.subr.mxu0 0.0
    %7511 = vmatpush1.msra.mxu0 0.0
    %7512 = vmatprep.mubr.f32.mxu0 0.0
    %v7513 = vand.u32 %v4192, 4294901760
    %v7514 = vsub.f32 %v4192, %v7513
    %v7515 = vand.u32 %v7514, 4294901760
    %7516 = vmatmul.mubr.f32.gmra.mrb[0].mxu0 %v7515
    %v7517 = vpop.f32.mrb[0].mxu0
    %v7518 = vadd.f32 %v7422, %v7517
    %v7519 = vpop.f32.mrb[0].mxu0
    %7520 = vmatprep.mubr.f32.mxu0 0.0
    %v7521 = vand.u32 %v4195, 4294901760
    %v7522 = vsub.f32 %v4195, %v7521
    %v7523 = vand.u32 %v7522, 4294901760
    %7524 = vmatmul.mubr.f32.gmra.mrb[0].mxu0 %v7523
    %v7525 = vpop.f32.mrb[0].mxu0
    %v7526 = vadd.f32 %v7429, %v7525
    %v7527 = vpop.f32.mrb[0].mxu0
    %7528 = vmatprep.mubr.f32.mxu0 0.0
    %v7529 = vand.u32 %v4198, 4294901760
    %v7530 = vsub.f32 %v4198, %v7529
    %v7531 = vand.u32 %v7530, 4294901760
    %7532 = vmatmul.mubr.f32.gmra.mrb[0].mxu0 %v7531
    %v7533 = vpop.f32.mrb[0].mxu0
    %v7534 = vadd.f32 %v7436, %v7533
    %v7535 = vpop.f32.mrb[0].mxu0
    %7536 = vmatprep.mubr.f32.mxu0 0.0
    %v7537 = vand.u32 %v4201, 4294901760
    %v7538 = vsub.f32 %v4201, %v7537
    %v7539 = vand.u32 %v7538, 4294901760
    %7540 = vmatmul.mubr.f32.gmra.mrb[0].mxu0 %v7539
    %v7541 = vpop.f32.mrb[0].mxu0
    %v7542 = vadd.f32 %v7443, %v7541
    %v7543 = vpop.f32.mrb[0].mxu0
    %7544 = vdwg.mxu0
    %7545 = vmatprep.subr.mxu0 0.0
    %v7546 = vand.u32 %v3166, 4294901760
    %v7547 = vsub.f32 %v3166, %v7546
    %v7548 = vand.u32 %v7547, 4294901760
    %7549 = vmatpush1.msra.mxu0 %v7548
    %7550 = vmatprep.subr.mxu0 0.0
    %v7551 = vand.u32 %v3172, 4294901760
    %v7552 = vsub.f32 %v3172, %v7551
    %v7553 = vand.u32 %v7552, 4294901760
    %7554 = vmatpush1.msra.mxu0 %v7553
    %7555 = vmatprep.subr.mxu0 0.0
    %7556 = vmatpush1.msra.mxu0 0.0
    %7557 = vmatprep.subr.mxu0 0.0
    %7558 = vmatpush1.msra.mxu0 0.0
    %7559 = vmatprep.subr.mxu0 0.0
    %7560 = vmatpush1.msra.mxu0 0.0
    %7561 = vmatprep.subr.mxu0 0.0
    %7562 = vmatpush1.msra.mxu0 0.0
    %7563 = vmatprep.subr.mxu0 0.0
    %7564 = vmatpush1.msra.mxu0 0.0
    %7565 = vmatprep.subr.mxu0 0.0
    %7566 = vmatpush1.msra.mxu0 0.0
    %7567 = vmatprep.subr.mxu0 0.0
    %7568 = vmatpush1.msra.mxu0 0.0
    %7569 = vmatprep.subr.mxu0 0.0
    %7570 = vmatpush1.msra.mxu0 0.0
    %7571 = vmatprep.subr.mxu0 0.0
    %7572 = vmatpush1.msra.mxu0 0.0
    %7573 = vmatprep.subr.mxu0 0.0
    %7574 = vmatpush1.msra.mxu0 0.0
    %7575 = vmatprep.subr.mxu0 0.0
    %7576 = vmatpush1.msra.mxu0 0.0
    %7577 = vmatprep.subr.mxu0 0.0
    %7578 = vmatpush1.msra.mxu0 0.0
    %7579 = vmatprep.subr.mxu0 0.0
    %7580 = vmatpush1.msra.mxu0 0.0
    %7581 = vmatprep.subr.mxu0 0.0
    %7582 = vmatpush1.msra.mxu0 0.0
    %7583 = vmatprep.subr.mxu0 0.0
    %7584 = vmatpush1.msra.mxu0 0.0
    %7585 = vmatprep.subr.mxu0 0.0
    %7586 = vmatpush1.msra.mxu0 0.0
    %7587 = vmatprep.subr.mxu0 0.0
    %7588 = vmatpush1.msra.mxu0 0.0
    %7589 = vmatprep.subr.mxu0 0.0
    %7590 = vmatpush1.msra.mxu0 0.0
    %7591 = vmatprep.subr.mxu0 0.0
    %7592 = vmatpush1.msra.mxu0 0.0
    %7593 = vmatprep.subr.mxu0 0.0
    %7594 = vmatpush1.msra.mxu0 0.0
    %7595 = vmatprep.subr.mxu0 0.0
    %7596 = vmatpush1.msra.mxu0 0.0
    %7597 = vmatprep.subr.mxu0 0.0
    %7598 = vmatpush1.msra.mxu0 0.0
    %7599 = vmatprep.subr.mxu0 0.0
    %7600 = vmatpush1.msra.mxu0 0.0
    %7601 = vmatprep.subr.mxu0 0.0
    %7602 = vmatpush1.msra.mxu0 0.0
    %7603 = vmatprep.subr.mxu0 0.0
    %7604 = vmatpush1.msra.mxu0 0.0
    %7605 = vmatprep.subr.mxu0 0.0
    %7606 = vmatpush1.msra.mxu0 0.0
    %7607 = vmatprep.subr.mxu0 0.0
    %7608 = vmatpush1.msra.mxu0 0.0
    %7609 = vmatprep.subr.mxu0 0.0
    %7610 = vmatpush1.msra.mxu0 0.0
    %7611 = vmatprep.subr.mxu0 0.0
    %7612 = vmatpush1.msra.mxu0 0.0
    %7613 = vmatprep.subr.mxu0 0.0
    %7614 = vmatpush1.msra.mxu0 0.0
    %7615 = vmatprep.mubr.f32.mxu0 0.0
    %v7616 = vand.u32 %v4192, 4294901760
    %7617 = vmatmul.mubr.f32.gmra.mrb[0].mxu0 %v7616
    %v7618 = vpop.f32.mrb[0].mxu0
    %v7619 = vadd.f32 %v7518, %v7618
    %v7620 = vpop.f32.mrb[0].mxu0
    %7621 = vmatprep.mubr.f32.mxu0 0.0
    %v7622 = vand.u32 %v4195, 4294901760
    %7623 = vmatmul.mubr.f32.gmra.mrb[0].mxu0 %v7622
    %v7624 = vpop.f32.mrb[0].mxu0
    %v7625 = vadd.f32 %v7526, %v7624
    %v7626 = vpop.f32.mrb[0].mxu0
    %7627 = vmatprep.mubr.f32.mxu0 0.0
    %v7628 = vand.u32 %v4198, 4294901760
    %7629 = vmatmul.mubr.f32.gmra.mrb[0].mxu0 %v7628
    %v7630 = vpop.f32.mrb[0].mxu0
    %v7631 = vadd.f32 %v7534, %v7630
    %v7632 = vpop.f32.mrb[0].mxu0
    %7633 = vmatprep.mubr.f32.mxu0 0.0
    %v7634 = vand.u32 %v4201, 4294901760
    %7635 = vmatmul.mubr.f32.gmra.mrb[0].mxu0 %v7634
    %v7636 = vpop.f32.mrb[0].mxu0
    %v7637 = vadd.f32 %v7542, %v7636
    %v7638 = vpop.f32.mrb[0].mxu0
    %7639 = vdwg.mxu0
    %7640 = vmatprep.subr.mxu0 0.0
    %v7641 = vand.u32 %v3166, 4294901760
    %7642 = vmatpush1.msra.mxu0 %v7641
    %7643 = vmatprep.subr.mxu0 0.0
    %v7644 = vand.u32 %v3172, 4294901760
    %7645 = vmatpush1.msra.mxu0 %v7644
    %7646 = vmatprep.subr.mxu0 0.0
    %7647 = vmatpush1.msra.mxu0 0.0
    %7648 = vmatprep.subr.mxu0 0.0
    %7649 = vmatpush1.msra.mxu0 0.0
    %7650 = vmatprep.subr.mxu0 0.0
    %7651 = vmatpush1.msra.mxu0 0.0
    %7652 = vmatprep.subr.mxu0 0.0
    %7653 = vmatpush1.msra.mxu0 0.0
    %7654 = vmatprep.subr.mxu0 0.0
    %7655 = vmatpush1.msra.mxu0 0.0
    %7656 = vmatprep.subr.mxu0 0.0
    %7657 = vmatpush1.msra.mxu0 0.0
    %7658 = vmatprep.subr.mxu0 0.0
    %7659 = vmatpush1.msra.mxu0 0.0
    %7660 = vmatprep.subr.mxu0 0.0
    %7661 = vmatpush1.msra.mxu0 0.0
    %7662 = vmatprep.subr.mxu0 0.0
    %7663 = vmatpush1.msra.mxu0 0.0
    %7664 = vmatprep.subr.mxu0 0.0
    %7665 = vmatpush1.msra.mxu0 0.0
    %7666 = vmatprep.subr.mxu0 0.0
    %7667 = vmatpush1.msra.mxu0 0.0
    %7668 = vmatprep.subr.mxu0 0.0
    %7669 = vmatpush1.msra.mxu0 0.0
    %7670 = vmatprep.subr.mxu0 0.0
    %7671 = vmatpush1.msra.mxu0 0.0
    %7672 = vmatprep.subr.mxu0 0.0
    %7673 = vmatpush1.msra.mxu0 0.0
    %7674 = vmatprep.subr.mxu0 0.0
    %7675 = vmatpush1.msra.mxu0 0.0
    %7676 = vmatprep.subr.mxu0 0.0
    %7677 = vmatpush1.msra.mxu0 0.0
    %7678 = vmatprep.subr.mxu0 0.0
    %7679 = vmatpush1.msra.mxu0 0.0
    %7680 = vmatprep.subr.mxu0 0.0
    %7681 = vmatpush1.msra.mxu0 0.0
    %7682 = vmatprep.subr.mxu0 0.0
    %7683 = vmatpush1.msra.mxu0 0.0
    %7684 = vmatprep.subr.mxu0 0.0
    %7685 = vmatpush1.msra.mxu0 0.0
    %7686 = vmatprep.subr.mxu0 0.0
    %7687 = vmatpush1.msra.mxu0 0.0
    %7688 = vmatprep.subr.mxu0 0.0
    %7689 = vmatpush1.msra.mxu0 0.0
    %7690 = vmatprep.subr.mxu0 0.0
    %7691 = vmatpush1.msra.mxu0 0.0
    %7692 = vmatprep.subr.mxu0 0.0
    %7693 = vmatpush1.msra.mxu0 0.0
    %7694 = vmatprep.subr.mxu0 0.0
    %7695 = vmatpush1.msra.mxu0 0.0
    %7696 = vmatprep.subr.mxu0 0.0
    %7697 = vmatpush1.msra.mxu0 0.0
    %7698 = vmatprep.subr.mxu0 0.0
    %7699 = vmatpush1.msra.mxu0 0.0
    %7700 = vmatprep.subr.mxu0 0.0
    %7701 = vmatpush1.msra.mxu0 0.0
    %7702 = vmatprep.subr.mxu0 0.0
    %7703 = vmatpush1.msra.mxu0 0.0
    %7704 = vmatprep.subr.mxu0 0.0
    %7705 = vmatpush1.msra.mxu0 0.0
    %7706 = vmatprep.mubr.f32.mxu0 0.0
    %v7707 = vand.u32 %v4192, 4294901760
    %7708 = vmatmul.mubr.f32.gmra.mrb[0].mxu0 %v7707
    %v7709 = vpop.f32.mrb[0].mxu0
    %v7710 = vadd.f32 %v7619, %v7709
    %v7711 = vpop.f32.mrb[0].mxu0
    %7712 = vmatprep.mubr.f32.mxu0 0.0
    %v7713 = vand.u32 %v4195, 4294901760
    %7714 = vmatmul.mubr.f32.gmra.mrb[0].mxu0 %v7713
    %v7715 = vpop.f32.mrb[0].mxu0
    %v7716 = vadd.f32 %v7625, %v7715
    %v7717 = vpop.f32.mrb[0].mxu0
    %7718 = vmatprep.mubr.f32.mxu0 0.0
    %v7719 = vand.u32 %v4198, 4294901760
    %7720 = vmatmul.mubr.f32.gmra.mrb[0].mxu0 %v7719
    %v7721 = vpop.f32.mrb[0].mxu0
    %v7722 = vadd.f32 %v7631, %v7721
    %v7723 = vpop.f32.mrb[0].mxu0
    %7724 = vmatprep.mubr.f32.mxu0 0.0
    %v7725 = vand.u32 %v4201, 4294901760
    %7726 = vmatmul.mubr.f32.gmra.mrb[0].mxu0 %v7725
    %v7727 = vpop.f32.mrb[0].mxu0
    %v7728 = vadd.f32 %v7637, %v7727
    %v7729 = vpop.f32.mrb[0].mxu0
    %7730 = vdwg.mxu0
    %7731 = vmatprep.subr.mxu0 0.0
    %v7732 = vand.u32 %v3674, 4294901760
    %7733 = vmatpush1.msra.mxu0 %v7732
    %7734 = vmatprep.subr.mxu0 0.0
    %v7735 = vand.u32 %v3680, 4294901760
    %7736 = vmatpush1.msra.mxu0 %v7735
    %7737 = vmatprep.subr.mxu0 0.0
    %7738 = vmatpush1.msra.mxu0 0.0
    %7739 = vmatprep.subr.mxu0 0.0
    %7740 = vmatpush1.msra.mxu0 0.0
    %7741 = vmatprep.subr.mxu0 0.0
    %7742 = vmatpush1.msra.mxu0 0.0
    %7743 = vmatprep.subr.mxu0 0.0
    %7744 = vmatpush1.msra.mxu0 0.0
    %7745 = vmatprep.subr.mxu0 0.0
    %7746 = vmatpush1.msra.mxu0 0.0
    %7747 = vmatprep.subr.mxu0 0.0
    %7748 = vmatpush1.msra.mxu0 0.0
    %7749 = vmatprep.subr.mxu0 0.0
    %7750 = vmatpush1.msra.mxu0 0.0
    %7751 = vmatprep.subr.mxu0 0.0
    %7752 = vmatpush1.msra.mxu0 0.0
    %7753 = vmatprep.subr.mxu0 0.0
    %7754 = vmatpush1.msra.mxu0 0.0
    %7755 = vmatprep.subr.mxu0 0.0
    %7756 = vmatpush1.msra.mxu0 0.0
    %7757 = vmatprep.subr.mxu0 0.0
    %7758 = vmatpush1.msra.mxu0 0.0
    %7759 = vmatprep.subr.mxu0 0.0
    %7760 = vmatpush1.msra.mxu0 0.0
    %7761 = vmatprep.subr.mxu0 0.0
    %7762 = vmatpush1.msra.mxu0 0.0
    %7763 = vmatprep.subr.mxu0 0.0
    %7764 = vmatpush1.msra.mxu0 0.0
    %7765 = vmatprep.subr.mxu0 0.0
    %7766 = vmatpush1.msra.mxu0 0.0
    %7767 = vmatprep.subr.mxu0 0.0
    %7768 = vmatpush1.msra.mxu0 0.0
    %7769 = vmatprep.subr.mxu0 0.0
    %7770 = vmatpush1.msra.mxu0 0.0
    %7771 = vmatprep.subr.mxu0 0.0
    %7772 = vmatpush1.msra.mxu0 0.0
    %7773 = vmatprep.subr.mxu0 0.0
    %7774 = vmatpush1.msra.mxu0 0.0
    %7775 = vmatprep.subr.mxu0 0.0
    %7776 = vmatpush1.msra.mxu0 0.0
    %7777 = vmatprep.subr.mxu0 0.0
    %7778 = vmatpush1.msra.mxu0 0.0
    %7779 = vmatprep.subr.mxu0 0.0
    %7780 = vmatpush1.msra.mxu0 0.0
    %7781 = vmatprep.subr.mxu0 0.0
    %7782 = vmatpush1.msra.mxu0 0.0
    %7783 = vmatprep.subr.mxu0 0.0
    %7784 = vmatpush1.msra.mxu0 0.0
    %7785 = vmatprep.subr.mxu0 0.0
    %7786 = vmatpush1.msra.mxu0 0.0
    %7787 = vmatprep.subr.mxu0 0.0
    %7788 = vmatpush1.msra.mxu0 0.0
    %7789 = vmatprep.subr.mxu0 0.0
    %7790 = vmatpush1.msra.mxu0 0.0
    %7791 = vmatprep.subr.mxu0 0.0
    %7792 = vmatpush1.msra.mxu0 0.0
    %7793 = vmatprep.subr.mxu0 0.0
    %7794 = vmatpush1.msra.mxu0 0.0
    %7795 = vmatprep.subr.mxu0 0.0
    %7796 = vmatpush1.msra.mxu0 0.0
    %7797 = vmatprep.mubr.f32.mxu0 0.0
    %v7798 = vand.u32 %v4192, 4294901760
    %v7799 = vsub.f32 %v4192, %v7798
    %v7800 = vand.u32 %v7799, 4294901760
    %v7801 = vsub.f32 %v7799, %v7800
    %v7802 = vand.u32 %v7801, 4294901760
    %7803 = vmatmul.mubr.f32.gmra.mrb[0].mxu0 %v7802
    %v7804 = vpop.f32.mrb[0].mxu0
    %v7805 = vadd.f32 0.0, %v7804
    %v7806 = vpop.f32.mrb[0].mxu0
    %7807 = vmatprep.mubr.f32.mxu0 0.0
    %v7808 = vand.u32 %v4195, 4294901760
    %v7809 = vsub.f32 %v4195, %v7808
    %v7810 = vand.u32 %v7809, 4294901760
    %v7811 = vsub.f32 %v7809, %v7810
    %v7812 = vand.u32 %v7811, 4294901760
    %7813 = vmatmul.mubr.f32.gmra.mrb[0].mxu0 %v7812
    %v7814 = vpop.f32.mrb[0].mxu0
    %v7815 = vadd.f32 0.0, %v7814
    %v7816 = vpop.f32.mrb[0].mxu0
    %7817 = vmatprep.mubr.f32.mxu0 0.0
    %v7818 = vand.u32 %v4198, 4294901760
    %v7819 = vsub.f32 %v4198, %v7818
    %v7820 = vand.u32 %v7819, 4294901760
    %v7821 = vsub.f32 %v7819, %v7820
    %v7822 = vand.u32 %v7821, 4294901760
    %7823 = vmatmul.mubr.f32.gmra.mrb[0].mxu0 %v7822
    %v7824 = vpop.f32.mrb[0].mxu0
    %v7825 = vadd.f32 0.0, %v7824
    %v7826 = vpop.f32.mrb[0].mxu0
    %7827 = vmatprep.mubr.f32.mxu0 0.0
    %v7828 = vand.u32 %v4201, 4294901760
    %v7829 = vsub.f32 %v4201, %v7828
    %v7830 = vand.u32 %v7829, 4294901760
    %v7831 = vsub.f32 %v7829, %v7830
    %v7832 = vand.u32 %v7831, 4294901760
    %7833 = vmatmul.mubr.f32.gmra.mrb[0].mxu0 %v7832
    %v7834 = vpop.f32.mrb[0].mxu0
    %v7835 = vadd.f32 0.0, %v7834
    %v7836 = vpop.f32.mrb[0].mxu0
    %7837 = vdwg.mxu0
    %7838 = vmatprep.subr.mxu0 0.0
    %v7839 = vand.u32 %v3674, 4294901760
    %v7840 = vsub.f32 %v3674, %v7839
    %v7841 = vand.u32 %v7840, 4294901760
    %v7842 = vsub.f32 %v7840, %v7841
    %v7843 = vand.u32 %v7842, 4294901760
    %7844 = vmatpush1.msra.mxu0 %v7843
    %7845 = vmatprep.subr.mxu0 0.0
    %v7846 = vand.u32 %v3680, 4294901760
    %v7847 = vsub.f32 %v3680, %v7846
    %v7848 = vand.u32 %v7847, 4294901760
    %v7849 = vsub.f32 %v7847, %v7848
    %v7850 = vand.u32 %v7849, 4294901760
    %7851 = vmatpush1.msra.mxu0 %v7850
    %7852 = vmatprep.subr.mxu0 0.0
    %7853 = vmatpush1.msra.mxu0 0.0
    %7854 = vmatprep.subr.mxu0 0.0
    %7855 = vmatpush1.msra.mxu0 0.0
    %7856 = vmatprep.subr.mxu0 0.0
    %7857 = vmatpush1.msra.mxu0 0.0
    %7858 = vmatprep.subr.mxu0 0.0
    %7859 = vmatpush1.msra.mxu0 0.0
    %7860 = vmatprep.subr.mxu0 0.0
    %7861 = vmatpush1.msra.mxu0 0.0
    %7862 = vmatprep.subr.mxu0 0.0
    %7863 = vmatpush1.msra.mxu0 0.0
    %7864 = vmatprep.subr.mxu0 0.0
    %7865 = vmatpush1.msra.mxu0 0.0
    %7866 = vmatprep.subr.mxu0 0.0
    %7867 = vmatpush1.msra.mxu0 0.0
    %7868 = vmatprep.subr.mxu0 0.0
    %7869 = vmatpush1.msra.mxu0 0.0
    %7870 = vmatprep.subr.mxu0 0.0
    %7871 = vmatpush1.msra.mxu0 0.0
    %7872 = vmatprep.subr.mxu0 0.0
    %7873 = vmatpush1.msra.mxu0 0.0
    %7874 = vmatprep.subr.mxu0 0.0
    %7875 = vmatpush1.msra.mxu0 0.0
    %7876 = vmatprep.subr.mxu0 0.0
    %7877 = vmatpush1.msra.mxu0 0.0
    %7878 = vmatprep.subr.mxu0 0.0
    %7879 = vmatpush1.msra.mxu0 0.0
    %7880 = vmatprep.subr.mxu0 0.0
    %7881 = vmatpush1.msra.mxu0 0.0
    %7882 = vmatprep.subr.mxu0 0.0
    %7883 = vmatpush1.msra.mxu0 0.0
    %7884 = vmatprep.subr.mxu0 0.0
    %7885 = vmatpush1.msra.mxu0 0.0
    %7886 = vmatprep.subr.mxu0 0.0
    %7887 = vmatpush1.msra.mxu0 0.0
    %7888 = vmatprep.subr.mxu0 0.0
    %7889 = vmatpush1.msra.mxu0 0.0
    %7890 = vmatprep.subr.mxu0 0.0
    %7891 = vmatpush1.msra.mxu0 0.0
    %7892 = vmatprep.subr.mxu0 0.0
    %7893 = vmatpush1.msra.mxu0 0.0
    %7894 = vmatprep.subr.mxu0 0.0
    %7895 = vmatpush1.msra.mxu0 0.0
    %7896 = vmatprep.subr.mxu0 0.0
    %7897 = vmatpush1.msra.mxu0 0.0
    %7898 = vmatprep.subr.mxu0 0.0
    %7899 = vmatpush1.msra.mxu0 0.0
    %7900 = vmatprep.subr.mxu0 0.0
    %7901 = vmatpush1.msra.mxu0 0.0
    %7902 = vmatprep.subr.mxu0 0.0
    %7903 = vmatpush1.msra.mxu0 0.0
    %7904 = vmatprep.subr.mxu0 0.0
    %7905 = vmatpush1.msra.mxu0 0.0
    %7906 = vmatprep.subr.mxu0 0.0
    %7907 = vmatpush1.msra.mxu0 0.0
    %7908 = vmatprep.subr.mxu0 0.0
    %7909 = vmatpush1.msra.mxu0 0.0
    %7910 = vmatprep.subr.mxu0 0.0
    %7911 = vmatpush1.msra.mxu0 0.0
    %7912 = vmatprep.mubr.f32.mxu0 0.0
    %v7913 = vand.u32 %v4192, 4294901760
    %7914 = vmatmul.mubr.f32.gmra.mrb[0].mxu0 %v7913
    %v7915 = vpop.f32.mrb[0].mxu0
    %v7916 = vadd.f32 %v7805, %v7915
    %v7917 = vpop.f32.mrb[0].mxu0
    %7918 = vmatprep.mubr.f32.mxu0 0.0
    %v7919 = vand.u32 %v4195, 4294901760
    %7920 = vmatmul.mubr.f32.gmra.mrb[0].mxu0 %v7919
    %v7921 = vpop.f32.mrb[0].mxu0
    %v7922 = vadd.f32 %v7815, %v7921
    %v7923 = vpop.f32.mrb[0].mxu0
    %7924 = vmatprep.mubr.f32.mxu0 0.0
    %v7925 = vand.u32 %v4198, 4294901760
    %7926 = vmatmul.mubr.f32.gmra.mrb[0].mxu0 %v7925
    %v7927 = vpop.f32.mrb[0].mxu0
    %v7928 = vadd.f32 %v7825, %v7927
    %v7929 = vpop.f32.mrb[0].mxu0
    %7930 = vmatprep.mubr.f32.mxu0 0.0
    %v7931 = vand.u32 %v4201, 4294901760
    %7932 = vmatmul.mubr.f32.gmra.mrb[0].mxu0 %v7931
    %v7933 = vpop.f32.mrb[0].mxu0
    %v7934 = vadd.f32 %v7835, %v7933
    %v7935 = vpop.f32.mrb[0].mxu0
    %7936 = vdwg.mxu0
    %7937 = vmatprep.subr.mxu0 0.0
    %v7938 = vand.u32 %v3674, 4294901760
    %v7939 = vsub.f32 %v3674, %v7938
    %7940 = vmatpush1.msra.mxu0 %v7939
    %7941 = vmatprep.subr.mxu0 0.0
    %v7942 = vand.u32 %v3680, 4294901760
    %v7943 = vsub.f32 %v3680, %v7942
    %7944 = vmatpush1.msra.mxu0 %v7943
    %7945 = vmatprep.subr.mxu0 0.0
    %7946 = vmatpush1.msra.mxu0 0.0
    %7947 = vmatprep.subr.mxu0 0.0
    %7948 = vmatpush1.msra.mxu0 0.0
    %7949 = vmatprep.subr.mxu0 0.0
    %7950 = vmatpush1.msra.mxu0 0.0
    %7951 = vmatprep.subr.mxu0 0.0
    %7952 = vmatpush1.msra.mxu0 0.0
    %7953 = vmatprep.subr.mxu0 0.0
    %7954 = vmatpush1.msra.mxu0 0.0
    %7955 = vmatprep.subr.mxu0 0.0
    %7956 = vmatpush1.msra.mxu0 0.0
    %7957 = vmatprep.subr.mxu0 0.0
    %7958 = vmatpush1.msra.mxu0 0.0
    %7959 = vmatprep.subr.mxu0 0.0
    %7960 = vmatpush1.msra.mxu0 0.0
    %7961 = vmatprep.subr.mxu0 0.0
    %7962 = vmatpush1.msra.mxu0 0.0
    %7963 = vmatprep.subr.mxu0 0.0
    %7964 = vmatpush1.msra.mxu0 0.0
    %7965 = vmatprep.subr.mxu0 0.0
    %7966 = vmatpush1.msra.mxu0 0.0
    %7967 = vmatprep.subr.mxu0 0.0
    %7968 = vmatpush1.msra.mxu0 0.0
    %7969 = vmatprep.subr.mxu0 0.0
    %7970 = vmatpush1.msra.mxu0 0.0
    %7971 = vmatprep.subr.mxu0 0.0
    %7972 = vmatpush1.msra.mxu0 0.0
    %7973 = vmatprep.subr.mxu0 0.0
    %7974 = vmatpush1.msra.mxu0 0.0
    %7975 = vmatprep.subr.mxu0 0.0
    %7976 = vmatpush1.msra.mxu0 0.0
    %7977 = vmatprep.subr.mxu0 0.0
    %7978 = vmatpush1.msra.mxu0 0.0
    %7979 = vmatprep.subr.mxu0 0.0
    %7980 = vmatpush1.msra.mxu0 0.0
    %7981 = vmatprep.subr.mxu0 0.0
    %7982 = vmatpush1.msra.mxu0 0.0
    %7983 = vmatprep.subr.mxu0 0.0
    %7984 = vmatpush1.msra.mxu0 0.0
    %7985 = vmatprep.subr.mxu0 0.0
    %7986 = vmatpush1.msra.mxu0 0.0
    %7987 = vmatprep.subr.mxu0 0.0
    %7988 = vmatpush1.msra.mxu0 0.0
    %7989 = vmatprep.subr.mxu0 0.0
    %7990 = vmatpush1.msra.mxu0 0.0
    %7991 = vmatprep.subr.mxu0 0.0
    %7992 = vmatpush1.msra.mxu0 0.0
    %7993 = vmatprep.subr.mxu0 0.0
    %7994 = vmatpush1.msra.mxu0 0.0
    %7995 = vmatprep.subr.mxu0 0.0
    %7996 = vmatpush1.msra.mxu0 0.0
    %7997 = vmatprep.subr.mxu0 0.0
    %7998 = vmatpush1.msra.mxu0 0.0
    %7999 = vmatprep.subr.mxu0 0.0
    %8000 = vmatpush1.msra.mxu0 0.0
    %8001 = vmatprep.subr.mxu0 0.0
    %8002 = vmatpush1.msra.mxu0 0.0
    %8003 = vmatprep.subr.mxu0 0.0
    %8004 = vmatpush1.msra.mxu0 0.0
    %8005 = vmatprep.mubr.f32.mxu0 0.0
    %v8006 = vand.u32 %v4192, 4294901760
    %v8007 = vsub.f32 %v4192, %v8006
    %8008 = vmatmul.mubr.f32.gmra.mrb[0].mxu0 %v8007
    %v8009 = vpop.f32.mrb[0].mxu0
    %v8010 = vadd.f32 %v7916, %v8009
    %v8011 = vpop.f32.mrb[0].mxu0
    %8012 = vmatprep.mubr.f32.mxu0 0.0
    %v8013 = vand.u32 %v4195, 4294901760
    %v8014 = vsub.f32 %v4195, %v8013
    %8015 = vmatmul.mubr.f32.gmra.mrb[0].mxu0 %v8014
    %v8016 = vpop.f32.mrb[0].mxu0
    %v8017 = vadd.f32 %v7922, %v8016
    %v8018 = vpop.f32.mrb[0].mxu0
    %8019 = vmatprep.mubr.f32.mxu0 0.0
    %v8020 = vand.u32 %v4198, 4294901760
    %v8021 = vsub.f32 %v4198, %v8020
    %8022 = vmatmul.mubr.f32.gmra.mrb[0].mxu0 %v8021
    %v8023 = vpop.f32.mrb[0].mxu0
    %v8024 = vadd.f32 %v7928, %v8023
    %v8025 = vpop.f32.mrb[0].mxu0
    %8026 = vmatprep.mubr.f32.mxu0 0.0
    %v8027 = vand.u32 %v4201, 4294901760
    %v8028 = vsub.f32 %v4201, %v8027
    %8029 = vmatmul.mubr.f32.gmra.mrb[0].mxu0 %v8028
    %v8030 = vpop.f32.mrb[0].mxu0
    %v8031 = vadd.f32 %v7934, %v8030
    %v8032 = vpop.f32.mrb[0].mxu0
    %8033 = vdwg.mxu0
    %8034 = vmatprep.subr.mxu0 0.0
    %v8035 = vand.u32 %v3674, 4294901760
    %8036 = vmatpush1.msra.mxu0 %v8035
    %8037 = vmatprep.subr.mxu0 0.0
    %v8038 = vand.u32 %v3680, 4294901760
    %8039 = vmatpush1.msra.mxu0 %v8038
    %8040 = vmatprep.subr.mxu0 0.0
    %8041 = vmatpush1.msra.mxu0 0.0
    %8042 = vmatprep.subr.mxu0 0.0
    %8043 = vmatpush1.msra.mxu0 0.0
    %8044 = vmatprep.subr.mxu0 0.0
    %8045 = vmatpush1.msra.mxu0 0.0
    %8046 = vmatprep.subr.mxu0 0.0
    %8047 = vmatpush1.msra.mxu0 0.0
    %8048 = vmatprep.subr.mxu0 0.0
    %8049 = vmatpush1.msra.mxu0 0.0
    %8050 = vmatprep.subr.mxu0 0.0
    %8051 = vmatpush1.msra.mxu0 0.0
    %8052 = vmatprep.subr.mxu0 0.0
    %8053 = vmatpush1.msra.mxu0 0.0
    %8054 = vmatprep.subr.mxu0 0.0
    %8055 = vmatpush1.msra.mxu0 0.0
    %8056 = vmatprep.subr.mxu0 0.0
    %8057 = vmatpush1.msra.mxu0 0.0
    %8058 = vmatprep.subr.mxu0 0.0
    %8059 = vmatpush1.msra.mxu0 0.0
    %8060 = vmatprep.subr.mxu0 0.0
    %8061 = vmatpush1.msra.mxu0 0.0
    %8062 = vmatprep.subr.mxu0 0.0
    %8063 = vmatpush1.msra.mxu0 0.0
    %8064 = vmatprep.subr.mxu0 0.0
    %8065 = vmatpush1.msra.mxu0 0.0
    %8066 = vmatprep.subr.mxu0 0.0
    %8067 = vmatpush1.msra.mxu0 0.0
    %8068 = vmatprep.subr.mxu0 0.0
    %8069 = vmatpush1.msra.mxu0 0.0
    %8070 = vmatprep.subr.mxu0 0.0
    %8071 = vmatpush1.msra.mxu0 0.0
    %8072 = vmatprep.subr.mxu0 0.0
    %8073 = vmatpush1.msra.mxu0 0.0
    %8074 = vmatprep.subr.mxu0 0.0
    %8075 = vmatpush1.msra.mxu0 0.0
    %8076 = vmatprep.subr.mxu0 0.0
    %8077 = vmatpush1.msra.mxu0 0.0
    %8078 = vmatprep.subr.mxu0 0.0
    %8079 = vmatpush1.msra.mxu0 0.0
    %8080 = vmatprep.subr.mxu0 0.0
    %8081 = vmatpush1.msra.mxu0 0.0
    %8082 = vmatprep.subr.mxu0 0.0
    %8083 = vmatpush1.msra.mxu0 0.0
    %8084 = vmatprep.subr.mxu0 0.0
    %8085 = vmatpush1.msra.mxu0 0.0
    %8086 = vmatprep.subr.mxu0 0.0
    %8087 = vmatpush1.msra.mxu0 0.0
    %8088 = vmatprep.subr.mxu0 0.0
    %8089 = vmatpush1.msra.mxu0 0.0
    %8090 = vmatprep.subr.mxu0 0.0
    %8091 = vmatpush1.msra.mxu0 0.0
    %8092 = vmatprep.subr.mxu0 0.0
    %8093 = vmatpush1.msra.mxu0 0.0
    %8094 = vmatprep.subr.mxu0 0.0
    %8095 = vmatpush1.msra.mxu0 0.0
    %8096 = vmatprep.subr.mxu0 0.0
    %8097 = vmatpush1.msra.mxu0 0.0
    %8098 = vmatprep.subr.mxu0 0.0
    %8099 = vmatpush1.msra.mxu0 0.0
    %8100 = vmatprep.mubr.f32.mxu0 0.0
    %v8101 = vand.u32 %v4192, 4294901760
    %v8102 = vsub.f32 %v4192, %v8101
    %v8103 = vand.u32 %v8102, 4294901760
    %8104 = vmatmul.mubr.f32.gmra.mrb[0].mxu0 %v8103
    %v8105 = vpop.f32.mrb[0].mxu0
    %v8106 = vadd.f32 %v8010, %v8105
    %v8107 = vpop.f32.mrb[0].mxu0
    %8108 = vmatprep.mubr.f32.mxu0 0.0
    %v8109 = vand.u32 %v4195, 4294901760
    %v8110 = vsub.f32 %v4195, %v8109
    %v8111 = vand.u32 %v8110, 4294901760
    %8112 = vmatmul.mubr.f32.gmra.mrb[0].mxu0 %v8111
    %v8113 = vpop.f32.mrb[0].mxu0
    %v8114 = vadd.f32 %v8017, %v8113
    %v8115 = vpop.f32.mrb[0].mxu0
    %8116 = vmatprep.mubr.f32.mxu0 0.0
    %v8117 = vand.u32 %v4198, 4294901760
    %v8118 = vsub.f32 %v4198, %v8117
    %v8119 = vand.u32 %v8118, 4294901760
    %8120 = vmatmul.mubr.f32.gmra.mrb[0].mxu0 %v8119
    %v8121 = vpop.f32.mrb[0].mxu0
    %v8122 = vadd.f32 %v8024, %v8121
    %v8123 = vpop.f32.mrb[0].mxu0
    %8124 = vmatprep.mubr.f32.mxu0 0.0
    %v8125 = vand.u32 %v4201, 4294901760
    %v8126 = vsub.f32 %v4201, %v8125
    %v8127 = vand.u32 %v8126, 4294901760
    %8128 = vmatmul.mubr.f32.gmra.mrb[0].mxu0 %v8127
    %v8129 = vpop.f32.mrb[0].mxu0
    %v8130 = vadd.f32 %v8031, %v8129
    %v8131 = vpop.f32.mrb[0].mxu0
    %8132 = vdwg.mxu0
    %8133 = vmatprep.subr.mxu0 0.0
    %v8134 = vand.u32 %v3674, 4294901760
    %v8135 = vsub.f32 %v3674, %v8134
    %v8136 = vand.u32 %v8135, 4294901760
    %8137 = vmatpush1.msra.mxu0 %v8136
    %8138 = vmatprep.subr.mxu0 0.0
    %v8139 = vand.u32 %v3680, 4294901760
    %v8140 = vsub.f32 %v3680, %v8139
    %v8141 = vand.u32 %v8140, 4294901760
    %8142 = vmatpush1.msra.mxu0 %v8141
    %8143 = vmatprep.subr.mxu0 0.0
    %8144 = vmatpush1.msra.mxu0 0.0
    %8145 = vmatprep.subr.mxu0 0.0
    %8146 = vmatpush1.msra.mxu0 0.0
    %8147 = vmatprep.subr.mxu0 0.0
    %8148 = vmatpush1.msra.mxu0 0.0
    %8149 = vmatprep.subr.mxu0 0.0
    %8150 = vmatpush1.msra.mxu0 0.0
    %8151 = vmatprep.subr.mxu0 0.0
    %8152 = vmatpush1.msra.mxu0 0.0
    %8153 = vmatprep.subr.mxu0 0.0
    %8154 = vmatpush1.msra.mxu0 0.0
    %8155 = vmatprep.subr.mxu0 0.0
    %8156 = vmatpush1.msra.mxu0 0.0
    %8157 = vmatprep.subr.mxu0 0.0
    %8158 = vmatpush1.msra.mxu0 0.0
    %8159 = vmatprep.subr.mxu0 0.0
    %8160 = vmatpush1.msra.mxu0 0.0
    %8161 = vmatprep.subr.mxu0 0.0
    %8162 = vmatpush1.msra.mxu0 0.0
    %8163 = vmatprep.subr.mxu0 0.0
    %8164 = vmatpush1.msra.mxu0 0.0
    %8165 = vmatprep.subr.mxu0 0.0
    %8166 = vmatpush1.msra.mxu0 0.0
    %8167 = vmatprep.subr.mxu0 0.0
    %8168 = vmatpush1.msra.mxu0 0.0
    %8169 = vmatprep.subr.mxu0 0.0
    %8170 = vmatpush1.msra.mxu0 0.0
    %8171 = vmatprep.subr.mxu0 0.0
    %8172 = vmatpush1.msra.mxu0 0.0
    %8173 = vmatprep.subr.mxu0 0.0
    %8174 = vmatpush1.msra.mxu0 0.0
    %8175 = vmatprep.subr.mxu0 0.0
    %8176 = vmatpush1.msra.mxu0 0.0
    %8177 = vmatprep.subr.mxu0 0.0
    %8178 = vmatpush1.msra.mxu0 0.0
    %8179 = vmatprep.subr.mxu0 0.0
    %8180 = vmatpush1.msra.mxu0 0.0
    %8181 = vmatprep.subr.mxu0 0.0
    %8182 = vmatpush1.msra.mxu0 0.0
    %8183 = vmatprep.subr.mxu0 0.0
    %8184 = vmatpush1.msra.mxu0 0.0
    %8185 = vmatprep.subr.mxu0 0.0
    %8186 = vmatpush1.msra.mxu0 0.0
    %8187 = vmatprep.subr.mxu0 0.0
    %8188 = vmatpush1.msra.mxu0 0.0
    %8189 = vmatprep.subr.mxu0 0.0
    %8190 = vmatpush1.msra.mxu0 0.0
    %8191 = vmatprep.subr.mxu0 0.0
    %8192 = vmatpush1.msra.mxu0 0.0
    %8193 = vmatprep.subr.mxu0 0.0
    %8194 = vmatpush1.msra.mxu0 0.0
    %8195 = vmatprep.subr.mxu0 0.0
    %8196 = vmatpush1.msra.mxu0 0.0
    %8197 = vmatprep.subr.mxu0 0.0
    %8198 = vmatpush1.msra.mxu0 0.0
    %8199 = vmatprep.subr.mxu0 0.0
    %8200 = vmatpush1.msra.mxu0 0.0
    %8201 = vmatprep.subr.mxu0 0.0
    %8202 = vmatpush1.msra.mxu0 0.0
    %8203 = vmatprep.mubr.f32.mxu0 0.0
    %v8204 = vand.u32 %v4192, 4294901760
    %8205 = vmatmul.mubr.f32.gmra.mrb[0].mxu0 %v8204
    %v8206 = vpop.f32.mrb[0].mxu0
    %v8207 = vadd.f32 %v8106, %v8206
    %v8208 = vpop.f32.mrb[0].mxu0
    %8209 = vmatprep.mubr.f32.mxu0 0.0
    %v8210 = vand.u32 %v4195, 4294901760
    %8211 = vmatmul.mubr.f32.gmra.mrb[0].mxu0 %v8210
    %v8212 = vpop.f32.mrb[0].mxu0
    %v8213 = vadd.f32 %v8114, %v8212
    %v8214 = vpop.f32.mrb[0].mxu0
    %8215 = vmatprep.mubr.f32.mxu0 0.0
    %v8216 = vand.u32 %v4198, 4294901760
    %8217 = vmatmul.mubr.f32.gmra.mrb[0].mxu0 %v8216
    %v8218 = vpop.f32.mrb[0].mxu0
    %v8219 = vadd.f32 %v8122, %v8218
    %v8220 = vpop.f32.mrb[0].mxu0
    %8221 = vmatprep.mubr.f32.mxu0 0.0
    %v8222 = vand.u32 %v4201, 4294901760
    %8223 = vmatmul.mubr.f32.gmra.mrb[0].mxu0 %v8222
    %v8224 = vpop.f32.mrb[0].mxu0
    %v8225 = vadd.f32 %v8130, %v8224
    %v8226 = vpop.f32.mrb[0].mxu0
    %8227 = vdwg.mxu0
    %8228 = vmatprep.subr.mxu0 0.0
    %v8229 = vand.u32 %v3674, 4294901760
    %8230 = vmatpush1.msra.mxu0 %v8229
    %8231 = vmatprep.subr.mxu0 0.0
    %v8232 = vand.u32 %v3680, 4294901760
    %8233 = vmatpush1.msra.mxu0 %v8232
    %8234 = vmatprep.subr.mxu0 0.0
    %8235 = vmatpush1.msra.mxu0 0.0
    %8236 = vmatprep.subr.mxu0 0.0
    %8237 = vmatpush1.msra.mxu0 0.0
    %8238 = vmatprep.subr.mxu0 0.0
    %8239 = vmatpush1.msra.mxu0 0.0
    %8240 = vmatprep.subr.mxu0 0.0
    %8241 = vmatpush1.msra.mxu0 0.0
    %8242 = vmatprep.subr.mxu0 0.0
    %8243 = vmatpush1.msra.mxu0 0.0
    %8244 = vmatprep.subr.mxu0 0.0
    %8245 = vmatpush1.msra.mxu0 0.0
    %8246 = vmatprep.subr.mxu0 0.0
    %8247 = vmatpush1.msra.mxu0 0.0
    %8248 = vmatprep.subr.mxu0 0.0
    %8249 = vmatpush1.msra.mxu0 0.0
    %8250 = vmatprep.subr.mxu0 0.0
    %8251 = vmatpush1.msra.mxu0 0.0
    %8252 = vmatprep.subr.mxu0 0.0
    %8253 = vmatpush1.msra.mxu0 0.0
    %8254 = vmatprep.subr.mxu0 0.0
    %8255 = vmatpush1.msra.mxu0 0.0
    %8256 = vmatprep.subr.mxu0 0.0
    %8257 = vmatpush1.msra.mxu0 0.0
    %8258 = vmatprep.subr.mxu0 0.0
    %8259 = vmatpush1.msra.mxu0 0.0
    %8260 = vmatprep.subr.mxu0 0.0
    %8261 = vmatpush1.msra.mxu0 0.0
    %8262 = vmatprep.subr.mxu0 0.0
    %8263 = vmatpush1.msra.mxu0 0.0
    %8264 = vmatprep.subr.mxu0 0.0
    %8265 = vmatpush1.msra.mxu0 0.0
    %8266 = vmatprep.subr.mxu0 0.0
    %8267 = vmatpush1.msra.mxu0 0.0
    %8268 = vmatprep.subr.mxu0 0.0
    %8269 = vmatpush1.msra.mxu0 0.0
    %8270 = vmatprep.subr.mxu0 0.0
    %8271 = vmatpush1.msra.mxu0 0.0
    %8272 = vmatprep.subr.mxu0 0.0
    %8273 = vmatpush1.msra.mxu0 0.0
    %8274 = vmatprep.subr.mxu0 0.0
    %8275 = vmatpush1.msra.mxu0 0.0
    %8276 = vmatprep.subr.mxu0 0.0
    %8277 = vmatpush1.msra.mxu0 0.0
    %8278 = vmatprep.subr.mxu0 0.0
    %8279 = vmatpush1.msra.mxu0 0.0
    %8280 = vmatprep.subr.mxu0 0.0
    %8281 = vmatpush1.msra.mxu0 0.0
    %8282 = vmatprep.subr.mxu0 0.0
    %8283 = vmatpush1.msra.mxu0 0.0
    %8284 = vmatprep.subr.mxu0 0.0
    %8285 = vmatpush1.msra.mxu0 0.0
    %8286 = vmatprep.subr.mxu0 0.0
    %8287 = vmatpush1.msra.mxu0 0.0
    %8288 = vmatprep.subr.mxu0 0.0
    %8289 = vmatpush1.msra.mxu0 0.0
    %8290 = vmatprep.subr.mxu0 0.0
    %8291 = vmatpush1.msra.mxu0 0.0
    %8292 = vmatprep.subr.mxu0 0.0
    %8293 = vmatpush1.msra.mxu0 0.0
    %8294 = vmatprep.mubr.f32.mxu0 0.0
    %v8295 = vand.u32 %v4192, 4294901760
    %8296 = vmatmul.mubr.f32.gmra.mrb[0].mxu0 %v8295
    %v8297 = vpop.f32.mrb[0].mxu0
    %v8298 = vadd.f32 %v8207, %v8297
    %v8299 = vpop.f32.mrb[0].mxu0
    %8300 = vmatprep.mubr.f32.mxu0 0.0
    %v8301 = vand.u32 %v4195, 4294901760
    %8302 = vmatmul.mubr.f32.gmra.mrb[0].mxu0 %v8301
    %v8303 = vpop.f32.mrb[0].mxu0
    %v8304 = vadd.f32 %v8213, %v8303
    %v8305 = vpop.f32.mrb[0].mxu0
    %8306 = vmatprep.mubr.f32.mxu0 0.0
    %v8307 = vand.u32 %v4198, 4294901760
    %8308 = vmatmul.mubr.f32.gmra.mrb[0].mxu0 %v8307
    %v8309 = vpop.f32.mrb[0].mxu0
    %v8310 = vadd.f32 %v8219, %v8309
    %v8311 = vpop.f32.mrb[0].mxu0
    %8312 = vmatprep.mubr.f32.mxu0 0.0
    %v8313 = vand.u32 %v4201, 4294901760
    %8314 = vmatmul.mubr.f32.gmra.mrb[0].mxu0 %v8313
    %v8315 = vpop.f32.mrb[0].mxu0
    %v8316 = vadd.f32 %v8225, %v8315
    %v8317 = vpop.f32.mrb[0].mxu0
    %8318 = vdwg.mxu0
    %8319 = vmatprep.subr.mxu0 0.0
    %v8320 = vand.u32 %v4182, 4294901760
    %8321 = vmatpush1.msra.mxu0 %v8320
    %8322 = vmatprep.subr.mxu0 0.0
    %v8323 = vand.u32 %v4188, 4294901760
    %8324 = vmatpush1.msra.mxu0 %v8323
    %8325 = vmatprep.subr.mxu0 0.0
    %8326 = vmatpush1.msra.mxu0 0.0
    %8327 = vmatprep.subr.mxu0 0.0
    %8328 = vmatpush1.msra.mxu0 0.0
    %8329 = vmatprep.subr.mxu0 0.0
    %8330 = vmatpush1.msra.mxu0 0.0
    %8331 = vmatprep.subr.mxu0 0.0
    %8332 = vmatpush1.msra.mxu0 0.0
    %8333 = vmatprep.subr.mxu0 0.0
    %8334 = vmatpush1.msra.mxu0 0.0
    %8335 = vmatprep.subr.mxu0 0.0
    %8336 = vmatpush1.msra.mxu0 0.0
    %8337 = vmatprep.subr.mxu0 0.0
    %8338 = vmatpush1.msra.mxu0 0.0
    %8339 = vmatprep.subr.mxu0 0.0
    %8340 = vmatpush1.msra.mxu0 0.0
    %8341 = vmatprep.subr.mxu0 0.0
    %8342 = vmatpush1.msra.mxu0 0.0
    %8343 = vmatprep.subr.mxu0 0.0
    %8344 = vmatpush1.msra.mxu0 0.0
    %8345 = vmatprep.subr.mxu0 0.0
    %8346 = vmatpush1.msra.mxu0 0.0
    %8347 = vmatprep.subr.mxu0 0.0
    %8348 = vmatpush1.msra.mxu0 0.0
    %8349 = vmatprep.subr.mxu0 0.0
    %8350 = vmatpush1.msra.mxu0 0.0
    %8351 = vmatprep.subr.mxu0 0.0
    %8352 = vmatpush1.msra.mxu0 0.0
    %8353 = vmatprep.subr.mxu0 0.0
    %8354 = vmatpush1.msra.mxu0 0.0
    %8355 = vmatprep.subr.mxu0 0.0
    %8356 = vmatpush1.msra.mxu0 0.0
    %8357 = vmatprep.subr.mxu0 0.0
    %8358 = vmatpush1.msra.mxu0 0.0
    %8359 = vmatprep.subr.mxu0 0.0
    %8360 = vmatpush1.msra.mxu0 0.0
    %8361 = vmatprep.subr.mxu0 0.0
    %8362 = vmatpush1.msra.mxu0 0.0
    %8363 = vmatprep.subr.mxu0 0.0
    %8364 = vmatpush1.msra.mxu0 0.0
    %8365 = vmatprep.subr.mxu0 0.0
    %8366 = vmatpush1.msra.mxu0 0.0
    %8367 = vmatprep.subr.mxu0 0.0
    %8368 = vmatpush1.msra.mxu0 0.0
    %8369 = vmatprep.subr.mxu0 0.0
    %8370 = vmatpush1.msra.mxu0 0.0
    %8371 = vmatprep.subr.mxu0 0.0
    %8372 = vmatpush1.msra.mxu0 0.0
    %8373 = vmatprep.subr.mxu0 0.0
    %8374 = vmatpush1.msra.mxu0 0.0
    %8375 = vmatprep.subr.mxu0 0.0
    %8376 = vmatpush1.msra.mxu0 0.0
    %8377 = vmatprep.subr.mxu0 0.0
    %8378 = vmatpush1.msra.mxu0 0.0
    %8379 = vmatprep.subr.mxu0 0.0
    %8380 = vmatpush1.msra.mxu0 0.0
    %8381 = vmatprep.subr.mxu0 0.0
    %8382 = vmatpush1.msra.mxu0 0.0
    %8383 = vmatprep.subr.mxu0 0.0
    %8384 = vmatpush1.msra.mxu0 0.0
    %8385 = vmatprep.mubr.f32.mxu0 0.0
    %v8386 = vand.u32 %v4192, 4294901760
    %v8387 = vsub.f32 %v4192, %v8386
    %v8388 = vand.u32 %v8387, 4294901760
    %v8389 = vsub.f32 %v8387, %v8388
    %v8390 = vand.u32 %v8389, 4294901760
    %8391 = vmatmul.mubr.f32.gmra.mrb[0].mxu0 %v8390
    %v8392 = vpop.f32.mrb[0].mxu0
    %v8393 = vadd.f32 0.0, %v8392
    %v8394 = vpop.f32.mrb[0].mxu0
    %8395 = vmatprep.mubr.f32.mxu0 0.0
    %v8396 = vand.u32 %v4195, 4294901760
    %v8397 = vsub.f32 %v4195, %v8396
    %v8398 = vand.u32 %v8397, 4294901760
    %v8399 = vsub.f32 %v8397, %v8398
    %v8400 = vand.u32 %v8399, 4294901760
    %8401 = vmatmul.mubr.f32.gmra.mrb[0].mxu0 %v8400
    %v8402 = vpop.f32.mrb[0].mxu0
    %v8403 = vadd.f32 0.0, %v8402
    %v8404 = vpop.f32.mrb[0].mxu0
    %8405 = vmatprep.mubr.f32.mxu0 0.0
    %v8406 = vand.u32 %v4198, 4294901760
    %v8407 = vsub.f32 %v4198, %v8406
    %v8408 = vand.u32 %v8407, 4294901760
    %v8409 = vsub.f32 %v8407, %v8408
    %v8410 = vand.u32 %v8409, 4294901760
    %8411 = vmatmul.mubr.f32.gmra.mrb[0].mxu0 %v8410
    %v8412 = vpop.f32.mrb[0].mxu0
    %v8413 = vadd.f32 0.0, %v8412
    %v8414 = vpop.f32.mrb[0].mxu0
    %8415 = vmatprep.mubr.f32.mxu0 0.0
    %v8416 = vand.u32 %v4201, 4294901760
    %v8417 = vsub.f32 %v4201, %v8416
    %v8418 = vand.u32 %v8417, 4294901760
    %v8419 = vsub.f32 %v8417, %v8418
    %v8420 = vand.u32 %v8419, 4294901760
    %8421 = vmatmul.mubr.f32.gmra.mrb[0].mxu0 %v8420
    %v8422 = vpop.f32.mrb[0].mxu0
    %v8423 = vadd.f32 0.0, %v8422
    %v8424 = vpop.f32.mrb[0].mxu0
    %8425 = vdwg.mxu0
    %8426 = vmatprep.subr.mxu0 0.0
    %v8427 = vand.u32 %v4182, 4294901760
    %v8428 = vsub.f32 %v4182, %v8427
    %v8429 = vand.u32 %v8428, 4294901760
    %v8430 = vsub.f32 %v8428, %v8429
    %v8431 = vand.u32 %v8430, 4294901760
    %8432 = vmatpush1.msra.mxu0 %v8431
    %8433 = vmatprep.subr.mxu0 0.0
    %v8434 = vand.u32 %v4188, 4294901760
    %v8435 = vsub.f32 %v4188, %v8434
    %v8436 = vand.u32 %v8435, 4294901760
    %v8437 = vsub.f32 %v8435, %v8436
    %v8438 = vand.u32 %v8437, 4294901760
    %8439 = vmatpush1.msra.mxu0 %v8438
    %8440 = vmatprep.subr.mxu0 0.0
    %8441 = vmatpush1.msra.mxu0 0.0
    %8442 = vmatprep.subr.mxu0 0.0
    %8443 = vmatpush1.msra.mxu0 0.0
    %8444 = vmatprep.subr.mxu0 0.0
    %8445 = vmatpush1.msra.mxu0 0.0
    %8446 = vmatprep.subr.mxu0 0.0
    %8447 = vmatpush1.msra.mxu0 0.0
    %8448 = vmatprep.subr.mxu0 0.0
    %8449 = vmatpush1.msra.mxu0 0.0
    %8450 = vmatprep.subr.mxu0 0.0
    %8451 = vmatpush1.msra.mxu0 0.0
    %8452 = vmatprep.subr.mxu0 0.0
    %8453 = vmatpush1.msra.mxu0 0.0
    %8454 = vmatprep.subr.mxu0 0.0
    %8455 = vmatpush1.msra.mxu0 0.0
    %8456 = vmatprep.subr.mxu0 0.0
    %8457 = vmatpush1.msra.mxu0 0.0
    %8458 = vmatprep.subr.mxu0 0.0
    %8459 = vmatpush1.msra.mxu0 0.0
    %8460 = vmatprep.subr.mxu0 0.0
    %8461 = vmatpush1.msra.mxu0 0.0
    %8462 = vmatprep.subr.mxu0 0.0
    %8463 = vmatpush1.msra.mxu0 0.0
    %8464 = vmatprep.subr.mxu0 0.0
    %8465 = vmatpush1.msra.mxu0 0.0
    %8466 = vmatprep.subr.mxu0 0.0
    %8467 = vmatpush1.msra.mxu0 0.0
    %8468 = vmatprep.subr.mxu0 0.0
    %8469 = vmatpush1.msra.mxu0 0.0
    %8470 = vmatprep.subr.mxu0 0.0
    %8471 = vmatpush1.msra.mxu0 0.0
    %8472 = vmatprep.subr.mxu0 0.0
    %8473 = vmatpush1.msra.mxu0 0.0
    %8474 = vmatprep.subr.mxu0 0.0
    %8475 = vmatpush1.msra.mxu0 0.0
    %8476 = vmatprep.subr.mxu0 0.0
    %8477 = vmatpush1.msra.mxu0 0.0
    %8478 = vmatprep.subr.mxu0 0.0
    %8479 = vmatpush1.msra.mxu0 0.0
    %8480 = vmatprep.subr.mxu0 0.0
    %8481 = vmatpush1.msra.mxu0 0.0
    %8482 = vmatprep.subr.mxu0 0.0
    %8483 = vmatpush1.msra.mxu0 0.0
    %8484 = vmatprep.subr.mxu0 0.0
    %8485 = vmatpush1.msra.mxu0 0.0
    %8486 = vmatprep.subr.mxu0 0.0
    %8487 = vmatpush1.msra.mxu0 0.0
    %8488 = vmatprep.subr.mxu0 0.0
    %8489 = vmatpush1.msra.mxu0 0.0
    %8490 = vmatprep.subr.mxu0 0.0
    %8491 = vmatpush1.msra.mxu0 0.0
    %8492 = vmatprep.subr.mxu0 0.0
    %8493 = vmatpush1.msra.mxu0 0.0
    %8494 = vmatprep.subr.mxu0 0.0
    %8495 = vmatpush1.msra.mxu0 0.0
    %8496 = vmatprep.subr.mxu0 0.0
    %8497 = vmatpush1.msra.mxu0 0.0
    %8498 = vmatprep.subr.mxu0 0.0
    %8499 = vmatpush1.msra.mxu0 0.0
    %8500 = vmatprep.mubr.f32.mxu0 0.0
    %v8501 = vand.u32 %v4192, 4294901760
    %8502 = vmatmul.mubr.f32.gmra.mrb[0].mxu0 %v8501
    %v8503 = vpop.f32.mrb[0].mxu0
    %v8504 = vadd.f32 %v8393, %v8503
    %v8505 = vpop.f32.mrb[0].mxu0
    %8506 = vmatprep.mubr.f32.mxu0 0.0
    %v8507 = vand.u32 %v4195, 4294901760
    %8508 = vmatmul.mubr.f32.gmra.mrb[0].mxu0 %v8507
    %v8509 = vpop.f32.mrb[0].mxu0
    %v8510 = vadd.f32 %v8403, %v8509
    %v8511 = vpop.f32.mrb[0].mxu0
    %8512 = vmatprep.mubr.f32.mxu0 0.0
    %v8513 = vand.u32 %v4198, 4294901760
    %8514 = vmatmul.mubr.f32.gmra.mrb[0].mxu0 %v8513
    %v8515 = vpop.f32.mrb[0].mxu0
    %v8516 = vadd.f32 %v8413, %v8515
    %v8517 = vpop.f32.mrb[0].mxu0
    %8518 = vmatprep.mubr.f32.mxu0 0.0
    %v8519 = vand.u32 %v4201, 4294901760
    %8520 = vmatmul.mubr.f32.gmra.mrb[0].mxu0 %v8519
    %v8521 = vpop.f32.mrb[0].mxu0
    %v8522 = vadd.f32 %v8423, %v8521
    %v8523 = vpop.f32.mrb[0].mxu0
    %8524 = vdwg.mxu0
    %8525 = vmatprep.subr.mxu0 0.0
    %v8526 = vand.u32 %v4182, 4294901760
    %v8527 = vsub.f32 %v4182, %v8526
    %8528 = vmatpush1.msra.mxu0 %v8527
    %8529 = vmatprep.subr.mxu0 0.0
    %v8530 = vand.u32 %v4188, 4294901760
    %v8531 = vsub.f32 %v4188, %v8530
    %8532 = vmatpush1.msra.mxu0 %v8531
    %8533 = vmatprep.subr.mxu0 0.0
    %8534 = vmatpush1.msra.mxu0 0.0
    %8535 = vmatprep.subr.mxu0 0.0
    %8536 = vmatpush1.msra.mxu0 0.0
    %8537 = vmatprep.subr.mxu0 0.0
    %8538 = vmatpush1.msra.mxu0 0.0
    %8539 = vmatprep.subr.mxu0 0.0
    %8540 = vmatpush1.msra.mxu0 0.0
    %8541 = vmatprep.subr.mxu0 0.0
    %8542 = vmatpush1.msra.mxu0 0.0
    %8543 = vmatprep.subr.mxu0 0.0
    %8544 = vmatpush1.msra.mxu0 0.0
    %8545 = vmatprep.subr.mxu0 0.0
    %8546 = vmatpush1.msra.mxu0 0.0
    %8547 = vmatprep.subr.mxu0 0.0
    %8548 = vmatpush1.msra.mxu0 0.0
    %8549 = vmatprep.subr.mxu0 0.0
    %8550 = vmatpush1.msra.mxu0 0.0
    %8551 = vmatprep.subr.mxu0 0.0
    %8552 = vmatpush1.msra.mxu0 0.0
    %8553 = vmatprep.subr.mxu0 0.0
    %8554 = vmatpush1.msra.mxu0 0.0
    %8555 = vmatprep.subr.mxu0 0.0
    %8556 = vmatpush1.msra.mxu0 0.0
    %8557 = vmatprep.subr.mxu0 0.0
    %8558 = vmatpush1.msra.mxu0 0.0
    %8559 = vmatprep.subr.mxu0 0.0
    %8560 = vmatpush1.msra.mxu0 0.0
    %8561 = vmatprep.subr.mxu0 0.0
    %8562 = vmatpush1.msra.mxu0 0.0
    %8563 = vmatprep.subr.mxu0 0.0
    %8564 = vmatpush1.msra.mxu0 0.0
    %8565 = vmatprep.subr.mxu0 0.0
    %8566 = vmatpush1.msra.mxu0 0.0
    %8567 = vmatprep.subr.mxu0 0.0
    %8568 = vmatpush1.msra.mxu0 0.0
    %8569 = vmatprep.subr.mxu0 0.0
    %8570 = vmatpush1.msra.mxu0 0.0
    %8571 = vmatprep.subr.mxu0 0.0
    %8572 = vmatpush1.msra.mxu0 0.0
    %8573 = vmatprep.subr.mxu0 0.0
    %8574 = vmatpush1.msra.mxu0 0.0
    %8575 = vmatprep.subr.mxu0 0.0
    %8576 = vmatpush1.msra.mxu0 0.0
    %8577 = vmatprep.subr.mxu0 0.0
    %8578 = vmatpush1.msra.mxu0 0.0
    %8579 = vmatprep.subr.mxu0 0.0
    %8580 = vmatpush1.msra.mxu0 0.0
    %8581 = vmatprep.subr.mxu0 0.0
    %8582 = vmatpush1.msra.mxu0 0.0
    %8583 = vmatprep.subr.mxu0 0.0
    %8584 = vmatpush1.msra.mxu0 0.0
    %8585 = vmatprep.subr.mxu0 0.0
    %8586 = vmatpush1.msra.mxu0 0.0
    %8587 = vmatprep.subr.mxu0 0.0
    %8588 = vmatpush1.msra.mxu0 0.0
    %8589 = vmatprep.subr.mxu0 0.0
    %8590 = vmatpush1.msra.mxu0 0.0
    %8591 = vmatprep.subr.mxu0 0.0
    %8592 = vmatpush1.msra.mxu0 0.0
    %8593 = vmatprep.mubr.f32.mxu0 0.0
    %v8594 = vand.u32 %v4192, 4294901760
    %v8595 = vsub.f32 %v4192, %v8594
    %8596 = vmatmul.mubr.f32.gmra.mrb[0].mxu0 %v8595
    %v8597 = vpop.f32.mrb[0].mxu0
    %v8598 = vadd.f32 %v8504, %v8597
    %v8599 = vpop.f32.mrb[0].mxu0
    %8600 = vmatprep.mubr.f32.mxu0 0.0
    %v8601 = vand.u32 %v4195, 4294901760
    %v8602 = vsub.f32 %v4195, %v8601
    %8603 = vmatmul.mubr.f32.gmra.mrb[0].mxu0 %v8602
    %v8604 = vpop.f32.mrb[0].mxu0
    %v8605 = vadd.f32 %v8510, %v8604
    %v8606 = vpop.f32.mrb[0].mxu0
    %8607 = vmatprep.mubr.f32.mxu0 0.0
    %v8608 = vand.u32 %v4198, 4294901760
    %v8609 = vsub.f32 %v4198, %v8608
    %8610 = vmatmul.mubr.f32.gmra.mrb[0].mxu0 %v8609
    %v8611 = vpop.f32.mrb[0].mxu0
    %v8612 = vadd.f32 %v8516, %v8611
    %v8613 = vpop.f32.mrb[0].mxu0
    %8614 = vmatprep.mubr.f32.mxu0 0.0
    %v8615 = vand.u32 %v4201, 4294901760
    %v8616 = vsub.f32 %v4201, %v8615
    %8617 = vmatmul.mubr.f32.gmra.mrb[0].mxu0 %v8616
    %v8618 = vpop.f32.mrb[0].mxu0
    %v8619 = vadd.f32 %v8522, %v8618
    %v8620 = vpop.f32.mrb[0].mxu0
    %8621 = vdwg.mxu0
    %8622 = vmatprep.subr.mxu0 0.0
    %v8623 = vand.u32 %v4182, 4294901760
    %8624 = vmatpush1.msra.mxu0 %v8623
    %8625 = vmatprep.subr.mxu0 0.0
    %v8626 = vand.u32 %v4188, 4294901760
    %8627 = vmatpush1.msra.mxu0 %v8626
    %8628 = vmatprep.subr.mxu0 0.0
    %8629 = vmatpush1.msra.mxu0 0.0
    %8630 = vmatprep.subr.mxu0 0.0
    %8631 = vmatpush1.msra.mxu0 0.0
    %8632 = vmatprep.subr.mxu0 0.0
    %8633 = vmatpush1.msra.mxu0 0.0
    %8634 = vmatprep.subr.mxu0 0.0
    %8635 = vmatpush1.msra.mxu0 0.0
    %8636 = vmatprep.subr.mxu0 0.0
    %8637 = vmatpush1.msra.mxu0 0.0
    %8638 = vmatprep.subr.mxu0 0.0
    %8639 = vmatpush1.msra.mxu0 0.0
    %8640 = vmatprep.subr.mxu0 0.0
    %8641 = vmatpush1.msra.mxu0 0.0
    %8642 = vmatprep.subr.mxu0 0.0
    %8643 = vmatpush1.msra.mxu0 0.0
    %8644 = vmatprep.subr.mxu0 0.0
    %8645 = vmatpush1.msra.mxu0 0.0
    %8646 = vmatprep.subr.mxu0 0.0
    %8647 = vmatpush1.msra.mxu0 0.0
    %8648 = vmatprep.subr.mxu0 0.0
    %8649 = vmatpush1.msra.mxu0 0.0
    %8650 = vmatprep.subr.mxu0 0.0
    %8651 = vmatpush1.msra.mxu0 0.0
    %8652 = vmatprep.subr.mxu0 0.0
    %8653 = vmatpush1.msra.mxu0 0.0
    %8654 = vmatprep.subr.mxu0 0.0
    %8655 = vmatpush1.msra.mxu0 0.0
    %8656 = vmatprep.subr.mxu0 0.0
    %8657 = vmatpush1.msra.mxu0 0.0
    %8658 = vmatprep.subr.mxu0 0.0
    %8659 = vmatpush1.msra.mxu0 0.0
    %8660 = vmatprep.subr.mxu0 0.0
    %8661 = vmatpush1.msra.mxu0 0.0
    %8662 = vmatprep.subr.mxu0 0.0
    %8663 = vmatpush1.msra.mxu0 0.0
    %8664 = vmatprep.subr.mxu0 0.0
    %8665 = vmatpush1.msra.mxu0 0.0
    %8666 = vmatprep.subr.mxu0 0.0
    %8667 = vmatpush1.msra.mxu0 0.0
    %8668 = vmatprep.subr.mxu0 0.0
    %8669 = vmatpush1.msra.mxu0 0.0
    %8670 = vmatprep.subr.mxu0 0.0
    %8671 = vmatpush1.msra.mxu0 0.0
    %8672 = vmatprep.subr.mxu0 0.0
    %8673 = vmatpush1.msra.mxu0 0.0
    %8674 = vmatprep.subr.mxu0 0.0
    %8675 = vmatpush1.msra.mxu0 0.0
    %8676 = vmatprep.subr.mxu0 0.0
    %8677 = vmatpush1.msra.mxu0 0.0
    %8678 = vmatprep.subr.mxu0 0.0
    %8679 = vmatpush1.msra.mxu0 0.0
    %8680 = vmatprep.subr.mxu0 0.0
    %8681 = vmatpush1.msra.mxu0 0.0
    %8682 = vmatprep.subr.mxu0 0.0
    %8683 = vmatpush1.msra.mxu0 0.0
    %8684 = vmatprep.subr.mxu0 0.0
    %8685 = vmatpush1.msra.mxu0 0.0
    %8686 = vmatprep.subr.mxu0 0.0
    %8687 = vmatpush1.msra.mxu0 0.0
    %8688 = vmatprep.mubr.f32.mxu0 0.0
    %v8689 = vand.u32 %v4192, 4294901760
    %v8690 = vsub.f32 %v4192, %v8689
    %v8691 = vand.u32 %v8690, 4294901760
    %8692 = vmatmul.mubr.f32.gmra.mrb[0].mxu0 %v8691
    %v8693 = vpop.f32.mrb[0].mxu0
    %v8694 = vadd.f32 %v8598, %v8693
    %v8695 = vpop.f32.mrb[0].mxu0
    %8696 = vmatprep.mubr.f32.mxu0 0.0
    %v8697 = vand.u32 %v4195, 4294901760
    %v8698 = vsub.f32 %v4195, %v8697
    %v8699 = vand.u32 %v8698, 4294901760
    %8700 = vmatmul.mubr.f32.gmra.mrb[0].mxu0 %v8699
    %v8701 = vpop.f32.mrb[0].mxu0
    %v8702 = vadd.f32 %v8605, %v8701
    %v8703 = vpop.f32.mrb[0].mxu0
    %8704 = vmatprep.mubr.f32.mxu0 0.0
    %v8705 = vand.u32 %v4198, 4294901760
    %v8706 = vsub.f32 %v4198, %v8705
    %v8707 = vand.u32 %v8706, 4294901760
    %8708 = vmatmul.mubr.f32.gmra.mrb[0].mxu0 %v8707
    %v8709 = vpop.f32.mrb[0].mxu0
    %v8710 = vadd.f32 %v8612, %v8709
    %v8711 = vpop.f32.mrb[0].mxu0
    %8712 = vmatprep.mubr.f32.mxu0 0.0
    %v8713 = vand.u32 %v4201, 4294901760
    %v8714 = vsub.f32 %v4201, %v8713
    %v8715 = vand.u32 %v8714, 4294901760
    %8716 = vmatmul.mubr.f32.gmra.mrb[0].mxu0 %v8715
    %v8717 = vpop.f32.mrb[0].mxu0
    %v8718 = vadd.f32 %v8619, %v8717
    %v8719 = vpop.f32.mrb[0].mxu0
    %8720 = vdwg.mxu0
    %8721 = vmatprep.subr.mxu0 0.0
    %v8722 = vand.u32 %v4182, 4294901760
    %v8723 = vsub.f32 %v4182, %v8722
    %v8724 = vand.u32 %v8723, 4294901760
    %8725 = vmatpush1.msra.mxu0 %v8724
    %8726 = vmatprep.subr.mxu0 0.0
    %v8727 = vand.u32 %v4188, 4294901760
    %v8728 = vsub.f32 %v4188, %v8727
    %v8729 = vand.u32 %v8728, 4294901760
    %8730 = vmatpush1.msra.mxu0 %v8729
    %8731 = vmatprep.subr.mxu0 0.0
    %8732 = vmatpush1.msra.mxu0 0.0
    %8733 = vmatprep.subr.mxu0 0.0
    %8734 = vmatpush1.msra.mxu0 0.0
    %8735 = vmatprep.subr.mxu0 0.0
    %8736 = vmatpush1.msra.mxu0 0.0
    %8737 = vmatprep.subr.mxu0 0.0
    %8738 = vmatpush1.msra.mxu0 0.0
    %8739 = vmatprep.subr.mxu0 0.0
    %8740 = vmatpush1.msra.mxu0 0.0
    %8741 = vmatprep.subr.mxu0 0.0
    %8742 = vmatpush1.msra.mxu0 0.0
    %8743 = vmatprep.subr.mxu0 0.0
    %8744 = vmatpush1.msra.mxu0 0.0
    %8745 = vmatprep.subr.mxu0 0.0
    %8746 = vmatpush1.msra.mxu0 0.0
    %8747 = vmatprep.subr.mxu0 0.0
    %8748 = vmatpush1.msra.mxu0 0.0
    %8749 = vmatprep.subr.mxu0 0.0
    %8750 = vmatpush1.msra.mxu0 0.0
    %8751 = vmatprep.subr.mxu0 0.0
    %8752 = vmatpush1.msra.mxu0 0.0
    %8753 = vmatprep.subr.mxu0 0.0
    %8754 = vmatpush1.msra.mxu0 0.0
    %8755 = vmatprep.subr.mxu0 0.0
    %8756 = vmatpush1.msra.mxu0 0.0
    %8757 = vmatprep.subr.mxu0 0.0
    %8758 = vmatpush1.msra.mxu0 0.0
    %8759 = vmatprep.subr.mxu0 0.0
    %8760 = vmatpush1.msra.mxu0 0.0
    %8761 = vmatprep.subr.mxu0 0.0
    %8762 = vmatpush1.msra.mxu0 0.0
    %8763 = vmatprep.subr.mxu0 0.0
    %8764 = vmatpush1.msra.mxu0 0.0
    %8765 = vmatprep.subr.mxu0 0.0
    %8766 = vmatpush1.msra.mxu0 0.0
    %8767 = vmatprep.subr.mxu0 0.0
    %8768 = vmatpush1.msra.mxu0 0.0
    %8769 = vmatprep.subr.mxu0 0.0
    %8770 = vmatpush1.msra.mxu0 0.0
    %8771 = vmatprep.subr.mxu0 0.0
    %8772 = vmatpush1.msra.mxu0 0.0
    %8773 = vmatprep.subr.mxu0 0.0
    %8774 = vmatpush1.msra.mxu0 0.0
    %8775 = vmatprep.subr.mxu0 0.0
    %8776 = vmatpush1.msra.mxu0 0.0
    %8777 = vmatprep.subr.mxu0 0.0
    %8778 = vmatpush1.msra.mxu0 0.0
    %8779 = vmatprep.subr.mxu0 0.0
    %8780 = vmatpush1.msra.mxu0 0.0
    %8781 = vmatprep.subr.mxu0 0.0
    %8782 = vmatpush1.msra.mxu0 0.0
    %8783 = vmatprep.subr.mxu0 0.0
    %8784 = vmatpush1.msra.mxu0 0.0
    %8785 = vmatprep.subr.mxu0 0.0
    %8786 = vmatpush1.msra.mxu0 0.0
    %8787 = vmatprep.subr.mxu0 0.0
    %8788 = vmatpush1.msra.mxu0 0.0
    %8789 = vmatprep.subr.mxu0 0.0
    %8790 = vmatpush1.msra.mxu0 0.0
    %8791 = vmatprep.mubr.f32.mxu0 0.0
    %v8792 = vand.u32 %v4192, 4294901760
    %8793 = vmatmul.mubr.f32.gmra.mrb[0].mxu0 %v8792
    %v8794 = vpop.f32.mrb[0].mxu0
    %v8795 = vadd.f32 %v8694, %v8794
    %v8796 = vpop.f32.mrb[0].mxu0
    %8797 = vmatprep.mubr.f32.mxu0 0.0
    %v8798 = vand.u32 %v4195, 4294901760
    %8799 = vmatmul.mubr.f32.gmra.mrb[0].mxu0 %v8798
    %v8800 = vpop.f32.mrb[0].mxu0
    %v8801 = vadd.f32 %v8702, %v8800
    %v8802 = vpop.f32.mrb[0].mxu0
    %8803 = vmatprep.mubr.f32.mxu0 0.0
    %v8804 = vand.u32 %v4198, 4294901760
    %8805 = vmatmul.mubr.f32.gmra.mrb[0].mxu0 %v8804
    %v8806 = vpop.f32.mrb[0].mxu0
    %v8807 = vadd.f32 %v8710, %v8806
    %v8808 = vpop.f32.mrb[0].mxu0
    %8809 = vmatprep.mubr.f32.mxu0 0.0
    %v8810 = vand.u32 %v4201, 4294901760
    %8811 = vmatmul.mubr.f32.gmra.mrb[0].mxu0 %v8810
    %v8812 = vpop.f32.mrb[0].mxu0
    %v8813 = vadd.f32 %v8718, %v8812
    %v8814 = vpop.f32.mrb[0].mxu0
    %8815 = vdwg.mxu0
    %8816 = vmatprep.subr.mxu0 0.0
    %v8817 = vand.u32 %v4182, 4294901760
    %8818 = vmatpush1.msra.mxu0 %v8817
    %8819 = vmatprep.subr.mxu0 0.0
    %v8820 = vand.u32 %v4188, 4294901760
    %8821 = vmatpush1.msra.mxu0 %v8820
    %8822 = vmatprep.subr.mxu0 0.0
    %8823 = vmatpush1.msra.mxu0 0.0
    %8824 = vmatprep.subr.mxu0 0.0
    %8825 = vmatpush1.msra.mxu0 0.0
    %8826 = vmatprep.subr.mxu0 0.0
    %8827 = vmatpush1.msra.mxu0 0.0
    %8828 = vmatprep.subr.mxu0 0.0
    %8829 = vmatpush1.msra.mxu0 0.0
    %8830 = vmatprep.subr.mxu0 0.0
    %8831 = vmatpush1.msra.mxu0 0.0
    %8832 = vmatprep.subr.mxu0 0.0
    %8833 = vmatpush1.msra.mxu0 0.0
    %8834 = vmatprep.subr.mxu0 0.0
    %8835 = vmatpush1.msra.mxu0 0.0
    %8836 = vmatprep.subr.mxu0 0.0
    %8837 = vmatpush1.msra.mxu0 0.0
    %8838 = vmatprep.subr.mxu0 0.0
    %8839 = vmatpush1.msra.mxu0 0.0
    %8840 = vmatprep.subr.mxu0 0.0
    %8841 = vmatpush1.msra.mxu0 0.0
    %8842 = vmatprep.subr.mxu0 0.0
    %8843 = vmatpush1.msra.mxu0 0.0
    %8844 = vmatprep.subr.mxu0 0.0
    %8845 = vmatpush1.msra.mxu0 0.0
    %8846 = vmatprep.subr.mxu0 0.0
    %8847 = vmatpush1.msra.mxu0 0.0
    %8848 = vmatprep.subr.mxu0 0.0
    %8849 = vmatpush1.msra.mxu0 0.0
    %8850 = vmatprep.subr.mxu0 0.0
    %8851 = vmatpush1.msra.mxu0 0.0
    %8852 = vmatprep.subr.mxu0 0.0
    %8853 = vmatpush1.msra.mxu0 0.0
    %8854 = vmatprep.subr.mxu0 0.0
    %8855 = vmatpush1.msra.mxu0 0.0
    %8856 = vmatprep.subr.mxu0 0.0
    %8857 = vmatpush1.msra.mxu0 0.0
    %8858 = vmatprep.subr.mxu0 0.0
    %8859 = vmatpush1.msra.mxu0 0.0
    %8860 = vmatprep.subr.mxu0 0.0
    %8861 = vmatpush1.msra.mxu0 0.0
    %8862 = vmatprep.subr.mxu0 0.0
    %8863 = vmatpush1.msra.mxu0 0.0
    %8864 = vmatprep.subr.mxu0 0.0
    %8865 = vmatpush1.msra.mxu0 0.0
    %8866 = vmatprep.subr.mxu0 0.0
    %8867 = vmatpush1.msra.mxu0 0.0
    %8868 = vmatprep.subr.mxu0 0.0
    %8869 = vmatpush1.msra.mxu0 0.0
    %8870 = vmatprep.subr.mxu0 0.0
    %8871 = vmatpush1.msra.mxu0 0.0
    %8872 = vmatprep.subr.mxu0 0.0
    %8873 = vmatpush1.msra.mxu0 0.0
    %8874 = vmatprep.subr.mxu0 0.0
    %8875 = vmatpush1.msra.mxu0 0.0
    %8876 = vmatprep.subr.mxu0 0.0
    %8877 = vmatpush1.msra.mxu0 0.0
    %8878 = vmatprep.subr.mxu0 0.0
    %8879 = vmatpush1.msra.mxu0 0.0
    %8880 = vmatprep.subr.mxu0 0.0
    %8881 = vmatpush1.msra.mxu0 0.0
    %8882 = vmatprep.mubr.f32.mxu0 0.0
    %v8883 = vand.u32 %v4192, 4294901760
    %8884 = vmatmul.mubr.f32.gmra.mrb[0].mxu0 %v8883
    %v8885 = vpop.f32.mrb[0].mxu0
    %v8886 = vadd.f32 %v8795, %v8885
    %v8887 = vpop.f32.mrb[0].mxu0
    %8888 = vmatprep.mubr.f32.mxu0 0.0
    %v8889 = vand.u32 %v4195, 4294901760
    %8890 = vmatmul.mubr.f32.gmra.mrb[0].mxu0 %v8889
    %v8891 = vpop.f32.mrb[0].mxu0
    %v8892 = vadd.f32 %v8801, %v8891
    %v8893 = vpop.f32.mrb[0].mxu0
    %8894 = vmatprep.mubr.f32.mxu0 0.0
    %v8895 = vand.u32 %v4198, 4294901760
    %8896 = vmatmul.mubr.f32.gmra.mrb[0].mxu0 %v8895
    %v8897 = vpop.f32.mrb[0].mxu0
    %v8898 = vadd.f32 %v8807, %v8897
    %v8899 = vpop.f32.mrb[0].mxu0
    %8900 = vmatprep.mubr.f32.mxu0 0.0
    %v8901 = vand.u32 %v4201, 4294901760
    %8902 = vmatmul.mubr.f32.gmra.mrb[0].mxu0 %v8901
    %v8903 = vpop.f32.mrb[0].mxu0
    %v8904 = vadd.f32 %v8813, %v8903
    %v8905 = vpop.f32.mrb[0].mxu0
    %8906 = vdwg.mxu0
    %vm8907 = vcmask 261120
    %8908 = vst.msk [vmem:[#allocation5] sm:$0xff] %vm8907, %v4770
    %8909 = vst.msk [vmem:[#allocation5 + $0x8] sm:$0xff] %vm8907, %v4776
    %8910 = vst.msk [vmem:[#allocation5 + $0x10] sm:$0xff] %vm8907, %v4782
    %8911 = vst.msk [vmem:[#allocation5 + $0x18] sm:$0xff] %vm8907, %v4788
    %8912 = vst.msk [vmem:[#allocation5 + $0x20] sm:$0xff] %vm8907, %v5358
    %8913 = vst.msk [vmem:[#allocation5 + $0x28] sm:$0xff] %vm8907, %v5364
    %8914 = vst.msk [vmem:[#allocation5 + $0x30] sm:$0xff] %vm8907, %v5370
    %8915 = vst.msk [vmem:[#allocation5 + $0x38] sm:$0xff] %vm8907, %v5376
    %8916 = vst.msk [vmem:[#allocation5 + $0x40] sm:$0xff] %vm8907, %v5946
    %8917 = vst.msk [vmem:[#allocation5 + $0x48] sm:$0xff] %vm8907, %v5952
    %8918 = vst.msk [vmem:[#allocation5 + $0x50] sm:$0xff] %vm8907, %v5958
    %8919 = vst.msk [vmem:[#allocation5 + $0x58] sm:$0xff] %vm8907, %v5964
    %8920 = vst.msk [vmem:[#allocation5 + $0x60] sm:$0xff] %vm8907, %v6534
    %8921 = vst.msk [vmem:[#allocation5 + $0x68] sm:$0xff] %vm8907, %v6540
    %8922 = vst.msk [vmem:[#allocation5 + $0x70] sm:$0xff] %vm8907, %v6546
    %8923 = vst.msk [vmem:[#allocation5 + $0x78] sm:$0xff] %vm8907, %v6552
    %8924 = vst.msk [vmem:[#allocation5 + $0x80] sm:$0xff] %vm8907, %v7122
    %8925 = vst.msk [vmem:[#allocation5 + $0x88] sm:$0xff] %vm8907, %v7128
    %8926 = vst.msk [vmem:[#allocation5 + $0x90] sm:$0xff] %vm8907, %v7134
    %8927 = vst.msk [vmem:[#allocation5 + $0x98] sm:$0xff] %vm8907, %v7140
    %8928 = vst.msk [vmem:[#allocation5 + $0xa0] sm:$0xff] %vm8907, %v7710
    %8929 = vst.msk [vmem:[#allocation5 + $0xa8] sm:$0xff] %vm8907, %v7716
    %8930 = vst.msk [vmem:[#allocation5 + $0xb0] sm:$0xff] %vm8907, %v7722
    %8931 = vst.msk [vmem:[#allocation5 + $0xb8] sm:$0xff] %vm8907, %v7728
    %8932 = vst.msk [vmem:[#allocation5 + $0xc0] sm:$0xff] %vm8907, %v8298
    %8933 = vst.msk [vmem:[#allocation5 + $0xc8] sm:$0xff] %vm8907, %v8304
    %8934 = vst.msk [vmem:[#allocation5 + $0xd0] sm:$0xff] %vm8907, %v8310
    %8935 = vst.msk [vmem:[#allocation5 + $0xd8] sm:$0xff] %vm8907, %v8316
    %8936 = vst.msk [vmem:[#allocation5 + $0xe0] sm:$0xff] %vm8907, %v8886
    %8937 = vst.msk [vmem:[#allocation5 + $0xe8] sm:$0xff] %vm8907, %v8892
    %8938 = vst.msk [vmem:[#allocation5 + $0xf0] sm:$0xff] %vm8907, %v8898
    %8939 = vst.msk [vmem:[#allocation5 + $0xf8] sm:$0xff] %vm8907, %v8904
    // Predicated region
    $region10: #{tpu_custom_call.1} parent=1 // pred_check
      _
    $region11: #{tpu_custom_call.1} parent=1 // pred_check_branch
      %8941 = sbr.rel (0) target = $region13
    $region12: #{tpu_custom_call.1} parent=1 // pred_region
      %s8943 = ssub.s32 4096, 4096
      %8944 = vsyncadd [#allocation4], %s8943
      %s8945 = sshll.u32 [#allocation5], 4
      %s8946 = int_to_ptr.vmem [resolvable:$true] %s8945
      %8951 = dma.vmem_to_hbm [thread:$0]  %s8946, 4096, %s1, [#allocation4], 128, 128, 8
    $region13: #{tpu_custom_call.1} parent=1 // pred_fallthru
      _
    // Predicated region
    $region14: #{tpu_custom_call.1} parent=1 // pred_check
      _
    $region15: #{tpu_custom_call.1} parent=1 // pred_check_branch
      %8953 = sbr.rel (0) target = $region17
    $region16: #{tpu_custom_call.1} parent=1 // pred_region
      %8954 = dma.done [#allocation4], 4096
    $region17: #{tpu_custom_call.1} parent=1 // pred_fallthru
      _
    %8955 = vsyncpa [#allocation3], 1
    %8956 = vsyncpa [#allocation4], 1

</llo_original>
